<compile_context>
chip_gen: v7x
topology: tpu7x:2x2x1
jax: 0.10.0
libtpu: 0.0.40
codegen_flags: <defaults>
</compile_context>

<pallas_src>
import functools

import jax
import jax.numpy as jnp
import numpy as np
from jax import lax
from jax.experimental import pallas as pl
from jax.experimental.pallas import tpu as pltpu


# ------------------------------ Pallas kernel ------------------------------ #

def _decoder_block_kernel(x_ref, w1_ref, b1_ref, w2_ref, b2_ref, o_ref, ypad_ref,
                          *, H, W, C_in, C_mid, C_out4):
    # x_ref   : (1, H+2, W+2, C_in)   zero-padded NHWC input tile (one batch elem)
    # w1_ref  : (3, 3, C_in, C_mid)   conv1 taps
    # b1_ref  : (1, C_mid)
    # w2_ref  : (3, 3, C_mid, 4*C_out) sub-pixel deconv taps, 4 phases packed in N
    # b2_ref  : (1, 4*C_out)
    # o_ref   : (1, H*W, 4*C_out)
    # ypad_ref: VMEM scratch (H+2, W+2, C_mid) — intermediate with zero border.

    # ---- stage 1: y = relu(conv3x3(x) + b1), as 9 shifted matmuls ----------
    acc1 = jnp.zeros((H * W, C_mid), jnp.float32)
    for kh in range(3):
        for kw in range(3):
            x_tap = x_ref[0, kh:kh + H, kw:kw + W, :]            # (H, W, C_in)
            acc1 = acc1 + jnp.dot(x_tap.reshape(H * W, C_in),
                                  w1_ref[kh, kw],
                                  preferred_element_type=jnp.float32)
    y = jnp.maximum(acc1 + b1_ref[...], 0.0)                     # (H*W, C_mid)

    # Keep y in VMEM with a 1-pixel zero border (never written to HBM).
    ypad_ref[...] = jnp.zeros((H + 2, W + 2, C_mid), jnp.float32)
    ypad_ref[1:H + 1, 1:W + 1, :] = y.reshape(H, W, C_mid)

    # ---- stage 2: z = relu(deconv4x4/s2(y) + b2), sub-pixel decomposition --
    # z[2m+ph, 2r+pw, co] = sum_{a,b,ci} ypad[m+a, r+b, ci] * w2[a, b, ci, (2ph+pw)*C_out+co]
    acc2 = jnp.zeros((H * W, C_out4), jnp.float32)
    for a in range(3):
        for b in range(3):
            y_tap = ypad_ref[a:a + H, b:b + W, :]                # (H, W, C_mid)
            acc2 = acc2 + jnp.dot(y_tap.reshape(H * W, C_mid),
                                  w2_ref[a, b],
                                  preferred_element_type=jnp.float32)
    z = jnp.maximum(acc2 + b2_ref[...], 0.0)                     # (H*W, 4*C_out)
    o_ref[0, :, :] = z.astype(o_ref.dtype)


# ------------------------------ JAX wrapper -------------------------------- #

def _pack_weights(conv_w, conv_b, deconv_w, deconv_b):
    """Rearrange PyTorch weights into the kernel's tap matrices (one-time)."""
    c_mid, c_in = conv_w.shape[0], conv_w.shape[1]
    c_out = deconv_w.shape[1]

    # conv1 (OIHW) -> per-tap (C_in, C_mid) matrices.
    w1 = jnp.transpose(conv_w, (2, 3, 1, 0))                     # (3, 3, C_in, C_mid)
    b1 = conv_b.reshape(1, c_mid)

    # ConvTranspose2d(k=4, s=2, p=1) sub-pixel decomposition:
    #   z[2m+ph, 2r+pw, co] = sum_{dh,dw,ci} ypad[m+ph+dh, r+pw+dw, ci]
    #                                        * W[ci, co, 3-ph-2dh, 3-pw-2dw]
    # Pack the 4 phases into the output-channel (lane) dimension.
    w2 = jnp.zeros((3, 3, c_mid, 4 * c_out), conv_w.dtype)
    for ph in range(2):
        for pw in range(2):
            col = (2 * ph + pw) * c_out
            for dh in range(2):
                for dw in range(2):
                    a, b = ph + dh, pw + dw
                    kh, kw = 3 - ph - 2 * dh, 3 - pw - 2 * dw
                    w2 = w2.at[a, b, :, col:col + c_out].set(deconv_w[:, :, kh, kw])
    b2 = jnp.tile(deconv_b, 4).reshape(1, 4 * c_out)
    return w1, b1, w2, b2


@jax.jit
def decoder_block_resnet_forward(x_nchw, params):
    """DecoderBlockResNet.forward with res_blocks_dec=False (the default)."""
    conv_w, conv_b = params["conv1_w"], params["conv1_b"]
    deconv_w, deconv_b = params["deconv_w"], params["deconv_b"]
    n, c_in, h, w = x_nchw.shape
    c_mid = conv_w.shape[0]
    c_out = deconv_w.shape[1]

    x = jnp.transpose(x_nchw, (0, 2, 3, 1))                       # NCHW -> NHWC
    x_pad = jnp.pad(x, ((0, 0), (1, 1), (1, 1), (0, 0)))          # conv pad=1 border
    w1, b1, w2, b2 = _pack_weights(conv_w, conv_b, deconv_w, deconv_b)

    kernel = functools.partial(_decoder_block_kernel, H=h, W=w, C_in=c_in,
                               C_mid=c_mid, C_out4=4 * c_out)

    out = pl.pallas_call(
        kernel,
        out_shape=jax.ShapeDtypeStruct((n, h * w, 4 * c_out), x_nchw.dtype),
        grid=(n,),
        in_specs=[
            pl.BlockSpec((1, h + 2, w + 2, c_in), lambda i: (i, 0, 0, 0)),
            pl.BlockSpec((3, 3, c_in, c_mid), lambda i: (0, 0, 0, 0)),
            pl.BlockSpec((1, c_mid), lambda i: (0, 0)),
            pl.BlockSpec((3, 3, c_mid, 4 * c_out), lambda i: (0, 0, 0, 0)),
            pl.BlockSpec((1, 4 * c_out), lambda i: (0, 0)),
        ],
        out_specs=pl.BlockSpec((1, h * w, 4 * c_out), lambda i: (i, 0, 0)),
        scratch_shapes=[pltpu.VMEM((h + 2, w + 2, c_mid), jnp.float32)],
        compiler_params=pltpu.CompilerParams(
            dimension_semantics=("parallel",)),   # v7x: one batch elem per TC
    )(x_pad, w1, b1, w2, b2)

    # De-interleave phases: out[n, m*W+r, (2ph+pw)*C_out+co] == z[n, 2m+ph, 2r+pw, co]
    z = out.reshape(n, h, w, 2, 2, c_out)                         # (n, m, r, ph, pw, co)
    z = jnp.transpose(z, (0, 1, 3, 2, 4, 5)).reshape(n, 2 * h, 2 * w, c_out)
    return jnp.transpose(z, (0, 3, 1, 2))                         # NHWC -> NCHW


# --------------------------- Reference (lax) -------------------------------- #

def reference_forward(x_nchw, params):
    conv_w, conv_b = params["conv1_w"], params["conv1_b"]
    deconv_w, deconv_b = params["deconv_w"], params["deconv_b"]
    dn = ("NCHW", "OIHW", "NCHW")
    y = lax.conv_general_dilated(
        x_nchw, conv_w, window_strides=(1, 1), padding=((1, 1), (1, 1)),
        dimension_numbers=dn, precision=lax.Precision.HIGHEST)
    y = jnp.maximum(y + conv_b[None, :, None, None], 0.0)
    w_eq = jnp.transpose(deconv_w, (1, 0, 2, 3))[:, :, ::-1, ::-1]
    z = lax.conv_general_dilated(
        y, w_eq, window_strides=(1, 1), padding=((2, 2), (2, 2)),
        lhs_dilation=(2, 2), dimension_numbers=dn,
        precision=lax.Precision.HIGHEST)
    z = jnp.maximum(z + deconv_b[None, :, None, None], 0.0)
    return z


# --------------------------------- main ------------------------------------- #

if __name__ == "__main__":
    # Small shapes consistent with the module: N=2, C_in=4, H=W=16,
    # middle_channels=8, out_channels=4.
    N, C_IN, C_MID, C_OUT, H, W = 2, 4, 8, 4, 16, 16

    key = jax.random.PRNGKey(0)
    k1, k2, k3, k4, k5 = jax.random.split(key, 5)
    params = {
        "conv1_w": 0.1 * jax.random.normal(k1, (C_MID, C_IN, 3, 3), jnp.float32),
        "conv1_b": 0.1 * jax.random.normal(k2, (C_MID,), jnp.float32),
        "deconv_w": 0.1 * jax.random.normal(k3, (C_MID, C_OUT, 4, 4), jnp.float32),
        "deconv_b": 0.1 * jax.random.normal(k4, (C_OUT,), jnp.float32),
    }
    x = jax.random.normal(k5, (N, C_IN, H, W), jnp.float32)

    out = decoder_block_resnet_forward(x, params)
    out = jax.block_until_ready(out)
    assert out.shape == (N, C_OUT, 2 * H, 2 * W), out.shape

    ref = jax.block_until_ready(reference_forward(x, params))
    np.testing.assert_allclose(np.asarray(out), np.asarray(ref),
                               rtol=1e-3, atol=1e-3)

    # TODO(synk): res_blocks_dec=True branch (ResidualBlock with BatchNorm2d
    # running-statistics semantics) not implemented; constructor default is False.
    print("KERNEL_OK")
</pallas_src>

<mosaic_0001>
module attributes {stable_mosaic.version = 11 : i64} {
  func.func @_decoder_block_kernel(%arg0: i32, %arg1: memref<1x18x18x4xf32, #tpu.memory_space<vmem>>, %arg2: memref<3x3x4x8xf32, #tpu.memory_space<vmem>>, %arg3: memref<1x8xf32, #tpu.memory_space<vmem>>, %arg4: memref<3x3x8x16xf32, #tpu.memory_space<vmem>>, %arg5: memref<1x16xf32, #tpu.memory_space<vmem>>, %arg6: memref<1x256x16xf32, #tpu.memory_space<vmem>>, %arg7: memref<18x18x8xf32, #tpu.memory_space<vmem>>) attributes {dimension_semantics = [#tpu.dimension_semantics<parallel>], iteration_bounds = array<i64: 2>, scalar_prefetch = 0 : i64, scratch_operands = 1 : i64, tpu.core_type = #tpu.core_type<tc>, window_params = [{transform_indices = @transform_0, window_bounds = array<i64: 1, 18, 18, 4>}, {pipeline_mode = #tpu.pipeline_mode<synchronous>, transform_indices = @transform_1, window_bounds = array<i64: 3, 3, 4, 8>}, {pipeline_mode = #tpu.pipeline_mode<synchronous>, transform_indices = @transform_2, window_bounds = array<i64: 1, 8>}, {pipeline_mode = #tpu.pipeline_mode<synchronous>, transform_indices = @transform_3, window_bounds = array<i64: 3, 3, 8, 16>}, {pipeline_mode = #tpu.pipeline_mode<synchronous>, transform_indices = @transform_4, window_bounds = array<i64: 1, 16>}, {transform_indices = @transform_5, window_bounds = array<i64: 1, 256, 16>}]} {
    %cst = arith.constant 0.000000e+00 : f32
    %0 = vector.broadcast %cst : f32 to vector<256x8xf32>
    %c0 = arith.constant 0 : index
    %c0_0 = arith.constant 0 : index
    %c0_1 = arith.constant 0 : index
    %c0_2 = arith.constant 0 : index
    %1 = vector.load %arg1[%c0, %c0_0, %c0_1, %c0_2] : memref<1x18x18x4xf32, #tpu.memory_space<vmem>>, vector<1x16x16x4xf32>
    %2 = vector.shape_cast %1 : vector<1x16x16x4xf32> to vector<16x16x4xf32>
    %3 = vector.shape_cast %2 : vector<16x16x4xf32> to vector<256x4xf32>
    %c0_3 = arith.constant 0 : index
    %c0_4 = arith.constant 0 : index
    %c0_5 = arith.constant 0 : index
    %c0_6 = arith.constant 0 : index
    %4 = vector.load %arg2[%c0_3, %c0_4, %c0_5, %c0_6] : memref<3x3x4x8xf32, #tpu.memory_space<vmem>>, vector<1x1x4x8xf32>
    %5 = vector.shape_cast %4 : vector<1x1x4x8xf32> to vector<4x8xf32>
    %cst_7 = arith.constant dense<0.000000e+00> : vector<256x8xf32>
    %6 = tpu.matmul %3, %5, %cst_7 {dimension_numbers = #tpu.dot_dimension_numbers<[1], [0], [0], [1], [0, 0, 1, 1], [], []>} : vector<256x4xf32>, vector<4x8xf32>, vector<256x8xf32> -> vector<256x8xf32>
    %7 = arith.addf %0, %6 : vector<256x8xf32>
    %c0_8 = arith.constant 0 : index
    %c0_9 = arith.constant 0 : index
    %c1 = arith.constant 1 : index
    %c0_10 = arith.constant 0 : index
    %8 = vector.load %arg1[%c0_8, %c0_9, %c1, %c0_10] : memref<1x18x18x4xf32, #tpu.memory_space<vmem>>, vector<1x16x16x4xf32>
    %9 = vector.shape_cast %8 : vector<1x16x16x4xf32> to vector<16x16x4xf32>
    %10 = vector.shape_cast %9 : vector<16x16x4xf32> to vector<256x4xf32>
    %c0_11 = arith.constant 0 : index
    %c1_12 = arith.constant 1 : index
    %c0_13 = arith.constant 0 : index
    %c0_14 = arith.constant 0 : index
    %11 = vector.load %arg2[%c0_11, %c1_12, %c0_13, %c0_14] : memref<3x3x4x8xf32, #tpu.memory_space<vmem>>, vector<1x1x4x8xf32>
    %12 = vector.shape_cast %11 : vector<1x1x4x8xf32> to vector<4x8xf32>
    %cst_15 = arith.constant dense<0.000000e+00> : vector<256x8xf32>
    %13 = tpu.matmul %10, %12, %cst_15 {dimension_numbers = #tpu.dot_dimension_numbers<[1], [0], [0], [1], [0, 0, 1, 1], [], []>} : vector<256x4xf32>, vector<4x8xf32>, vector<256x8xf32> -> vector<256x8xf32>
    %14 = arith.addf %7, %13 : vector<256x8xf32>
    %c0_16 = arith.constant 0 : index
    %c0_17 = arith.constant 0 : index
    %c2 = arith.constant 2 : index
    %c0_18 = arith.constant 0 : index
    %15 = vector.load %arg1[%c0_16, %c0_17, %c2, %c0_18] : memref<1x18x18x4xf32, #tpu.memory_space<vmem>>, vector<1x16x16x4xf32>
    %16 = vector.shape_cast %15 : vector<1x16x16x4xf32> to vector<16x16x4xf32>
    %17 = vector.shape_cast %16 : vector<16x16x4xf32> to vector<256x4xf32>
    %c0_19 = arith.constant 0 : index
    %c2_20 = arith.constant 2 : index
    %c0_21 = arith.constant 0 : index
    %c0_22 = arith.constant 0 : index
    %18 = vector.load %arg2[%c0_19, %c2_20, %c0_21, %c0_22] : memref<3x3x4x8xf32, #tpu.memory_space<vmem>>, vector<1x1x4x8xf32>
    %19 = vector.shape_cast %18 : vector<1x1x4x8xf32> to vector<4x8xf32>
    %cst_23 = arith.constant dense<0.000000e+00> : vector<256x8xf32>
    %20 = tpu.matmul %17, %19, %cst_23 {dimension_numbers = #tpu.dot_dimension_numbers<[1], [0], [0], [1], [0, 0, 1, 1], [], []>} : vector<256x4xf32>, vector<4x8xf32>, vector<256x8xf32> -> vector<256x8xf32>
    %21 = arith.addf %14, %20 : vector<256x8xf32>
    %c0_24 = arith.constant 0 : index
    %c1_25 = arith.constant 1 : index
    %c0_26 = arith.constant 0 : index
    %c0_27 = arith.constant 0 : index
    %22 = vector.load %arg1[%c0_24, %c1_25, %c0_26, %c0_27] : memref<1x18x18x4xf32, #tpu.memory_space<vmem>>, vector<1x16x16x4xf32>
    %23 = vector.shape_cast %22 : vector<1x16x16x4xf32> to vector<16x16x4xf32>
    %24 = vector.shape_cast %23 : vector<16x16x4xf32> to vector<256x4xf32>
    %c1_28 = arith.constant 1 : index
    %c0_29 = arith.constant 0 : index
    %c0_30 = arith.constant 0 : index
    %c0_31 = arith.constant 0 : index
    %25 = vector.load %arg2[%c1_28, %c0_29, %c0_30, %c0_31] : memref<3x3x4x8xf32, #tpu.memory_space<vmem>>, vector<1x1x4x8xf32>
    %26 = vector.shape_cast %25 : vector<1x1x4x8xf32> to vector<4x8xf32>
    %cst_32 = arith.constant dense<0.000000e+00> : vector<256x8xf32>
    %27 = tpu.matmul %24, %26, %cst_32 {dimension_numbers = #tpu.dot_dimension_numbers<[1], [0], [0], [1], [0, 0, 1, 1], [], []>} : vector<256x4xf32>, vector<4x8xf32>, vector<256x8xf32> -> vector<256x8xf32>
    %28 = arith.addf %21, %27 : vector<256x8xf32>
    %c0_33 = arith.constant 0 : index
    %c1_34 = arith.constant 1 : index
    %c1_35 = arith.constant 1 : index
    %c0_36 = arith.constant 0 : index
    %29 = vector.load %arg1[%c0_33, %c1_34, %c1_35, %c0_36] : memref<1x18x18x4xf32, #tpu.memory_space<vmem>>, vector<1x16x16x4xf32>
    %30 = vector.shape_cast %29 : vector<1x16x16x4xf32> to vector<16x16x4xf32>
    %31 = vector.shape_cast %30 : vector<16x16x4xf32> to vector<256x4xf32>
    %c1_37 = arith.constant 1 : index
    %c1_38 = arith.constant 1 : index
    %c0_39 = arith.constant 0 : index
    %c0_40 = arith.constant 0 : index
    %32 = vector.load %arg2[%c1_37, %c1_38, %c0_39, %c0_40] : memref<3x3x4x8xf32, #tpu.memory_space<vmem>>, vector<1x1x4x8xf32>
    %33 = vector.shape_cast %32 : vector<1x1x4x8xf32> to vector<4x8xf32>
    %cst_41 = arith.constant dense<0.000000e+00> : vector<256x8xf32>
    %34 = tpu.matmul %31, %33, %cst_41 {dimension_numbers = #tpu.dot_dimension_numbers<[1], [0], [0], [1], [0, 0, 1, 1], [], []>} : vector<256x4xf32>, vector<4x8xf32>, vector<256x8xf32> -> vector<256x8xf32>
    %35 = arith.addf %28, %34 : vector<256x8xf32>
    %c0_42 = arith.constant 0 : index
    %c1_43 = arith.constant 1 : index
    %c2_44 = arith.constant 2 : index
    %c0_45 = arith.constant 0 : index
    %36 = vector.load %arg1[%c0_42, %c1_43, %c2_44, %c0_45] : memref<1x18x18x4xf32, #tpu.memory_space<vmem>>, vector<1x16x16x4xf32>
    %37 = vector.shape_cast %36 : vector<1x16x16x4xf32> to vector<16x16x4xf32>
    %38 = vector.shape_cast %37 : vector<16x16x4xf32> to vector<256x4xf32>
    %c1_46 = arith.constant 1 : index
    %c2_47 = arith.constant 2 : index
    %c0_48 = arith.constant 0 : index
    %c0_49 = arith.constant 0 : index
    %39 = vector.load %arg2[%c1_46, %c2_47, %c0_48, %c0_49] : memref<3x3x4x8xf32, #tpu.memory_space<vmem>>, vector<1x1x4x8xf32>
    %40 = vector.shape_cast %39 : vector<1x1x4x8xf32> to vector<4x8xf32>
    %cst_50 = arith.constant dense<0.000000e+00> : vector<256x8xf32>
    %41 = tpu.matmul %38, %40, %cst_50 {dimension_numbers = #tpu.dot_dimension_numbers<[1], [0], [0], [1], [0, 0, 1, 1], [], []>} : vector<256x4xf32>, vector<4x8xf32>, vector<256x8xf32> -> vector<256x8xf32>
    %42 = arith.addf %35, %41 : vector<256x8xf32>
    %c0_51 = arith.constant 0 : index
    %c2_52 = arith.constant 2 : index
    %c0_53 = arith.constant 0 : index
    %c0_54 = arith.constant 0 : index
    %43 = vector.load %arg1[%c0_51, %c2_52, %c0_53, %c0_54] : memref<1x18x18x4xf32, #tpu.memory_space<vmem>>, vector<1x16x16x4xf32>
    %44 = vector.shape_cast %43 : vector<1x16x16x4xf32> to vector<16x16x4xf32>
    %45 = vector.shape_cast %44 : vector<16x16x4xf32> to vector<256x4xf32>
    %c2_55 = arith.constant 2 : index
    %c0_56 = arith.constant 0 : index
    %c0_57 = arith.constant 0 : index
    %c0_58 = arith.constant 0 : index
    %46 = vector.load %arg2[%c2_55, %c0_56, %c0_57, %c0_58] : memref<3x3x4x8xf32, #tpu.memory_space<vmem>>, vector<1x1x4x8xf32>
    %47 = vector.shape_cast %46 : vector<1x1x4x8xf32> to vector<4x8xf32>
    %cst_59 = arith.constant dense<0.000000e+00> : vector<256x8xf32>
    %48 = tpu.matmul %45, %47, %cst_59 {dimension_numbers = #tpu.dot_dimension_numbers<[1], [0], [0], [1], [0, 0, 1, 1], [], []>} : vector<256x4xf32>, vector<4x8xf32>, vector<256x8xf32> -> vector<256x8xf32>
    %49 = arith.addf %42, %48 : vector<256x8xf32>
    %c0_60 = arith.constant 0 : index
    %c2_61 = arith.constant 2 : index
    %c1_62 = arith.constant 1 : index
    %c0_63 = arith.constant 0 : index
    %50 = vector.load %arg1[%c0_60, %c2_61, %c1_62, %c0_63] : memref<1x18x18x4xf32, #tpu.memory_space<vmem>>, vector<1x16x16x4xf32>
    %51 = vector.shape_cast %50 : vector<1x16x16x4xf32> to vector<16x16x4xf32>
    %52 = vector.shape_cast %51 : vector<16x16x4xf32> to vector<256x4xf32>
    %c2_64 = arith.constant 2 : index
    %c1_65 = arith.constant 1 : index
    %c0_66 = arith.constant 0 : index
    %c0_67 = arith.constant 0 : index
    %53 = vector.load %arg2[%c2_64, %c1_65, %c0_66, %c0_67] : memref<3x3x4x8xf32, #tpu.memory_space<vmem>>, vector<1x1x4x8xf32>
    %54 = vector.shape_cast %53 : vector<1x1x4x8xf32> to vector<4x8xf32>
    %cst_68 = arith.constant dense<0.000000e+00> : vector<256x8xf32>
    %55 = tpu.matmul %52, %54, %cst_68 {dimension_numbers = #tpu.dot_dimension_numbers<[1], [0], [0], [1], [0, 0, 1, 1], [], []>} : vector<256x4xf32>, vector<4x8xf32>, vector<256x8xf32> -> vector<256x8xf32>
    %56 = arith.addf %49, %55 : vector<256x8xf32>
    %c0_69 = arith.constant 0 : index
    %c2_70 = arith.constant 2 : index
    %c2_71 = arith.constant 2 : index
    %c0_72 = arith.constant 0 : index
    %57 = vector.load %arg1[%c0_69, %c2_70, %c2_71, %c0_72] : memref<1x18x18x4xf32, #tpu.memory_space<vmem>>, vector<1x16x16x4xf32>
    %58 = vector.shape_cast %57 : vector<1x16x16x4xf32> to vector<16x16x4xf32>
    %59 = vector.shape_cast %58 : vector<16x16x4xf32> to vector<256x4xf32>
    %c2_73 = arith.constant 2 : index
    %c2_74 = arith.constant 2 : index
    %c0_75 = arith.constant 0 : index
    %c0_76 = arith.constant 0 : index
    %60 = vector.load %arg2[%c2_73, %c2_74, %c0_75, %c0_76] : memref<3x3x4x8xf32, #tpu.memory_space<vmem>>, vector<1x1x4x8xf32>
    %61 = vector.shape_cast %60 : vector<1x1x4x8xf32> to vector<4x8xf32>
    %cst_77 = arith.constant dense<0.000000e+00> : vector<256x8xf32>
    %62 = tpu.matmul %59, %61, %cst_77 {dimension_numbers = #tpu.dot_dimension_numbers<[1], [0], [0], [1], [0, 0, 1, 1], [], []>} : vector<256x4xf32>, vector<4x8xf32>, vector<256x8xf32> -> vector<256x8xf32>
    %63 = arith.addf %56, %62 : vector<256x8xf32>
    %c0_78 = arith.constant 0 : index
    %c0_79 = arith.constant 0 : index
    %64 = vector.load %arg3[%c0_78, %c0_79] : memref<1x8xf32, #tpu.memory_space<vmem>>, vector<1x8xf32>
    %65 = vector.broadcast %64 : vector<1x8xf32> to vector<256x8xf32>
    %66 = arith.addf %63, %65 : vector<256x8xf32>
    %cst_80 = arith.constant 0.000000e+00 : f32
    %67 = vector.broadcast %cst_80 : f32 to vector<256x8xf32>
    %68 = arith.maximumf %66, %67 : vector<256x8xf32>
    %cst_81 = arith.constant 0.000000e+00 : f32
    %69 = vector.broadcast %cst_81 : f32 to vector<18x18x8xf32>
    %c0_82 = arith.constant 0 : index
    %c0_83 = arith.constant 0 : index
    %c0_84 = arith.constant 0 : index
    %70 = vector.load %arg7[%c0_82, %c0_83, %c0_84] : memref<18x18x8xf32, #tpu.memory_space<vmem>>, vector<18x18x8xf32>
    tpu.vector_store %arg7[%c0_82, %c0_83, %c0_84], %69 {strides = array<i32>} : memref<18x18x8xf32, #tpu.memory_space<vmem>>, vector<18x18x8xf32>,
    %71 = vector.shape_cast %68 : vector<256x8xf32> to vector<16x16x8xf32>
    %c1_85 = arith.constant 1 : index
    %c1_86 = arith.constant 1 : index
    %c0_87 = arith.constant 0 : index
    %72 = vector.load %arg7[%c1_85, %c1_86, %c0_87] : memref<18x18x8xf32, #tpu.memory_space<vmem>>, vector<16x16x8xf32>
    tpu.vector_store %arg7[%c1_85, %c1_86, %c0_87], %71 {strides = array<i32>} : memref<18x18x8xf32, #tpu.memory_space<vmem>>, vector<16x16x8xf32>,
    %cst_88 = arith.constant 0.000000e+00 : f32
    %73 = vector.broadcast %cst_88 : f32 to vector<256x16xf32>
    %c0_89 = arith.constant 0 : index
    %c0_90 = arith.constant 0 : index
    %c0_91 = arith.constant 0 : index
    %74 = vector.load %arg7[%c0_89, %c0_90, %c0_91] : memref<18x18x8xf32, #tpu.memory_space<vmem>>, vector<16x16x8xf32>
    %75 = vector.shape_cast %74 : vector<16x16x8xf32> to vector<256x8xf32>
    %c0_92 = arith.constant 0 : index
    %c0_93 = arith.constant 0 : index
    %c0_94 = arith.constant 0 : index
    %c0_95 = arith.constant 0 : index
    %76 = vector.load %arg4[%c0_92, %c0_93, %c0_94, %c0_95] : memref<3x3x8x16xf32, #tpu.memory_space<vmem>>, vector<1x1x8x16xf32>
    %77 = vector.shape_cast %76 : vector<1x1x8x16xf32> to vector<8x16xf32>
    %cst_96 = arith.constant dense<0.000000e+00> : vector<256x16xf32>
    %78 = tpu.matmul %75, %77, %cst_96 {dimension_numbers = #tpu.dot_dimension_numbers<[1], [0], [0], [1], [0, 0, 1, 1], [], []>} : vector<256x8xf32>, vector<8x16xf32>, vector<256x16xf32> -> vector<256x16xf32>
    %79 = arith.addf %73, %78 : vector<256x16xf32>
    %c0_97 = arith.constant 0 : index
    %c1_98 = arith.constant 1 : index
    %c0_99 = arith.constant 0 : index
    %80 = vector.load %arg7[%c0_97, %c1_98, %c0_99] : memref<18x18x8xf32, #tpu.memory_space<vmem>>, vector<16x16x8xf32>
    %81 = vector.shape_cast %80 : vector<16x16x8xf32> to vector<256x8xf32>
    %c0_100 = arith.constant 0 : index
    %c1_101 = arith.constant 1 : index
    %c0_102 = arith.constant 0 : index
    %c0_103 = arith.constant 0 : index
    %82 = vector.load %arg4[%c0_100, %c1_101, %c0_102, %c0_103] : memref<3x3x8x16xf32, #tpu.memory_space<vmem>>, vector<1x1x8x16xf32>
    %83 = vector.shape_cast %82 : vector<1x1x8x16xf32> to vector<8x16xf32>
    %cst_104 = arith.constant dense<0.000000e+00> : vector<256x16xf32>
    %84 = tpu.matmul %81, %83, %cst_104 {dimension_numbers = #tpu.dot_dimension_numbers<[1], [0], [0], [1], [0, 0, 1, 1], [], []>} : vector<256x8xf32>, vector<8x16xf32>, vector<256x16xf32> -> vector<256x16xf32>
    %85 = arith.addf %79, %84 : vector<256x16xf32>
    %c0_105 = arith.constant 0 : index
    %c2_106 = arith.constant 2 : index
    %c0_107 = arith.constant 0 : index
    %86 = vector.load %arg7[%c0_105, %c2_106, %c0_107] : memref<18x18x8xf32, #tpu.memory_space<vmem>>, vector<16x16x8xf32>
    %87 = vector.shape_cast %86 : vector<16x16x8xf32> to vector<256x8xf32>
    %c0_108 = arith.constant 0 : index
    %c2_109 = arith.constant 2 : index
    %c0_110 = arith.constant 0 : index
    %c0_111 = arith.constant 0 : index
    %88 = vector.load %arg4[%c0_108, %c2_109, %c0_110, %c0_111] : memref<3x3x8x16xf32, #tpu.memory_space<vmem>>, vector<1x1x8x16xf32>
    %89 = vector.shape_cast %88 : vector<1x1x8x16xf32> to vector<8x16xf32>
    %cst_112 = arith.constant dense<0.000000e+00> : vector<256x16xf32>
    %90 = tpu.matmul %87, %89, %cst_112 {dimension_numbers = #tpu.dot_dimension_numbers<[1], [0], [0], [1], [0, 0, 1, 1], [], []>} : vector<256x8xf32>, vector<8x16xf32>, vector<256x16xf32> -> vector<256x16xf32>
    %91 = arith.addf %85, %90 : vector<256x16xf32>
    %c1_113 = arith.constant 1 : index
    %c0_114 = arith.constant 0 : index
    %c0_115 = arith.constant 0 : index
    %92 = vector.load %arg7[%c1_113, %c0_114, %c0_115] : memref<18x18x8xf32, #tpu.memory_space<vmem>>, vector<16x16x8xf32>
    %93 = vector.shape_cast %92 : vector<16x16x8xf32> to vector<256x8xf32>
    %c1_116 = arith.constant 1 : index
    %c0_117 = arith.constant 0 : index
    %c0_118 = arith.constant 0 : index
    %c0_119 = arith.constant 0 : index
    %94 = vector.load %arg4[%c1_116, %c0_117, %c0_118, %c0_119] : memref<3x3x8x16xf32, #tpu.memory_space<vmem>>, vector<1x1x8x16xf32>
    %95 = vector.shape_cast %94 : vector<1x1x8x16xf32> to vector<8x16xf32>
    %cst_120 = arith.constant dense<0.000000e+00> : vector<256x16xf32>
    %96 = tpu.matmul %93, %95, %cst_120 {dimension_numbers = #tpu.dot_dimension_numbers<[1], [0], [0], [1], [0, 0, 1, 1], [], []>} : vector<256x8xf32>, vector<8x16xf32>, vector<256x16xf32> -> vector<256x16xf32>
    %97 = arith.addf %91, %96 : vector<256x16xf32>
    %c1_121 = arith.constant 1 : index
    %c1_122 = arith.constant 1 : index
    %c0_123 = arith.constant 0 : index
    %98 = vector.load %arg7[%c1_121, %c1_122, %c0_123] : memref<18x18x8xf32, #tpu.memory_space<vmem>>, vector<16x16x8xf32>
    %99 = vector.shape_cast %98 : vector<16x16x8xf32> to vector<256x8xf32>
    %c1_124 = arith.constant 1 : index
    %c1_125 = arith.constant 1 : index
    %c0_126 = arith.constant 0 : index
    %c0_127 = arith.constant 0 : index
    %100 = vector.load %arg4[%c1_124, %c1_125, %c0_126, %c0_127] : memref<3x3x8x16xf32, #tpu.memory_space<vmem>>, vector<1x1x8x16xf32>
    %101 = vector.shape_cast %100 : vector<1x1x8x16xf32> to vector<8x16xf32>
    %cst_128 = arith.constant dense<0.000000e+00> : vector<256x16xf32>
    %102 = tpu.matmul %99, %101, %cst_128 {dimension_numbers = #tpu.dot_dimension_numbers<[1], [0], [0], [1], [0, 0, 1, 1], [], []>} : vector<256x8xf32>, vector<8x16xf32>, vector<256x16xf32> -> vector<256x16xf32>
    %103 = arith.addf %97, %102 : vector<256x16xf32>
    %c1_129 = arith.constant 1 : index
    %c2_130 = arith.constant 2 : index
    %c0_131 = arith.constant 0 : index
    %104 = vector.load %arg7[%c1_129, %c2_130, %c0_131] : memref<18x18x8xf32, #tpu.memory_space<vmem>>, vector<16x16x8xf32>
    %105 = vector.shape_cast %104 : vector<16x16x8xf32> to vector<256x8xf32>
    %c1_132 = arith.constant 1 : index
    %c2_133 = arith.constant 2 : index
    %c0_134 = arith.constant 0 : index
    %c0_135 = arith.constant 0 : index
    %106 = vector.load %arg4[%c1_132, %c2_133, %c0_134, %c0_135] : memref<3x3x8x16xf32, #tpu.memory_space<vmem>>, vector<1x1x8x16xf32>
    %107 = vector.shape_cast %106 : vector<1x1x8x16xf32> to vector<8x16xf32>
    %cst_136 = arith.constant dense<0.000000e+00> : vector<256x16xf32>
    %108 = tpu.matmul %105, %107, %cst_136 {dimension_numbers = #tpu.dot_dimension_numbers<[1], [0], [0], [1], [0, 0, 1, 1], [], []>} : vector<256x8xf32>, vector<8x16xf32>, vector<256x16xf32> -> vector<256x16xf32>
    %109 = arith.addf %103, %108 : vector<256x16xf32>
    %c2_137 = arith.constant 2 : index
    %c0_138 = arith.constant 0 : index
    %c0_139 = arith.constant 0 : index
    %110 = vector.load %arg7[%c2_137, %c0_138, %c0_139] : memref<18x18x8xf32, #tpu.memory_space<vmem>>, vector<16x16x8xf32>
    %111 = vector.shape_cast %110 : vector<16x16x8xf32> to vector<256x8xf32>
    %c2_140 = arith.constant 2 : index
    %c0_141 = arith.constant 0 : index
    %c0_142 = arith.constant 0 : index
    %c0_143 = arith.constant 0 : index
    %112 = vector.load %arg4[%c2_140, %c0_141, %c0_142, %c0_143] : memref<3x3x8x16xf32, #tpu.memory_space<vmem>>, vector<1x1x8x16xf32>
    %113 = vector.shape_cast %112 : vector<1x1x8x16xf32> to vector<8x16xf32>
    %cst_144 = arith.constant dense<0.000000e+00> : vector<256x16xf32>
    %114 = tpu.matmul %111, %113, %cst_144 {dimension_numbers = #tpu.dot_dimension_numbers<[1], [0], [0], [1], [0, 0, 1, 1], [], []>} : vector<256x8xf32>, vector<8x16xf32>, vector<256x16xf32> -> vector<256x16xf32>
    %115 = arith.addf %109, %114 : vector<256x16xf32>
    %c2_145 = arith.constant 2 : index
    %c1_146 = arith.constant 1 : index
    %c0_147 = arith.constant 0 : index
    %116 = vector.load %arg7[%c2_145, %c1_146, %c0_147] : memref<18x18x8xf32, #tpu.memory_space<vmem>>, vector<16x16x8xf32>
    %117 = vector.shape_cast %116 : vector<16x16x8xf32> to vector<256x8xf32>
    %c2_148 = arith.constant 2 : index
    %c1_149 = arith.constant 1 : index
    %c0_150 = arith.constant 0 : index
    %c0_151 = arith.constant 0 : index
    %118 = vector.load %arg4[%c2_148, %c1_149, %c0_150, %c0_151] : memref<3x3x8x16xf32, #tpu.memory_space<vmem>>, vector<1x1x8x16xf32>
    %119 = vector.shape_cast %118 : vector<1x1x8x16xf32> to vector<8x16xf32>
    %cst_152 = arith.constant dense<0.000000e+00> : vector<256x16xf32>
    %120 = tpu.matmul %117, %119, %cst_152 {dimension_numbers = #tpu.dot_dimension_numbers<[1], [0], [0], [1], [0, 0, 1, 1], [], []>} : vector<256x8xf32>, vector<8x16xf32>, vector<256x16xf32> -> vector<256x16xf32>
    %121 = arith.addf %115, %120 : vector<256x16xf32>
    %c2_153 = arith.constant 2 : index
    %c2_154 = arith.constant 2 : index
    %c0_155 = arith.constant 0 : index
    %122 = vector.load %arg7[%c2_153, %c2_154, %c0_155] : memref<18x18x8xf32, #tpu.memory_space<vmem>>, vector<16x16x8xf32>
    %123 = vector.shape_cast %122 : vector<16x16x8xf32> to vector<256x8xf32>
    %c2_156 = arith.constant 2 : index
    %c2_157 = arith.constant 2 : index
    %c0_158 = arith.constant 0 : index
    %c0_159 = arith.constant 0 : index
    %124 = vector.load %arg4[%c2_156, %c2_157, %c0_158, %c0_159] : memref<3x3x8x16xf32, #tpu.memory_space<vmem>>, vector<1x1x8x16xf32>
    %125 = vector.shape_cast %124 : vector<1x1x8x16xf32> to vector<8x16xf32>
    %cst_160 = arith.constant dense<0.000000e+00> : vector<256x16xf32>
    %126 = tpu.matmul %123, %125, %cst_160 {dimension_numbers = #tpu.dot_dimension_numbers<[1], [0], [0], [1], [0, 0, 1, 1], [], []>} : vector<256x8xf32>, vector<8x16xf32>, vector<256x16xf32> -> vector<256x16xf32>
    %127 = arith.addf %121, %126 : vector<256x16xf32>
    %c0_161 = arith.constant 0 : index
    %c0_162 = arith.constant 0 : index
    %128 = vector.load %arg5[%c0_161, %c0_162] : memref<1x16xf32, #tpu.memory_space<vmem>>, vector<1x16xf32>
    %129 = vector.broadcast %128 : vector<1x16xf32> to vector<256x16xf32>
    %130 = arith.addf %127, %129 : vector<256x16xf32>
    %cst_163 = arith.constant 0.000000e+00 : f32
    %131 = vector.broadcast %cst_163 : f32 to vector<256x16xf32>
    %132 = arith.maximumf %130, %131 : vector<256x16xf32>
    %c0_164 = arith.constant 0 : index
    %c0_165 = arith.constant 0 : index
    %c0_166 = arith.constant 0 : index
    %133 = vector.load %arg6[%c0_164, %c0_165, %c0_166] : memref<1x256x16xf32, #tpu.memory_space<vmem>>, vector<1x256x16xf32>
    %134 = vector.shape_cast %133 : vector<1x256x16xf32> to vector<256x16xf32>
    %135 = vector.shape_cast %132 : vector<256x16xf32> to vector<1x256x16xf32>
    tpu.vector_store %arg6[%c0_164, %c0_165, %c0_166], %135 {strides = array<i32>} : memref<1x256x16xf32, #tpu.memory_space<vmem>>, vector<1x256x16xf32>,
    return
  }
  func.func @transform_0(%arg0: i32) -> (i32, i32, i32, i32) {
    %c0_i32 = arith.constant 0 : i32
    %c0_i32_0 = arith.constant 0 : i32
    %c0_i32_1 = arith.constant 0 : i32
    %c0_i32_2 = arith.constant 0 : i32
    return %arg0, %c0_i32, %c0_i32_0, %c0_i32_1 : i32, i32, i32, i32
  }
  func.func @transform_1(%arg0: i32) -> (i32, i32, i32, i32) {
    %c0_i32 = arith.constant 0 : i32
    %c0_i32_0 = arith.constant 0 : i32
    %c0_i32_1 = arith.constant 0 : i32
    %c0_i32_2 = arith.constant 0 : i32
    %c0_i32_3 = arith.constant 0 : i32
    return %c0_i32, %c0_i32_0, %c0_i32_1, %c0_i32_2 : i32, i32, i32, i32
  }
  func.func @transform_2(%arg0: i32) -> (i32, i32) {
    %c0_i32 = arith.constant 0 : i32
    %c0_i32_0 = arith.constant 0 : i32
    %c0_i32_1 = arith.constant 0 : i32
    return %c0_i32, %c0_i32_0 : i32, i32
  }
  func.func @transform_3(%arg0: i32) -> (i32, i32, i32, i32) {
    %c0_i32 = arith.constant 0 : i32
    %c0_i32_0 = arith.constant 0 : i32
    %c0_i32_1 = arith.constant 0 : i32
    %c0_i32_2 = arith.constant 0 : i32
    %c0_i32_3 = arith.constant 0 : i32
    return %c0_i32, %c0_i32_0, %c0_i32_1, %c0_i32_2 : i32, i32, i32, i32
  }
  func.func @transform_4(%arg0: i32) -> (i32, i32) {
    %c0_i32 = arith.constant 0 : i32
    %c0_i32_0 = arith.constant 0 : i32
    %c0_i32_1 = arith.constant 0 : i32
    return %c0_i32, %c0_i32_0 : i32, i32
  }
  func.func @transform_5(%arg0: i32) -> (i32, i32, i32) {
    %c0_i32 = arith.constant 0 : i32
    %c0_i32_0 = arith.constant 0 : i32
    %c0_i32_1 = arith.constant 0 : i32
    return %arg0, %c0_i32, %c0_i32_0 : i32, i32, i32
  }
}

</mosaic_0001>

<llo_original>
// kernel: tile.8
$region0: #{tile.8}
  #allocation2 [shape = 's32[1]{0}', space=sflag, size = 0x4, scoped, tag = 'scoped memory for tile.8']
  %s0 = inlined_call_operand.hbm [shape: f32[4], index: 0, kind: input, shape index: {}]
  %s1 = inlined_call_operand.vmem [shape: f32[4,4], index: 1, kind: output, shape index: {}]
  $region1: #{tile.8} parent=0
    #allocation0 [shape = 'u8[512]{0}', space=vmem, size = 0x400, scoped, tag = 'operand span for operand 0']
    #allocation1 [shape = 's32[1]{0}', space=sflag, size = 0x4, scoped, tag = 'scoped memory for tile.8']
    %2 = vsyncpa [#allocation1], 0
    // Predicated region
    $region2: #{tile.8} parent=1 // pred_check
      _
    $region3: #{tile.8} parent=1 // pred_check_branch
      %4 = sbr.rel (0) target = $region5
    $region4: #{tile.8} parent=1 // pred_region
      %s6 = ssub.s32 16, 16
      %7 = vsyncadd [#allocation1], %s6
      %s9 = sshll.u32 [#allocation0], 4
      %s10 = int_to_ptr.vmem [resolvable:$true] %s9
      %12 = dma.hbm_to_vmem [thread:$0]  %s0, 16, %s10, [#allocation1]
    $region5: #{tile.8} parent=1 // pred_fallthru
      _
    // Predicated region
    $region6: #{tile.8} parent=1 // pred_check
      _
    $region7: #{tile.8} parent=1 // pred_check_branch
      %14 = sbr.rel (0) target = $region9
    $region8: #{tile.8} parent=1 // pred_region
      %15 = dma.done [#allocation1], 16
    $region9: #{tile.8} parent=1 // pred_fallthru
      _
    %v16 = vld [vmem:[#allocation0] ss:$0 sm:$0xff]
    %17 = vst [vmem:[%s1] sm:$0xf] %v16
    %18 = vsyncpa [#allocation1], 1

// kernel: tile.9
$region0: #{tile.9}
  %s0 = inlined_call_operand.vmem [shape: f32[4,4], index: 0, kind: input, shape index: {}]
  %s1 = inlined_call_operand.vmem [shape: f32[1,16], index: 1, kind: output, shape index: {}]
  $region1: #{tile.9} parent=0
    #allocation0 [shape = 'u8[4096]{0}', space=vmem, size = 0x1000, scoped, tag = 'scoped mem for output reshape']
    #allocation1 [shape = 'u8[4096]{0}', space=vmem, size = 0x1000, scoped, tag = 'scoped mem for input reshape']
    %s3 = sshllo.u32 0, 4
    %v4 = vld [vmem:[%s0] sm:%s3]
    %5 = vst [vmem:[#allocation1] sm:%s3] %v4
    %v6 = vld [vmem:[#allocation1] sm:$0x1]
    %vm7 = vcmask 31744
    %8 = vst.msk [vmem:[#allocation0] sm:$0x1] %vm7, %v6
    %s9 = scalar_lea.vmem [#allocation1], 3
    %v10 = vld [vmem:[%s9] sm:$0x1]
    %11 = vrot.lane.b32.xlu0 %v10, 12
    %v12 = vpop.permute.xlu0 %11
    %vm13 = vcmask 130144
    %14 = vst.msk [vmem:[#allocation0] sm:$0x1] %vm13, %v12
    %s15 = scalar_lea.vmem [#allocation1], 2
    %v16 = vld [vmem:[%s15] sm:$0x1]
    %17 = vrot.lane.b32.xlu0 %v16, 8
    %v18 = vpop.permute.xlu0 %17
    %vm19 = vcmask 97344
    %20 = vst.msk [vmem:[#allocation0] sm:$0x1] %vm19, %v18
    %s21 = scalar_lea.vmem [#allocation1], 1
    %v22 = vld [vmem:[%s21] sm:$0x1]
    %23 = vrot.lane.b32.xlu0 %v22, 4
    %v24 = vpop.permute.xlu0 %23
    %vm25 = vcmask 64544
    %26 = vst.msk [vmem:[#allocation0] sm:$0x1] %vm25, %v24
    %s28 = sshllo.u32 0, 1
    %v30 = vld [vmem:[#allocation0] sm:%s28]
    %s31 = sshllo.u32 0, 1
    %32 = vst [vmem:[%s1] sm:%s31] %v30

// kernel: decoder_block_resnet_forward.1
$region0: #{decoder_block_resnet_forward.1}
  #allocation0 [shape = 'u32[]', space=smem, size = 0x4, offset = 0x4, fixed_abs, tag = 'smem constant byte address 0x4 - core index']
  #allocation1 [shape = 'u32[144,128]{1,0:T(1,128)}', space=vmem, size = 0x12000, scoped, tag = 'internal scratch']
  #allocation2 [shape = 'f32[18,18,8]{2,1,0:T(8,128)}', space=vmem, size = 0x36000, scoped, tag = 'scratch operand']
  %s0 = inlined_call_operand.vmem [shape: f32[2,18,18,4], index: 0, kind: input, shape index: {}]
  %s1 = inlined_call_operand.vmem [shape: f32[3,3,4,8], index: 1, kind: input, shape index: {}]
  %s2 = inlined_call_operand.vmem [shape: f32[1,8], index: 2, kind: input, shape index: {}]
  %s3 = inlined_call_operand.vmem [shape: f32[3,3,8,16], index: 3, kind: input, shape index: {}]
  %s4 = inlined_call_operand.vmem [shape: f32[1,16], index: 4, kind: input, shape index: {}]
  %s5 = inlined_call_operand.vmem [shape: f32[2,256,16], index: 5, kind: output, shape index: {}]
  %s6 = sld [smem:[#allocation0]]
  $region53: #{decoder_block_resnet_forward.1} parent=0
    _
  %s8 = ssub.s32 1, %s6
  %s9 = scalar_select 0, %s8, %s6
  loop: start=0, step=1, limit=4
  $region2: #{decoder_block_resnet_forward.1} parent=0 // loop_pre_header
    _
  $region3: #{decoder_block_resnet_forward.1} parent=0 // loop_header
    %s11 = sphi 0, %s15
    %p12 = scmp.ge.s32.totalorder %s11, 4
    %s21 = sphi 0, %s23
    %s24 = sphi 0, %s21
    %s25 = sphi 0, %s24
    %s41 = sphi 0, %s25
    %s45 = sphi 0, %s45
    %s47 = sphi 0, %s45
    %s48 = sphi 0, %s47
    %s62 = sphi 0, %s48
    %s66 = sphi 0, %s66
    %s68 = sphi 0, %s66
    %s69 = sphi 0, %s68
    %s83 = sphi 0, %s69
    %s87 = sphi 0, %s87
    %s89 = sphi 0, %s87
    %s90 = sphi 0, %s89
    %s104 = sphi 0, %s90
    %s108 = sphi 0, %s108
    %s110 = sphi 0, %s108
    %s111 = sphi 0, %s110
    %s125 = sphi 0, %s111
    %s131 = sphi 0, %s133
    %s134 = sphi 0, %s131
    %s135 = sphi 0, %s134
    %s151 = sphi 0, %s135
  $region4: #{decoder_block_resnet_forward.1} parent=0 // loop_header_branch
    %14 = sbr.rel (%p12) target = $region8
  $region5: #{decoder_block_resnet_forward.1} parent=0 // loop_body
    %s16 = ssub.s32 %s11, 1
    %s17 = ssub.s32 %s11, 2
    %s18 = sadd.s32 %s11, 1
    %s19 = ssub.s32 %s11, %s18
    %p20 = scmp.eq.s32.totalorder %s19, 0
    %s22 = sadd.s32 %s21, 1
    %s23 = scalar_select %p20, %s21, %s22
    %p26 = pneg %p20
    %p27 = scmp.eq.s32.totalorder %s11, 1
    %p28 = por %p26, %p27
    %p29 = scmp.ne.s32.totalorder %s21, %s24
    %p30 = scmp.eq.s32.totalorder %s11, 0
    %p31 = por %p29, %p30
    %p32 = scmp.ne.s32.totalorder %s21, %s24
    %p33 = scmp.eq.s32.totalorder %s16, 1
    %p34 = por %p32, %p33
    %p35 = scmp.ne.s32.totalorder %s24, %s25
    %p36 = scmp.eq.s32.totalorder %s16, 0
    %p37 = por %p35, %p36
    %p38 = scmp.ne.s32.totalorder %s24, %s25
    %p39 = scmp.eq.s32.totalorder %s17, 1
    %p40 = por %p38, %p39
    %p42 = scmp.ne.s32.totalorder %s25, %s41
    %p43 = scmp.eq.s32.totalorder %s17, 0
    %p44 = por %p42, %p43
    %s46 = sadd.s32 %s45, 1
    %p49 = scmp.eq.s32.totalorder %s11, 1
    %p50 = scmp.ne.s32.totalorder %s45, %s47
    %p51 = scmp.eq.s32.totalorder %s11, 0
    %p52 = por %p50, %p51
    %p53 = scmp.ne.s32.totalorder %s45, %s47
    %p54 = scmp.eq.s32.totalorder %s16, 1
    %p55 = por %p53, %p54
    %p56 = scmp.ne.s32.totalorder %s47, %s48
    %p57 = scmp.eq.s32.totalorder %s16, 0
    %p58 = por %p56, %p57
    %p59 = scmp.ne.s32.totalorder %s47, %s48
    %p60 = scmp.eq.s32.totalorder %s17, 1
    %p61 = por %p59, %p60
    %p63 = scmp.ne.s32.totalorder %s48, %s62
    %p64 = scmp.eq.s32.totalorder %s17, 0
    %p65 = por %p63, %p64
    %s67 = sadd.s32 %s66, 1
    %p70 = scmp.eq.s32.totalorder %s11, 1
    %p71 = scmp.ne.s32.totalorder %s66, %s68
    %p72 = scmp.eq.s32.totalorder %s11, 0
    %p73 = por %p71, %p72
    %p74 = scmp.ne.s32.totalorder %s66, %s68
    %p75 = scmp.eq.s32.totalorder %s16, 1
    %p76 = por %p74, %p75
    %p77 = scmp.ne.s32.totalorder %s68, %s69
    %p78 = scmp.eq.s32.totalorder %s16, 0
    %p79 = por %p77, %p78
    %p80 = scmp.ne.s32.totalorder %s68, %s69
    %p81 = scmp.eq.s32.totalorder %s17, 1
    %p82 = por %p80, %p81
    %p84 = scmp.ne.s32.totalorder %s69, %s83
    %p85 = scmp.eq.s32.totalorder %s17, 0
    %p86 = por %p84, %p85
    %s88 = sadd.s32 %s87, 1
    %p91 = scmp.eq.s32.totalorder %s11, 1
    %p92 = scmp.ne.s32.totalorder %s87, %s89
    %p93 = scmp.eq.s32.totalorder %s11, 0
    %p94 = por %p92, %p93
    %p95 = scmp.ne.s32.totalorder %s87, %s89
    %p96 = scmp.eq.s32.totalorder %s16, 1
    %p97 = por %p95, %p96
    %p98 = scmp.ne.s32.totalorder %s89, %s90
    %p99 = scmp.eq.s32.totalorder %s16, 0
    %p100 = por %p98, %p99
    %p101 = scmp.ne.s32.totalorder %s89, %s90
    %p102 = scmp.eq.s32.totalorder %s17, 1
    %p103 = por %p101, %p102
    %p105 = scmp.ne.s32.totalorder %s90, %s104
    %p106 = scmp.eq.s32.totalorder %s17, 0
    %p107 = por %p105, %p106
    %s109 = sadd.s32 %s108, 1
    %p112 = scmp.eq.s32.totalorder %s11, 1
    %p113 = scmp.ne.s32.totalorder %s108, %s110
    %p114 = scmp.eq.s32.totalorder %s11, 0
    %p115 = por %p113, %p114
    %p116 = scmp.ne.s32.totalorder %s108, %s110
    %p117 = scmp.eq.s32.totalorder %s16, 1
    %p118 = por %p116, %p117
    %p119 = scmp.ne.s32.totalorder %s110, %s111
    %p120 = scmp.eq.s32.totalorder %s16, 0
    %p121 = por %p119, %p120
    %p122 = scmp.ne.s32.totalorder %s110, %s111
    %p123 = scmp.eq.s32.totalorder %s17, 1
    %p124 = por %p122, %p123
    %p126 = scmp.ne.s32.totalorder %s111, %s125
    %p127 = scmp.eq.s32.totalorder %s17, 0
    %p128 = por %p126, %p127
    %s129 = ssub.s32 %s11, %s18
    %p130 = scmp.eq.s32.totalorder %s129, 0
    %s132 = sadd.s32 %s131, 1
    %s133 = scalar_select %p130, %s131, %s132
    %p136 = pneg %p130
    %p137 = scmp.eq.s32.totalorder %s11, 1
    %p138 = por %p136, %p137
    %p139 = scmp.ne.s32.totalorder %s131, %s134
    %p140 = scmp.eq.s32.totalorder %s11, 0
    %p141 = por %p139, %p140
    %p142 = scmp.ne.s32.totalorder %s131, %s134
    %p143 = scmp.eq.s32.totalorder %s16, 1
    %p144 = por %p142, %p143
    %p145 = scmp.ne.s32.totalorder %s134, %s135
    %p146 = scmp.eq.s32.totalorder %s16, 0
    %p147 = por %p145, %p146
    %p148 = scmp.ne.s32.totalorder %s134, %s135
    %p149 = scmp.eq.s32.totalorder %s17, 1
    %p150 = por %p148, %p149
    %p152 = scmp.ne.s32.totalorder %s135, %s151
    %p153 = scmp.eq.s32.totalorder %s17, 0
    %p154 = por %p152, %p153
    %p155 = scmp.le.s32.totalorder 1, %s11
    %p156 = scmp.lt.s32.totalorder %s11, 3
    %p157 = pnand %p155, %p156
    %p158 = pneg %p157
    // Predicated region
    $region9: #{decoder_block_resnet_forward.1} parent=5 // pred_check
      _
    $region10: #{decoder_block_resnet_forward.1} parent=5 // pred_check_branch
      %160 = sbr.rel (%p157) target = $region12
    $region11: #{decoder_block_resnet_forward.1} parent=5 // pred_region
      %s161 = ssub.s32 %s11, 1
      // Predicated region
      $region13: #{decoder_block_resnet_forward.1} parent=11 // pred_check
        %p162 = pneg %p58
      $region14: #{decoder_block_resnet_forward.1} parent=11 // pred_check_branch
        %164 = sbr.rel (%p162) target = $region16
      $region15: #{decoder_block_resnet_forward.1} parent=11 // pred_region
        _
      $region16: #{decoder_block_resnet_forward.1} parent=11 // pred_fallthru
        _
      // Predicated region
      $region17: #{decoder_block_resnet_forward.1} parent=11 // pred_check
        %p165 = pneg %p79
      $region18: #{decoder_block_resnet_forward.1} parent=11 // pred_check_branch
        %167 = sbr.rel (%p165) target = $region20
      $region19: #{decoder_block_resnet_forward.1} parent=11 // pred_region
        _
      $region20: #{decoder_block_resnet_forward.1} parent=11 // pred_fallthru
        _
      // Predicated region
      $region21: #{decoder_block_resnet_forward.1} parent=11 // pred_check
        %p168 = pneg %p100
      $region22: #{decoder_block_resnet_forward.1} parent=11 // pred_check_branch
        %170 = sbr.rel (%p168) target = $region24
      $region23: #{decoder_block_resnet_forward.1} parent=11 // pred_region
        _
      $region24: #{decoder_block_resnet_forward.1} parent=11 // pred_fallthru
        _
      // Predicated region
      $region25: #{decoder_block_resnet_forward.1} parent=11 // pred_check
        %p171 = pneg %p121
      $region26: #{decoder_block_resnet_forward.1} parent=11 // pred_check_branch
        %173 = sbr.rel (%p171) target = $region28
      $region27: #{decoder_block_resnet_forward.1} parent=11 // pred_region
        _
      $region28: #{decoder_block_resnet_forward.1} parent=11 // pred_fallthru
        _
    $region12: #{decoder_block_resnet_forward.1} parent=5 // pred_fallthru
      _
    %p174 = scmp.lt.s32.totalorder %s11, 2
    // Predicated region
    $region29: #{decoder_block_resnet_forward.1} parent=5 // pred_check
      %p175 = pneg %p174
    $region30: #{decoder_block_resnet_forward.1} parent=5 // pred_check_branch
      %177 = sbr.rel (%p175) target = $region32
    $region31: #{decoder_block_resnet_forward.1} parent=5 // pred_region
      // Predicated region
      $region33: #{decoder_block_resnet_forward.1} parent=31 // pred_check
        %p178 = pneg %p31
      $region34: #{decoder_block_resnet_forward.1} parent=31 // pred_check_branch
        %180 = sbr.rel (%p178) target = $region36
      $region35: #{decoder_block_resnet_forward.1} parent=31 // pred_region
        %p181 = scmp.lt.s32.totalorder %s11, 1
        %s182 = scalar_select %p181, %s11, 1
        %s183 = smul.addr %s182, 54
        %s184 = smul.addr %s183, 8
        %s185 = scalar_lea.vmem %s0, %s184
      $region36: #{decoder_block_resnet_forward.1} parent=31 // pred_fallthru
        _
    $region32: #{decoder_block_resnet_forward.1} parent=5 // pred_fallthru
      _
    %p186 = scmp.le.s32.totalorder 1, %s11
    %p187 = scmp.lt.s32.totalorder %s11, 3
    %p188 = pnand %p186, %p187
    %p189 = pneg %p188
    // Predicated region
    $region37: #{decoder_block_resnet_forward.1} parent=5 // pred_check
      _
    $region38: #{decoder_block_resnet_forward.1} parent=5 // pred_check_branch
      %191 = sbr.rel (%p188) target = $region40
    $region39: #{decoder_block_resnet_forward.1} parent=5 // pred_region
      %s192 = ssub.s32 %s11, 1
      %p193 = scmp.lt.s32.totalorder %s16, 1
      %s194 = scalar_select %p193, %s16, 1
      %s195 = smul.addr %s194, 54
      %s196 = smul.addr %s195, 8
      %s197 = scalar_lea.vmem %s0, %s196
      %p198 = pneg %p37
      %p199 = pneg %p34
      %p200 = pneg %p58
      %p201 = pneg %p55
      %p202 = pneg %p79
      %p203 = pneg %p76
      %p204 = pneg %p100
      %p205 = pneg %p97
      %p206 = pneg %p121
      %p207 = pneg %p118
      %p208 = pneg %p147
      %p209 = pneg %p144
      %p210 = scmp.lt.s32.totalorder %s16, 1
      %s211 = scalar_select %p210, %s16, 1
      %s212 = smul.addr %s211, 32
      %s213 = smul.addr %s212, 8
      %s214 = scalar_lea.vmem %s5, %s213
      %p215 = scmp.lt.s32.totalorder %s16, 1
      %s216 = scalar_select %p215, %s16, 1
      %s217 = smul.addr %s216, 54
      %s218 = smul.addr %s217, 8
      %s219 = scalar_lea.vmem %s0, %s218
      %p220 = scmp.lt.s32.totalorder %s16, 1
      %s221 = scalar_select %p220, %s16, 1
      %s222 = smul.addr %s221, 32
      %s223 = smul.addr %s222, 8
      %s224 = scalar_lea.vmem %s5, %s223
      %v225 = vld [vmem:[%s219] sm:$0xff]
      %v226 = vld [vmem:[%s219 + $0x8] sm:$0xff]
      %v227 = vld [vmem:[%s219 + $0x18] sm:$0xff]
      %v228 = vld [vmem:[%s219 + $0x20] sm:$0xff]
      %v229 = vld [vmem:[%s219 + $0x30] sm:$0xff]
      %v230 = vld [vmem:[%s219 + $0x38] sm:$0xff]
      %v231 = vld [vmem:[%s219 + $0x48] sm:$0xff]
      %v232 = vld [vmem:[%s219 + $0x50] sm:$0xff]
      %v233 = vld [vmem:[%s219 + $0x60] sm:$0xff]
      %v234 = vld [vmem:[%s219 + $0x68] sm:$0xff]
      %v235 = vld [vmem:[%s219 + $0x78] sm:$0xff]
      %v236 = vld [vmem:[%s219 + $0x80] sm:$0xff]
      %v237 = vld [vmem:[%s219 + $0x90] sm:$0xff]
      %v238 = vld [vmem:[%s219 + $0x98] sm:$0xff]
      %v239 = vld [vmem:[%s219 + $0xa8] sm:$0xff]
      %v240 = vld [vmem:[%s219 + $0xb0] sm:$0xff]
      %v241 = vld [vmem:[%s219 + $0xc0] sm:$0xff]
      %v242 = vld [vmem:[%s219 + $0xc8] sm:$0xff]
      %v243 = vld [vmem:[%s219 + $0xd8] sm:$0xff]
      %v244 = vld [vmem:[%s219 + $0xe0] sm:$0xff]
      %v245 = vld [vmem:[%s219 + $0xf0] sm:$0xff]
      %v246 = vld [vmem:[%s219 + $0xf8] sm:$0xff]
      %v247 = vld [vmem:[%s219 + $0x108] sm:$0xff]
      %v248 = vld [vmem:[%s219 + $0x110] sm:$0xff]
      %v249 = vld [vmem:[%s219 + $0x120] sm:$0xff]
      %v250 = vld [vmem:[%s219 + $0x128] sm:$0xff]
      %v251 = vld [vmem:[%s219 + $0x138] sm:$0xff]
      %v252 = vld [vmem:[%s219 + $0x140] sm:$0xff]
      %v253 = vld [vmem:[%s219 + $0x150] sm:$0xff]
      %v254 = vld [vmem:[%s219 + $0x158] sm:$0xff]
      %v255 = vld [vmem:[%s219 + $0x168] sm:$0xff]
      %v256 = vld [vmem:[%s219 + $0x170] sm:$0xff]
      %v257 = vld [vmem:[%s1] sm:$0xf]
      %v258 = vld [vmem:[%s219 + $0x1] sm:$0xff]
      %v259 = vld [vmem:[%s219 + $0x9] sm:$0xff]
      %v260 = vld [vmem:[%s219 + $0x19] sm:$0xff]
      %v261 = vld [vmem:[%s219 + $0x21] sm:$0xff]
      %v262 = vld [vmem:[%s219 + $0x31] sm:$0xff]
      %v263 = vld [vmem:[%s219 + $0x39] sm:$0xff]
      %v264 = vld [vmem:[%s219 + $0x49] sm:$0xff]
      %v265 = vld [vmem:[%s219 + $0x51] sm:$0xff]
      %v266 = vld [vmem:[%s219 + $0x61] sm:$0xff]
      %v267 = vld [vmem:[%s219 + $0x69] sm:$0xff]
      %v268 = vld [vmem:[%s219 + $0x79] sm:$0xff]
      %v269 = vld [vmem:[%s219 + $0x81] sm:$0xff]
      %v270 = vld [vmem:[%s219 + $0x91] sm:$0xff]
      %v271 = vld [vmem:[%s219 + $0x99] sm:$0xff]
      %v272 = vld [vmem:[%s219 + $0xa9] sm:$0xff]
      %v273 = vld [vmem:[%s219 + $0xb1] sm:$0xff]
      %v274 = vld [vmem:[%s219 + $0xc1] sm:$0xff]
      %v275 = vld [vmem:[%s219 + $0xc9] sm:$0xff]
      %v276 = vld [vmem:[%s219 + $0xd9] sm:$0xff]
      %v277 = vld [vmem:[%s219 + $0xe1] sm:$0xff]
      %v278 = vld [vmem:[%s219 + $0xf1] sm:$0xff]
      %v279 = vld [vmem:[%s219 + $0xf9] sm:$0xff]
      %v280 = vld [vmem:[%s219 + $0x109] sm:$0xff]
      %v281 = vld [vmem:[%s219 + $0x111] sm:$0xff]
      %v282 = vld [vmem:[%s219 + $0x121] sm:$0xff]
      %v283 = vld [vmem:[%s219 + $0x129] sm:$0xff]
      %v284 = vld [vmem:[%s219 + $0x139] sm:$0xff]
      %v285 = vld [vmem:[%s219 + $0x141] sm:$0xff]
      %v286 = vld [vmem:[%s219 + $0x151] sm:$0xff]
      %v287 = vld [vmem:[%s219 + $0x159] sm:$0xff]
      %v288 = vld [vmem:[%s219 + $0x169] sm:$0xff]
      %v289 = vld [vmem:[%s219 + $0x171] sm:$0xff]
      %s290 = scalar_lea.vmem %s1, 4
      %v291 = vld [vmem:[%s290] sm:$0xf]
      %vm292 = vcmask 31744
      %v294 = vsel %vm292, %v258, 0
      %v297 = vsel %vm292, %v259, 0
      %v300 = vsel %vm292, %v260, 0
      %v303 = vsel %vm292, %v261, 0
      %v306 = vsel %vm292, %v262, 0
      %v309 = vsel %vm292, %v263, 0
      %v312 = vsel %vm292, %v264, 0
      %v315 = vsel %vm292, %v265, 0
      %v318 = vsel %vm292, %v266, 0
      %v321 = vsel %vm292, %v267, 0
      %v324 = vsel %vm292, %v268, 0
      %v327 = vsel %vm292, %v269, 0
      %v330 = vsel %vm292, %v270, 0
      %v333 = vsel %vm292, %v271, 0
      %v336 = vsel %vm292, %v272, 0
      %v339 = vsel %vm292, %v273, 0
      %v342 = vsel %vm292, %v274, 0
      %v345 = vsel %vm292, %v275, 0
      %v348 = vsel %vm292, %v276, 0
      %v351 = vsel %vm292, %v277, 0
      %v354 = vsel %vm292, %v278, 0
      %v357 = vsel %vm292, %v279, 0
      %v360 = vsel %vm292, %v280, 0
      %v363 = vsel %vm292, %v281, 0
      %v366 = vsel %vm292, %v282, 0
      %v369 = vsel %vm292, %v283, 0
      %v372 = vsel %vm292, %v284, 0
      %v375 = vsel %vm292, %v285, 0
      %v378 = vsel %vm292, %v286, 0
      %v381 = vsel %vm292, %v287, 0
      %v384 = vsel %vm292, %v288, 0
      %v387 = vsel %vm292, %v289, 0
      %vm389 = vcmask 1043456
      %v391 = vsel %vm389, %v291, 0
      %393 = vmatprep.subr.mxu0 0.0
      %394 = vmatpush1.msra.mxu0 %v391
      %395 = vmatprep.subr.mxu0 0.0
      %396 = vmatpush1.msra.mxu0 0.0
      %397 = vmatprep.subr.mxu0 0.0
      %398 = vmatpush1.msra.mxu0 0.0
      %399 = vmatprep.subr.mxu0 0.0
      %400 = vmatpush1.msra.mxu0 0.0
      %401 = vmatprep.subr.mxu0 0.0
      %402 = vmatpush1.msra.mxu0 0.0
      %403 = vmatprep.subr.mxu0 0.0
      %404 = vmatpush1.msra.mxu0 0.0
      %405 = vmatprep.subr.mxu0 0.0
      %406 = vmatpush1.msra.mxu0 0.0
      %407 = vmatprep.subr.mxu0 0.0
      %408 = vmatpush1.msra.mxu0 0.0
      %409 = vmatprep.subr.mxu0 0.0
      %410 = vmatpush1.msra.mxu0 0.0
      %411 = vmatprep.subr.mxu0 0.0
      %412 = vmatpush1.msra.mxu0 0.0
      %413 = vmatprep.subr.mxu0 0.0
      %414 = vmatpush1.msra.mxu0 0.0
      %415 = vmatprep.subr.mxu0 0.0
      %416 = vmatpush1.msra.mxu0 0.0
      %417 = vmatprep.subr.mxu0 0.0
      %418 = vmatpush1.msra.mxu0 0.0
      %419 = vmatprep.subr.mxu0 0.0
      %420 = vmatpush1.msra.mxu0 0.0
      %421 = vmatprep.subr.mxu0 0.0
      %422 = vmatpush1.msra.mxu0 0.0
      %423 = vmatprep.subr.mxu0 0.0
      %424 = vmatpush1.msra.mxu0 0.0
      %425 = vmatprep.subr.mxu0 0.0
      %426 = vmatpush1.msra.mxu0 0.0
      %427 = vmatprep.subr.mxu0 0.0
      %428 = vmatpush1.msra.mxu0 0.0
      %429 = vmatprep.subr.mxu0 0.0
      %430 = vmatpush1.msra.mxu0 0.0
      %431 = vmatprep.subr.mxu0 0.0
      %432 = vmatpush1.msra.mxu0 0.0
      %433 = vmatprep.subr.mxu0 0.0
      %434 = vmatpush1.msra.mxu0 0.0
      %435 = vmatprep.subr.mxu0 0.0
      %436 = vmatpush1.msra.mxu0 0.0
      %437 = vmatprep.subr.mxu0 0.0
      %438 = vmatpush1.msra.mxu0 0.0
      %439 = vmatprep.subr.mxu0 0.0
      %440 = vmatpush1.msra.mxu0 0.0
      %441 = vmatprep.subr.mxu0 0.0
      %442 = vmatpush1.msra.mxu0 0.0
      %443 = vmatprep.subr.mxu0 0.0
      %444 = vmatpush1.msra.mxu0 0.0
      %445 = vmatprep.subr.mxu0 0.0
      %446 = vmatpush1.msra.mxu0 0.0
      %447 = vmatprep.subr.mxu0 0.0
      %448 = vmatpush1.msra.mxu0 0.0
      %449 = vmatprep.subr.mxu0 0.0
      %450 = vmatpush1.msra.mxu0 0.0
      %451 = vmatprep.subr.mxu0 0.0
      %452 = vmatpush1.msra.mxu0 0.0
      %453 = vmatprep.subr.mxu0 0.0
      %454 = vmatpush1.msra.mxu0 0.0
      %455 = vmatprep.subr.mxu0 0.0
      %456 = vmatpush1.msra.mxu0 0.0
      %457 = vmatprep.mubr.f32.mxu0 0.0
      %458 = vmatmul.mubr.f32.gmra.mrb[0].mxu0 %v294
      %v459 = vpop.f32.mrb[0].mxu0
      %v460 = vadd.f32 0.0, %v459
      %v461 = vpop.f32.mrb[0].mxu0
      %462 = vmatprep.mubr.f32.mxu0 0.0
      %463 = vmatmul.mubr.f32.gmra.mrb[0].mxu0 %v297
      %v464 = vpop.f32.mrb[0].mxu0
      %v465 = vadd.f32 0.0, %v464
      %v466 = vpop.f32.mrb[0].mxu0
      %467 = vmatprep.mubr.f32.mxu0 0.0
      %468 = vmatmul.mubr.f32.gmra.mrb[0].mxu0 %v300
      %v469 = vpop.f32.mrb[0].mxu0
      %v470 = vadd.f32 0.0, %v469
      %v471 = vpop.f32.mrb[0].mxu0
      %472 = vmatprep.mubr.f32.mxu0 0.0
      %473 = vmatmul.mubr.f32.gmra.mrb[0].mxu0 %v303
      %v474 = vpop.f32.mrb[0].mxu0
      %v475 = vadd.f32 0.0, %v474
      %v476 = vpop.f32.mrb[0].mxu0
      %477 = vmatprep.mubr.f32.mxu0 0.0
      %478 = vmatmul.mubr.f32.gmra.mrb[0].mxu0 %v306
      %v479 = vpop.f32.mrb[0].mxu0
      %v480 = vadd.f32 0.0, %v479
      %v481 = vpop.f32.mrb[0].mxu0
      %482 = vmatprep.mubr.f32.mxu0 0.0
      %483 = vmatmul.mubr.f32.gmra.mrb[0].mxu0 %v309
      %v484 = vpop.f32.mrb[0].mxu0
      %v485 = vadd.f32 0.0, %v484
      %v486 = vpop.f32.mrb[0].mxu0
      %487 = vmatprep.mubr.f32.mxu0 0.0
      %488 = vmatmul.mubr.f32.gmra.mrb[0].mxu0 %v312
      %v489 = vpop.f32.mrb[0].mxu0
      %v490 = vadd.f32 0.0, %v489
      %v491 = vpop.f32.mrb[0].mxu0
      %492 = vmatprep.mubr.f32.mxu0 0.0
      %493 = vmatmul.mubr.f32.gmra.mrb[0].mxu0 %v315
      %v494 = vpop.f32.mrb[0].mxu0
      %v495 = vadd.f32 0.0, %v494
      %v496 = vpop.f32.mrb[0].mxu0
      %497 = vmatprep.mubr.f32.mxu0 0.0
      %498 = vmatmul.mubr.f32.gmra.mrb[0].mxu0 %v318
      %v499 = vpop.f32.mrb[0].mxu0
      %v500 = vadd.f32 0.0, %v499
      %v501 = vpop.f32.mrb[0].mxu0
      %502 = vmatprep.mubr.f32.mxu0 0.0
      %503 = vmatmul.mubr.f32.gmra.mrb[0].mxu0 %v321
      %v504 = vpop.f32.mrb[0].mxu0
      %v505 = vadd.f32 0.0, %v504
      %v506 = vpop.f32.mrb[0].mxu0
      %507 = vmatprep.mubr.f32.mxu0 0.0
      %508 = vmatmul.mubr.f32.gmra.mrb[0].mxu0 %v324
      %v509 = vpop.f32.mrb[0].mxu0
      %v510 = vadd.f32 0.0, %v509
      %v511 = vpop.f32.mrb[0].mxu0
      %512 = vmatprep.mubr.f32.mxu0 0.0
      %513 = vmatmul.mubr.f32.gmra.mrb[0].mxu0 %v327
      %v514 = vpop.f32.mrb[0].mxu0
      %v515 = vadd.f32 0.0, %v514
      %v516 = vpop.f32.mrb[0].mxu0
      %517 = vmatprep.mubr.f32.mxu0 0.0
      %518 = vmatmul.mubr.f32.gmra.mrb[0].mxu0 %v330
      %v519 = vpop.f32.mrb[0].mxu0
      %v520 = vadd.f32 0.0, %v519
      %v521 = vpop.f32.mrb[0].mxu0
      %522 = vmatprep.mubr.f32.mxu0 0.0
      %523 = vmatmul.mubr.f32.gmra.mrb[0].mxu0 %v333
      %v524 = vpop.f32.mrb[0].mxu0
      %v525 = vadd.f32 0.0, %v524
      %v526 = vpop.f32.mrb[0].mxu0
      %527 = vmatprep.mubr.f32.mxu0 0.0
      %528 = vmatmul.mubr.f32.gmra.mrb[0].mxu0 %v336
      %v529 = vpop.f32.mrb[0].mxu0
      %v530 = vadd.f32 0.0, %v529
      %v531 = vpop.f32.mrb[0].mxu0
      %532 = vmatprep.mubr.f32.mxu0 0.0
      %533 = vmatmul.mubr.f32.gmra.mrb[0].mxu0 %v339
      %v534 = vpop.f32.mrb[0].mxu0
      %v535 = vadd.f32 0.0, %v534
      %v536 = vpop.f32.mrb[0].mxu0
      %537 = vmatprep.mubr.f32.mxu0 0.0
      %538 = vmatmul.mubr.f32.gmra.mrb[0].mxu0 %v342
      %v539 = vpop.f32.mrb[0].mxu0
      %v540 = vadd.f32 0.0, %v539
      %v541 = vpop.f32.mrb[0].mxu0
      %542 = vmatprep.mubr.f32.mxu0 0.0
      %543 = vmatmul.mubr.f32.gmra.mrb[0].mxu0 %v345
      %v544 = vpop.f32.mrb[0].mxu0
      %v545 = vadd.f32 0.0, %v544
      %v546 = vpop.f32.mrb[0].mxu0
      %547 = vmatprep.mubr.f32.mxu0 0.0
      %548 = vmatmul.mubr.f32.gmra.mrb[0].mxu0 %v348
      %v549 = vpop.f32.mrb[0].mxu0
      %v550 = vadd.f32 0.0, %v549
      %v551 = vpop.f32.mrb[0].mxu0
      %552 = vmatprep.mubr.f32.mxu0 0.0
      %553 = vmatmul.mubr.f32.gmra.mrb[0].mxu0 %v351
      %v554 = vpop.f32.mrb[0].mxu0
      %v555 = vadd.f32 0.0, %v554
      %v556 = vpop.f32.mrb[0].mxu0
      %557 = vmatprep.mubr.f32.mxu0 0.0
      %558 = vmatmul.mubr.f32.gmra.mrb[0].mxu0 %v354
      %v559 = vpop.f32.mrb[0].mxu0
      %v560 = vadd.f32 0.0, %v559
      %v561 = vpop.f32.mrb[0].mxu0
      %562 = vmatprep.mubr.f32.mxu0 0.0
      %563 = vmatmul.mubr.f32.gmra.mrb[0].mxu0 %v357
      %v564 = vpop.f32.mrb[0].mxu0
      %v565 = vadd.f32 0.0, %v564
      %v566 = vpop.f32.mrb[0].mxu0
      %567 = vmatprep.mubr.f32.mxu0 0.0
      %568 = vmatmul.mubr.f32.gmra.mrb[0].mxu0 %v360
      %v569 = vpop.f32.mrb[0].mxu0
      %v570 = vadd.f32 0.0, %v569
      %v571 = vpop.f32.mrb[0].mxu0
      %572 = vmatprep.mubr.f32.mxu0 0.0
      %573 = vmatmul.mubr.f32.gmra.mrb[0].mxu0 %v363
      %v574 = vpop.f32.mrb[0].mxu0
      %v575 = vadd.f32 0.0, %v574
      %v576 = vpop.f32.mrb[0].mxu0
      %577 = vmatprep.mubr.f32.mxu0 0.0
      %578 = vmatmul.mubr.f32.gmra.mrb[0].mxu0 %v366
      %v579 = vpop.f32.mrb[0].mxu0
      %v580 = vadd.f32 0.0, %v579
      %v581 = vpop.f32.mrb[0].mxu0
      %582 = vmatprep.mubr.f32.mxu0 0.0
      %583 = vmatmul.mubr.f32.gmra.mrb[0].mxu0 %v369
      %v584 = vpop.f32.mrb[0].mxu0
      %v585 = vadd.f32 0.0, %v584
      %v586 = vpop.f32.mrb[0].mxu0
      %587 = vmatprep.mubr.f32.mxu0 0.0
      %588 = vmatmul.mubr.f32.gmra.mrb[0].mxu0 %v372
      %v589 = vpop.f32.mrb[0].mxu0
      %v590 = vadd.f32 0.0, %v589
      %v591 = vpop.f32.mrb[0].mxu0
      %592 = vmatprep.mubr.f32.mxu0 0.0
      %593 = vmatmul.mubr.f32.gmra.mrb[0].mxu0 %v375
      %v594 = vpop.f32.mrb[0].mxu0
      %v595 = vadd.f32 0.0, %v594
      %v596 = vpop.f32.mrb[0].mxu0
      %597 = vmatprep.mubr.f32.mxu0 0.0
      %598 = vmatmul.mubr.f32.gmra.mrb[0].mxu0 %v378
      %v599 = vpop.f32.mrb[0].mxu0
      %v600 = vadd.f32 0.0, %v599
      %v601 = vpop.f32.mrb[0].mxu0
      %602 = vmatprep.mubr.f32.mxu0 0.0
      %603 = vmatmul.mubr.f32.gmra.mrb[0].mxu0 %v381
      %v604 = vpop.f32.mrb[0].mxu0
      %v605 = vadd.f32 0.0, %v604
      %v606 = vpop.f32.mrb[0].mxu0
      %607 = vmatprep.mubr.f32.mxu0 0.0
      %608 = vmatmul.mubr.f32.gmra.mrb[0].mxu0 %v384
      %v609 = vpop.f32.mrb[0].mxu0
      %v610 = vadd.f32 0.0, %v609
      %v611 = vpop.f32.mrb[0].mxu0
      %612 = vmatprep.mubr.f32.mxu0 0.0
      %613 = vmatmul.mubr.f32.gmra.mrb[0].mxu0 %v387
      %v614 = vpop.f32.mrb[0].mxu0
      %v615 = vadd.f32 0.0, %v614
      %v616 = vpop.f32.mrb[0].mxu0
      %617 = vdwg.mxu0
      %v619 = vsel %vm292, %v225, 0
      %v622 = vsel %vm292, %v226, 0
      %v625 = vsel %vm292, %v227, 0
      %v628 = vsel %vm292, %v228, 0
      %v631 = vsel %vm292, %v229, 0
      %v634 = vsel %vm292, %v230, 0
      %v637 = vsel %vm292, %v231, 0
      %v640 = vsel %vm292, %v232, 0
      %v643 = vsel %vm292, %v233, 0
      %v646 = vsel %vm292, %v234, 0
      %v649 = vsel %vm292, %v235, 0
      %v652 = vsel %vm292, %v236, 0
      %v655 = vsel %vm292, %v237, 0
      %v658 = vsel %vm292, %v238, 0
      %v661 = vsel %vm292, %v239, 0
      %v664 = vsel %vm292, %v240, 0
      %v667 = vsel %vm292, %v241, 0
      %v670 = vsel %vm292, %v242, 0
      %v673 = vsel %vm292, %v243, 0
      %v676 = vsel %vm292, %v244, 0
      %v679 = vsel %vm292, %v245, 0
      %v682 = vsel %vm292, %v246, 0
      %v685 = vsel %vm292, %v247, 0
      %v688 = vsel %vm292, %v248, 0
      %v691 = vsel %vm292, %v249, 0
      %v694 = vsel %vm292, %v250, 0
      %v697 = vsel %vm292, %v251, 0
      %v700 = vsel %vm292, %v252, 0
      %v703 = vsel %vm292, %v253, 0
      %v706 = vsel %vm292, %v254, 0
      %v709 = vsel %vm292, %v255, 0
      %v712 = vsel %vm292, %v256, 0
      %v715 = vsel %vm389, %v257, 0
      %717 = vmatprep.subr.mxu0 0.0
      %718 = vmatpush1.msra.mxu0 %v715
      %719 = vmatprep.subr.mxu0 0.0
      %720 = vmatpush1.msra.mxu0 0.0
      %721 = vmatprep.subr.mxu0 0.0
      %722 = vmatpush1.msra.mxu0 0.0
      %723 = vmatprep.subr.mxu0 0.0
      %724 = vmatpush1.msra.mxu0 0.0
      %725 = vmatprep.subr.mxu0 0.0
      %726 = vmatpush1.msra.mxu0 0.0
      %727 = vmatprep.subr.mxu0 0.0
      %728 = vmatpush1.msra.mxu0 0.0
      %729 = vmatprep.subr.mxu0 0.0
      %730 = vmatpush1.msra.mxu0 0.0
      %731 = vmatprep.subr.mxu0 0.0
      %732 = vmatpush1.msra.mxu0 0.0
      %733 = vmatprep.subr.mxu0 0.0
      %734 = vmatpush1.msra.mxu0 0.0
      %735 = vmatprep.subr.mxu0 0.0
      %736 = vmatpush1.msra.mxu0 0.0
      %737 = vmatprep.subr.mxu0 0.0
      %738 = vmatpush1.msra.mxu0 0.0
      %739 = vmatprep.subr.mxu0 0.0
      %740 = vmatpush1.msra.mxu0 0.0
      %741 = vmatprep.subr.mxu0 0.0
      %742 = vmatpush1.msra.mxu0 0.0
      %743 = vmatprep.subr.mxu0 0.0
      %744 = vmatpush1.msra.mxu0 0.0
      %745 = vmatprep.subr.mxu0 0.0
      %746 = vmatpush1.msra.mxu0 0.0
      %747 = vmatprep.subr.mxu0 0.0
      %748 = vmatpush1.msra.mxu0 0.0
      %749 = vmatprep.subr.mxu0 0.0
      %750 = vmatpush1.msra.mxu0 0.0
      %751 = vmatprep.subr.mxu0 0.0
      %752 = vmatpush1.msra.mxu0 0.0
      %753 = vmatprep.subr.mxu0 0.0
      %754 = vmatpush1.msra.mxu0 0.0
      %755 = vmatprep.subr.mxu0 0.0
      %756 = vmatpush1.msra.mxu0 0.0
      %757 = vmatprep.subr.mxu0 0.0
      %758 = vmatpush1.msra.mxu0 0.0
      %759 = vmatprep.subr.mxu0 0.0
      %760 = vmatpush1.msra.mxu0 0.0
      %761 = vmatprep.subr.mxu0 0.0
      %762 = vmatpush1.msra.mxu0 0.0
      %763 = vmatprep.subr.mxu0 0.0
      %764 = vmatpush1.msra.mxu0 0.0
      %765 = vmatprep.subr.mxu0 0.0
      %766 = vmatpush1.msra.mxu0 0.0
      %767 = vmatprep.subr.mxu0 0.0
      %768 = vmatpush1.msra.mxu0 0.0
      %769 = vmatprep.subr.mxu0 0.0
      %770 = vmatpush1.msra.mxu0 0.0
      %771 = vmatprep.subr.mxu0 0.0
      %772 = vmatpush1.msra.mxu0 0.0
      %773 = vmatprep.subr.mxu0 0.0
      %774 = vmatpush1.msra.mxu0 0.0
      %775 = vmatprep.subr.mxu0 0.0
      %776 = vmatpush1.msra.mxu0 0.0
      %777 = vmatprep.subr.mxu0 0.0
      %778 = vmatpush1.msra.mxu0 0.0
      %779 = vmatprep.subr.mxu0 0.0
      %780 = vmatpush1.msra.mxu0 0.0
      %781 = vmatprep.mubr.f32.mxu0 0.0
      %782 = vmatmul.mubr.f32.gmra.mrb[0].mxu0 %v619
      %v783 = vpop.f32.mrb[0].mxu0
      %v784 = vadd.f32 %v460, %v783
      %v785 = vpop.f32.mrb[0].mxu0
      %786 = vmatprep.mubr.f32.mxu0 0.0
      %787 = vmatmul.mubr.f32.gmra.mrb[0].mxu0 %v622
      %v788 = vpop.f32.mrb[0].mxu0
      %v789 = vadd.f32 %v465, %v788
      %v790 = vpop.f32.mrb[0].mxu0
      %791 = vmatprep.mubr.f32.mxu0 0.0
      %792 = vmatmul.mubr.f32.gmra.mrb[0].mxu0 %v625
      %v793 = vpop.f32.mrb[0].mxu0
      %v794 = vadd.f32 %v470, %v793
      %v795 = vpop.f32.mrb[0].mxu0
      %796 = vmatprep.mubr.f32.mxu0 0.0
      %797 = vmatmul.mubr.f32.gmra.mrb[0].mxu0 %v628
      %v798 = vpop.f32.mrb[0].mxu0
      %v799 = vadd.f32 %v475, %v798
      %v800 = vpop.f32.mrb[0].mxu0
      %801 = vmatprep.mubr.f32.mxu0 0.0
      %802 = vmatmul.mubr.f32.gmra.mrb[0].mxu0 %v631
      %v803 = vpop.f32.mrb[0].mxu0
      %v804 = vadd.f32 %v480, %v803
      %v805 = vpop.f32.mrb[0].mxu0
      %806 = vmatprep.mubr.f32.mxu0 0.0
      %807 = vmatmul.mubr.f32.gmra.mrb[0].mxu0 %v634
      %v808 = vpop.f32.mrb[0].mxu0
      %v809 = vadd.f32 %v485, %v808
      %v810 = vpop.f32.mrb[0].mxu0
      %811 = vmatprep.mubr.f32.mxu0 0.0
      %812 = vmatmul.mubr.f32.gmra.mrb[0].mxu0 %v637
      %v813 = vpop.f32.mrb[0].mxu0
      %v814 = vadd.f32 %v490, %v813
      %v815 = vpop.f32.mrb[0].mxu0
      %816 = vmatprep.mubr.f32.mxu0 0.0
      %817 = vmatmul.mubr.f32.gmra.mrb[0].mxu0 %v640
      %v818 = vpop.f32.mrb[0].mxu0
      %v819 = vadd.f32 %v495, %v818
      %v820 = vpop.f32.mrb[0].mxu0
      %821 = vmatprep.mubr.f32.mxu0 0.0
      %822 = vmatmul.mubr.f32.gmra.mrb[0].mxu0 %v643
      %v823 = vpop.f32.mrb[0].mxu0
      %v824 = vadd.f32 %v500, %v823
      %v825 = vpop.f32.mrb[0].mxu0
      %826 = vmatprep.mubr.f32.mxu0 0.0
      %827 = vmatmul.mubr.f32.gmra.mrb[0].mxu0 %v646
      %v828 = vpop.f32.mrb[0].mxu0
      %v829 = vadd.f32 %v505, %v828
      %v830 = vpop.f32.mrb[0].mxu0
      %831 = vmatprep.mubr.f32.mxu0 0.0
      %832 = vmatmul.mubr.f32.gmra.mrb[0].mxu0 %v649
      %v833 = vpop.f32.mrb[0].mxu0
      %v834 = vadd.f32 %v510, %v833
      %v835 = vpop.f32.mrb[0].mxu0
      %836 = vmatprep.mubr.f32.mxu0 0.0
      %837 = vmatmul.mubr.f32.gmra.mrb[0].mxu0 %v652
      %v838 = vpop.f32.mrb[0].mxu0
      %v839 = vadd.f32 %v515, %v838
      %v840 = vpop.f32.mrb[0].mxu0
      %841 = vmatprep.mubr.f32.mxu0 0.0
      %842 = vmatmul.mubr.f32.gmra.mrb[0].mxu0 %v655
      %v843 = vpop.f32.mrb[0].mxu0
      %v844 = vadd.f32 %v520, %v843
      %v845 = vpop.f32.mrb[0].mxu0
      %846 = vmatprep.mubr.f32.mxu0 0.0
      %847 = vmatmul.mubr.f32.gmra.mrb[0].mxu0 %v658
      %v848 = vpop.f32.mrb[0].mxu0
      %v849 = vadd.f32 %v525, %v848
      %v850 = vpop.f32.mrb[0].mxu0
      %851 = vmatprep.mubr.f32.mxu0 0.0
      %852 = vmatmul.mubr.f32.gmra.mrb[0].mxu0 %v661
      %v853 = vpop.f32.mrb[0].mxu0
      %v854 = vadd.f32 %v530, %v853
      %v855 = vpop.f32.mrb[0].mxu0
      %856 = vmatprep.mubr.f32.mxu0 0.0
      %857 = vmatmul.mubr.f32.gmra.mrb[0].mxu0 %v664
      %v858 = vpop.f32.mrb[0].mxu0
      %v859 = vadd.f32 %v535, %v858
      %v860 = vpop.f32.mrb[0].mxu0
      %861 = vmatprep.mubr.f32.mxu0 0.0
      %862 = vmatmul.mubr.f32.gmra.mrb[0].mxu0 %v667
      %v863 = vpop.f32.mrb[0].mxu0
      %v864 = vadd.f32 %v540, %v863
      %v865 = vpop.f32.mrb[0].mxu0
      %866 = vmatprep.mubr.f32.mxu0 0.0
      %867 = vmatmul.mubr.f32.gmra.mrb[0].mxu0 %v670
      %v868 = vpop.f32.mrb[0].mxu0
      %v869 = vadd.f32 %v545, %v868
      %v870 = vpop.f32.mrb[0].mxu0
      %871 = vmatprep.mubr.f32.mxu0 0.0
      %872 = vmatmul.mubr.f32.gmra.mrb[0].mxu0 %v673
      %v873 = vpop.f32.mrb[0].mxu0
      %v874 = vadd.f32 %v550, %v873
      %v875 = vpop.f32.mrb[0].mxu0
      %876 = vmatprep.mubr.f32.mxu0 0.0
      %877 = vmatmul.mubr.f32.gmra.mrb[0].mxu0 %v676
      %v878 = vpop.f32.mrb[0].mxu0
      %v879 = vadd.f32 %v555, %v878
      %v880 = vpop.f32.mrb[0].mxu0
      %881 = vmatprep.mubr.f32.mxu0 0.0
      %882 = vmatmul.mubr.f32.gmra.mrb[0].mxu0 %v679
      %v883 = vpop.f32.mrb[0].mxu0
      %v884 = vadd.f32 %v560, %v883
      %v885 = vpop.f32.mrb[0].mxu0
      %886 = vmatprep.mubr.f32.mxu0 0.0
      %887 = vmatmul.mubr.f32.gmra.mrb[0].mxu0 %v682
      %v888 = vpop.f32.mrb[0].mxu0
      %v889 = vadd.f32 %v565, %v888
      %v890 = vpop.f32.mrb[0].mxu0
      %891 = vmatprep.mubr.f32.mxu0 0.0
      %892 = vmatmul.mubr.f32.gmra.mrb[0].mxu0 %v685
      %v893 = vpop.f32.mrb[0].mxu0
      %v894 = vadd.f32 %v570, %v893
      %v895 = vpop.f32.mrb[0].mxu0
      %896 = vmatprep.mubr.f32.mxu0 0.0
      %897 = vmatmul.mubr.f32.gmra.mrb[0].mxu0 %v688
      %v898 = vpop.f32.mrb[0].mxu0
      %v899 = vadd.f32 %v575, %v898
      %v900 = vpop.f32.mrb[0].mxu0
      %901 = vmatprep.mubr.f32.mxu0 0.0
      %902 = vmatmul.mubr.f32.gmra.mrb[0].mxu0 %v691
      %v903 = vpop.f32.mrb[0].mxu0
      %v904 = vadd.f32 %v580, %v903
      %v905 = vpop.f32.mrb[0].mxu0
      %906 = vmatprep.mubr.f32.mxu0 0.0
      %907 = vmatmul.mubr.f32.gmra.mrb[0].mxu0 %v694
      %v908 = vpop.f32.mrb[0].mxu0
      %v909 = vadd.f32 %v585, %v908
      %v910 = vpop.f32.mrb[0].mxu0
      %911 = vmatprep.mubr.f32.mxu0 0.0
      %912 = vmatmul.mubr.f32.gmra.mrb[0].mxu0 %v697
      %v913 = vpop.f32.mrb[0].mxu0
      %v914 = vadd.f32 %v590, %v913
      %v915 = vpop.f32.mrb[0].mxu0
      %916 = vmatprep.mubr.f32.mxu0 0.0
      %917 = vmatmul.mubr.f32.gmra.mrb[0].mxu0 %v700
      %v918 = vpop.f32.mrb[0].mxu0
      %v919 = vadd.f32 %v595, %v918
      %v920 = vpop.f32.mrb[0].mxu0
      %921 = vmatprep.mubr.f32.mxu0 0.0
      %922 = vmatmul.mubr.f32.gmra.mrb[0].mxu0 %v703
      %v923 = vpop.f32.mrb[0].mxu0
      %v924 = vadd.f32 %v600, %v923
      %v925 = vpop.f32.mrb[0].mxu0
      %926 = vmatprep.mubr.f32.mxu0 0.0
      %927 = vmatmul.mubr.f32.gmra.mrb[0].mxu0 %v706
      %v928 = vpop.f32.mrb[0].mxu0
      %v929 = vadd.f32 %v605, %v928
      %v930 = vpop.f32.mrb[0].mxu0
      %931 = vmatprep.mubr.f32.mxu0 0.0
      %932 = vmatmul.mubr.f32.gmra.mrb[0].mxu0 %v709
      %v933 = vpop.f32.mrb[0].mxu0
      %v934 = vadd.f32 %v610, %v933
      %v935 = vpop.f32.mrb[0].mxu0
      %936 = vmatprep.mubr.f32.mxu0 0.0
      %937 = vmatmul.mubr.f32.gmra.mrb[0].mxu0 %v712
      %v938 = vpop.f32.mrb[0].mxu0
      %v939 = vadd.f32 %v615, %v938
      %v940 = vpop.f32.mrb[0].mxu0
      %941 = vdwg.mxu0
      %v942 = vld [vmem:[%s219 + $0x2] sm:$0xff]
      %v943 = vld [vmem:[%s219 + $0xa] sm:$0xff]
      %v944 = vld [vmem:[%s219 + $0x1a] sm:$0xff]
      %v945 = vld [vmem:[%s219 + $0x22] sm:$0xff]
      %v946 = vld [vmem:[%s219 + $0x32] sm:$0xff]
      %v947 = vld [vmem:[%s219 + $0x3a] sm:$0xff]
      %v948 = vld [vmem:[%s219 + $0x4a] sm:$0xff]
      %v949 = vld [vmem:[%s219 + $0x52] sm:$0xff]
      %v950 = vld [vmem:[%s219 + $0x62] sm:$0xff]
      %v951 = vld [vmem:[%s219 + $0x6a] sm:$0xff]
      %v952 = vld [vmem:[%s219 + $0x7a] sm:$0xff]
      %v953 = vld [vmem:[%s219 + $0x82] sm:$0xff]
      %v954 = vld [vmem:[%s219 + $0x92] sm:$0xff]
      %v955 = vld [vmem:[%s219 + $0x9a] sm:$0xff]
      %v956 = vld [vmem:[%s219 + $0xaa] sm:$0xff]
      %v957 = vld [vmem:[%s219 + $0xb2] sm:$0xff]
      %v958 = vld [vmem:[%s219 + $0xc2] sm:$0xff]
      %v959 = vld [vmem:[%s219 + $0xca] sm:$0xff]
      %v960 = vld [vmem:[%s219 + $0xda] sm:$0xff]
      %v961 = vld [vmem:[%s219 + $0xe2] sm:$0xff]
      %v962 = vld [vmem:[%s219 + $0xf2] sm:$0xff]
      %v963 = vld [vmem:[%s219 + $0xfa] sm:$0xff]
      %v964 = vld [vmem:[%s219 + $0x10a] sm:$0xff]
      %v965 = vld [vmem:[%s219 + $0x112] sm:$0xff]
      %v966 = vld [vmem:[%s219 + $0x122] sm:$0xff]
      %v967 = vld [vmem:[%s219 + $0x12a] sm:$0xff]
      %v968 = vld [vmem:[%s219 + $0x13a] sm:$0xff]
      %v969 = vld [vmem:[%s219 + $0x142] sm:$0xff]
      %v970 = vld [vmem:[%s219 + $0x152] sm:$0xff]
      %v971 = vld [vmem:[%s219 + $0x15a] sm:$0xff]
      %v972 = vld [vmem:[%s219 + $0x16a] sm:$0xff]
      %v973 = vld [vmem:[%s219 + $0x172] sm:$0xff]
      %s974 = scalar_lea.vmem %s1, 8
      %v975 = vld [vmem:[%s974] sm:$0xf]
      %v977 = vsel %vm292, %v942, 0
      %v980 = vsel %vm292, %v943, 0
      %v983 = vsel %vm292, %v944, 0
      %v986 = vsel %vm292, %v945, 0
      %v989 = vsel %vm292, %v946, 0
      %v992 = vsel %vm292, %v947, 0
      %v995 = vsel %vm292, %v948, 0
      %v998 = vsel %vm292, %v949, 0
      %v1001 = vsel %vm292, %v950, 0
      %v1004 = vsel %vm292, %v951, 0
      %v1007 = vsel %vm292, %v952, 0
      %v1010 = vsel %vm292, %v953, 0
      %v1013 = vsel %vm292, %v954, 0
      %v1016 = vsel %vm292, %v955, 0
      %v1019 = vsel %vm292, %v956, 0
      %v1022 = vsel %vm292, %v957, 0
      %v1025 = vsel %vm292, %v958, 0
      %v1028 = vsel %vm292, %v959, 0
      %v1031 = vsel %vm292, %v960, 0
      %v1034 = vsel %vm292, %v961, 0
      %v1037 = vsel %vm292, %v962, 0
      %v1040 = vsel %vm292, %v963, 0
      %v1043 = vsel %vm292, %v964, 0
      %v1046 = vsel %vm292, %v965, 0
      %v1049 = vsel %vm292, %v966, 0
      %v1052 = vsel %vm292, %v967, 0
      %v1055 = vsel %vm292, %v968, 0
      %v1058 = vsel %vm292, %v969, 0
      %v1061 = vsel %vm292, %v970, 0
      %v1064 = vsel %vm292, %v971, 0
      %v1067 = vsel %vm292, %v972, 0
      %v1070 = vsel %vm292, %v973, 0
      %v1073 = vsel %vm389, %v975, 0
      %1075 = vmatprep.subr.mxu0 0.0
      %1076 = vmatpush1.msra.mxu0 %v1073
      %1077 = vmatprep.subr.mxu0 0.0
      %1078 = vmatpush1.msra.mxu0 0.0
      %1079 = vmatprep.subr.mxu0 0.0
      %1080 = vmatpush1.msra.mxu0 0.0
      %1081 = vmatprep.subr.mxu0 0.0
      %1082 = vmatpush1.msra.mxu0 0.0
      %1083 = vmatprep.subr.mxu0 0.0
      %1084 = vmatpush1.msra.mxu0 0.0
      %1085 = vmatprep.subr.mxu0 0.0
      %1086 = vmatpush1.msra.mxu0 0.0
      %1087 = vmatprep.subr.mxu0 0.0
      %1088 = vmatpush1.msra.mxu0 0.0
      %1089 = vmatprep.subr.mxu0 0.0
      %1090 = vmatpush1.msra.mxu0 0.0
      %1091 = vmatprep.subr.mxu0 0.0
      %1092 = vmatpush1.msra.mxu0 0.0
      %1093 = vmatprep.subr.mxu0 0.0
      %1094 = vmatpush1.msra.mxu0 0.0
      %1095 = vmatprep.subr.mxu0 0.0
      %1096 = vmatpush1.msra.mxu0 0.0
      %1097 = vmatprep.subr.mxu0 0.0
      %1098 = vmatpush1.msra.mxu0 0.0
      %1099 = vmatprep.subr.mxu0 0.0
      %1100 = vmatpush1.msra.mxu0 0.0
      %1101 = vmatprep.subr.mxu0 0.0
      %1102 = vmatpush1.msra.mxu0 0.0
      %1103 = vmatprep.subr.mxu0 0.0
      %1104 = vmatpush1.msra.mxu0 0.0
      %1105 = vmatprep.subr.mxu0 0.0
      %1106 = vmatpush1.msra.mxu0 0.0
      %1107 = vmatprep.subr.mxu0 0.0
      %1108 = vmatpush1.msra.mxu0 0.0
      %1109 = vmatprep.subr.mxu0 0.0
      %1110 = vmatpush1.msra.mxu0 0.0
      %1111 = vmatprep.subr.mxu0 0.0
      %1112 = vmatpush1.msra.mxu0 0.0
      %1113 = vmatprep.subr.mxu0 0.0
      %1114 = vmatpush1.msra.mxu0 0.0
      %1115 = vmatprep.subr.mxu0 0.0
      %1116 = vmatpush1.msra.mxu0 0.0
      %1117 = vmatprep.subr.mxu0 0.0
      %1118 = vmatpush1.msra.mxu0 0.0
      %1119 = vmatprep.subr.mxu0 0.0
      %1120 = vmatpush1.msra.mxu0 0.0
      %1121 = vmatprep.subr.mxu0 0.0
      %1122 = vmatpush1.msra.mxu0 0.0
      %1123 = vmatprep.subr.mxu0 0.0
      %1124 = vmatpush1.msra.mxu0 0.0
      %1125 = vmatprep.subr.mxu0 0.0
      %1126 = vmatpush1.msra.mxu0 0.0
      %1127 = vmatprep.subr.mxu0 0.0
      %1128 = vmatpush1.msra.mxu0 0.0
      %1129 = vmatprep.subr.mxu0 0.0
      %1130 = vmatpush1.msra.mxu0 0.0
      %1131 = vmatprep.subr.mxu0 0.0
      %1132 = vmatpush1.msra.mxu0 0.0
      %1133 = vmatprep.subr.mxu0 0.0
      %1134 = vmatpush1.msra.mxu0 0.0
      %1135 = vmatprep.subr.mxu0 0.0
      %1136 = vmatpush1.msra.mxu0 0.0
      %1137 = vmatprep.subr.mxu0 0.0
      %1138 = vmatpush1.msra.mxu0 0.0
      %1139 = vmatprep.mubr.f32.mxu0 0.0
      %1140 = vmatmul.mubr.f32.gmra.mrb[0].mxu0 %v977
      %v1141 = vpop.f32.mrb[0].mxu0
      %v1142 = vadd.f32 0.0, %v1141
      %v1143 = vpop.f32.mrb[0].mxu0
      %1144 = vmatprep.mubr.f32.mxu0 0.0
      %1145 = vmatmul.mubr.f32.gmra.mrb[0].mxu0 %v980
      %v1146 = vpop.f32.mrb[0].mxu0
      %v1147 = vadd.f32 0.0, %v1146
      %v1148 = vpop.f32.mrb[0].mxu0
      %1149 = vmatprep.mubr.f32.mxu0 0.0
      %1150 = vmatmul.mubr.f32.gmra.mrb[0].mxu0 %v983
      %v1151 = vpop.f32.mrb[0].mxu0
      %v1152 = vadd.f32 0.0, %v1151
      %v1153 = vpop.f32.mrb[0].mxu0
      %1154 = vmatprep.mubr.f32.mxu0 0.0
      %1155 = vmatmul.mubr.f32.gmra.mrb[0].mxu0 %v986
      %v1156 = vpop.f32.mrb[0].mxu0
      %v1157 = vadd.f32 0.0, %v1156
      %v1158 = vpop.f32.mrb[0].mxu0
      %1159 = vmatprep.mubr.f32.mxu0 0.0
      %1160 = vmatmul.mubr.f32.gmra.mrb[0].mxu0 %v989
      %v1161 = vpop.f32.mrb[0].mxu0
      %v1162 = vadd.f32 0.0, %v1161
      %v1163 = vpop.f32.mrb[0].mxu0
      %1164 = vmatprep.mubr.f32.mxu0 0.0
      %1165 = vmatmul.mubr.f32.gmra.mrb[0].mxu0 %v992
      %v1166 = vpop.f32.mrb[0].mxu0
      %v1167 = vadd.f32 0.0, %v1166
      %v1168 = vpop.f32.mrb[0].mxu0
      %1169 = vmatprep.mubr.f32.mxu0 0.0
      %1170 = vmatmul.mubr.f32.gmra.mrb[0].mxu0 %v995
      %v1171 = vpop.f32.mrb[0].mxu0
      %v1172 = vadd.f32 0.0, %v1171
      %v1173 = vpop.f32.mrb[0].mxu0
      %1174 = vmatprep.mubr.f32.mxu0 0.0
      %1175 = vmatmul.mubr.f32.gmra.mrb[0].mxu0 %v998
      %v1176 = vpop.f32.mrb[0].mxu0
      %v1177 = vadd.f32 0.0, %v1176
      %v1178 = vpop.f32.mrb[0].mxu0
      %1179 = vmatprep.mubr.f32.mxu0 0.0
      %1180 = vmatmul.mubr.f32.gmra.mrb[0].mxu0 %v1001
      %v1181 = vpop.f32.mrb[0].mxu0
      %v1182 = vadd.f32 0.0, %v1181
      %v1183 = vpop.f32.mrb[0].mxu0
      %1184 = vmatprep.mubr.f32.mxu0 0.0
      %1185 = vmatmul.mubr.f32.gmra.mrb[0].mxu0 %v1004
      %v1186 = vpop.f32.mrb[0].mxu0
      %v1187 = vadd.f32 0.0, %v1186
      %v1188 = vpop.f32.mrb[0].mxu0
      %1189 = vmatprep.mubr.f32.mxu0 0.0
      %1190 = vmatmul.mubr.f32.gmra.mrb[0].mxu0 %v1007
      %v1191 = vpop.f32.mrb[0].mxu0
      %v1192 = vadd.f32 0.0, %v1191
      %v1193 = vpop.f32.mrb[0].mxu0
      %1194 = vmatprep.mubr.f32.mxu0 0.0
      %1195 = vmatmul.mubr.f32.gmra.mrb[0].mxu0 %v1010
      %v1196 = vpop.f32.mrb[0].mxu0
      %v1197 = vadd.f32 0.0, %v1196
      %v1198 = vpop.f32.mrb[0].mxu0
      %1199 = vmatprep.mubr.f32.mxu0 0.0
      %1200 = vmatmul.mubr.f32.gmra.mrb[0].mxu0 %v1013
      %v1201 = vpop.f32.mrb[0].mxu0
      %v1202 = vadd.f32 0.0, %v1201
      %v1203 = vpop.f32.mrb[0].mxu0
      %1204 = vmatprep.mubr.f32.mxu0 0.0
      %1205 = vmatmul.mubr.f32.gmra.mrb[0].mxu0 %v1016
      %v1206 = vpop.f32.mrb[0].mxu0
      %v1207 = vadd.f32 0.0, %v1206
      %v1208 = vpop.f32.mrb[0].mxu0
      %1209 = vmatprep.mubr.f32.mxu0 0.0
      %1210 = vmatmul.mubr.f32.gmra.mrb[0].mxu0 %v1019
      %v1211 = vpop.f32.mrb[0].mxu0
      %v1212 = vadd.f32 0.0, %v1211
      %v1213 = vpop.f32.mrb[0].mxu0
      %1214 = vmatprep.mubr.f32.mxu0 0.0
      %1215 = vmatmul.mubr.f32.gmra.mrb[0].mxu0 %v1022
      %v1216 = vpop.f32.mrb[0].mxu0
      %v1217 = vadd.f32 0.0, %v1216
      %v1218 = vpop.f32.mrb[0].mxu0
      %1219 = vmatprep.mubr.f32.mxu0 0.0
      %1220 = vmatmul.mubr.f32.gmra.mrb[0].mxu0 %v1025
      %v1221 = vpop.f32.mrb[0].mxu0
      %v1222 = vadd.f32 0.0, %v1221
      %v1223 = vpop.f32.mrb[0].mxu0
      %1224 = vmatprep.mubr.f32.mxu0 0.0
      %1225 = vmatmul.mubr.f32.gmra.mrb[0].mxu0 %v1028
      %v1226 = vpop.f32.mrb[0].mxu0
      %v1227 = vadd.f32 0.0, %v1226
      %v1228 = vpop.f32.mrb[0].mxu0
      %1229 = vmatprep.mubr.f32.mxu0 0.0
      %1230 = vmatmul.mubr.f32.gmra.mrb[0].mxu0 %v1031
      %v1231 = vpop.f32.mrb[0].mxu0
      %v1232 = vadd.f32 0.0, %v1231
      %v1233 = vpop.f32.mrb[0].mxu0
      %1234 = vmatprep.mubr.f32.mxu0 0.0
      %1235 = vmatmul.mubr.f32.gmra.mrb[0].mxu0 %v1034
      %v1236 = vpop.f32.mrb[0].mxu0
      %v1237 = vadd.f32 0.0, %v1236
      %v1238 = vpop.f32.mrb[0].mxu0
      %1239 = vmatprep.mubr.f32.mxu0 0.0
      %1240 = vmatmul.mubr.f32.gmra.mrb[0].mxu0 %v1037
      %v1241 = vpop.f32.mrb[0].mxu0
      %v1242 = vadd.f32 0.0, %v1241
      %v1243 = vpop.f32.mrb[0].mxu0
      %1244 = vmatprep.mubr.f32.mxu0 0.0
      %1245 = vmatmul.mubr.f32.gmra.mrb[0].mxu0 %v1040
      %v1246 = vpop.f32.mrb[0].mxu0
      %v1247 = vadd.f32 0.0, %v1246
      %v1248 = vpop.f32.mrb[0].mxu0
      %1249 = vmatprep.mubr.f32.mxu0 0.0
      %1250 = vmatmul.mubr.f32.gmra.mrb[0].mxu0 %v1043
      %v1251 = vpop.f32.mrb[0].mxu0
      %v1252 = vadd.f32 0.0, %v1251
      %v1253 = vpop.f32.mrb[0].mxu0
      %1254 = vmatprep.mubr.f32.mxu0 0.0
      %1255 = vmatmul.mubr.f32.gmra.mrb[0].mxu0 %v1046
      %v1256 = vpop.f32.mrb[0].mxu0
      %v1257 = vadd.f32 0.0, %v1256
      %v1258 = vpop.f32.mrb[0].mxu0
      %1259 = vmatprep.mubr.f32.mxu0 0.0
      %1260 = vmatmul.mubr.f32.gmra.mrb[0].mxu0 %v1049
      %v1261 = vpop.f32.mrb[0].mxu0
      %v1262 = vadd.f32 0.0, %v1261
      %v1263 = vpop.f32.mrb[0].mxu0
      %1264 = vmatprep.mubr.f32.mxu0 0.0
      %1265 = vmatmul.mubr.f32.gmra.mrb[0].mxu0 %v1052
      %v1266 = vpop.f32.mrb[0].mxu0
      %v1267 = vadd.f32 0.0, %v1266
      %v1268 = vpop.f32.mrb[0].mxu0
      %1269 = vmatprep.mubr.f32.mxu0 0.0
      %1270 = vmatmul.mubr.f32.gmra.mrb[0].mxu0 %v1055
      %v1271 = vpop.f32.mrb[0].mxu0
      %v1272 = vadd.f32 0.0, %v1271
      %v1273 = vpop.f32.mrb[0].mxu0
      %1274 = vmatprep.mubr.f32.mxu0 0.0
      %1275 = vmatmul.mubr.f32.gmra.mrb[0].mxu0 %v1058
      %v1276 = vpop.f32.mrb[0].mxu0
      %v1277 = vadd.f32 0.0, %v1276
      %v1278 = vpop.f32.mrb[0].mxu0
      %1279 = vmatprep.mubr.f32.mxu0 0.0
      %1280 = vmatmul.mubr.f32.gmra.mrb[0].mxu0 %v1061
      %v1281 = vpop.f32.mrb[0].mxu0
      %v1282 = vadd.f32 0.0, %v1281
      %v1283 = vpop.f32.mrb[0].mxu0
      %1284 = vmatprep.mubr.f32.mxu0 0.0
      %1285 = vmatmul.mubr.f32.gmra.mrb[0].mxu0 %v1064
      %v1286 = vpop.f32.mrb[0].mxu0
      %v1287 = vadd.f32 0.0, %v1286
      %v1288 = vpop.f32.mrb[0].mxu0
      %1289 = vmatprep.mubr.f32.mxu0 0.0
      %1290 = vmatmul.mubr.f32.gmra.mrb[0].mxu0 %v1067
      %v1291 = vpop.f32.mrb[0].mxu0
      %v1292 = vadd.f32 0.0, %v1291
      %v1293 = vpop.f32.mrb[0].mxu0
      %1294 = vmatprep.mubr.f32.mxu0 0.0
      %1295 = vmatmul.mubr.f32.gmra.mrb[0].mxu0 %v1070
      %v1296 = vpop.f32.mrb[0].mxu0
      %v1297 = vadd.f32 0.0, %v1296
      %v1298 = vpop.f32.mrb[0].mxu0
      %1299 = vdwg.mxu0
      %v1300 = vadd.f32 %v784, %v1142
      %v1301 = vadd.f32 %v789, %v1147
      %v1302 = vadd.f32 %v794, %v1152
      %v1303 = vadd.f32 %v799, %v1157
      %v1304 = vadd.f32 %v804, %v1162
      %v1305 = vadd.f32 %v809, %v1167
      %v1306 = vadd.f32 %v814, %v1172
      %v1307 = vadd.f32 %v819, %v1177
      %v1308 = vadd.f32 %v824, %v1182
      %v1309 = vadd.f32 %v829, %v1187
      %v1310 = vadd.f32 %v834, %v1192
      %v1311 = vadd.f32 %v839, %v1197
      %v1312 = vadd.f32 %v844, %v1202
      %v1313 = vadd.f32 %v849, %v1207
      %v1314 = vadd.f32 %v854, %v1212
      %v1315 = vadd.f32 %v859, %v1217
      %v1316 = vadd.f32 %v864, %v1222
      %v1317 = vadd.f32 %v869, %v1227
      %v1318 = vadd.f32 %v874, %v1232
      %v1319 = vadd.f32 %v879, %v1237
      %v1320 = vadd.f32 %v884, %v1242
      %v1321 = vadd.f32 %v889, %v1247
      %v1322 = vadd.f32 %v894, %v1252
      %v1323 = vadd.f32 %v899, %v1257
      %v1324 = vadd.f32 %v904, %v1262
      %v1325 = vadd.f32 %v909, %v1267
      %v1326 = vadd.f32 %v914, %v1272
      %v1327 = vadd.f32 %v919, %v1277
      %v1328 = vadd.f32 %v924, %v1282
      %v1329 = vadd.f32 %v929, %v1287
      %v1330 = vadd.f32 %v934, %v1292
      %v1331 = vadd.f32 %v939, %v1297
      %s1332 = scalar_lea.vmem %s219, 24
      %v1333 = vld [vmem:[%s1332] sm:$0xff]
      %v1334 = vld [vmem:[%s1332 + $0x8] sm:$0xff]
      %v1335 = vld [vmem:[%s1332 + $0x18] sm:$0xff]
      %v1336 = vld [vmem:[%s1332 + $0x20] sm:$0xff]
      %v1337 = vld [vmem:[%s1332 + $0x30] sm:$0xff]
      %v1338 = vld [vmem:[%s1332 + $0x38] sm:$0xff]
      %v1339 = vld [vmem:[%s1332 + $0x48] sm:$0xff]
      %v1340 = vld [vmem:[%s1332 + $0x50] sm:$0xff]
      %v1341 = vld [vmem:[%s1332 + $0x60] sm:$0xff]
      %v1342 = vld [vmem:[%s1332 + $0x68] sm:$0xff]
      %v1343 = vld [vmem:[%s1332 + $0x78] sm:$0xff]
      %v1344 = vld [vmem:[%s1332 + $0x80] sm:$0xff]
      %v1345 = vld [vmem:[%s1332 + $0x90] sm:$0xff]
      %v1346 = vld [vmem:[%s1332 + $0x98] sm:$0xff]
      %v1347 = vld [vmem:[%s1332 + $0xa8] sm:$0xff]
      %v1348 = vld [vmem:[%s1332 + $0xb0] sm:$0xff]
      %v1349 = vld [vmem:[%s1332 + $0xc0] sm:$0xff]
      %v1350 = vld [vmem:[%s1332 + $0xc8] sm:$0xff]
      %v1351 = vld [vmem:[%s1332 + $0xd8] sm:$0xff]
      %v1352 = vld [vmem:[%s1332 + $0xe0] sm:$0xff]
      %v1353 = vld [vmem:[%s1332 + $0xf0] sm:$0xff]
      %v1354 = vld [vmem:[%s1332 + $0xf8] sm:$0xff]
      %v1355 = vld [vmem:[%s1332 + $0x108] sm:$0xff]
      %v1356 = vld [vmem:[%s1332 + $0x110] sm:$0xff]
      %v1357 = vld [vmem:[%s1332 + $0x120] sm:$0xff]
      %v1358 = vld [vmem:[%s1332 + $0x128] sm:$0xff]
      %v1359 = vld [vmem:[%s1332 + $0x138] sm:$0xff]
      %v1360 = vld [vmem:[%s1332 + $0x140] sm:$0xff]
      %v1361 = vld [vmem:[%s1332 + $0x150] sm:$0xff]
      %v1362 = vld [vmem:[%s1332 + $0x158] sm:$0xff]
      %v1363 = vld [vmem:[%s1332 + $0x168] sm:$0xff]
      %v1364 = vld [vmem:[%s1332 + $0x170] sm:$0xff]
      %s1365 = scalar_lea.vmem %s1, 12
      %v1366 = vld [vmem:[%s1365] sm:$0xf]
      %v1368 = vsel %vm292, %v1333, 0
      %v1371 = vsel %vm292, %v1334, 0
      %v1374 = vsel %vm292, %v1335, 0
      %v1377 = vsel %vm292, %v1336, 0
      %v1380 = vsel %vm292, %v1337, 0
      %v1383 = vsel %vm292, %v1338, 0
      %v1386 = vsel %vm292, %v1339, 0
      %v1389 = vsel %vm292, %v1340, 0
      %v1392 = vsel %vm292, %v1341, 0
      %v1395 = vsel %vm292, %v1342, 0
      %v1398 = vsel %vm292, %v1343, 0
      %v1401 = vsel %vm292, %v1344, 0
      %v1404 = vsel %vm292, %v1345, 0
      %v1407 = vsel %vm292, %v1346, 0
      %v1410 = vsel %vm292, %v1347, 0
      %v1413 = vsel %vm292, %v1348, 0
      %v1416 = vsel %vm292, %v1349, 0
      %v1419 = vsel %vm292, %v1350, 0
      %v1422 = vsel %vm292, %v1351, 0
      %v1425 = vsel %vm292, %v1352, 0
      %v1428 = vsel %vm292, %v1353, 0
      %v1431 = vsel %vm292, %v1354, 0
      %v1434 = vsel %vm292, %v1355, 0
      %v1437 = vsel %vm292, %v1356, 0
      %v1440 = vsel %vm292, %v1357, 0
      %v1443 = vsel %vm292, %v1358, 0
      %v1446 = vsel %vm292, %v1359, 0
      %v1449 = vsel %vm292, %v1360, 0
      %v1452 = vsel %vm292, %v1361, 0
      %v1455 = vsel %vm292, %v1362, 0
      %v1458 = vsel %vm292, %v1363, 0
      %v1461 = vsel %vm292, %v1364, 0
      %v1464 = vsel %vm389, %v1366, 0
      %1466 = vmatprep.subr.mxu0 0.0
      %1467 = vmatpush1.msra.mxu0 %v1464
      %1468 = vmatprep.subr.mxu0 0.0
      %1469 = vmatpush1.msra.mxu0 0.0
      %1470 = vmatprep.subr.mxu0 0.0
      %1471 = vmatpush1.msra.mxu0 0.0
      %1472 = vmatprep.subr.mxu0 0.0
      %1473 = vmatpush1.msra.mxu0 0.0
      %1474 = vmatprep.subr.mxu0 0.0
      %1475 = vmatpush1.msra.mxu0 0.0
      %1476 = vmatprep.subr.mxu0 0.0
      %1477 = vmatpush1.msra.mxu0 0.0
      %1478 = vmatprep.subr.mxu0 0.0
      %1479 = vmatpush1.msra.mxu0 0.0
      %1480 = vmatprep.subr.mxu0 0.0
      %1481 = vmatpush1.msra.mxu0 0.0
      %1482 = vmatprep.subr.mxu0 0.0
      %1483 = vmatpush1.msra.mxu0 0.0
      %1484 = vmatprep.subr.mxu0 0.0
      %1485 = vmatpush1.msra.mxu0 0.0
      %1486 = vmatprep.subr.mxu0 0.0
      %1487 = vmatpush1.msra.mxu0 0.0
      %1488 = vmatprep.subr.mxu0 0.0
      %1489 = vmatpush1.msra.mxu0 0.0
      %1490 = vmatprep.subr.mxu0 0.0
      %1491 = vmatpush1.msra.mxu0 0.0
      %1492 = vmatprep.subr.mxu0 0.0
      %1493 = vmatpush1.msra.mxu0 0.0
      %1494 = vmatprep.subr.mxu0 0.0
      %1495 = vmatpush1.msra.mxu0 0.0
      %1496 = vmatprep.subr.mxu0 0.0
      %1497 = vmatpush1.msra.mxu0 0.0
      %1498 = vmatprep.subr.mxu0 0.0
      %1499 = vmatpush1.msra.mxu0 0.0
      %1500 = vmatprep.subr.mxu0 0.0
      %1501 = vmatpush1.msra.mxu0 0.0
      %1502 = vmatprep.subr.mxu0 0.0
      %1503 = vmatpush1.msra.mxu0 0.0
      %1504 = vmatprep.subr.mxu0 0.0
      %1505 = vmatpush1.msra.mxu0 0.0
      %1506 = vmatprep.subr.mxu0 0.0
      %1507 = vmatpush1.msra.mxu0 0.0
      %1508 = vmatprep.subr.mxu0 0.0
      %1509 = vmatpush1.msra.mxu0 0.0
      %1510 = vmatprep.subr.mxu0 0.0
      %1511 = vmatpush1.msra.mxu0 0.0
      %1512 = vmatprep.subr.mxu0 0.0
      %1513 = vmatpush1.msra.mxu0 0.0
      %1514 = vmatprep.subr.mxu0 0.0
      %1515 = vmatpush1.msra.mxu0 0.0
      %1516 = vmatprep.subr.mxu0 0.0
      %1517 = vmatpush1.msra.mxu0 0.0
      %1518 = vmatprep.subr.mxu0 0.0
      %1519 = vmatpush1.msra.mxu0 0.0
      %1520 = vmatprep.subr.mxu0 0.0
      %1521 = vmatpush1.msra.mxu0 0.0
      %1522 = vmatprep.subr.mxu0 0.0
      %1523 = vmatpush1.msra.mxu0 0.0
      %1524 = vmatprep.subr.mxu0 0.0
      %1525 = vmatpush1.msra.mxu0 0.0
      %1526 = vmatprep.subr.mxu0 0.0
      %1527 = vmatpush1.msra.mxu0 0.0
      %1528 = vmatprep.subr.mxu0 0.0
      %1529 = vmatpush1.msra.mxu0 0.0
      %1530 = vmatprep.mubr.f32.mxu0 0.0
      %1531 = vmatmul.mubr.f32.gmra.mrb[0].mxu0 %v1368
      %v1532 = vpop.f32.mrb[0].mxu0
      %v1533 = vadd.f32 0.0, %v1532
      %v1534 = vpop.f32.mrb[0].mxu0
      %1535 = vmatprep.mubr.f32.mxu0 0.0
      %1536 = vmatmul.mubr.f32.gmra.mrb[0].mxu0 %v1371
      %v1537 = vpop.f32.mrb[0].mxu0
      %v1538 = vadd.f32 0.0, %v1537
      %v1539 = vpop.f32.mrb[0].mxu0
      %1540 = vmatprep.mubr.f32.mxu0 0.0
      %1541 = vmatmul.mubr.f32.gmra.mrb[0].mxu0 %v1374
      %v1542 = vpop.f32.mrb[0].mxu0
      %v1543 = vadd.f32 0.0, %v1542
      %v1544 = vpop.f32.mrb[0].mxu0
      %1545 = vmatprep.mubr.f32.mxu0 0.0
      %1546 = vmatmul.mubr.f32.gmra.mrb[0].mxu0 %v1377
      %v1547 = vpop.f32.mrb[0].mxu0
      %v1548 = vadd.f32 0.0, %v1547
      %v1549 = vpop.f32.mrb[0].mxu0
      %1550 = vmatprep.mubr.f32.mxu0 0.0
      %1551 = vmatmul.mubr.f32.gmra.mrb[0].mxu0 %v1380
      %v1552 = vpop.f32.mrb[0].mxu0
      %v1553 = vadd.f32 0.0, %v1552
      %v1554 = vpop.f32.mrb[0].mxu0
      %1555 = vmatprep.mubr.f32.mxu0 0.0
      %1556 = vmatmul.mubr.f32.gmra.mrb[0].mxu0 %v1383
      %v1557 = vpop.f32.mrb[0].mxu0
      %v1558 = vadd.f32 0.0, %v1557
      %v1559 = vpop.f32.mrb[0].mxu0
      %1560 = vmatprep.mubr.f32.mxu0 0.0
      %1561 = vmatmul.mubr.f32.gmra.mrb[0].mxu0 %v1386
      %v1562 = vpop.f32.mrb[0].mxu0
      %v1563 = vadd.f32 0.0, %v1562
      %v1564 = vpop.f32.mrb[0].mxu0
      %1565 = vmatprep.mubr.f32.mxu0 0.0
      %1566 = vmatmul.mubr.f32.gmra.mrb[0].mxu0 %v1389
      %v1567 = vpop.f32.mrb[0].mxu0
      %v1568 = vadd.f32 0.0, %v1567
      %v1569 = vpop.f32.mrb[0].mxu0
      %1570 = vmatprep.mubr.f32.mxu0 0.0
      %1571 = vmatmul.mubr.f32.gmra.mrb[0].mxu0 %v1392
      %v1572 = vpop.f32.mrb[0].mxu0
      %v1573 = vadd.f32 0.0, %v1572
      %v1574 = vpop.f32.mrb[0].mxu0
      %1575 = vmatprep.mubr.f32.mxu0 0.0
      %1576 = vmatmul.mubr.f32.gmra.mrb[0].mxu0 %v1395
      %v1577 = vpop.f32.mrb[0].mxu0
      %v1578 = vadd.f32 0.0, %v1577
      %v1579 = vpop.f32.mrb[0].mxu0
      %1580 = vmatprep.mubr.f32.mxu0 0.0
      %1581 = vmatmul.mubr.f32.gmra.mrb[0].mxu0 %v1398
      %v1582 = vpop.f32.mrb[0].mxu0
      %v1583 = vadd.f32 0.0, %v1582
      %v1584 = vpop.f32.mrb[0].mxu0
      %1585 = vmatprep.mubr.f32.mxu0 0.0
      %1586 = vmatmul.mubr.f32.gmra.mrb[0].mxu0 %v1401
      %v1587 = vpop.f32.mrb[0].mxu0
      %v1588 = vadd.f32 0.0, %v1587
      %v1589 = vpop.f32.mrb[0].mxu0
      %1590 = vmatprep.mubr.f32.mxu0 0.0
      %1591 = vmatmul.mubr.f32.gmra.mrb[0].mxu0 %v1404
      %v1592 = vpop.f32.mrb[0].mxu0
      %v1593 = vadd.f32 0.0, %v1592
      %v1594 = vpop.f32.mrb[0].mxu0
      %1595 = vmatprep.mubr.f32.mxu0 0.0
      %1596 = vmatmul.mubr.f32.gmra.mrb[0].mxu0 %v1407
      %v1597 = vpop.f32.mrb[0].mxu0
      %v1598 = vadd.f32 0.0, %v1597
      %v1599 = vpop.f32.mrb[0].mxu0
      %1600 = vmatprep.mubr.f32.mxu0 0.0
      %1601 = vmatmul.mubr.f32.gmra.mrb[0].mxu0 %v1410
      %v1602 = vpop.f32.mrb[0].mxu0
      %v1603 = vadd.f32 0.0, %v1602
      %v1604 = vpop.f32.mrb[0].mxu0
      %1605 = vmatprep.mubr.f32.mxu0 0.0
      %1606 = vmatmul.mubr.f32.gmra.mrb[0].mxu0 %v1413
      %v1607 = vpop.f32.mrb[0].mxu0
      %v1608 = vadd.f32 0.0, %v1607
      %v1609 = vpop.f32.mrb[0].mxu0
      %1610 = vmatprep.mubr.f32.mxu0 0.0
      %1611 = vmatmul.mubr.f32.gmra.mrb[0].mxu0 %v1416
      %v1612 = vpop.f32.mrb[0].mxu0
      %v1613 = vadd.f32 0.0, %v1612
      %v1614 = vpop.f32.mrb[0].mxu0
      %1615 = vmatprep.mubr.f32.mxu0 0.0
      %1616 = vmatmul.mubr.f32.gmra.mrb[0].mxu0 %v1419
      %v1617 = vpop.f32.mrb[0].mxu0
      %v1618 = vadd.f32 0.0, %v1617
      %v1619 = vpop.f32.mrb[0].mxu0
      %1620 = vmatprep.mubr.f32.mxu0 0.0
      %1621 = vmatmul.mubr.f32.gmra.mrb[0].mxu0 %v1422
      %v1622 = vpop.f32.mrb[0].mxu0
      %v1623 = vadd.f32 0.0, %v1622
      %v1624 = vpop.f32.mrb[0].mxu0
      %1625 = vmatprep.mubr.f32.mxu0 0.0
      %1626 = vmatmul.mubr.f32.gmra.mrb[0].mxu0 %v1425
      %v1627 = vpop.f32.mrb[0].mxu0
      %v1628 = vadd.f32 0.0, %v1627
      %v1629 = vpop.f32.mrb[0].mxu0
      %1630 = vmatprep.mubr.f32.mxu0 0.0
      %1631 = vmatmul.mubr.f32.gmra.mrb[0].mxu0 %v1428
      %v1632 = vpop.f32.mrb[0].mxu0
      %v1633 = vadd.f32 0.0, %v1632
      %v1634 = vpop.f32.mrb[0].mxu0
      %1635 = vmatprep.mubr.f32.mxu0 0.0
      %1636 = vmatmul.mubr.f32.gmra.mrb[0].mxu0 %v1431
      %v1637 = vpop.f32.mrb[0].mxu0
      %v1638 = vadd.f32 0.0, %v1637
      %v1639 = vpop.f32.mrb[0].mxu0
      %1640 = vmatprep.mubr.f32.mxu0 0.0
      %1641 = vmatmul.mubr.f32.gmra.mrb[0].mxu0 %v1434
      %v1642 = vpop.f32.mrb[0].mxu0
      %v1643 = vadd.f32 0.0, %v1642
      %v1644 = vpop.f32.mrb[0].mxu0
      %1645 = vmatprep.mubr.f32.mxu0 0.0
      %1646 = vmatmul.mubr.f32.gmra.mrb[0].mxu0 %v1437
      %v1647 = vpop.f32.mrb[0].mxu0
      %v1648 = vadd.f32 0.0, %v1647
      %v1649 = vpop.f32.mrb[0].mxu0
      %1650 = vmatprep.mubr.f32.mxu0 0.0
      %1651 = vmatmul.mubr.f32.gmra.mrb[0].mxu0 %v1440
      %v1652 = vpop.f32.mrb[0].mxu0
      %v1653 = vadd.f32 0.0, %v1652
      %v1654 = vpop.f32.mrb[0].mxu0
      %1655 = vmatprep.mubr.f32.mxu0 0.0
      %1656 = vmatmul.mubr.f32.gmra.mrb[0].mxu0 %v1443
      %v1657 = vpop.f32.mrb[0].mxu0
      %v1658 = vadd.f32 0.0, %v1657
      %v1659 = vpop.f32.mrb[0].mxu0
      %1660 = vmatprep.mubr.f32.mxu0 0.0
      %1661 = vmatmul.mubr.f32.gmra.mrb[0].mxu0 %v1446
      %v1662 = vpop.f32.mrb[0].mxu0
      %v1663 = vadd.f32 0.0, %v1662
      %v1664 = vpop.f32.mrb[0].mxu0
      %1665 = vmatprep.mubr.f32.mxu0 0.0
      %1666 = vmatmul.mubr.f32.gmra.mrb[0].mxu0 %v1449
      %v1667 = vpop.f32.mrb[0].mxu0
      %v1668 = vadd.f32 0.0, %v1667
      %v1669 = vpop.f32.mrb[0].mxu0
      %1670 = vmatprep.mubr.f32.mxu0 0.0
      %1671 = vmatmul.mubr.f32.gmra.mrb[0].mxu0 %v1452
      %v1672 = vpop.f32.mrb[0].mxu0
      %v1673 = vadd.f32 0.0, %v1672
      %v1674 = vpop.f32.mrb[0].mxu0
      %1675 = vmatprep.mubr.f32.mxu0 0.0
      %1676 = vmatmul.mubr.f32.gmra.mrb[0].mxu0 %v1455
      %v1677 = vpop.f32.mrb[0].mxu0
      %v1678 = vadd.f32 0.0, %v1677
      %v1679 = vpop.f32.mrb[0].mxu0
      %1680 = vmatprep.mubr.f32.mxu0 0.0
      %1681 = vmatmul.mubr.f32.gmra.mrb[0].mxu0 %v1458
      %v1682 = vpop.f32.mrb[0].mxu0
      %v1683 = vadd.f32 0.0, %v1682
      %v1684 = vpop.f32.mrb[0].mxu0
      %1685 = vmatprep.mubr.f32.mxu0 0.0
      %1686 = vmatmul.mubr.f32.gmra.mrb[0].mxu0 %v1461
      %v1687 = vpop.f32.mrb[0].mxu0
      %v1688 = vadd.f32 0.0, %v1687
      %v1689 = vpop.f32.mrb[0].mxu0
      %1690 = vdwg.mxu0
      %v1691 = vadd.f32 %v1300, %v1533
      %v1692 = vadd.f32 %v1301, %v1538
      %v1693 = vadd.f32 %v1302, %v1543
      %v1694 = vadd.f32 %v1303, %v1548
      %v1695 = vadd.f32 %v1304, %v1553
      %v1696 = vadd.f32 %v1305, %v1558
      %v1697 = vadd.f32 %v1306, %v1563
      %v1698 = vadd.f32 %v1307, %v1568
      %v1699 = vadd.f32 %v1308, %v1573
      %v1700 = vadd.f32 %v1309, %v1578
      %v1701 = vadd.f32 %v1310, %v1583
      %v1702 = vadd.f32 %v1311, %v1588
      %v1703 = vadd.f32 %v1312, %v1593
      %v1704 = vadd.f32 %v1313, %v1598
      %v1705 = vadd.f32 %v1314, %v1603
      %v1706 = vadd.f32 %v1315, %v1608
      %v1707 = vadd.f32 %v1316, %v1613
      %v1708 = vadd.f32 %v1317, %v1618
      %v1709 = vadd.f32 %v1318, %v1623
      %v1710 = vadd.f32 %v1319, %v1628
      %v1711 = vadd.f32 %v1320, %v1633
      %v1712 = vadd.f32 %v1321, %v1638
      %v1713 = vadd.f32 %v1322, %v1643
      %v1714 = vadd.f32 %v1323, %v1648
      %v1715 = vadd.f32 %v1324, %v1653
      %v1716 = vadd.f32 %v1325, %v1658
      %v1717 = vadd.f32 %v1326, %v1663
      %v1718 = vadd.f32 %v1327, %v1668
      %v1719 = vadd.f32 %v1328, %v1673
      %v1720 = vadd.f32 %v1329, %v1678
      %v1721 = vadd.f32 %v1330, %v1683
      %v1722 = vadd.f32 %v1331, %v1688
      %v1723 = vld [vmem:[%s1332 + $0x1] sm:$0xff]
      %v1724 = vld [vmem:[%s1332 + $0x9] sm:$0xff]
      %v1725 = vld [vmem:[%s1332 + $0x19] sm:$0xff]
      %v1726 = vld [vmem:[%s1332 + $0x21] sm:$0xff]
      %v1727 = vld [vmem:[%s1332 + $0x31] sm:$0xff]
      %v1728 = vld [vmem:[%s1332 + $0x39] sm:$0xff]
      %v1729 = vld [vmem:[%s1332 + $0x49] sm:$0xff]
      %v1730 = vld [vmem:[%s1332 + $0x51] sm:$0xff]
      %v1731 = vld [vmem:[%s1332 + $0x61] sm:$0xff]
      %v1732 = vld [vmem:[%s1332 + $0x69] sm:$0xff]
      %v1733 = vld [vmem:[%s1332 + $0x79] sm:$0xff]
      %v1734 = vld [vmem:[%s1332 + $0x81] sm:$0xff]
      %v1735 = vld [vmem:[%s1332 + $0x91] sm:$0xff]
      %v1736 = vld [vmem:[%s1332 + $0x99] sm:$0xff]
      %v1737 = vld [vmem:[%s1332 + $0xa9] sm:$0xff]
      %v1738 = vld [vmem:[%s1332 + $0xb1] sm:$0xff]
      %v1739 = vld [vmem:[%s1332 + $0xc1] sm:$0xff]
      %v1740 = vld [vmem:[%s1332 + $0xc9] sm:$0xff]
      %v1741 = vld [vmem:[%s1332 + $0xd9] sm:$0xff]
      %v1742 = vld [vmem:[%s1332 + $0xe1] sm:$0xff]
      %v1743 = vld [vmem:[%s1332 + $0xf1] sm:$0xff]
      %v1744 = vld [vmem:[%s1332 + $0xf9] sm:$0xff]
      %v1745 = vld [vmem:[%s1332 + $0x109] sm:$0xff]
      %v1746 = vld [vmem:[%s1332 + $0x111] sm:$0xff]
      %v1747 = vld [vmem:[%s1332 + $0x121] sm:$0xff]
      %v1748 = vld [vmem:[%s1332 + $0x129] sm:$0xff]
      %v1749 = vld [vmem:[%s1332 + $0x139] sm:$0xff]
      %v1750 = vld [vmem:[%s1332 + $0x141] sm:$0xff]
      %v1751 = vld [vmem:[%s1332 + $0x151] sm:$0xff]
      %v1752 = vld [vmem:[%s1332 + $0x159] sm:$0xff]
      %v1753 = vld [vmem:[%s1332 + $0x169] sm:$0xff]
      %v1754 = vld [vmem:[%s1332 + $0x171] sm:$0xff]
      %s1755 = scalar_lea.vmem %s1, 16
      %v1756 = vld [vmem:[%s1755] sm:$0xf]
      %v1758 = vsel %vm292, %v1723, 0
      %v1761 = vsel %vm292, %v1724, 0
      %v1764 = vsel %vm292, %v1725, 0
      %v1767 = vsel %vm292, %v1726, 0
      %v1770 = vsel %vm292, %v1727, 0
      %v1773 = vsel %vm292, %v1728, 0
      %v1776 = vsel %vm292, %v1729, 0
      %v1779 = vsel %vm292, %v1730, 0
      %v1782 = vsel %vm292, %v1731, 0
      %v1785 = vsel %vm292, %v1732, 0
      %v1788 = vsel %vm292, %v1733, 0
      %v1791 = vsel %vm292, %v1734, 0
      %v1794 = vsel %vm292, %v1735, 0
      %v1797 = vsel %vm292, %v1736, 0
      %v1800 = vsel %vm292, %v1737, 0
      %v1803 = vsel %vm292, %v1738, 0
      %v1806 = vsel %vm292, %v1739, 0
      %v1809 = vsel %vm292, %v1740, 0
      %v1812 = vsel %vm292, %v1741, 0
      %v1815 = vsel %vm292, %v1742, 0
      %v1818 = vsel %vm292, %v1743, 0
      %v1821 = vsel %vm292, %v1744, 0
      %v1824 = vsel %vm292, %v1745, 0
      %v1827 = vsel %vm292, %v1746, 0
      %v1830 = vsel %vm292, %v1747, 0
      %v1833 = vsel %vm292, %v1748, 0
      %v1836 = vsel %vm292, %v1749, 0
      %v1839 = vsel %vm292, %v1750, 0
      %v1842 = vsel %vm292, %v1751, 0
      %v1845 = vsel %vm292, %v1752, 0
      %v1848 = vsel %vm292, %v1753, 0
      %v1851 = vsel %vm292, %v1754, 0
      %v1854 = vsel %vm389, %v1756, 0
      %1856 = vmatprep.subr.mxu0 0.0
      %1857 = vmatpush1.msra.mxu0 %v1854
      %1858 = vmatprep.subr.mxu0 0.0
      %1859 = vmatpush1.msra.mxu0 0.0
      %1860 = vmatprep.subr.mxu0 0.0
      %1861 = vmatpush1.msra.mxu0 0.0
      %1862 = vmatprep.subr.mxu0 0.0
      %1863 = vmatpush1.msra.mxu0 0.0
      %1864 = vmatprep.subr.mxu0 0.0
      %1865 = vmatpush1.msra.mxu0 0.0
      %1866 = vmatprep.subr.mxu0 0.0
      %1867 = vmatpush1.msra.mxu0 0.0
      %1868 = vmatprep.subr.mxu0 0.0
      %1869 = vmatpush1.msra.mxu0 0.0
      %1870 = vmatprep.subr.mxu0 0.0
      %1871 = vmatpush1.msra.mxu0 0.0
      %1872 = vmatprep.subr.mxu0 0.0
      %1873 = vmatpush1.msra.mxu0 0.0
      %1874 = vmatprep.subr.mxu0 0.0
      %1875 = vmatpush1.msra.mxu0 0.0
      %1876 = vmatprep.subr.mxu0 0.0
      %1877 = vmatpush1.msra.mxu0 0.0
      %1878 = vmatprep.subr.mxu0 0.0
      %1879 = vmatpush1.msra.mxu0 0.0
      %1880 = vmatprep.subr.mxu0 0.0
      %1881 = vmatpush1.msra.mxu0 0.0
      %1882 = vmatprep.subr.mxu0 0.0
      %1883 = vmatpush1.msra.mxu0 0.0
      %1884 = vmatprep.subr.mxu0 0.0
      %1885 = vmatpush1.msra.mxu0 0.0
      %1886 = vmatprep.subr.mxu0 0.0
      %1887 = vmatpush1.msra.mxu0 0.0
      %1888 = vmatprep.subr.mxu0 0.0
      %1889 = vmatpush1.msra.mxu0 0.0
      %1890 = vmatprep.subr.mxu0 0.0
      %1891 = vmatpush1.msra.mxu0 0.0
      %1892 = vmatprep.subr.mxu0 0.0
      %1893 = vmatpush1.msra.mxu0 0.0
      %1894 = vmatprep.subr.mxu0 0.0
      %1895 = vmatpush1.msra.mxu0 0.0
      %1896 = vmatprep.subr.mxu0 0.0
      %1897 = vmatpush1.msra.mxu0 0.0
      %1898 = vmatprep.subr.mxu0 0.0
      %1899 = vmatpush1.msra.mxu0 0.0
      %1900 = vmatprep.subr.mxu0 0.0
      %1901 = vmatpush1.msra.mxu0 0.0
      %1902 = vmatprep.subr.mxu0 0.0
      %1903 = vmatpush1.msra.mxu0 0.0
      %1904 = vmatprep.subr.mxu0 0.0
      %1905 = vmatpush1.msra.mxu0 0.0
      %1906 = vmatprep.subr.mxu0 0.0
      %1907 = vmatpush1.msra.mxu0 0.0
      %1908 = vmatprep.subr.mxu0 0.0
      %1909 = vmatpush1.msra.mxu0 0.0
      %1910 = vmatprep.subr.mxu0 0.0
      %1911 = vmatpush1.msra.mxu0 0.0
      %1912 = vmatprep.subr.mxu0 0.0
      %1913 = vmatpush1.msra.mxu0 0.0
      %1914 = vmatprep.subr.mxu0 0.0
      %1915 = vmatpush1.msra.mxu0 0.0
      %1916 = vmatprep.subr.mxu0 0.0
      %1917 = vmatpush1.msra.mxu0 0.0
      %1918 = vmatprep.subr.mxu0 0.0
      %1919 = vmatpush1.msra.mxu0 0.0
      %1920 = vmatprep.mubr.f32.mxu0 0.0
      %1921 = vmatmul.mubr.f32.gmra.mrb[0].mxu0 %v1758
      %v1922 = vpop.f32.mrb[0].mxu0
      %v1923 = vadd.f32 0.0, %v1922
      %v1924 = vpop.f32.mrb[0].mxu0
      %1925 = vmatprep.mubr.f32.mxu0 0.0
      %1926 = vmatmul.mubr.f32.gmra.mrb[0].mxu0 %v1761
      %v1927 = vpop.f32.mrb[0].mxu0
      %v1928 = vadd.f32 0.0, %v1927
      %v1929 = vpop.f32.mrb[0].mxu0
      %1930 = vmatprep.mubr.f32.mxu0 0.0
      %1931 = vmatmul.mubr.f32.gmra.mrb[0].mxu0 %v1764
      %v1932 = vpop.f32.mrb[0].mxu0
      %v1933 = vadd.f32 0.0, %v1932
      %v1934 = vpop.f32.mrb[0].mxu0
      %1935 = vmatprep.mubr.f32.mxu0 0.0
      %1936 = vmatmul.mubr.f32.gmra.mrb[0].mxu0 %v1767
      %v1937 = vpop.f32.mrb[0].mxu0
      %v1938 = vadd.f32 0.0, %v1937
      %v1939 = vpop.f32.mrb[0].mxu0
      %1940 = vmatprep.mubr.f32.mxu0 0.0
      %1941 = vmatmul.mubr.f32.gmra.mrb[0].mxu0 %v1770
      %v1942 = vpop.f32.mrb[0].mxu0
      %v1943 = vadd.f32 0.0, %v1942
      %v1944 = vpop.f32.mrb[0].mxu0
      %1945 = vmatprep.mubr.f32.mxu0 0.0
      %1946 = vmatmul.mubr.f32.gmra.mrb[0].mxu0 %v1773
      %v1947 = vpop.f32.mrb[0].mxu0
      %v1948 = vadd.f32 0.0, %v1947
      %v1949 = vpop.f32.mrb[0].mxu0
      %1950 = vmatprep.mubr.f32.mxu0 0.0
      %1951 = vmatmul.mubr.f32.gmra.mrb[0].mxu0 %v1776
      %v1952 = vpop.f32.mrb[0].mxu0
      %v1953 = vadd.f32 0.0, %v1952
      %v1954 = vpop.f32.mrb[0].mxu0
      %1955 = vmatprep.mubr.f32.mxu0 0.0
      %1956 = vmatmul.mubr.f32.gmra.mrb[0].mxu0 %v1779
      %v1957 = vpop.f32.mrb[0].mxu0
      %v1958 = vadd.f32 0.0, %v1957
      %v1959 = vpop.f32.mrb[0].mxu0
      %1960 = vmatprep.mubr.f32.mxu0 0.0
      %1961 = vmatmul.mubr.f32.gmra.mrb[0].mxu0 %v1782
      %v1962 = vpop.f32.mrb[0].mxu0
      %v1963 = vadd.f32 0.0, %v1962
      %v1964 = vpop.f32.mrb[0].mxu0
      %1965 = vmatprep.mubr.f32.mxu0 0.0
      %1966 = vmatmul.mubr.f32.gmra.mrb[0].mxu0 %v1785
      %v1967 = vpop.f32.mrb[0].mxu0
      %v1968 = vadd.f32 0.0, %v1967
      %v1969 = vpop.f32.mrb[0].mxu0
      %1970 = vmatprep.mubr.f32.mxu0 0.0
      %1971 = vmatmul.mubr.f32.gmra.mrb[0].mxu0 %v1788
      %v1972 = vpop.f32.mrb[0].mxu0
      %v1973 = vadd.f32 0.0, %v1972
      %v1974 = vpop.f32.mrb[0].mxu0
      %1975 = vmatprep.mubr.f32.mxu0 0.0
      %1976 = vmatmul.mubr.f32.gmra.mrb[0].mxu0 %v1791
      %v1977 = vpop.f32.mrb[0].mxu0
      %v1978 = vadd.f32 0.0, %v1977
      %v1979 = vpop.f32.mrb[0].mxu0
      %1980 = vmatprep.mubr.f32.mxu0 0.0
      %1981 = vmatmul.mubr.f32.gmra.mrb[0].mxu0 %v1794
      %v1982 = vpop.f32.mrb[0].mxu0
      %v1983 = vadd.f32 0.0, %v1982
      %v1984 = vpop.f32.mrb[0].mxu0
      %1985 = vmatprep.mubr.f32.mxu0 0.0
      %1986 = vmatmul.mubr.f32.gmra.mrb[0].mxu0 %v1797
      %v1987 = vpop.f32.mrb[0].mxu0
      %v1988 = vadd.f32 0.0, %v1987
      %v1989 = vpop.f32.mrb[0].mxu0
      %1990 = vmatprep.mubr.f32.mxu0 0.0
      %1991 = vmatmul.mubr.f32.gmra.mrb[0].mxu0 %v1800
      %v1992 = vpop.f32.mrb[0].mxu0
      %v1993 = vadd.f32 0.0, %v1992
      %v1994 = vpop.f32.mrb[0].mxu0
      %1995 = vmatprep.mubr.f32.mxu0 0.0
      %1996 = vmatmul.mubr.f32.gmra.mrb[0].mxu0 %v1803
      %v1997 = vpop.f32.mrb[0].mxu0
      %v1998 = vadd.f32 0.0, %v1997
      %v1999 = vpop.f32.mrb[0].mxu0
      %2000 = vmatprep.mubr.f32.mxu0 0.0
      %2001 = vmatmul.mubr.f32.gmra.mrb[0].mxu0 %v1806
      %v2002 = vpop.f32.mrb[0].mxu0
      %v2003 = vadd.f32 0.0, %v2002
      %v2004 = vpop.f32.mrb[0].mxu0
      %2005 = vmatprep.mubr.f32.mxu0 0.0
      %2006 = vmatmul.mubr.f32.gmra.mrb[0].mxu0 %v1809
      %v2007 = vpop.f32.mrb[0].mxu0
      %v2008 = vadd.f32 0.0, %v2007
      %v2009 = vpop.f32.mrb[0].mxu0
      %2010 = vmatprep.mubr.f32.mxu0 0.0
      %2011 = vmatmul.mubr.f32.gmra.mrb[0].mxu0 %v1812
      %v2012 = vpop.f32.mrb[0].mxu0
      %v2013 = vadd.f32 0.0, %v2012
      %v2014 = vpop.f32.mrb[0].mxu0
      %2015 = vmatprep.mubr.f32.mxu0 0.0
      %2016 = vmatmul.mubr.f32.gmra.mrb[0].mxu0 %v1815
      %v2017 = vpop.f32.mrb[0].mxu0
      %v2018 = vadd.f32 0.0, %v2017
      %v2019 = vpop.f32.mrb[0].mxu0
      %2020 = vmatprep.mubr.f32.mxu0 0.0
      %2021 = vmatmul.mubr.f32.gmra.mrb[0].mxu0 %v1818
      %v2022 = vpop.f32.mrb[0].mxu0
      %v2023 = vadd.f32 0.0, %v2022
      %v2024 = vpop.f32.mrb[0].mxu0
      %2025 = vmatprep.mubr.f32.mxu0 0.0
      %2026 = vmatmul.mubr.f32.gmra.mrb[0].mxu0 %v1821
      %v2027 = vpop.f32.mrb[0].mxu0
      %v2028 = vadd.f32 0.0, %v2027
      %v2029 = vpop.f32.mrb[0].mxu0
      %2030 = vmatprep.mubr.f32.mxu0 0.0
      %2031 = vmatmul.mubr.f32.gmra.mrb[0].mxu0 %v1824
      %v2032 = vpop.f32.mrb[0].mxu0
      %v2033 = vadd.f32 0.0, %v2032
      %v2034 = vpop.f32.mrb[0].mxu0
      %2035 = vmatprep.mubr.f32.mxu0 0.0
      %2036 = vmatmul.mubr.f32.gmra.mrb[0].mxu0 %v1827
      %v2037 = vpop.f32.mrb[0].mxu0
      %v2038 = vadd.f32 0.0, %v2037
      %v2039 = vpop.f32.mrb[0].mxu0
      %2040 = vmatprep.mubr.f32.mxu0 0.0
      %2041 = vmatmul.mubr.f32.gmra.mrb[0].mxu0 %v1830
      %v2042 = vpop.f32.mrb[0].mxu0
      %v2043 = vadd.f32 0.0, %v2042
      %v2044 = vpop.f32.mrb[0].mxu0
      %2045 = vmatprep.mubr.f32.mxu0 0.0
      %2046 = vmatmul.mubr.f32.gmra.mrb[0].mxu0 %v1833
      %v2047 = vpop.f32.mrb[0].mxu0
      %v2048 = vadd.f32 0.0, %v2047
      %v2049 = vpop.f32.mrb[0].mxu0
      %2050 = vmatprep.mubr.f32.mxu0 0.0
      %2051 = vmatmul.mubr.f32.gmra.mrb[0].mxu0 %v1836
      %v2052 = vpop.f32.mrb[0].mxu0
      %v2053 = vadd.f32 0.0, %v2052
      %v2054 = vpop.f32.mrb[0].mxu0
      %2055 = vmatprep.mubr.f32.mxu0 0.0
      %2056 = vmatmul.mubr.f32.gmra.mrb[0].mxu0 %v1839
      %v2057 = vpop.f32.mrb[0].mxu0
      %v2058 = vadd.f32 0.0, %v2057
      %v2059 = vpop.f32.mrb[0].mxu0
      %2060 = vmatprep.mubr.f32.mxu0 0.0
      %2061 = vmatmul.mubr.f32.gmra.mrb[0].mxu0 %v1842
      %v2062 = vpop.f32.mrb[0].mxu0
      %v2063 = vadd.f32 0.0, %v2062
      %v2064 = vpop.f32.mrb[0].mxu0
      %2065 = vmatprep.mubr.f32.mxu0 0.0
      %2066 = vmatmul.mubr.f32.gmra.mrb[0].mxu0 %v1845
      %v2067 = vpop.f32.mrb[0].mxu0
      %v2068 = vadd.f32 0.0, %v2067
      %v2069 = vpop.f32.mrb[0].mxu0
      %2070 = vmatprep.mubr.f32.mxu0 0.0
      %2071 = vmatmul.mubr.f32.gmra.mrb[0].mxu0 %v1848
      %v2072 = vpop.f32.mrb[0].mxu0
      %v2073 = vadd.f32 0.0, %v2072
      %v2074 = vpop.f32.mrb[0].mxu0
      %2075 = vmatprep.mubr.f32.mxu0 0.0
      %2076 = vmatmul.mubr.f32.gmra.mrb[0].mxu0 %v1851
      %v2077 = vpop.f32.mrb[0].mxu0
      %v2078 = vadd.f32 0.0, %v2077
      %v2079 = vpop.f32.mrb[0].mxu0
      %2080 = vdwg.mxu0
      %v2081 = vadd.f32 %v1691, %v1923
      %v2082 = vadd.f32 %v1692, %v1928
      %v2083 = vadd.f32 %v1693, %v1933
      %v2084 = vadd.f32 %v1694, %v1938
      %v2085 = vadd.f32 %v1695, %v1943
      %v2086 = vadd.f32 %v1696, %v1948
      %v2087 = vadd.f32 %v1697, %v1953
      %v2088 = vadd.f32 %v1698, %v1958
      %v2089 = vadd.f32 %v1699, %v1963
      %v2090 = vadd.f32 %v1700, %v1968
      %v2091 = vadd.f32 %v1701, %v1973
      %v2092 = vadd.f32 %v1702, %v1978
      %v2093 = vadd.f32 %v1703, %v1983
      %v2094 = vadd.f32 %v1704, %v1988
      %v2095 = vadd.f32 %v1705, %v1993
      %v2096 = vadd.f32 %v1706, %v1998
      %v2097 = vadd.f32 %v1707, %v2003
      %v2098 = vadd.f32 %v1708, %v2008
      %v2099 = vadd.f32 %v1709, %v2013
      %v2100 = vadd.f32 %v1710, %v2018
      %v2101 = vadd.f32 %v1711, %v2023
      %v2102 = vadd.f32 %v1712, %v2028
      %v2103 = vadd.f32 %v1713, %v2033
      %v2104 = vadd.f32 %v1714, %v2038
      %v2105 = vadd.f32 %v1715, %v2043
      %v2106 = vadd.f32 %v1716, %v2048
      %v2107 = vadd.f32 %v1717, %v2053
      %v2108 = vadd.f32 %v1718, %v2058
      %v2109 = vadd.f32 %v1719, %v2063
      %v2110 = vadd.f32 %v1720, %v2068
      %v2111 = vadd.f32 %v1721, %v2073
      %v2112 = vadd.f32 %v1722, %v2078
      %v2113 = vld [vmem:[%s1332 + $0x2] sm:$0xff]
      %v2114 = vld [vmem:[%s1332 + $0xa] sm:$0xff]
      %v2115 = vld [vmem:[%s1332 + $0x1a] sm:$0xff]
      %v2116 = vld [vmem:[%s1332 + $0x22] sm:$0xff]
      %v2117 = vld [vmem:[%s1332 + $0x32] sm:$0xff]
      %v2118 = vld [vmem:[%s1332 + $0x3a] sm:$0xff]
      %v2119 = vld [vmem:[%s1332 + $0x4a] sm:$0xff]
      %v2120 = vld [vmem:[%s1332 + $0x52] sm:$0xff]
      %v2121 = vld [vmem:[%s1332 + $0x62] sm:$0xff]
      %v2122 = vld [vmem:[%s1332 + $0x6a] sm:$0xff]
      %v2123 = vld [vmem:[%s1332 + $0x7a] sm:$0xff]
      %v2124 = vld [vmem:[%s1332 + $0x82] sm:$0xff]
      %v2125 = vld [vmem:[%s1332 + $0x92] sm:$0xff]
      %v2126 = vld [vmem:[%s1332 + $0x9a] sm:$0xff]
      %v2127 = vld [vmem:[%s1332 + $0xaa] sm:$0xff]
      %v2128 = vld [vmem:[%s1332 + $0xb2] sm:$0xff]
      %v2129 = vld [vmem:[%s1332 + $0xc2] sm:$0xff]
      %v2130 = vld [vmem:[%s1332 + $0xca] sm:$0xff]
      %v2131 = vld [vmem:[%s1332 + $0xda] sm:$0xff]
      %v2132 = vld [vmem:[%s1332 + $0xe2] sm:$0xff]
      %v2133 = vld [vmem:[%s1332 + $0xf2] sm:$0xff]
      %v2134 = vld [vmem:[%s1332 + $0xfa] sm:$0xff]
      %v2135 = vld [vmem:[%s1332 + $0x10a] sm:$0xff]
      %v2136 = vld [vmem:[%s1332 + $0x112] sm:$0xff]
      %v2137 = vld [vmem:[%s1332 + $0x122] sm:$0xff]
      %v2138 = vld [vmem:[%s1332 + $0x12a] sm:$0xff]
      %v2139 = vld [vmem:[%s1332 + $0x13a] sm:$0xff]
      %v2140 = vld [vmem:[%s1332 + $0x142] sm:$0xff]
      %v2141 = vld [vmem:[%s1332 + $0x152] sm:$0xff]
      %v2142 = vld [vmem:[%s1332 + $0x15a] sm:$0xff]
      %v2143 = vld [vmem:[%s1332 + $0x16a] sm:$0xff]
      %v2144 = vld [vmem:[%s1332 + $0x172] sm:$0xff]
      %s2145 = scalar_lea.vmem %s1, 20
      %v2146 = vld [vmem:[%s2145] sm:$0xf]
      %v2148 = vsel %vm292, %v2113, 0
      %v2151 = vsel %vm292, %v2114, 0
      %v2154 = vsel %vm292, %v2115, 0
      %v2157 = vsel %vm292, %v2116, 0
      %v2160 = vsel %vm292, %v2117, 0
      %v2163 = vsel %vm292, %v2118, 0
      %v2166 = vsel %vm292, %v2119, 0
      %v2169 = vsel %vm292, %v2120, 0
      %v2172 = vsel %vm292, %v2121, 0
      %v2175 = vsel %vm292, %v2122, 0
      %v2178 = vsel %vm292, %v2123, 0
      %v2181 = vsel %vm292, %v2124, 0
      %v2184 = vsel %vm292, %v2125, 0
      %v2187 = vsel %vm292, %v2126, 0
      %v2190 = vsel %vm292, %v2127, 0
      %v2193 = vsel %vm292, %v2128, 0
      %v2196 = vsel %vm292, %v2129, 0
      %v2199 = vsel %vm292, %v2130, 0
      %v2202 = vsel %vm292, %v2131, 0
      %v2205 = vsel %vm292, %v2132, 0
      %v2208 = vsel %vm292, %v2133, 0
      %v2211 = vsel %vm292, %v2134, 0
      %v2214 = vsel %vm292, %v2135, 0
      %v2217 = vsel %vm292, %v2136, 0
      %v2220 = vsel %vm292, %v2137, 0
      %v2223 = vsel %vm292, %v2138, 0
      %v2226 = vsel %vm292, %v2139, 0
      %v2229 = vsel %vm292, %v2140, 0
      %v2232 = vsel %vm292, %v2141, 0
      %v2235 = vsel %vm292, %v2142, 0
      %v2238 = vsel %vm292, %v2143, 0
      %v2241 = vsel %vm292, %v2144, 0
      %v2244 = vsel %vm389, %v2146, 0
      %2246 = vmatprep.subr.mxu0 0.0
      %2247 = vmatpush1.msra.mxu0 %v2244
      %2248 = vmatprep.subr.mxu0 0.0
      %2249 = vmatpush1.msra.mxu0 0.0
      %2250 = vmatprep.subr.mxu0 0.0
      %2251 = vmatpush1.msra.mxu0 0.0
      %2252 = vmatprep.subr.mxu0 0.0
      %2253 = vmatpush1.msra.mxu0 0.0
      %2254 = vmatprep.subr.mxu0 0.0
      %2255 = vmatpush1.msra.mxu0 0.0
      %2256 = vmatprep.subr.mxu0 0.0
      %2257 = vmatpush1.msra.mxu0 0.0
      %2258 = vmatprep.subr.mxu0 0.0
      %2259 = vmatpush1.msra.mxu0 0.0
      %2260 = vmatprep.subr.mxu0 0.0
      %2261 = vmatpush1.msra.mxu0 0.0
      %2262 = vmatprep.subr.mxu0 0.0
      %2263 = vmatpush1.msra.mxu0 0.0
      %2264 = vmatprep.subr.mxu0 0.0
      %2265 = vmatpush1.msra.mxu0 0.0
      %2266 = vmatprep.subr.mxu0 0.0
      %2267 = vmatpush1.msra.mxu0 0.0
      %2268 = vmatprep.subr.mxu0 0.0
      %2269 = vmatpush1.msra.mxu0 0.0
      %2270 = vmatprep.subr.mxu0 0.0
      %2271 = vmatpush1.msra.mxu0 0.0
      %2272 = vmatprep.subr.mxu0 0.0
      %2273 = vmatpush1.msra.mxu0 0.0
      %2274 = vmatprep.subr.mxu0 0.0
      %2275 = vmatpush1.msra.mxu0 0.0
      %2276 = vmatprep.subr.mxu0 0.0
      %2277 = vmatpush1.msra.mxu0 0.0
      %2278 = vmatprep.subr.mxu0 0.0
      %2279 = vmatpush1.msra.mxu0 0.0
      %2280 = vmatprep.subr.mxu0 0.0
      %2281 = vmatpush1.msra.mxu0 0.0
      %2282 = vmatprep.subr.mxu0 0.0
      %2283 = vmatpush1.msra.mxu0 0.0
      %2284 = vmatprep.subr.mxu0 0.0
      %2285 = vmatpush1.msra.mxu0 0.0
      %2286 = vmatprep.subr.mxu0 0.0
      %2287 = vmatpush1.msra.mxu0 0.0
      %2288 = vmatprep.subr.mxu0 0.0
      %2289 = vmatpush1.msra.mxu0 0.0
      %2290 = vmatprep.subr.mxu0 0.0
      %2291 = vmatpush1.msra.mxu0 0.0
      %2292 = vmatprep.subr.mxu0 0.0
      %2293 = vmatpush1.msra.mxu0 0.0
      %2294 = vmatprep.subr.mxu0 0.0
      %2295 = vmatpush1.msra.mxu0 0.0
      %2296 = vmatprep.subr.mxu0 0.0
      %2297 = vmatpush1.msra.mxu0 0.0
      %2298 = vmatprep.subr.mxu0 0.0
      %2299 = vmatpush1.msra.mxu0 0.0
      %2300 = vmatprep.subr.mxu0 0.0
      %2301 = vmatpush1.msra.mxu0 0.0
      %2302 = vmatprep.subr.mxu0 0.0
      %2303 = vmatpush1.msra.mxu0 0.0
      %2304 = vmatprep.subr.mxu0 0.0
      %2305 = vmatpush1.msra.mxu0 0.0
      %2306 = vmatprep.subr.mxu0 0.0
      %2307 = vmatpush1.msra.mxu0 0.0
      %2308 = vmatprep.subr.mxu0 0.0
      %2309 = vmatpush1.msra.mxu0 0.0
      %2310 = vmatprep.mubr.f32.mxu0 0.0
      %2311 = vmatmul.mubr.f32.gmra.mrb[0].mxu0 %v2148
      %v2312 = vpop.f32.mrb[0].mxu0
      %v2313 = vadd.f32 0.0, %v2312
      %v2314 = vpop.f32.mrb[0].mxu0
      %2315 = vmatprep.mubr.f32.mxu0 0.0
      %2316 = vmatmul.mubr.f32.gmra.mrb[0].mxu0 %v2151
      %v2317 = vpop.f32.mrb[0].mxu0
      %v2318 = vadd.f32 0.0, %v2317
      %v2319 = vpop.f32.mrb[0].mxu0
      %2320 = vmatprep.mubr.f32.mxu0 0.0
      %2321 = vmatmul.mubr.f32.gmra.mrb[0].mxu0 %v2154
      %v2322 = vpop.f32.mrb[0].mxu0
      %v2323 = vadd.f32 0.0, %v2322
      %v2324 = vpop.f32.mrb[0].mxu0
      %2325 = vmatprep.mubr.f32.mxu0 0.0
      %2326 = vmatmul.mubr.f32.gmra.mrb[0].mxu0 %v2157
      %v2327 = vpop.f32.mrb[0].mxu0
      %v2328 = vadd.f32 0.0, %v2327
      %v2329 = vpop.f32.mrb[0].mxu0
      %2330 = vmatprep.mubr.f32.mxu0 0.0
      %2331 = vmatmul.mubr.f32.gmra.mrb[0].mxu0 %v2160
      %v2332 = vpop.f32.mrb[0].mxu0
      %v2333 = vadd.f32 0.0, %v2332
      %v2334 = vpop.f32.mrb[0].mxu0
      %2335 = vmatprep.mubr.f32.mxu0 0.0
      %2336 = vmatmul.mubr.f32.gmra.mrb[0].mxu0 %v2163
      %v2337 = vpop.f32.mrb[0].mxu0
      %v2338 = vadd.f32 0.0, %v2337
      %v2339 = vpop.f32.mrb[0].mxu0
      %2340 = vmatprep.mubr.f32.mxu0 0.0
      %2341 = vmatmul.mubr.f32.gmra.mrb[0].mxu0 %v2166
      %v2342 = vpop.f32.mrb[0].mxu0
      %v2343 = vadd.f32 0.0, %v2342
      %v2344 = vpop.f32.mrb[0].mxu0
      %2345 = vmatprep.mubr.f32.mxu0 0.0
      %2346 = vmatmul.mubr.f32.gmra.mrb[0].mxu0 %v2169
      %v2347 = vpop.f32.mrb[0].mxu0
      %v2348 = vadd.f32 0.0, %v2347
      %v2349 = vpop.f32.mrb[0].mxu0
      %2350 = vmatprep.mubr.f32.mxu0 0.0
      %2351 = vmatmul.mubr.f32.gmra.mrb[0].mxu0 %v2172
      %v2352 = vpop.f32.mrb[0].mxu0
      %v2353 = vadd.f32 0.0, %v2352
      %v2354 = vpop.f32.mrb[0].mxu0
      %2355 = vmatprep.mubr.f32.mxu0 0.0
      %2356 = vmatmul.mubr.f32.gmra.mrb[0].mxu0 %v2175
      %v2357 = vpop.f32.mrb[0].mxu0
      %v2358 = vadd.f32 0.0, %v2357
      %v2359 = vpop.f32.mrb[0].mxu0
      %2360 = vmatprep.mubr.f32.mxu0 0.0
      %2361 = vmatmul.mubr.f32.gmra.mrb[0].mxu0 %v2178
      %v2362 = vpop.f32.mrb[0].mxu0
      %v2363 = vadd.f32 0.0, %v2362
      %v2364 = vpop.f32.mrb[0].mxu0
      %2365 = vmatprep.mubr.f32.mxu0 0.0
      %2366 = vmatmul.mubr.f32.gmra.mrb[0].mxu0 %v2181
      %v2367 = vpop.f32.mrb[0].mxu0
      %v2368 = vadd.f32 0.0, %v2367
      %v2369 = vpop.f32.mrb[0].mxu0
      %2370 = vmatprep.mubr.f32.mxu0 0.0
      %2371 = vmatmul.mubr.f32.gmra.mrb[0].mxu0 %v2184
      %v2372 = vpop.f32.mrb[0].mxu0
      %v2373 = vadd.f32 0.0, %v2372
      %v2374 = vpop.f32.mrb[0].mxu0
      %2375 = vmatprep.mubr.f32.mxu0 0.0
      %2376 = vmatmul.mubr.f32.gmra.mrb[0].mxu0 %v2187
      %v2377 = vpop.f32.mrb[0].mxu0
      %v2378 = vadd.f32 0.0, %v2377
      %v2379 = vpop.f32.mrb[0].mxu0
      %2380 = vmatprep.mubr.f32.mxu0 0.0
      %2381 = vmatmul.mubr.f32.gmra.mrb[0].mxu0 %v2190
      %v2382 = vpop.f32.mrb[0].mxu0
      %v2383 = vadd.f32 0.0, %v2382
      %v2384 = vpop.f32.mrb[0].mxu0
      %2385 = vmatprep.mubr.f32.mxu0 0.0
      %2386 = vmatmul.mubr.f32.gmra.mrb[0].mxu0 %v2193
      %v2387 = vpop.f32.mrb[0].mxu0
      %v2388 = vadd.f32 0.0, %v2387
      %v2389 = vpop.f32.mrb[0].mxu0
      %2390 = vmatprep.mubr.f32.mxu0 0.0
      %2391 = vmatmul.mubr.f32.gmra.mrb[0].mxu0 %v2196
      %v2392 = vpop.f32.mrb[0].mxu0
      %v2393 = vadd.f32 0.0, %v2392
      %v2394 = vpop.f32.mrb[0].mxu0
      %2395 = vmatprep.mubr.f32.mxu0 0.0
      %2396 = vmatmul.mubr.f32.gmra.mrb[0].mxu0 %v2199
      %v2397 = vpop.f32.mrb[0].mxu0
      %v2398 = vadd.f32 0.0, %v2397
      %v2399 = vpop.f32.mrb[0].mxu0
      %2400 = vmatprep.mubr.f32.mxu0 0.0
      %2401 = vmatmul.mubr.f32.gmra.mrb[0].mxu0 %v2202
      %v2402 = vpop.f32.mrb[0].mxu0
      %v2403 = vadd.f32 0.0, %v2402
      %v2404 = vpop.f32.mrb[0].mxu0
      %2405 = vmatprep.mubr.f32.mxu0 0.0
      %2406 = vmatmul.mubr.f32.gmra.mrb[0].mxu0 %v2205
      %v2407 = vpop.f32.mrb[0].mxu0
      %v2408 = vadd.f32 0.0, %v2407
      %v2409 = vpop.f32.mrb[0].mxu0
      %2410 = vmatprep.mubr.f32.mxu0 0.0
      %2411 = vmatmul.mubr.f32.gmra.mrb[0].mxu0 %v2208
      %v2412 = vpop.f32.mrb[0].mxu0
      %v2413 = vadd.f32 0.0, %v2412
      %v2414 = vpop.f32.mrb[0].mxu0
      %2415 = vmatprep.mubr.f32.mxu0 0.0
      %2416 = vmatmul.mubr.f32.gmra.mrb[0].mxu0 %v2211
      %v2417 = vpop.f32.mrb[0].mxu0
      %v2418 = vadd.f32 0.0, %v2417
      %v2419 = vpop.f32.mrb[0].mxu0
      %2420 = vmatprep.mubr.f32.mxu0 0.0
      %2421 = vmatmul.mubr.f32.gmra.mrb[0].mxu0 %v2214
      %v2422 = vpop.f32.mrb[0].mxu0
      %v2423 = vadd.f32 0.0, %v2422
      %v2424 = vpop.f32.mrb[0].mxu0
      %2425 = vmatprep.mubr.f32.mxu0 0.0
      %2426 = vmatmul.mubr.f32.gmra.mrb[0].mxu0 %v2217
      %v2427 = vpop.f32.mrb[0].mxu0
      %v2428 = vadd.f32 0.0, %v2427
      %v2429 = vpop.f32.mrb[0].mxu0
      %2430 = vmatprep.mubr.f32.mxu0 0.0
      %2431 = vmatmul.mubr.f32.gmra.mrb[0].mxu0 %v2220
      %v2432 = vpop.f32.mrb[0].mxu0
      %v2433 = vadd.f32 0.0, %v2432
      %v2434 = vpop.f32.mrb[0].mxu0
      %2435 = vmatprep.mubr.f32.mxu0 0.0
      %2436 = vmatmul.mubr.f32.gmra.mrb[0].mxu0 %v2223
      %v2437 = vpop.f32.mrb[0].mxu0
      %v2438 = vadd.f32 0.0, %v2437
      %v2439 = vpop.f32.mrb[0].mxu0
      %2440 = vmatprep.mubr.f32.mxu0 0.0
      %2441 = vmatmul.mubr.f32.gmra.mrb[0].mxu0 %v2226
      %v2442 = vpop.f32.mrb[0].mxu0
      %v2443 = vadd.f32 0.0, %v2442
      %v2444 = vpop.f32.mrb[0].mxu0
      %2445 = vmatprep.mubr.f32.mxu0 0.0
      %2446 = vmatmul.mubr.f32.gmra.mrb[0].mxu0 %v2229
      %v2447 = vpop.f32.mrb[0].mxu0
      %v2448 = vadd.f32 0.0, %v2447
      %v2449 = vpop.f32.mrb[0].mxu0
      %2450 = vmatprep.mubr.f32.mxu0 0.0
      %2451 = vmatmul.mubr.f32.gmra.mrb[0].mxu0 %v2232
      %v2452 = vpop.f32.mrb[0].mxu0
      %v2453 = vadd.f32 0.0, %v2452
      %v2454 = vpop.f32.mrb[0].mxu0
      %2455 = vmatprep.mubr.f32.mxu0 0.0
      %2456 = vmatmul.mubr.f32.gmra.mrb[0].mxu0 %v2235
      %v2457 = vpop.f32.mrb[0].mxu0
      %v2458 = vadd.f32 0.0, %v2457
      %v2459 = vpop.f32.mrb[0].mxu0
      %2460 = vmatprep.mubr.f32.mxu0 0.0
      %2461 = vmatmul.mubr.f32.gmra.mrb[0].mxu0 %v2238
      %v2462 = vpop.f32.mrb[0].mxu0
      %v2463 = vadd.f32 0.0, %v2462
      %v2464 = vpop.f32.mrb[0].mxu0
      %2465 = vmatprep.mubr.f32.mxu0 0.0
      %2466 = vmatmul.mubr.f32.gmra.mrb[0].mxu0 %v2241
      %v2467 = vpop.f32.mrb[0].mxu0
      %v2468 = vadd.f32 0.0, %v2467
      %v2469 = vpop.f32.mrb[0].mxu0
      %2470 = vdwg.mxu0
      %v2471 = vadd.f32 %v2081, %v2313
      %v2472 = vadd.f32 %v2082, %v2318
      %v2473 = vadd.f32 %v2083, %v2323
      %v2474 = vadd.f32 %v2084, %v2328
      %v2475 = vadd.f32 %v2085, %v2333
      %v2476 = vadd.f32 %v2086, %v2338
      %v2477 = vadd.f32 %v2087, %v2343
      %v2478 = vadd.f32 %v2088, %v2348
      %v2479 = vadd.f32 %v2089, %v2353
      %v2480 = vadd.f32 %v2090, %v2358
      %v2481 = vadd.f32 %v2091, %v2363
      %v2482 = vadd.f32 %v2092, %v2368
      %v2483 = vadd.f32 %v2093, %v2373
      %v2484 = vadd.f32 %v2094, %v2378
      %v2485 = vadd.f32 %v2095, %v2383
      %v2486 = vadd.f32 %v2096, %v2388
      %v2487 = vadd.f32 %v2097, %v2393
      %v2488 = vadd.f32 %v2098, %v2398
      %v2489 = vadd.f32 %v2099, %v2403
      %v2490 = vadd.f32 %v2100, %v2408
      %v2491 = vadd.f32 %v2101, %v2413
      %v2492 = vadd.f32 %v2102, %v2418
      %v2493 = vadd.f32 %v2103, %v2423
      %v2494 = vadd.f32 %v2104, %v2428
      %v2495 = vadd.f32 %v2105, %v2433
      %v2496 = vadd.f32 %v2106, %v2438
      %v2497 = vadd.f32 %v2107, %v2443
      %v2498 = vadd.f32 %v2108, %v2448
      %v2499 = vadd.f32 %v2109, %v2453
      %v2500 = vadd.f32 %v2110, %v2458
      %v2501 = vadd.f32 %v2111, %v2463
      %v2502 = vadd.f32 %v2112, %v2468
      %s2503 = scalar_lea.vmem %s219, 48
      %v2504 = vld [vmem:[%s2503] sm:$0xff]
      %v2505 = vld [vmem:[%s2503 + $0x8] sm:$0xff]
      %v2506 = vld [vmem:[%s2503 + $0x18] sm:$0xff]
      %v2507 = vld [vmem:[%s2503 + $0x20] sm:$0xff]
      %v2508 = vld [vmem:[%s2503 + $0x30] sm:$0xff]
      %v2509 = vld [vmem:[%s2503 + $0x38] sm:$0xff]
      %v2510 = vld [vmem:[%s2503 + $0x48] sm:$0xff]
      %v2511 = vld [vmem:[%s2503 + $0x50] sm:$0xff]
      %v2512 = vld [vmem:[%s2503 + $0x60] sm:$0xff]
      %v2513 = vld [vmem:[%s2503 + $0x68] sm:$0xff]
      %v2514 = vld [vmem:[%s2503 + $0x78] sm:$0xff]
      %v2515 = vld [vmem:[%s2503 + $0x80] sm:$0xff]
      %v2516 = vld [vmem:[%s2503 + $0x90] sm:$0xff]
      %v2517 = vld [vmem:[%s2503 + $0x98] sm:$0xff]
      %v2518 = vld [vmem:[%s2503 + $0xa8] sm:$0xff]
      %v2519 = vld [vmem:[%s2503 + $0xb0] sm:$0xff]
      %v2520 = vld [vmem:[%s2503 + $0xc0] sm:$0xff]
      %v2521 = vld [vmem:[%s2503 + $0xc8] sm:$0xff]
      %v2522 = vld [vmem:[%s2503 + $0xd8] sm:$0xff]
      %v2523 = vld [vmem:[%s2503 + $0xe0] sm:$0xff]
      %v2524 = vld [vmem:[%s2503 + $0xf0] sm:$0xff]
      %v2525 = vld [vmem:[%s2503 + $0xf8] sm:$0xff]
      %v2526 = vld [vmem:[%s2503 + $0x108] sm:$0xff]
      %v2527 = vld [vmem:[%s2503 + $0x110] sm:$0xff]
      %v2528 = vld [vmem:[%s2503 + $0x120] sm:$0xff]
      %v2529 = vld [vmem:[%s2503 + $0x128] sm:$0xff]
      %v2530 = vld [vmem:[%s2503 + $0x138] sm:$0xff]
      %v2531 = vld [vmem:[%s2503 + $0x140] sm:$0xff]
      %v2532 = vld [vmem:[%s2503 + $0x150] sm:$0xff]
      %v2533 = vld [vmem:[%s2503 + $0x158] sm:$0xff]
      %v2534 = vld [vmem:[%s2503 + $0x168] sm:$0xff]
      %v2535 = vld [vmem:[%s2503 + $0x170] sm:$0xff]
      %s2536 = scalar_lea.vmem %s1, 24
      %v2537 = vld [vmem:[%s2536] sm:$0xf]
      %v2539 = vsel %vm292, %v2504, 0
      %v2542 = vsel %vm292, %v2505, 0
      %v2545 = vsel %vm292, %v2506, 0
      %v2548 = vsel %vm292, %v2507, 0
      %v2551 = vsel %vm292, %v2508, 0
      %v2554 = vsel %vm292, %v2509, 0
      %v2557 = vsel %vm292, %v2510, 0
      %v2560 = vsel %vm292, %v2511, 0
      %v2563 = vsel %vm292, %v2512, 0
      %v2566 = vsel %vm292, %v2513, 0
      %v2569 = vsel %vm292, %v2514, 0
      %v2572 = vsel %vm292, %v2515, 0
      %v2575 = vsel %vm292, %v2516, 0
      %v2578 = vsel %vm292, %v2517, 0
      %v2581 = vsel %vm292, %v2518, 0
      %v2584 = vsel %vm292, %v2519, 0
      %v2587 = vsel %vm292, %v2520, 0
      %v2590 = vsel %vm292, %v2521, 0
      %v2593 = vsel %vm292, %v2522, 0
      %v2596 = vsel %vm292, %v2523, 0
      %v2599 = vsel %vm292, %v2524, 0
      %v2602 = vsel %vm292, %v2525, 0
      %v2605 = vsel %vm292, %v2526, 0
      %v2608 = vsel %vm292, %v2527, 0
      %v2611 = vsel %vm292, %v2528, 0
      %v2614 = vsel %vm292, %v2529, 0
      %v2617 = vsel %vm292, %v2530, 0
      %v2620 = vsel %vm292, %v2531, 0
      %v2623 = vsel %vm292, %v2532, 0
      %v2626 = vsel %vm292, %v2533, 0
      %v2629 = vsel %vm292, %v2534, 0
      %v2632 = vsel %vm292, %v2535, 0
      %v2635 = vsel %vm389, %v2537, 0
      %2637 = vmatprep.subr.mxu0 0.0
      %2638 = vmatpush1.msra.mxu0 %v2635
      %2639 = vmatprep.subr.mxu0 0.0
      %2640 = vmatpush1.msra.mxu0 0.0
      %2641 = vmatprep.subr.mxu0 0.0
      %2642 = vmatpush1.msra.mxu0 0.0
      %2643 = vmatprep.subr.mxu0 0.0
      %2644 = vmatpush1.msra.mxu0 0.0
      %2645 = vmatprep.subr.mxu0 0.0
      %2646 = vmatpush1.msra.mxu0 0.0
      %2647 = vmatprep.subr.mxu0 0.0
      %2648 = vmatpush1.msra.mxu0 0.0
      %2649 = vmatprep.subr.mxu0 0.0
      %2650 = vmatpush1.msra.mxu0 0.0
      %2651 = vmatprep.subr.mxu0 0.0
      %2652 = vmatpush1.msra.mxu0 0.0
      %2653 = vmatprep.subr.mxu0 0.0
      %2654 = vmatpush1.msra.mxu0 0.0
      %2655 = vmatprep.subr.mxu0 0.0
      %2656 = vmatpush1.msra.mxu0 0.0
      %2657 = vmatprep.subr.mxu0 0.0
      %2658 = vmatpush1.msra.mxu0 0.0
      %2659 = vmatprep.subr.mxu0 0.0
      %2660 = vmatpush1.msra.mxu0 0.0
      %2661 = vmatprep.subr.mxu0 0.0
      %2662 = vmatpush1.msra.mxu0 0.0
      %2663 = vmatprep.subr.mxu0 0.0
      %2664 = vmatpush1.msra.mxu0 0.0
      %2665 = vmatprep.subr.mxu0 0.0
      %2666 = vmatpush1.msra.mxu0 0.0
      %2667 = vmatprep.subr.mxu0 0.0
      %2668 = vmatpush1.msra.mxu0 0.0
      %2669 = vmatprep.subr.mxu0 0.0
      %2670 = vmatpush1.msra.mxu0 0.0
      %2671 = vmatprep.subr.mxu0 0.0
      %2672 = vmatpush1.msra.mxu0 0.0
      %2673 = vmatprep.subr.mxu0 0.0
      %2674 = vmatpush1.msra.mxu0 0.0
      %2675 = vmatprep.subr.mxu0 0.0
      %2676 = vmatpush1.msra.mxu0 0.0
      %2677 = vmatprep.subr.mxu0 0.0
      %2678 = vmatpush1.msra.mxu0 0.0
      %2679 = vmatprep.subr.mxu0 0.0
      %2680 = vmatpush1.msra.mxu0 0.0
      %2681 = vmatprep.subr.mxu0 0.0
      %2682 = vmatpush1.msra.mxu0 0.0
      %2683 = vmatprep.subr.mxu0 0.0
      %2684 = vmatpush1.msra.mxu0 0.0
      %2685 = vmatprep.subr.mxu0 0.0
      %2686 = vmatpush1.msra.mxu0 0.0
      %2687 = vmatprep.subr.mxu0 0.0
      %2688 = vmatpush1.msra.mxu0 0.0
      %2689 = vmatprep.subr.mxu0 0.0
      %2690 = vmatpush1.msra.mxu0 0.0
      %2691 = vmatprep.subr.mxu0 0.0
      %2692 = vmatpush1.msra.mxu0 0.0
      %2693 = vmatprep.subr.mxu0 0.0
      %2694 = vmatpush1.msra.mxu0 0.0
      %2695 = vmatprep.subr.mxu0 0.0
      %2696 = vmatpush1.msra.mxu0 0.0
      %2697 = vmatprep.subr.mxu0 0.0
      %2698 = vmatpush1.msra.mxu0 0.0
      %2699 = vmatprep.subr.mxu0 0.0
      %2700 = vmatpush1.msra.mxu0 0.0
      %2701 = vmatprep.mubr.f32.mxu0 0.0
      %2702 = vmatmul.mubr.f32.gmra.mrb[0].mxu0 %v2539
      %v2703 = vpop.f32.mrb[0].mxu0
      %v2704 = vadd.f32 0.0, %v2703
      %v2705 = vpop.f32.mrb[0].mxu0
      %2706 = vmatprep.mubr.f32.mxu0 0.0
      %2707 = vmatmul.mubr.f32.gmra.mrb[0].mxu0 %v2542
      %v2708 = vpop.f32.mrb[0].mxu0
      %v2709 = vadd.f32 0.0, %v2708
      %v2710 = vpop.f32.mrb[0].mxu0
      %2711 = vmatprep.mubr.f32.mxu0 0.0
      %2712 = vmatmul.mubr.f32.gmra.mrb[0].mxu0 %v2545
      %v2713 = vpop.f32.mrb[0].mxu0
      %v2714 = vadd.f32 0.0, %v2713
      %v2715 = vpop.f32.mrb[0].mxu0
      %2716 = vmatprep.mubr.f32.mxu0 0.0
      %2717 = vmatmul.mubr.f32.gmra.mrb[0].mxu0 %v2548
      %v2718 = vpop.f32.mrb[0].mxu0
      %v2719 = vadd.f32 0.0, %v2718
      %v2720 = vpop.f32.mrb[0].mxu0
      %2721 = vmatprep.mubr.f32.mxu0 0.0
      %2722 = vmatmul.mubr.f32.gmra.mrb[0].mxu0 %v2551
      %v2723 = vpop.f32.mrb[0].mxu0
      %v2724 = vadd.f32 0.0, %v2723
      %v2725 = vpop.f32.mrb[0].mxu0
      %2726 = vmatprep.mubr.f32.mxu0 0.0
      %2727 = vmatmul.mubr.f32.gmra.mrb[0].mxu0 %v2554
      %v2728 = vpop.f32.mrb[0].mxu0
      %v2729 = vadd.f32 0.0, %v2728
      %v2730 = vpop.f32.mrb[0].mxu0
      %2731 = vmatprep.mubr.f32.mxu0 0.0
      %2732 = vmatmul.mubr.f32.gmra.mrb[0].mxu0 %v2557
      %v2733 = vpop.f32.mrb[0].mxu0
      %v2734 = vadd.f32 0.0, %v2733
      %v2735 = vpop.f32.mrb[0].mxu0
      %2736 = vmatprep.mubr.f32.mxu0 0.0
      %2737 = vmatmul.mubr.f32.gmra.mrb[0].mxu0 %v2560
      %v2738 = vpop.f32.mrb[0].mxu0
      %v2739 = vadd.f32 0.0, %v2738
      %v2740 = vpop.f32.mrb[0].mxu0
      %2741 = vmatprep.mubr.f32.mxu0 0.0
      %2742 = vmatmul.mubr.f32.gmra.mrb[0].mxu0 %v2563
      %v2743 = vpop.f32.mrb[0].mxu0
      %v2744 = vadd.f32 0.0, %v2743
      %v2745 = vpop.f32.mrb[0].mxu0
      %2746 = vmatprep.mubr.f32.mxu0 0.0
      %2747 = vmatmul.mubr.f32.gmra.mrb[0].mxu0 %v2566
      %v2748 = vpop.f32.mrb[0].mxu0
      %v2749 = vadd.f32 0.0, %v2748
      %v2750 = vpop.f32.mrb[0].mxu0
      %2751 = vmatprep.mubr.f32.mxu0 0.0
      %2752 = vmatmul.mubr.f32.gmra.mrb[0].mxu0 %v2569
      %v2753 = vpop.f32.mrb[0].mxu0
      %v2754 = vadd.f32 0.0, %v2753
      %v2755 = vpop.f32.mrb[0].mxu0
      %2756 = vmatprep.mubr.f32.mxu0 0.0
      %2757 = vmatmul.mubr.f32.gmra.mrb[0].mxu0 %v2572
      %v2758 = vpop.f32.mrb[0].mxu0
      %v2759 = vadd.f32 0.0, %v2758
      %v2760 = vpop.f32.mrb[0].mxu0
      %2761 = vmatprep.mubr.f32.mxu0 0.0
      %2762 = vmatmul.mubr.f32.gmra.mrb[0].mxu0 %v2575
      %v2763 = vpop.f32.mrb[0].mxu0
      %v2764 = vadd.f32 0.0, %v2763
      %v2765 = vpop.f32.mrb[0].mxu0
      %2766 = vmatprep.mubr.f32.mxu0 0.0
      %2767 = vmatmul.mubr.f32.gmra.mrb[0].mxu0 %v2578
      %v2768 = vpop.f32.mrb[0].mxu0
      %v2769 = vadd.f32 0.0, %v2768
      %v2770 = vpop.f32.mrb[0].mxu0
      %2771 = vmatprep.mubr.f32.mxu0 0.0
      %2772 = vmatmul.mubr.f32.gmra.mrb[0].mxu0 %v2581
      %v2773 = vpop.f32.mrb[0].mxu0
      %v2774 = vadd.f32 0.0, %v2773
      %v2775 = vpop.f32.mrb[0].mxu0
      %2776 = vmatprep.mubr.f32.mxu0 0.0
      %2777 = vmatmul.mubr.f32.gmra.mrb[0].mxu0 %v2584
      %v2778 = vpop.f32.mrb[0].mxu0
      %v2779 = vadd.f32 0.0, %v2778
      %v2780 = vpop.f32.mrb[0].mxu0
      %2781 = vmatprep.mubr.f32.mxu0 0.0
      %2782 = vmatmul.mubr.f32.gmra.mrb[0].mxu0 %v2587
      %v2783 = vpop.f32.mrb[0].mxu0
      %v2784 = vadd.f32 0.0, %v2783
      %v2785 = vpop.f32.mrb[0].mxu0
      %2786 = vmatprep.mubr.f32.mxu0 0.0
      %2787 = vmatmul.mubr.f32.gmra.mrb[0].mxu0 %v2590
      %v2788 = vpop.f32.mrb[0].mxu0
      %v2789 = vadd.f32 0.0, %v2788
      %v2790 = vpop.f32.mrb[0].mxu0
      %2791 = vmatprep.mubr.f32.mxu0 0.0
      %2792 = vmatmul.mubr.f32.gmra.mrb[0].mxu0 %v2593
      %v2793 = vpop.f32.mrb[0].mxu0
      %v2794 = vadd.f32 0.0, %v2793
      %v2795 = vpop.f32.mrb[0].mxu0
      %2796 = vmatprep.mubr.f32.mxu0 0.0
      %2797 = vmatmul.mubr.f32.gmra.mrb[0].mxu0 %v2596
      %v2798 = vpop.f32.mrb[0].mxu0
      %v2799 = vadd.f32 0.0, %v2798
      %v2800 = vpop.f32.mrb[0].mxu0
      %2801 = vmatprep.mubr.f32.mxu0 0.0
      %2802 = vmatmul.mubr.f32.gmra.mrb[0].mxu0 %v2599
      %v2803 = vpop.f32.mrb[0].mxu0
      %v2804 = vadd.f32 0.0, %v2803
      %v2805 = vpop.f32.mrb[0].mxu0
      %2806 = vmatprep.mubr.f32.mxu0 0.0
      %2807 = vmatmul.mubr.f32.gmra.mrb[0].mxu0 %v2602
      %v2808 = vpop.f32.mrb[0].mxu0
      %v2809 = vadd.f32 0.0, %v2808
      %v2810 = vpop.f32.mrb[0].mxu0
      %2811 = vmatprep.mubr.f32.mxu0 0.0
      %2812 = vmatmul.mubr.f32.gmra.mrb[0].mxu0 %v2605
      %v2813 = vpop.f32.mrb[0].mxu0
      %v2814 = vadd.f32 0.0, %v2813
      %v2815 = vpop.f32.mrb[0].mxu0
      %2816 = vmatprep.mubr.f32.mxu0 0.0
      %2817 = vmatmul.mubr.f32.gmra.mrb[0].mxu0 %v2608
      %v2818 = vpop.f32.mrb[0].mxu0
      %v2819 = vadd.f32 0.0, %v2818
      %v2820 = vpop.f32.mrb[0].mxu0
      %2821 = vmatprep.mubr.f32.mxu0 0.0
      %2822 = vmatmul.mubr.f32.gmra.mrb[0].mxu0 %v2611
      %v2823 = vpop.f32.mrb[0].mxu0
      %v2824 = vadd.f32 0.0, %v2823
      %v2825 = vpop.f32.mrb[0].mxu0
      %2826 = vmatprep.mubr.f32.mxu0 0.0
      %2827 = vmatmul.mubr.f32.gmra.mrb[0].mxu0 %v2614
      %v2828 = vpop.f32.mrb[0].mxu0
      %v2829 = vadd.f32 0.0, %v2828
      %v2830 = vpop.f32.mrb[0].mxu0
      %2831 = vmatprep.mubr.f32.mxu0 0.0
      %2832 = vmatmul.mubr.f32.gmra.mrb[0].mxu0 %v2617
      %v2833 = vpop.f32.mrb[0].mxu0
      %v2834 = vadd.f32 0.0, %v2833
      %v2835 = vpop.f32.mrb[0].mxu0
      %2836 = vmatprep.mubr.f32.mxu0 0.0
      %2837 = vmatmul.mubr.f32.gmra.mrb[0].mxu0 %v2620
      %v2838 = vpop.f32.mrb[0].mxu0
      %v2839 = vadd.f32 0.0, %v2838
      %v2840 = vpop.f32.mrb[0].mxu0
      %2841 = vmatprep.mubr.f32.mxu0 0.0
      %2842 = vmatmul.mubr.f32.gmra.mrb[0].mxu0 %v2623
      %v2843 = vpop.f32.mrb[0].mxu0
      %v2844 = vadd.f32 0.0, %v2843
      %v2845 = vpop.f32.mrb[0].mxu0
      %2846 = vmatprep.mubr.f32.mxu0 0.0
      %2847 = vmatmul.mubr.f32.gmra.mrb[0].mxu0 %v2626
      %v2848 = vpop.f32.mrb[0].mxu0
      %v2849 = vadd.f32 0.0, %v2848
      %v2850 = vpop.f32.mrb[0].mxu0
      %2851 = vmatprep.mubr.f32.mxu0 0.0
      %2852 = vmatmul.mubr.f32.gmra.mrb[0].mxu0 %v2629
      %v2853 = vpop.f32.mrb[0].mxu0
      %v2854 = vadd.f32 0.0, %v2853
      %v2855 = vpop.f32.mrb[0].mxu0
      %2856 = vmatprep.mubr.f32.mxu0 0.0
      %2857 = vmatmul.mubr.f32.gmra.mrb[0].mxu0 %v2632
      %v2858 = vpop.f32.mrb[0].mxu0
      %v2859 = vadd.f32 0.0, %v2858
      %v2860 = vpop.f32.mrb[0].mxu0
      %2861 = vdwg.mxu0
      %v2862 = vadd.f32 %v2471, %v2704
      %v2863 = vadd.f32 %v2472, %v2709
      %v2864 = vadd.f32 %v2473, %v2714
      %v2865 = vadd.f32 %v2474, %v2719
      %v2866 = vadd.f32 %v2475, %v2724
      %v2867 = vadd.f32 %v2476, %v2729
      %v2868 = vadd.f32 %v2477, %v2734
      %v2869 = vadd.f32 %v2478, %v2739
      %v2870 = vadd.f32 %v2479, %v2744
      %v2871 = vadd.f32 %v2480, %v2749
      %v2872 = vadd.f32 %v2481, %v2754
      %v2873 = vadd.f32 %v2482, %v2759
      %v2874 = vadd.f32 %v2483, %v2764
      %v2875 = vadd.f32 %v2484, %v2769
      %v2876 = vadd.f32 %v2485, %v2774
      %v2877 = vadd.f32 %v2486, %v2779
      %v2878 = vadd.f32 %v2487, %v2784
      %v2879 = vadd.f32 %v2488, %v2789
      %v2880 = vadd.f32 %v2489, %v2794
      %v2881 = vadd.f32 %v2490, %v2799
      %v2882 = vadd.f32 %v2491, %v2804
      %v2883 = vadd.f32 %v2492, %v2809
      %v2884 = vadd.f32 %v2493, %v2814
      %v2885 = vadd.f32 %v2494, %v2819
      %v2886 = vadd.f32 %v2495, %v2824
      %v2887 = vadd.f32 %v2496, %v2829
      %v2888 = vadd.f32 %v2497, %v2834
      %v2889 = vadd.f32 %v2498, %v2839
      %v2890 = vadd.f32 %v2499, %v2844
      %v2891 = vadd.f32 %v2500, %v2849
      %v2892 = vadd.f32 %v2501, %v2854
      %v2893 = vadd.f32 %v2502, %v2859
      %v2894 = vld [vmem:[%s2503 + $0x1] sm:$0xff]
      %v2895 = vld [vmem:[%s2503 + $0x9] sm:$0xff]
      %v2896 = vld [vmem:[%s2503 + $0x19] sm:$0xff]
      %v2897 = vld [vmem:[%s2503 + $0x21] sm:$0xff]
      %v2898 = vld [vmem:[%s2503 + $0x31] sm:$0xff]
      %v2899 = vld [vmem:[%s2503 + $0x39] sm:$0xff]
      %v2900 = vld [vmem:[%s2503 + $0x49] sm:$0xff]
      %v2901 = vld [vmem:[%s2503 + $0x51] sm:$0xff]
      %v2902 = vld [vmem:[%s2503 + $0x61] sm:$0xff]
      %v2903 = vld [vmem:[%s2503 + $0x69] sm:$0xff]
      %v2904 = vld [vmem:[%s2503 + $0x79] sm:$0xff]
      %v2905 = vld [vmem:[%s2503 + $0x81] sm:$0xff]
      %v2906 = vld [vmem:[%s2503 + $0x91] sm:$0xff]
      %v2907 = vld [vmem:[%s2503 + $0x99] sm:$0xff]
      %v2908 = vld [vmem:[%s2503 + $0xa9] sm:$0xff]
      %v2909 = vld [vmem:[%s2503 + $0xb1] sm:$0xff]
      %v2910 = vld [vmem:[%s2503 + $0xc1] sm:$0xff]
      %v2911 = vld [vmem:[%s2503 + $0xc9] sm:$0xff]
      %v2912 = vld [vmem:[%s2503 + $0xd9] sm:$0xff]
      %v2913 = vld [vmem:[%s2503 + $0xe1] sm:$0xff]
      %v2914 = vld [vmem:[%s2503 + $0xf1] sm:$0xff]
      %v2915 = vld [vmem:[%s2503 + $0xf9] sm:$0xff]
      %v2916 = vld [vmem:[%s2503 + $0x109] sm:$0xff]
      %v2917 = vld [vmem:[%s2503 + $0x111] sm:$0xff]
      %v2918 = vld [vmem:[%s2503 + $0x121] sm:$0xff]
      %v2919 = vld [vmem:[%s2503 + $0x129] sm:$0xff]
      %v2920 = vld [vmem:[%s2503 + $0x139] sm:$0xff]
      %v2921 = vld [vmem:[%s2503 + $0x141] sm:$0xff]
      %v2922 = vld [vmem:[%s2503 + $0x151] sm:$0xff]
      %v2923 = vld [vmem:[%s2503 + $0x159] sm:$0xff]
      %v2924 = vld [vmem:[%s2503 + $0x169] sm:$0xff]
      %v2925 = vld [vmem:[%s2503 + $0x171] sm:$0xff]
      %s2926 = scalar_lea.vmem %s1, 28
      %v2927 = vld [vmem:[%s2926] sm:$0xf]
      %v2929 = vsel %vm292, %v2894, 0
      %v2932 = vsel %vm292, %v2895, 0
      %v2935 = vsel %vm292, %v2896, 0
      %v2938 = vsel %vm292, %v2897, 0
      %v2941 = vsel %vm292, %v2898, 0
      %v2944 = vsel %vm292, %v2899, 0
      %v2947 = vsel %vm292, %v2900, 0
      %v2950 = vsel %vm292, %v2901, 0
      %v2953 = vsel %vm292, %v2902, 0
      %v2956 = vsel %vm292, %v2903, 0
      %v2959 = vsel %vm292, %v2904, 0
      %v2962 = vsel %vm292, %v2905, 0
      %v2965 = vsel %vm292, %v2906, 0
      %v2968 = vsel %vm292, %v2907, 0
      %v2971 = vsel %vm292, %v2908, 0
      %v2974 = vsel %vm292, %v2909, 0
      %v2977 = vsel %vm292, %v2910, 0
      %v2980 = vsel %vm292, %v2911, 0
      %v2983 = vsel %vm292, %v2912, 0
      %v2986 = vsel %vm292, %v2913, 0
      %v2989 = vsel %vm292, %v2914, 0
      %v2992 = vsel %vm292, %v2915, 0
      %v2995 = vsel %vm292, %v2916, 0
      %v2998 = vsel %vm292, %v2917, 0
      %v3001 = vsel %vm292, %v2918, 0
      %v3004 = vsel %vm292, %v2919, 0
      %v3007 = vsel %vm292, %v2920, 0
      %v3010 = vsel %vm292, %v2921, 0
      %v3013 = vsel %vm292, %v2922, 0
      %v3016 = vsel %vm292, %v2923, 0
      %v3019 = vsel %vm292, %v2924, 0
      %v3022 = vsel %vm292, %v2925, 0
      %v3025 = vsel %vm389, %v2927, 0
      %3027 = vmatprep.subr.mxu0 0.0
      %3028 = vmatpush1.msra.mxu0 %v3025
      %3029 = vmatprep.subr.mxu0 0.0
      %3030 = vmatpush1.msra.mxu0 0.0
      %3031 = vmatprep.subr.mxu0 0.0
      %3032 = vmatpush1.msra.mxu0 0.0
      %3033 = vmatprep.subr.mxu0 0.0
      %3034 = vmatpush1.msra.mxu0 0.0
      %3035 = vmatprep.subr.mxu0 0.0
      %3036 = vmatpush1.msra.mxu0 0.0
      %3037 = vmatprep.subr.mxu0 0.0
      %3038 = vmatpush1.msra.mxu0 0.0
      %3039 = vmatprep.subr.mxu0 0.0
      %3040 = vmatpush1.msra.mxu0 0.0
      %3041 = vmatprep.subr.mxu0 0.0
      %3042 = vmatpush1.msra.mxu0 0.0
      %3043 = vmatprep.subr.mxu0 0.0
      %3044 = vmatpush1.msra.mxu0 0.0
      %3045 = vmatprep.subr.mxu0 0.0
      %3046 = vmatpush1.msra.mxu0 0.0
      %3047 = vmatprep.subr.mxu0 0.0
      %3048 = vmatpush1.msra.mxu0 0.0
      %3049 = vmatprep.subr.mxu0 0.0
      %3050 = vmatpush1.msra.mxu0 0.0
      %3051 = vmatprep.subr.mxu0 0.0
      %3052 = vmatpush1.msra.mxu0 0.0
      %3053 = vmatprep.subr.mxu0 0.0
      %3054 = vmatpush1.msra.mxu0 0.0
      %3055 = vmatprep.subr.mxu0 0.0
      %3056 = vmatpush1.msra.mxu0 0.0
      %3057 = vmatprep.subr.mxu0 0.0
      %3058 = vmatpush1.msra.mxu0 0.0
      %3059 = vmatprep.subr.mxu0 0.0
      %3060 = vmatpush1.msra.mxu0 0.0
      %3061 = vmatprep.subr.mxu0 0.0
      %3062 = vmatpush1.msra.mxu0 0.0
      %3063 = vmatprep.subr.mxu0 0.0
      %3064 = vmatpush1.msra.mxu0 0.0
      %3065 = vmatprep.subr.mxu0 0.0
      %3066 = vmatpush1.msra.mxu0 0.0
      %3067 = vmatprep.subr.mxu0 0.0
      %3068 = vmatpush1.msra.mxu0 0.0
      %3069 = vmatprep.subr.mxu0 0.0
      %3070 = vmatpush1.msra.mxu0 0.0
      %3071 = vmatprep.subr.mxu0 0.0
      %3072 = vmatpush1.msra.mxu0 0.0
      %3073 = vmatprep.subr.mxu0 0.0
      %3074 = vmatpush1.msra.mxu0 0.0
      %3075 = vmatprep.subr.mxu0 0.0
      %3076 = vmatpush1.msra.mxu0 0.0
      %3077 = vmatprep.subr.mxu0 0.0
      %3078 = vmatpush1.msra.mxu0 0.0
      %3079 = vmatprep.subr.mxu0 0.0
      %3080 = vmatpush1.msra.mxu0 0.0
      %3081 = vmatprep.subr.mxu0 0.0
      %3082 = vmatpush1.msra.mxu0 0.0
      %3083 = vmatprep.subr.mxu0 0.0
      %3084 = vmatpush1.msra.mxu0 0.0
      %3085 = vmatprep.subr.mxu0 0.0
      %3086 = vmatpush1.msra.mxu0 0.0
      %3087 = vmatprep.subr.mxu0 0.0
      %3088 = vmatpush1.msra.mxu0 0.0
      %3089 = vmatprep.subr.mxu0 0.0
      %3090 = vmatpush1.msra.mxu0 0.0
      %3091 = vmatprep.mubr.f32.mxu0 0.0
      %3092 = vmatmul.mubr.f32.gmra.mrb[0].mxu0 %v2929
      %v3093 = vpop.f32.mrb[0].mxu0
      %v3094 = vadd.f32 0.0, %v3093
      %v3095 = vpop.f32.mrb[0].mxu0
      %3096 = vmatprep.mubr.f32.mxu0 0.0
      %3097 = vmatmul.mubr.f32.gmra.mrb[0].mxu0 %v2932
      %v3098 = vpop.f32.mrb[0].mxu0
      %v3099 = vadd.f32 0.0, %v3098
      %v3100 = vpop.f32.mrb[0].mxu0
      %3101 = vmatprep.mubr.f32.mxu0 0.0
      %3102 = vmatmul.mubr.f32.gmra.mrb[0].mxu0 %v2935
      %v3103 = vpop.f32.mrb[0].mxu0
      %v3104 = vadd.f32 0.0, %v3103
      %v3105 = vpop.f32.mrb[0].mxu0
      %3106 = vmatprep.mubr.f32.mxu0 0.0
      %3107 = vmatmul.mubr.f32.gmra.mrb[0].mxu0 %v2938
      %v3108 = vpop.f32.mrb[0].mxu0
      %v3109 = vadd.f32 0.0, %v3108
      %v3110 = vpop.f32.mrb[0].mxu0
      %3111 = vmatprep.mubr.f32.mxu0 0.0
      %3112 = vmatmul.mubr.f32.gmra.mrb[0].mxu0 %v2941
      %v3113 = vpop.f32.mrb[0].mxu0
      %v3114 = vadd.f32 0.0, %v3113
      %v3115 = vpop.f32.mrb[0].mxu0
      %3116 = vmatprep.mubr.f32.mxu0 0.0
      %3117 = vmatmul.mubr.f32.gmra.mrb[0].mxu0 %v2944
      %v3118 = vpop.f32.mrb[0].mxu0
      %v3119 = vadd.f32 0.0, %v3118
      %v3120 = vpop.f32.mrb[0].mxu0
      %3121 = vmatprep.mubr.f32.mxu0 0.0
      %3122 = vmatmul.mubr.f32.gmra.mrb[0].mxu0 %v2947
      %v3123 = vpop.f32.mrb[0].mxu0
      %v3124 = vadd.f32 0.0, %v3123
      %v3125 = vpop.f32.mrb[0].mxu0
      %3126 = vmatprep.mubr.f32.mxu0 0.0
      %3127 = vmatmul.mubr.f32.gmra.mrb[0].mxu0 %v2950
      %v3128 = vpop.f32.mrb[0].mxu0
      %v3129 = vadd.f32 0.0, %v3128
      %v3130 = vpop.f32.mrb[0].mxu0
      %3131 = vmatprep.mubr.f32.mxu0 0.0
      %3132 = vmatmul.mubr.f32.gmra.mrb[0].mxu0 %v2953
      %v3133 = vpop.f32.mrb[0].mxu0
      %v3134 = vadd.f32 0.0, %v3133
      %v3135 = vpop.f32.mrb[0].mxu0
      %3136 = vmatprep.mubr.f32.mxu0 0.0
      %3137 = vmatmul.mubr.f32.gmra.mrb[0].mxu0 %v2956
      %v3138 = vpop.f32.mrb[0].mxu0
      %v3139 = vadd.f32 0.0, %v3138
      %v3140 = vpop.f32.mrb[0].mxu0
      %3141 = vmatprep.mubr.f32.mxu0 0.0
      %3142 = vmatmul.mubr.f32.gmra.mrb[0].mxu0 %v2959
      %v3143 = vpop.f32.mrb[0].mxu0
      %v3144 = vadd.f32 0.0, %v3143
      %v3145 = vpop.f32.mrb[0].mxu0
      %3146 = vmatprep.mubr.f32.mxu0 0.0
      %3147 = vmatmul.mubr.f32.gmra.mrb[0].mxu0 %v2962
      %v3148 = vpop.f32.mrb[0].mxu0
      %v3149 = vadd.f32 0.0, %v3148
      %v3150 = vpop.f32.mrb[0].mxu0
      %3151 = vmatprep.mubr.f32.mxu0 0.0
      %3152 = vmatmul.mubr.f32.gmra.mrb[0].mxu0 %v2965
      %v3153 = vpop.f32.mrb[0].mxu0
      %v3154 = vadd.f32 0.0, %v3153
      %v3155 = vpop.f32.mrb[0].mxu0
      %3156 = vmatprep.mubr.f32.mxu0 0.0
      %3157 = vmatmul.mubr.f32.gmra.mrb[0].mxu0 %v2968
      %v3158 = vpop.f32.mrb[0].mxu0
      %v3159 = vadd.f32 0.0, %v3158
      %v3160 = vpop.f32.mrb[0].mxu0
      %3161 = vmatprep.mubr.f32.mxu0 0.0
      %3162 = vmatmul.mubr.f32.gmra.mrb[0].mxu0 %v2971
      %v3163 = vpop.f32.mrb[0].mxu0
      %v3164 = vadd.f32 0.0, %v3163
      %v3165 = vpop.f32.mrb[0].mxu0
      %3166 = vmatprep.mubr.f32.mxu0 0.0
      %3167 = vmatmul.mubr.f32.gmra.mrb[0].mxu0 %v2974
      %v3168 = vpop.f32.mrb[0].mxu0
      %v3169 = vadd.f32 0.0, %v3168
      %v3170 = vpop.f32.mrb[0].mxu0
      %3171 = vmatprep.mubr.f32.mxu0 0.0
      %3172 = vmatmul.mubr.f32.gmra.mrb[0].mxu0 %v2977
      %v3173 = vpop.f32.mrb[0].mxu0
      %v3174 = vadd.f32 0.0, %v3173
      %v3175 = vpop.f32.mrb[0].mxu0
      %3176 = vmatprep.mubr.f32.mxu0 0.0
      %3177 = vmatmul.mubr.f32.gmra.mrb[0].mxu0 %v2980
      %v3178 = vpop.f32.mrb[0].mxu0
      %v3179 = vadd.f32 0.0, %v3178
      %v3180 = vpop.f32.mrb[0].mxu0
      %3181 = vmatprep.mubr.f32.mxu0 0.0
      %3182 = vmatmul.mubr.f32.gmra.mrb[0].mxu0 %v2983
      %v3183 = vpop.f32.mrb[0].mxu0
      %v3184 = vadd.f32 0.0, %v3183
      %v3185 = vpop.f32.mrb[0].mxu0
      %3186 = vmatprep.mubr.f32.mxu0 0.0
      %3187 = vmatmul.mubr.f32.gmra.mrb[0].mxu0 %v2986
      %v3188 = vpop.f32.mrb[0].mxu0
      %v3189 = vadd.f32 0.0, %v3188
      %v3190 = vpop.f32.mrb[0].mxu0
      %3191 = vmatprep.mubr.f32.mxu0 0.0
      %3192 = vmatmul.mubr.f32.gmra.mrb[0].mxu0 %v2989
      %v3193 = vpop.f32.mrb[0].mxu0
      %v3194 = vadd.f32 0.0, %v3193
      %v3195 = vpop.f32.mrb[0].mxu0
      %3196 = vmatprep.mubr.f32.mxu0 0.0
      %3197 = vmatmul.mubr.f32.gmra.mrb[0].mxu0 %v2992
      %v3198 = vpop.f32.mrb[0].mxu0
      %v3199 = vadd.f32 0.0, %v3198
      %v3200 = vpop.f32.mrb[0].mxu0
      %3201 = vmatprep.mubr.f32.mxu0 0.0
      %3202 = vmatmul.mubr.f32.gmra.mrb[0].mxu0 %v2995
      %v3203 = vpop.f32.mrb[0].mxu0
      %v3204 = vadd.f32 0.0, %v3203
      %v3205 = vpop.f32.mrb[0].mxu0
      %3206 = vmatprep.mubr.f32.mxu0 0.0
      %3207 = vmatmul.mubr.f32.gmra.mrb[0].mxu0 %v2998
      %v3208 = vpop.f32.mrb[0].mxu0
      %v3209 = vadd.f32 0.0, %v3208
      %v3210 = vpop.f32.mrb[0].mxu0
      %3211 = vmatprep.mubr.f32.mxu0 0.0
      %3212 = vmatmul.mubr.f32.gmra.mrb[0].mxu0 %v3001
      %v3213 = vpop.f32.mrb[0].mxu0
      %v3214 = vadd.f32 0.0, %v3213
      %v3215 = vpop.f32.mrb[0].mxu0
      %3216 = vmatprep.mubr.f32.mxu0 0.0
      %3217 = vmatmul.mubr.f32.gmra.mrb[0].mxu0 %v3004
      %v3218 = vpop.f32.mrb[0].mxu0
      %v3219 = vadd.f32 0.0, %v3218
      %v3220 = vpop.f32.mrb[0].mxu0
      %3221 = vmatprep.mubr.f32.mxu0 0.0
      %3222 = vmatmul.mubr.f32.gmra.mrb[0].mxu0 %v3007
      %v3223 = vpop.f32.mrb[0].mxu0
      %v3224 = vadd.f32 0.0, %v3223
      %v3225 = vpop.f32.mrb[0].mxu0
      %3226 = vmatprep.mubr.f32.mxu0 0.0
      %3227 = vmatmul.mubr.f32.gmra.mrb[0].mxu0 %v3010
      %v3228 = vpop.f32.mrb[0].mxu0
      %v3229 = vadd.f32 0.0, %v3228
      %v3230 = vpop.f32.mrb[0].mxu0
      %3231 = vmatprep.mubr.f32.mxu0 0.0
      %3232 = vmatmul.mubr.f32.gmra.mrb[0].mxu0 %v3013
      %v3233 = vpop.f32.mrb[0].mxu0
      %v3234 = vadd.f32 0.0, %v3233
      %v3235 = vpop.f32.mrb[0].mxu0
      %3236 = vmatprep.mubr.f32.mxu0 0.0
      %3237 = vmatmul.mubr.f32.gmra.mrb[0].mxu0 %v3016
      %v3238 = vpop.f32.mrb[0].mxu0
      %v3239 = vadd.f32 0.0, %v3238
      %v3240 = vpop.f32.mrb[0].mxu0
      %3241 = vmatprep.mubr.f32.mxu0 0.0
      %3242 = vmatmul.mubr.f32.gmra.mrb[0].mxu0 %v3019
      %v3243 = vpop.f32.mrb[0].mxu0
      %v3244 = vadd.f32 0.0, %v3243
      %v3245 = vpop.f32.mrb[0].mxu0
      %3246 = vmatprep.mubr.f32.mxu0 0.0
      %3247 = vmatmul.mubr.f32.gmra.mrb[0].mxu0 %v3022
      %v3248 = vpop.f32.mrb[0].mxu0
      %v3249 = vadd.f32 0.0, %v3248
      %v3250 = vpop.f32.mrb[0].mxu0
      %3251 = vdwg.mxu0
      %v3252 = vadd.f32 %v2862, %v3094
      %v3253 = vadd.f32 %v2863, %v3099
      %v3254 = vadd.f32 %v2864, %v3104
      %v3255 = vadd.f32 %v2865, %v3109
      %v3256 = vadd.f32 %v2866, %v3114
      %v3257 = vadd.f32 %v2867, %v3119
      %v3258 = vadd.f32 %v2868, %v3124
      %v3259 = vadd.f32 %v2869, %v3129
      %v3260 = vadd.f32 %v2870, %v3134
      %v3261 = vadd.f32 %v2871, %v3139
      %v3262 = vadd.f32 %v2872, %v3144
      %v3263 = vadd.f32 %v2873, %v3149
      %v3264 = vadd.f32 %v2874, %v3154
      %v3265 = vadd.f32 %v2875, %v3159
      %v3266 = vadd.f32 %v2876, %v3164
      %v3267 = vadd.f32 %v2877, %v3169
      %v3268 = vadd.f32 %v2878, %v3174
      %v3269 = vadd.f32 %v2879, %v3179
      %v3270 = vadd.f32 %v2880, %v3184
      %v3271 = vadd.f32 %v2881, %v3189
      %v3272 = vadd.f32 %v2882, %v3194
      %v3273 = vadd.f32 %v2883, %v3199
      %v3274 = vadd.f32 %v2884, %v3204
      %v3275 = vadd.f32 %v2885, %v3209
      %v3276 = vadd.f32 %v2886, %v3214
      %v3277 = vadd.f32 %v2887, %v3219
      %v3278 = vadd.f32 %v2888, %v3224
      %v3279 = vadd.f32 %v2889, %v3229
      %v3280 = vadd.f32 %v2890, %v3234
      %v3281 = vadd.f32 %v2891, %v3239
      %v3282 = vadd.f32 %v2892, %v3244
      %v3283 = vadd.f32 %v2893, %v3249
      %v3284 = vld [vmem:[%s2503 + $0x2] sm:$0xff]
      %v3285 = vld [vmem:[%s2503 + $0xa] sm:$0xff]
      %v3286 = vld [vmem:[%s2503 + $0x1a] sm:$0xff]
      %v3287 = vld [vmem:[%s2503 + $0x22] sm:$0xff]
      %v3288 = vld [vmem:[%s2503 + $0x32] sm:$0xff]
      %v3289 = vld [vmem:[%s2503 + $0x3a] sm:$0xff]
      %v3290 = vld [vmem:[%s2503 + $0x4a] sm:$0xff]
      %v3291 = vld [vmem:[%s2503 + $0x52] sm:$0xff]
      %v3292 = vld [vmem:[%s2503 + $0x62] sm:$0xff]
      %v3293 = vld [vmem:[%s2503 + $0x6a] sm:$0xff]
      %v3294 = vld [vmem:[%s2503 + $0x7a] sm:$0xff]
      %v3295 = vld [vmem:[%s2503 + $0x82] sm:$0xff]
      %v3296 = vld [vmem:[%s2503 + $0x92] sm:$0xff]
      %v3297 = vld [vmem:[%s2503 + $0x9a] sm:$0xff]
      %v3298 = vld [vmem:[%s2503 + $0xaa] sm:$0xff]
      %v3299 = vld [vmem:[%s2503 + $0xb2] sm:$0xff]
      %v3300 = vld [vmem:[%s2503 + $0xc2] sm:$0xff]
      %v3301 = vld [vmem:[%s2503 + $0xca] sm:$0xff]
      %v3302 = vld [vmem:[%s2503 + $0xda] sm:$0xff]
      %v3303 = vld [vmem:[%s2503 + $0xe2] sm:$0xff]
      %v3304 = vld [vmem:[%s2503 + $0xf2] sm:$0xff]
      %v3305 = vld [vmem:[%s2503 + $0xfa] sm:$0xff]
      %v3306 = vld [vmem:[%s2503 + $0x10a] sm:$0xff]
      %v3307 = vld [vmem:[%s2503 + $0x112] sm:$0xff]
      %v3308 = vld [vmem:[%s2503 + $0x122] sm:$0xff]
      %v3309 = vld [vmem:[%s2503 + $0x12a] sm:$0xff]
      %v3310 = vld [vmem:[%s2503 + $0x13a] sm:$0xff]
      %v3311 = vld [vmem:[%s2503 + $0x142] sm:$0xff]
      %v3312 = vld [vmem:[%s2503 + $0x152] sm:$0xff]
      %v3313 = vld [vmem:[%s2503 + $0x15a] sm:$0xff]
      %v3314 = vld [vmem:[%s2503 + $0x16a] sm:$0xff]
      %v3315 = vld [vmem:[%s2503 + $0x172] sm:$0xff]
      %s3316 = scalar_lea.vmem %s1, 32
      %v3317 = vld [vmem:[%s3316] sm:$0xf]
      %v3319 = vsel %vm292, %v3284, 0
      %v3322 = vsel %vm292, %v3285, 0
      %v3325 = vsel %vm292, %v3286, 0
      %v3328 = vsel %vm292, %v3287, 0
      %v3331 = vsel %vm292, %v3288, 0
      %v3334 = vsel %vm292, %v3289, 0
      %v3337 = vsel %vm292, %v3290, 0
      %v3340 = vsel %vm292, %v3291, 0
      %v3343 = vsel %vm292, %v3292, 0
      %v3346 = vsel %vm292, %v3293, 0
      %v3349 = vsel %vm292, %v3294, 0
      %v3352 = vsel %vm292, %v3295, 0
      %v3355 = vsel %vm292, %v3296, 0
      %v3358 = vsel %vm292, %v3297, 0
      %v3361 = vsel %vm292, %v3298, 0
      %v3364 = vsel %vm292, %v3299, 0
      %v3367 = vsel %vm292, %v3300, 0
      %v3370 = vsel %vm292, %v3301, 0
      %v3373 = vsel %vm292, %v3302, 0
      %v3376 = vsel %vm292, %v3303, 0
      %v3379 = vsel %vm292, %v3304, 0
      %v3382 = vsel %vm292, %v3305, 0
      %v3385 = vsel %vm292, %v3306, 0
      %v3388 = vsel %vm292, %v3307, 0
      %v3391 = vsel %vm292, %v3308, 0
      %v3394 = vsel %vm292, %v3309, 0
      %v3397 = vsel %vm292, %v3310, 0
      %v3400 = vsel %vm292, %v3311, 0
      %v3403 = vsel %vm292, %v3312, 0
      %v3406 = vsel %vm292, %v3313, 0
      %v3409 = vsel %vm292, %v3314, 0
      %v3412 = vsel %vm292, %v3315, 0
      %v3415 = vsel %vm389, %v3317, 0
      %3417 = vmatprep.subr.mxu0 0.0
      %3418 = vmatpush1.msra.mxu0 %v3415
      %3419 = vmatprep.subr.mxu0 0.0
      %3420 = vmatpush1.msra.mxu0 0.0
      %3421 = vmatprep.subr.mxu0 0.0
      %3422 = vmatpush1.msra.mxu0 0.0
      %3423 = vmatprep.subr.mxu0 0.0
      %3424 = vmatpush1.msra.mxu0 0.0
      %3425 = vmatprep.subr.mxu0 0.0
      %3426 = vmatpush1.msra.mxu0 0.0
      %3427 = vmatprep.subr.mxu0 0.0
      %3428 = vmatpush1.msra.mxu0 0.0
      %3429 = vmatprep.subr.mxu0 0.0
      %3430 = vmatpush1.msra.mxu0 0.0
      %3431 = vmatprep.subr.mxu0 0.0
      %3432 = vmatpush1.msra.mxu0 0.0
      %3433 = vmatprep.subr.mxu0 0.0
      %3434 = vmatpush1.msra.mxu0 0.0
      %3435 = vmatprep.subr.mxu0 0.0
      %3436 = vmatpush1.msra.mxu0 0.0
      %3437 = vmatprep.subr.mxu0 0.0
      %3438 = vmatpush1.msra.mxu0 0.0
      %3439 = vmatprep.subr.mxu0 0.0
      %3440 = vmatpush1.msra.mxu0 0.0
      %3441 = vmatprep.subr.mxu0 0.0
      %3442 = vmatpush1.msra.mxu0 0.0
      %3443 = vmatprep.subr.mxu0 0.0
      %3444 = vmatpush1.msra.mxu0 0.0
      %3445 = vmatprep.subr.mxu0 0.0
      %3446 = vmatpush1.msra.mxu0 0.0
      %3447 = vmatprep.subr.mxu0 0.0
      %3448 = vmatpush1.msra.mxu0 0.0
      %3449 = vmatprep.subr.mxu0 0.0
      %3450 = vmatpush1.msra.mxu0 0.0
      %3451 = vmatprep.subr.mxu0 0.0
      %3452 = vmatpush1.msra.mxu0 0.0
      %3453 = vmatprep.subr.mxu0 0.0
      %3454 = vmatpush1.msra.mxu0 0.0
      %3455 = vmatprep.subr.mxu0 0.0
      %3456 = vmatpush1.msra.mxu0 0.0
      %3457 = vmatprep.subr.mxu0 0.0
      %3458 = vmatpush1.msra.mxu0 0.0
      %3459 = vmatprep.subr.mxu0 0.0
      %3460 = vmatpush1.msra.mxu0 0.0
      %3461 = vmatprep.subr.mxu0 0.0
      %3462 = vmatpush1.msra.mxu0 0.0
      %3463 = vmatprep.subr.mxu0 0.0
      %3464 = vmatpush1.msra.mxu0 0.0
      %3465 = vmatprep.subr.mxu0 0.0
      %3466 = vmatpush1.msra.mxu0 0.0
      %3467 = vmatprep.subr.mxu0 0.0
      %3468 = vmatpush1.msra.mxu0 0.0
      %3469 = vmatprep.subr.mxu0 0.0
      %3470 = vmatpush1.msra.mxu0 0.0
      %3471 = vmatprep.subr.mxu0 0.0
      %3472 = vmatpush1.msra.mxu0 0.0
      %3473 = vmatprep.subr.mxu0 0.0
      %3474 = vmatpush1.msra.mxu0 0.0
      %3475 = vmatprep.subr.mxu0 0.0
      %3476 = vmatpush1.msra.mxu0 0.0
      %3477 = vmatprep.subr.mxu0 0.0
      %3478 = vmatpush1.msra.mxu0 0.0
      %3479 = vmatprep.subr.mxu0 0.0
      %3480 = vmatpush1.msra.mxu0 0.0
      %3481 = vmatprep.mubr.f32.mxu0 0.0
      %3482 = vmatmul.mubr.f32.gmra.mrb[0].mxu0 %v3319
      %v3483 = vpop.f32.mrb[0].mxu0
      %v3484 = vadd.f32 0.0, %v3483
      %v3485 = vpop.f32.mrb[0].mxu0
      %3486 = vmatprep.mubr.f32.mxu0 0.0
      %3487 = vmatmul.mubr.f32.gmra.mrb[0].mxu0 %v3322
      %v3488 = vpop.f32.mrb[0].mxu0
      %v3489 = vadd.f32 0.0, %v3488
      %v3490 = vpop.f32.mrb[0].mxu0
      %3491 = vmatprep.mubr.f32.mxu0 0.0
      %3492 = vmatmul.mubr.f32.gmra.mrb[0].mxu0 %v3325
      %v3493 = vpop.f32.mrb[0].mxu0
      %v3494 = vadd.f32 0.0, %v3493
      %v3495 = vpop.f32.mrb[0].mxu0
      %3496 = vmatprep.mubr.f32.mxu0 0.0
      %3497 = vmatmul.mubr.f32.gmra.mrb[0].mxu0 %v3328
      %v3498 = vpop.f32.mrb[0].mxu0
      %v3499 = vadd.f32 0.0, %v3498
      %v3500 = vpop.f32.mrb[0].mxu0
      %3501 = vmatprep.mubr.f32.mxu0 0.0
      %3502 = vmatmul.mubr.f32.gmra.mrb[0].mxu0 %v3331
      %v3503 = vpop.f32.mrb[0].mxu0
      %v3504 = vadd.f32 0.0, %v3503
      %v3505 = vpop.f32.mrb[0].mxu0
      %3506 = vmatprep.mubr.f32.mxu0 0.0
      %3507 = vmatmul.mubr.f32.gmra.mrb[0].mxu0 %v3334
      %v3508 = vpop.f32.mrb[0].mxu0
      %v3509 = vadd.f32 0.0, %v3508
      %v3510 = vpop.f32.mrb[0].mxu0
      %3511 = vmatprep.mubr.f32.mxu0 0.0
      %3512 = vmatmul.mubr.f32.gmra.mrb[0].mxu0 %v3337
      %v3513 = vpop.f32.mrb[0].mxu0
      %v3514 = vadd.f32 0.0, %v3513
      %v3515 = vpop.f32.mrb[0].mxu0
      %3516 = vmatprep.mubr.f32.mxu0 0.0
      %3517 = vmatmul.mubr.f32.gmra.mrb[0].mxu0 %v3340
      %v3518 = vpop.f32.mrb[0].mxu0
      %v3519 = vadd.f32 0.0, %v3518
      %v3520 = vpop.f32.mrb[0].mxu0
      %3521 = vmatprep.mubr.f32.mxu0 0.0
      %3522 = vmatmul.mubr.f32.gmra.mrb[0].mxu0 %v3343
      %v3523 = vpop.f32.mrb[0].mxu0
      %v3524 = vadd.f32 0.0, %v3523
      %v3525 = vpop.f32.mrb[0].mxu0
      %3526 = vmatprep.mubr.f32.mxu0 0.0
      %3527 = vmatmul.mubr.f32.gmra.mrb[0].mxu0 %v3346
      %v3528 = vpop.f32.mrb[0].mxu0
      %v3529 = vadd.f32 0.0, %v3528
      %v3530 = vpop.f32.mrb[0].mxu0
      %3531 = vmatprep.mubr.f32.mxu0 0.0
      %3532 = vmatmul.mubr.f32.gmra.mrb[0].mxu0 %v3349
      %v3533 = vpop.f32.mrb[0].mxu0
      %v3534 = vadd.f32 0.0, %v3533
      %v3535 = vpop.f32.mrb[0].mxu0
      %3536 = vmatprep.mubr.f32.mxu0 0.0
      %3537 = vmatmul.mubr.f32.gmra.mrb[0].mxu0 %v3352
      %v3538 = vpop.f32.mrb[0].mxu0
      %v3539 = vadd.f32 0.0, %v3538
      %v3540 = vpop.f32.mrb[0].mxu0
      %3541 = vmatprep.mubr.f32.mxu0 0.0
      %3542 = vmatmul.mubr.f32.gmra.mrb[0].mxu0 %v3355
      %v3543 = vpop.f32.mrb[0].mxu0
      %v3544 = vadd.f32 0.0, %v3543
      %v3545 = vpop.f32.mrb[0].mxu0
      %3546 = vmatprep.mubr.f32.mxu0 0.0
      %3547 = vmatmul.mubr.f32.gmra.mrb[0].mxu0 %v3358
      %v3548 = vpop.f32.mrb[0].mxu0
      %v3549 = vadd.f32 0.0, %v3548
      %v3550 = vpop.f32.mrb[0].mxu0
      %3551 = vmatprep.mubr.f32.mxu0 0.0
      %3552 = vmatmul.mubr.f32.gmra.mrb[0].mxu0 %v3361
      %v3553 = vpop.f32.mrb[0].mxu0
      %v3554 = vadd.f32 0.0, %v3553
      %v3555 = vpop.f32.mrb[0].mxu0
      %3556 = vmatprep.mubr.f32.mxu0 0.0
      %3557 = vmatmul.mubr.f32.gmra.mrb[0].mxu0 %v3364
      %v3558 = vpop.f32.mrb[0].mxu0
      %v3559 = vadd.f32 0.0, %v3558
      %v3560 = vpop.f32.mrb[0].mxu0
      %3561 = vmatprep.mubr.f32.mxu0 0.0
      %3562 = vmatmul.mubr.f32.gmra.mrb[0].mxu0 %v3367
      %v3563 = vpop.f32.mrb[0].mxu0
      %v3564 = vadd.f32 0.0, %v3563
      %v3565 = vpop.f32.mrb[0].mxu0
      %3566 = vmatprep.mubr.f32.mxu0 0.0
      %3567 = vmatmul.mubr.f32.gmra.mrb[0].mxu0 %v3370
      %v3568 = vpop.f32.mrb[0].mxu0
      %v3569 = vadd.f32 0.0, %v3568
      %v3570 = vpop.f32.mrb[0].mxu0
      %3571 = vmatprep.mubr.f32.mxu0 0.0
      %3572 = vmatmul.mubr.f32.gmra.mrb[0].mxu0 %v3373
      %v3573 = vpop.f32.mrb[0].mxu0
      %v3574 = vadd.f32 0.0, %v3573
      %v3575 = vpop.f32.mrb[0].mxu0
      %3576 = vmatprep.mubr.f32.mxu0 0.0
      %3577 = vmatmul.mubr.f32.gmra.mrb[0].mxu0 %v3376
      %v3578 = vpop.f32.mrb[0].mxu0
      %v3579 = vadd.f32 0.0, %v3578
      %v3580 = vpop.f32.mrb[0].mxu0
      %3581 = vmatprep.mubr.f32.mxu0 0.0
      %3582 = vmatmul.mubr.f32.gmra.mrb[0].mxu0 %v3379
      %v3583 = vpop.f32.mrb[0].mxu0
      %v3584 = vadd.f32 0.0, %v3583
      %v3585 = vpop.f32.mrb[0].mxu0
      %3586 = vmatprep.mubr.f32.mxu0 0.0
      %3587 = vmatmul.mubr.f32.gmra.mrb[0].mxu0 %v3382
      %v3588 = vpop.f32.mrb[0].mxu0
      %v3589 = vadd.f32 0.0, %v3588
      %v3590 = vpop.f32.mrb[0].mxu0
      %3591 = vmatprep.mubr.f32.mxu0 0.0
      %3592 = vmatmul.mubr.f32.gmra.mrb[0].mxu0 %v3385
      %v3593 = vpop.f32.mrb[0].mxu0
      %v3594 = vadd.f32 0.0, %v3593
      %v3595 = vpop.f32.mrb[0].mxu0
      %3596 = vmatprep.mubr.f32.mxu0 0.0
      %3597 = vmatmul.mubr.f32.gmra.mrb[0].mxu0 %v3388
      %v3598 = vpop.f32.mrb[0].mxu0
      %v3599 = vadd.f32 0.0, %v3598
      %v3600 = vpop.f32.mrb[0].mxu0
      %3601 = vmatprep.mubr.f32.mxu0 0.0
      %3602 = vmatmul.mubr.f32.gmra.mrb[0].mxu0 %v3391
      %v3603 = vpop.f32.mrb[0].mxu0
      %v3604 = vadd.f32 0.0, %v3603
      %v3605 = vpop.f32.mrb[0].mxu0
      %3606 = vmatprep.mubr.f32.mxu0 0.0
      %3607 = vmatmul.mubr.f32.gmra.mrb[0].mxu0 %v3394
      %v3608 = vpop.f32.mrb[0].mxu0
      %v3609 = vadd.f32 0.0, %v3608
      %v3610 = vpop.f32.mrb[0].mxu0
      %3611 = vmatprep.mubr.f32.mxu0 0.0
      %3612 = vmatmul.mubr.f32.gmra.mrb[0].mxu0 %v3397
      %v3613 = vpop.f32.mrb[0].mxu0
      %v3614 = vadd.f32 0.0, %v3613
      %v3615 = vpop.f32.mrb[0].mxu0
      %3616 = vmatprep.mubr.f32.mxu0 0.0
      %3617 = vmatmul.mubr.f32.gmra.mrb[0].mxu0 %v3400
      %v3618 = vpop.f32.mrb[0].mxu0
      %v3619 = vadd.f32 0.0, %v3618
      %v3620 = vpop.f32.mrb[0].mxu0
      %3621 = vmatprep.mubr.f32.mxu0 0.0
      %3622 = vmatmul.mubr.f32.gmra.mrb[0].mxu0 %v3403
      %v3623 = vpop.f32.mrb[0].mxu0
      %v3624 = vadd.f32 0.0, %v3623
      %v3625 = vpop.f32.mrb[0].mxu0
      %3626 = vmatprep.mubr.f32.mxu0 0.0
      %3627 = vmatmul.mubr.f32.gmra.mrb[0].mxu0 %v3406
      %v3628 = vpop.f32.mrb[0].mxu0
      %v3629 = vadd.f32 0.0, %v3628
      %v3630 = vpop.f32.mrb[0].mxu0
      %3631 = vmatprep.mubr.f32.mxu0 0.0
      %3632 = vmatmul.mubr.f32.gmra.mrb[0].mxu0 %v3409
      %v3633 = vpop.f32.mrb[0].mxu0
      %v3634 = vadd.f32 0.0, %v3633
      %v3635 = vpop.f32.mrb[0].mxu0
      %3636 = vmatprep.mubr.f32.mxu0 0.0
      %3637 = vmatmul.mubr.f32.gmra.mrb[0].mxu0 %v3412
      %v3638 = vpop.f32.mrb[0].mxu0
      %v3639 = vadd.f32 0.0, %v3638
      %v3640 = vpop.f32.mrb[0].mxu0
      %3641 = vdwg.mxu0
      %v3642 = vadd.f32 %v3252, %v3484
      %v3643 = vadd.f32 %v3253, %v3489
      %v3644 = vadd.f32 %v3254, %v3494
      %v3645 = vadd.f32 %v3255, %v3499
      %v3646 = vadd.f32 %v3256, %v3504
      %v3647 = vadd.f32 %v3257, %v3509
      %v3648 = vadd.f32 %v3258, %v3514
      %v3649 = vadd.f32 %v3259, %v3519
      %v3650 = vadd.f32 %v3260, %v3524
      %v3651 = vadd.f32 %v3261, %v3529
      %v3652 = vadd.f32 %v3262, %v3534
      %v3653 = vadd.f32 %v3263, %v3539
      %v3654 = vadd.f32 %v3264, %v3544
      %v3655 = vadd.f32 %v3265, %v3549
      %v3656 = vadd.f32 %v3266, %v3554
      %v3657 = vadd.f32 %v3267, %v3559
      %v3658 = vadd.f32 %v3268, %v3564
      %v3659 = vadd.f32 %v3269, %v3569
      %v3660 = vadd.f32 %v3270, %v3574
      %v3661 = vadd.f32 %v3271, %v3579
      %v3662 = vadd.f32 %v3272, %v3584
      %v3663 = vadd.f32 %v3273, %v3589
      %v3664 = vadd.f32 %v3274, %v3594
      %v3665 = vadd.f32 %v3275, %v3599
      %v3666 = vadd.f32 %v3276, %v3604
      %v3667 = vadd.f32 %v3277, %v3609
      %v3668 = vadd.f32 %v3278, %v3614
      %v3669 = vadd.f32 %v3279, %v3619
      %v3670 = vadd.f32 %v3280, %v3624
      %v3671 = vadd.f32 %v3281, %v3629
      %v3672 = vadd.f32 %v3282, %v3634
      %v3673 = vadd.f32 %v3283, %v3639
      %v3674 = vld [vmem:[%s2] sm:$0x1]
      %v3676 = vlaneseq
      %v3677 = vshrl.u32 %v3676, 7
      %v3678 = vsub.s32 0, %v3677
      %v3679 = vrot.slane %v3674, %v3678
      %v3681 = vadd.f32 %v3642, %v3679
      %v3682 = vadd.f32 %v3643, %v3679
      %v3683 = vadd.f32 %v3644, %v3679
      %v3684 = vadd.f32 %v3645, %v3679
      %v3685 = vadd.f32 %v3646, %v3679
      %v3686 = vadd.f32 %v3647, %v3679
      %v3687 = vadd.f32 %v3648, %v3679
      %v3688 = vadd.f32 %v3649, %v3679
      %v3689 = vadd.f32 %v3650, %v3679
      %v3690 = vadd.f32 %v3651, %v3679
      %v3691 = vadd.f32 %v3652, %v3679
      %v3692 = vadd.f32 %v3653, %v3679
      %v3693 = vadd.f32 %v3654, %v3679
      %v3694 = vadd.f32 %v3655, %v3679
      %v3695 = vadd.f32 %v3656, %v3679
      %v3696 = vadd.f32 %v3657, %v3679
      %v3697 = vadd.f32 %v3658, %v3679
      %v3698 = vadd.f32 %v3659, %v3679
      %v3699 = vadd.f32 %v3660, %v3679
      %v3700 = vadd.f32 %v3661, %v3679
      %v3701 = vadd.f32 %v3662, %v3679
      %v3702 = vadd.f32 %v3663, %v3679
      %v3703 = vadd.f32 %v3664, %v3679
      %v3704 = vadd.f32 %v3665, %v3679
      %v3705 = vadd.f32 %v3666, %v3679
      %v3706 = vadd.f32 %v3667, %v3679
      %v3707 = vadd.f32 %v3668, %v3679
      %v3708 = vadd.f32 %v3669, %v3679
      %v3709 = vadd.f32 %v3670, %v3679
      %v3710 = vadd.f32 %v3671, %v3679
      %v3711 = vadd.f32 %v3672, %v3679
      %v3712 = vadd.f32 %v3673, %v3679
      %v3713 = vmax.f32 %v3681, 0.0
      %v3714 = vmax.f32 %v3682, 0.0
      %v3715 = vmax.f32 %v3683, 0.0
      %v3716 = vmax.f32 %v3684, 0.0
      %v3717 = vmax.f32 %v3685, 0.0
      %v3718 = vmax.f32 %v3686, 0.0
      %v3719 = vmax.f32 %v3687, 0.0
      %v3720 = vmax.f32 %v3688, 0.0
      %v3721 = vmax.f32 %v3689, 0.0
      %v3722 = vmax.f32 %v3690, 0.0
      %v3723 = vmax.f32 %v3691, 0.0
      %v3724 = vmax.f32 %v3692, 0.0
      %v3725 = vmax.f32 %v3693, 0.0
      %v3726 = vmax.f32 %v3694, 0.0
      %v3727 = vmax.f32 %v3695, 0.0
      %v3728 = vmax.f32 %v3696, 0.0
      %v3729 = vmax.f32 %v3697, 0.0
      %v3730 = vmax.f32 %v3698, 0.0
      %v3731 = vmax.f32 %v3699, 0.0
      %v3732 = vmax.f32 %v3700, 0.0
      %v3733 = vmax.f32 %v3701, 0.0
      %v3734 = vmax.f32 %v3702, 0.0
      %v3735 = vmax.f32 %v3703, 0.0
      %v3736 = vmax.f32 %v3704, 0.0
      %v3737 = vmax.f32 %v3705, 0.0
      %v3738 = vmax.f32 %v3706, 0.0
      %v3739 = vmax.f32 %v3707, 0.0
      %v3740 = vmax.f32 %v3708, 0.0
      %v3741 = vmax.f32 %v3709, 0.0
      %v3742 = vmax.f32 %v3710, 0.0
      %v3743 = vmax.f32 %v3711, 0.0
      %v3744 = vmax.f32 %v3712, 0.0
      %vm3745 = vcmask 64512
      %3746 = vst.msk [vmem:[#allocation2] sm:$0xff] %vm3745, 0.0
      %3747 = vst.msk [vmem:[#allocation2 + $0x8] sm:$0xff] %vm3745, 0.0
      %vm3748 = vcmask 58368
      %3749 = vst.msk [vmem:[#allocation2 + $0x10] sm:$0x3] %vm3748, 0.0
      %3750 = vst.msk [vmem:[#allocation2 + $0x18] sm:$0xff] %vm3745, 0.0
      %3751 = vst.msk [vmem:[#allocation2 + $0x20] sm:$0xff] %vm3745, 0.0
      %3752 = vst.msk [vmem:[#allocation2 + $0x28] sm:$0x3] %vm3748, 0.0
      %3753 = vst.msk [vmem:[#allocation2 + $0x30] sm:$0xff] %vm3745, 0.0
      %3754 = vst.msk [vmem:[#allocation2 + $0x38] sm:$0xff] %vm3745, 0.0
      %3755 = vst.msk [vmem:[#allocation2 + $0x40] sm:$0x3] %vm3748, 0.0
      %3756 = vst.msk [vmem:[#allocation2 + $0x48] sm:$0xff] %vm3745, 0.0
      %3757 = vst.msk [vmem:[#allocation2 + $0x50] sm:$0xff] %vm3745, 0.0
      %3758 = vst.msk [vmem:[#allocation2 + $0x58] sm:$0x3] %vm3748, 0.0
      %3759 = vst.msk [vmem:[#allocation2 + $0x60] sm:$0xff] %vm3745, 0.0
      %3760 = vst.msk [vmem:[#allocation2 + $0x68] sm:$0xff] %vm3745, 0.0
      %3761 = vst.msk [vmem:[#allocation2 + $0x70] sm:$0x3] %vm3748, 0.0
      %3762 = vst.msk [vmem:[#allocation2 + $0x78] sm:$0xff] %vm3745, 0.0
      %3763 = vst.msk [vmem:[#allocation2 + $0x80] sm:$0xff] %vm3745, 0.0
      %3764 = vst.msk [vmem:[#allocation2 + $0x88] sm:$0x3] %vm3748, 0.0
      %3765 = vst.msk [vmem:[#allocation2 + $0x90] sm:$0xff] %vm3745, 0.0
      %3766 = vst.msk [vmem:[#allocation2 + $0x98] sm:$0xff] %vm3745, 0.0
      %3767 = vst.msk [vmem:[#allocation2 + $0xa0] sm:$0x3] %vm3748, 0.0
      %3768 = vst.msk [vmem:[#allocation2 + $0xa8] sm:$0xff] %vm3745, 0.0
      %3769 = vst.msk [vmem:[#allocation2 + $0xb0] sm:$0xff] %vm3745, 0.0
      %3770 = vst.msk [vmem:[#allocation2 + $0xb8] sm:$0x3] %vm3748, 0.0
      %3771 = vst.msk [vmem:[#allocation2 + $0xc0] sm:$0xff] %vm3745, 0.0
      %3772 = vst.msk [vmem:[#allocation2 + $0xc8] sm:$0xff] %vm3745, 0.0
      %3773 = vst.msk [vmem:[#allocation2 + $0xd0] sm:$0x3] %vm3748, 0.0
      %3774 = vst.msk [vmem:[#allocation2 + $0xd8] sm:$0xff] %vm3745, 0.0
      %3775 = vst.msk [vmem:[#allocation2 + $0xe0] sm:$0xff] %vm3745, 0.0
      %3776 = vst.msk [vmem:[#allocation2 + $0xe8] sm:$0x3] %vm3748, 0.0
      %3777 = vst.msk [vmem:[#allocation2 + $0xf0] sm:$0xff] %vm3745, 0.0
      %3778 = vst.msk [vmem:[#allocation2 + $0xf8] sm:$0xff] %vm3745, 0.0
      %3779 = vst.msk [vmem:[#allocation2 + $0x100] sm:$0x3] %vm3748, 0.0
      %3780 = vst.msk [vmem:[#allocation2 + $0x108] sm:$0xff] %vm3745, 0.0
      %3781 = vst.msk [vmem:[#allocation2 + $0x110] sm:$0xff] %vm3745, 0.0
      %3782 = vst.msk [vmem:[#allocation2 + $0x118] sm:$0x3] %vm3748, 0.0
      %3783 = vst.msk [vmem:[#allocation2 + $0x120] sm:$0xff] %vm3745, 0.0
      %3784 = vst.msk [vmem:[#allocation2 + $0x128] sm:$0xff] %vm3745, 0.0
      %3785 = vst.msk [vmem:[#allocation2 + $0x130] sm:$0x3] %vm3748, 0.0
      %3786 = vst.msk [vmem:[#allocation2 + $0x138] sm:$0xff] %vm3745, 0.0
      %3787 = vst.msk [vmem:[#allocation2 + $0x140] sm:$0xff] %vm3745, 0.0
      %3788 = vst.msk [vmem:[#allocation2 + $0x148] sm:$0x3] %vm3748, 0.0
      %3789 = vst.msk [vmem:[#allocation2 + $0x150] sm:$0xff] %vm3745, 0.0
      %3790 = vst.msk [vmem:[#allocation2 + $0x158] sm:$0xff] %vm3745, 0.0
      %3791 = vst.msk [vmem:[#allocation2 + $0x160] sm:$0x3] %vm3748, 0.0
      %3792 = vst.msk [vmem:[#allocation2 + $0x168] sm:$0xff] %vm3745, 0.0
      %3793 = vst.msk [vmem:[#allocation2 + $0x170] sm:$0xff] %vm3745, 0.0
      %3794 = vst.msk [vmem:[#allocation2 + $0x178] sm:$0x3] %vm3748, 0.0
      %3795 = vst.msk [vmem:[#allocation2 + $0x180] sm:$0xff] %vm3745, 0.0
      %3796 = vst.msk [vmem:[#allocation2 + $0x188] sm:$0xff] %vm3745, 0.0
      %3797 = vst.msk [vmem:[#allocation2 + $0x190] sm:$0x3] %vm3748, 0.0
      %3798 = vst.msk [vmem:[#allocation2 + $0x198] sm:$0xff] %vm3745, 0.0
      %3799 = vst.msk [vmem:[#allocation2 + $0x1a0] sm:$0xff] %vm3745, 0.0
      %3800 = vst.msk [vmem:[#allocation2 + $0x1a8] sm:$0x3] %vm3748, 0.0
      %s3801 = scalar_lea.vmem [#allocation2], 24
      %3802 = vst.msk [vmem:[%s3801 + $0x1] sm:$0xff] %vm3745, %v3713
      %3803 = vst.msk [vmem:[%s3801 + $0x9] sm:$0xff] %vm3745, %v3714
      %3804 = vst.msk [vmem:[%s3801 + $0x19] sm:$0xff] %vm3745, %v3715
      %3805 = vst.msk [vmem:[%s3801 + $0x21] sm:$0xff] %vm3745, %v3716
      %3806 = vst.msk [vmem:[%s3801 + $0x31] sm:$0xff] %vm3745, %v3717
      %3807 = vst.msk [vmem:[%s3801 + $0x39] sm:$0xff] %vm3745, %v3718
      %3808 = vst.msk [vmem:[%s3801 + $0x49] sm:$0xff] %vm3745, %v3719
      %3809 = vst.msk [vmem:[%s3801 + $0x51] sm:$0xff] %vm3745, %v3720
      %3810 = vst.msk [vmem:[%s3801 + $0x61] sm:$0xff] %vm3745, %v3721
      %3811 = vst.msk [vmem:[%s3801 + $0x69] sm:$0xff] %vm3745, %v3722
      %3812 = vst.msk [vmem:[%s3801 + $0x79] sm:$0xff] %vm3745, %v3723
      %3813 = vst.msk [vmem:[%s3801 + $0x81] sm:$0xff] %vm3745, %v3724
      %3814 = vst.msk [vmem:[%s3801 + $0x91] sm:$0xff] %vm3745, %v3725
      %3815 = vst.msk [vmem:[%s3801 + $0x99] sm:$0xff] %vm3745, %v3726
      %3816 = vst.msk [vmem:[%s3801 + $0xa9] sm:$0xff] %vm3745, %v3727
      %3817 = vst.msk [vmem:[%s3801 + $0xb1] sm:$0xff] %vm3745, %v3728
      %3818 = vst.msk [vmem:[%s3801 + $0xc1] sm:$0xff] %vm3745, %v3729
      %3819 = vst.msk [vmem:[%s3801 + $0xc9] sm:$0xff] %vm3745, %v3730
      %3820 = vst.msk [vmem:[%s3801 + $0xd9] sm:$0xff] %vm3745, %v3731
      %3821 = vst.msk [vmem:[%s3801 + $0xe1] sm:$0xff] %vm3745, %v3732
      %3822 = vst.msk [vmem:[%s3801 + $0xf1] sm:$0xff] %vm3745, %v3733
      %3823 = vst.msk [vmem:[%s3801 + $0xf9] sm:$0xff] %vm3745, %v3734
      %3824 = vst.msk [vmem:[%s3801 + $0x109] sm:$0xff] %vm3745, %v3735
      %3825 = vst.msk [vmem:[%s3801 + $0x111] sm:$0xff] %vm3745, %v3736
      %3826 = vst.msk [vmem:[%s3801 + $0x121] sm:$0xff] %vm3745, %v3737
      %3827 = vst.msk [vmem:[%s3801 + $0x129] sm:$0xff] %vm3745, %v3738
      %3828 = vst.msk [vmem:[%s3801 + $0x139] sm:$0xff] %vm3745, %v3739
      %3829 = vst.msk [vmem:[%s3801 + $0x141] sm:$0xff] %vm3745, %v3740
      %3830 = vst.msk [vmem:[%s3801 + $0x151] sm:$0xff] %vm3745, %v3741
      %3831 = vst.msk [vmem:[%s3801 + $0x159] sm:$0xff] %vm3745, %v3742
      %3832 = vst.msk [vmem:[%s3801 + $0x169] sm:$0xff] %vm3745, %v3743
      %3833 = vst.msk [vmem:[%s3801 + $0x171] sm:$0xff] %vm3745, %v3744
      %v3834 = vld [vmem:[#allocation2] sm:$0xff]
      %v3835 = vld [vmem:[#allocation2 + $0x8] sm:$0xff]
      %v3836 = vld [vmem:[#allocation2 + $0x18] sm:$0xff]
      %v3837 = vld [vmem:[#allocation2 + $0x20] sm:$0xff]
      %v3838 = vld [vmem:[#allocation2 + $0x30] sm:$0xff]
      %v3839 = vld [vmem:[#allocation2 + $0x38] sm:$0xff]
      %v3840 = vld [vmem:[#allocation2 + $0x48] sm:$0xff]
      %v3841 = vld [vmem:[#allocation2 + $0x50] sm:$0xff]
      %v3842 = vld [vmem:[#allocation2 + $0x60] sm:$0xff]
      %v3843 = vld [vmem:[#allocation2 + $0x68] sm:$0xff]
      %v3844 = vld [vmem:[#allocation2 + $0x78] sm:$0xff]
      %v3845 = vld [vmem:[#allocation2 + $0x80] sm:$0xff]
      %v3846 = vld [vmem:[#allocation2 + $0x90] sm:$0xff]
      %v3847 = vld [vmem:[#allocation2 + $0x98] sm:$0xff]
      %v3848 = vld [vmem:[#allocation2 + $0xa8] sm:$0xff]
      %v3849 = vld [vmem:[#allocation2 + $0xb0] sm:$0xff]
      %v3850 = vld [vmem:[#allocation2 + $0xc0] sm:$0xff]
      %v3851 = vld [vmem:[#allocation2 + $0xc8] sm:$0xff]
      %v3852 = vld [vmem:[#allocation2 + $0xd8] sm:$0xff]
      %v3853 = vld [vmem:[#allocation2 + $0xe0] sm:$0xff]
      %v3854 = vld [vmem:[#allocation2 + $0xf0] sm:$0xff]
      %v3855 = vld [vmem:[#allocation2 + $0xf8] sm:$0xff]
      %v3856 = vld [vmem:[#allocation2 + $0x108] sm:$0xff]
      %v3857 = vld [vmem:[#allocation2 + $0x110] sm:$0xff]
      %v3858 = vld [vmem:[#allocation2 + $0x120] sm:$0xff]
      %v3859 = vld [vmem:[#allocation2 + $0x128] sm:$0xff]
      %v3860 = vld [vmem:[#allocation2 + $0x138] sm:$0xff]
      %v3861 = vld [vmem:[#allocation2 + $0x140] sm:$0xff]
      %v3862 = vld [vmem:[#allocation2 + $0x150] sm:$0xff]
      %v3863 = vld [vmem:[#allocation2 + $0x158] sm:$0xff]
      %v3864 = vld [vmem:[#allocation2 + $0x168] sm:$0xff]
      %v3865 = vld [vmem:[#allocation2 + $0x170] sm:$0xff]
      %v3866 = vld [vmem:[%s3] sm:$0xff]
      %v3867 = vld [vmem:[#allocation2 + $0x1] sm:$0xff]
      %v3868 = vld [vmem:[#allocation2 + $0x9] sm:$0xff]
      %v3869 = vld [vmem:[#allocation2 + $0x19] sm:$0xff]
      %v3870 = vld [vmem:[#allocation2 + $0x21] sm:$0xff]
      %v3871 = vld [vmem:[#allocation2 + $0x31] sm:$0xff]
      %v3872 = vld [vmem:[#allocation2 + $0x39] sm:$0xff]
      %v3873 = vld [vmem:[#allocation2 + $0x49] sm:$0xff]
      %v3874 = vld [vmem:[#allocation2 + $0x51] sm:$0xff]
      %v3875 = vld [vmem:[#allocation2 + $0x61] sm:$0xff]
      %v3876 = vld [vmem:[#allocation2 + $0x69] sm:$0xff]
      %v3877 = vld [vmem:[#allocation2 + $0x79] sm:$0xff]
      %v3878 = vld [vmem:[#allocation2 + $0x81] sm:$0xff]
      %v3879 = vld [vmem:[#allocation2 + $0x91] sm:$0xff]
      %v3880 = vld [vmem:[#allocation2 + $0x99] sm:$0xff]
      %v3881 = vld [vmem:[#allocation2 + $0xa9] sm:$0xff]
      %v3882 = vld [vmem:[#allocation2 + $0xb1] sm:$0xff]
      %v3883 = vld [vmem:[#allocation2 + $0xc1] sm:$0xff]
      %v3884 = vld [vmem:[#allocation2 + $0xc9] sm:$0xff]
      %v3885 = vld [vmem:[#allocation2 + $0xd9] sm:$0xff]
      %v3886 = vld [vmem:[#allocation2 + $0xe1] sm:$0xff]
      %v3887 = vld [vmem:[#allocation2 + $0xf1] sm:$0xff]
      %v3888 = vld [vmem:[#allocation2 + $0xf9] sm:$0xff]
      %v3889 = vld [vmem:[#allocation2 + $0x109] sm:$0xff]
      %v3890 = vld [vmem:[#allocation2 + $0x111] sm:$0xff]
      %v3891 = vld [vmem:[#allocation2 + $0x121] sm:$0xff]
      %v3892 = vld [vmem:[#allocation2 + $0x129] sm:$0xff]
      %v3893 = vld [vmem:[#allocation2 + $0x139] sm:$0xff]
      %v3894 = vld [vmem:[#allocation2 + $0x141] sm:$0xff]
      %v3895 = vld [vmem:[#allocation2 + $0x151] sm:$0xff]
      %v3896 = vld [vmem:[#allocation2 + $0x159] sm:$0xff]
      %v3897 = vld [vmem:[#allocation2 + $0x169] sm:$0xff]
      %v3898 = vld [vmem:[#allocation2 + $0x171] sm:$0xff]
      %s3899 = scalar_lea.vmem %s3, 8
      %v3900 = vld [vmem:[%s3899] sm:$0xff]
      %v3902 = vsel %vm3745, %v3867, 0
      %v3905 = vsel %vm3745, %v3868, 0
      %v3908 = vsel %vm3745, %v3869, 0
      %v3911 = vsel %vm3745, %v3870, 0
      %v3914 = vsel %vm3745, %v3871, 0
      %v3917 = vsel %vm3745, %v3872, 0
      %v3920 = vsel %vm3745, %v3873, 0
      %v3923 = vsel %vm3745, %v3874, 0
      %v3926 = vsel %vm3745, %v3875, 0
      %v3929 = vsel %vm3745, %v3876, 0
      %v3932 = vsel %vm3745, %v3877, 0
      %v3935 = vsel %vm3745, %v3878, 0
      %v3938 = vsel %vm3745, %v3879, 0
      %v3941 = vsel %vm3745, %v3880, 0
      %v3944 = vsel %vm3745, %v3881, 0
      %v3947 = vsel %vm3745, %v3882, 0
      %v3950 = vsel %vm3745, %v3883, 0
      %v3953 = vsel %vm3745, %v3884, 0
      %v3956 = vsel %vm3745, %v3885, 0
      %v3959 = vsel %vm3745, %v3886, 0
      %v3962 = vsel %vm3745, %v3887, 0
      %v3965 = vsel %vm3745, %v3888, 0
      %v3968 = vsel %vm3745, %v3889, 0
      %v3971 = vsel %vm3745, %v3890, 0
      %v3974 = vsel %vm3745, %v3891, 0
      %v3977 = vsel %vm3745, %v3892, 0
      %v3980 = vsel %vm3745, %v3893, 0
      %v3983 = vsel %vm3745, %v3894, 0
      %v3986 = vsel %vm3745, %v3895, 0
      %v3989 = vsel %vm3745, %v3896, 0
      %v3992 = vsel %vm3745, %v3897, 0
      %v3995 = vsel %vm3745, %v3898, 0
      %3997 = vmatprep.subr.mxu0 0.0
      %3998 = vmatpush1.msra.mxu0 %v3900
      %3999 = vmatprep.subr.mxu0 0.0
      %4000 = vmatpush1.msra.mxu0 0.0
      %4001 = vmatprep.subr.mxu0 0.0
      %4002 = vmatpush1.msra.mxu0 0.0
      %4003 = vmatprep.subr.mxu0 0.0
      %4004 = vmatpush1.msra.mxu0 0.0
      %4005 = vmatprep.subr.mxu0 0.0
      %4006 = vmatpush1.msra.mxu0 0.0
      %4007 = vmatprep.subr.mxu0 0.0
      %4008 = vmatpush1.msra.mxu0 0.0
      %4009 = vmatprep.subr.mxu0 0.0
      %4010 = vmatpush1.msra.mxu0 0.0
      %4011 = vmatprep.subr.mxu0 0.0
      %4012 = vmatpush1.msra.mxu0 0.0
      %4013 = vmatprep.subr.mxu0 0.0
      %4014 = vmatpush1.msra.mxu0 0.0
      %4015 = vmatprep.subr.mxu0 0.0
      %4016 = vmatpush1.msra.mxu0 0.0
      %4017 = vmatprep.subr.mxu0 0.0
      %4018 = vmatpush1.msra.mxu0 0.0
      %4019 = vmatprep.subr.mxu0 0.0
      %4020 = vmatpush1.msra.mxu0 0.0
      %4021 = vmatprep.subr.mxu0 0.0
      %4022 = vmatpush1.msra.mxu0 0.0
      %4023 = vmatprep.subr.mxu0 0.0
      %4024 = vmatpush1.msra.mxu0 0.0
      %4025 = vmatprep.subr.mxu0 0.0
      %4026 = vmatpush1.msra.mxu0 0.0
      %4027 = vmatprep.subr.mxu0 0.0
      %4028 = vmatpush1.msra.mxu0 0.0
      %4029 = vmatprep.subr.mxu0 0.0
      %4030 = vmatpush1.msra.mxu0 0.0
      %4031 = vmatprep.subr.mxu0 0.0
      %4032 = vmatpush1.msra.mxu0 0.0
      %4033 = vmatprep.subr.mxu0 0.0
      %4034 = vmatpush1.msra.mxu0 0.0
      %4035 = vmatprep.subr.mxu0 0.0
      %4036 = vmatpush1.msra.mxu0 0.0
      %4037 = vmatprep.subr.mxu0 0.0
      %4038 = vmatpush1.msra.mxu0 0.0
      %4039 = vmatprep.subr.mxu0 0.0
      %4040 = vmatpush1.msra.mxu0 0.0
      %4041 = vmatprep.subr.mxu0 0.0
      %4042 = vmatpush1.msra.mxu0 0.0
      %4043 = vmatprep.subr.mxu0 0.0
      %4044 = vmatpush1.msra.mxu0 0.0
      %4045 = vmatprep.subr.mxu0 0.0
      %4046 = vmatpush1.msra.mxu0 0.0
      %4047 = vmatprep.subr.mxu0 0.0
      %4048 = vmatpush1.msra.mxu0 0.0
      %4049 = vmatprep.subr.mxu0 0.0
      %4050 = vmatpush1.msra.mxu0 0.0
      %4051 = vmatprep.subr.mxu0 0.0
      %4052 = vmatpush1.msra.mxu0 0.0
      %4053 = vmatprep.subr.mxu0 0.0
      %4054 = vmatpush1.msra.mxu0 0.0
      %4055 = vmatprep.subr.mxu0 0.0
      %4056 = vmatpush1.msra.mxu0 0.0
      %4057 = vmatprep.subr.mxu0 0.0
      %4058 = vmatpush1.msra.mxu0 0.0
      %4059 = vmatprep.subr.mxu0 0.0
      %4060 = vmatpush1.msra.mxu0 0.0
      %4061 = vmatprep.mubr.f32.mxu0 0.0
      %4062 = vmatmul.mubr.f32.gmra.mrb[0].mxu0 %v3902
      %v4063 = vpop.f32.mrb[0].mxu0
      %v4064 = vadd.f32 0.0, %v4063
      %v4065 = vpop.f32.mrb[0].mxu0
      %4066 = vmatprep.mubr.f32.mxu0 0.0
      %4067 = vmatmul.mubr.f32.gmra.mrb[0].mxu0 %v3905
      %v4068 = vpop.f32.mrb[0].mxu0
      %v4069 = vadd.f32 0.0, %v4068
      %v4070 = vpop.f32.mrb[0].mxu0
      %4071 = vmatprep.mubr.f32.mxu0 0.0
      %4072 = vmatmul.mubr.f32.gmra.mrb[0].mxu0 %v3908
      %v4073 = vpop.f32.mrb[0].mxu0
      %v4074 = vadd.f32 0.0, %v4073
      %v4075 = vpop.f32.mrb[0].mxu0
      %4076 = vmatprep.mubr.f32.mxu0 0.0
      %4077 = vmatmul.mubr.f32.gmra.mrb[0].mxu0 %v3911
      %v4078 = vpop.f32.mrb[0].mxu0
      %v4079 = vadd.f32 0.0, %v4078
      %v4080 = vpop.f32.mrb[0].mxu0
      %4081 = vmatprep.mubr.f32.mxu0 0.0
      %4082 = vmatmul.mubr.f32.gmra.mrb[0].mxu0 %v3914
      %v4083 = vpop.f32.mrb[0].mxu0
      %v4084 = vadd.f32 0.0, %v4083
      %v4085 = vpop.f32.mrb[0].mxu0
      %4086 = vmatprep.mubr.f32.mxu0 0.0
      %4087 = vmatmul.mubr.f32.gmra.mrb[0].mxu0 %v3917
      %v4088 = vpop.f32.mrb[0].mxu0
      %v4089 = vadd.f32 0.0, %v4088
      %v4090 = vpop.f32.mrb[0].mxu0
      %4091 = vmatprep.mubr.f32.mxu0 0.0
      %4092 = vmatmul.mubr.f32.gmra.mrb[0].mxu0 %v3920
      %v4093 = vpop.f32.mrb[0].mxu0
      %v4094 = vadd.f32 0.0, %v4093
      %v4095 = vpop.f32.mrb[0].mxu0
      %4096 = vmatprep.mubr.f32.mxu0 0.0
      %4097 = vmatmul.mubr.f32.gmra.mrb[0].mxu0 %v3923
      %v4098 = vpop.f32.mrb[0].mxu0
      %v4099 = vadd.f32 0.0, %v4098
      %v4100 = vpop.f32.mrb[0].mxu0
      %4101 = vmatprep.mubr.f32.mxu0 0.0
      %4102 = vmatmul.mubr.f32.gmra.mrb[0].mxu0 %v3926
      %v4103 = vpop.f32.mrb[0].mxu0
      %v4104 = vadd.f32 0.0, %v4103
      %v4105 = vpop.f32.mrb[0].mxu0
      %4106 = vmatprep.mubr.f32.mxu0 0.0
      %4107 = vmatmul.mubr.f32.gmra.mrb[0].mxu0 %v3929
      %v4108 = vpop.f32.mrb[0].mxu0
      %v4109 = vadd.f32 0.0, %v4108
      %v4110 = vpop.f32.mrb[0].mxu0
      %4111 = vmatprep.mubr.f32.mxu0 0.0
      %4112 = vmatmul.mubr.f32.gmra.mrb[0].mxu0 %v3932
      %v4113 = vpop.f32.mrb[0].mxu0
      %v4114 = vadd.f32 0.0, %v4113
      %v4115 = vpop.f32.mrb[0].mxu0
      %4116 = vmatprep.mubr.f32.mxu0 0.0
      %4117 = vmatmul.mubr.f32.gmra.mrb[0].mxu0 %v3935
      %v4118 = vpop.f32.mrb[0].mxu0
      %v4119 = vadd.f32 0.0, %v4118
      %v4120 = vpop.f32.mrb[0].mxu0
      %4121 = vmatprep.mubr.f32.mxu0 0.0
      %4122 = vmatmul.mubr.f32.gmra.mrb[0].mxu0 %v3938
      %v4123 = vpop.f32.mrb[0].mxu0
      %v4124 = vadd.f32 0.0, %v4123
      %v4125 = vpop.f32.mrb[0].mxu0
      %4126 = vmatprep.mubr.f32.mxu0 0.0
      %4127 = vmatmul.mubr.f32.gmra.mrb[0].mxu0 %v3941
      %v4128 = vpop.f32.mrb[0].mxu0
      %v4129 = vadd.f32 0.0, %v4128
      %v4130 = vpop.f32.mrb[0].mxu0
      %4131 = vmatprep.mubr.f32.mxu0 0.0
      %4132 = vmatmul.mubr.f32.gmra.mrb[0].mxu0 %v3944
      %v4133 = vpop.f32.mrb[0].mxu0
      %v4134 = vadd.f32 0.0, %v4133
      %v4135 = vpop.f32.mrb[0].mxu0
      %4136 = vmatprep.mubr.f32.mxu0 0.0
      %4137 = vmatmul.mubr.f32.gmra.mrb[0].mxu0 %v3947
      %v4138 = vpop.f32.mrb[0].mxu0
      %v4139 = vadd.f32 0.0, %v4138
      %v4140 = vpop.f32.mrb[0].mxu0
      %4141 = vmatprep.mubr.f32.mxu0 0.0
      %4142 = vmatmul.mubr.f32.gmra.mrb[0].mxu0 %v3950
      %v4143 = vpop.f32.mrb[0].mxu0
      %v4144 = vadd.f32 0.0, %v4143
      %v4145 = vpop.f32.mrb[0].mxu0
      %4146 = vmatprep.mubr.f32.mxu0 0.0
      %4147 = vmatmul.mubr.f32.gmra.mrb[0].mxu0 %v3953
      %v4148 = vpop.f32.mrb[0].mxu0
      %v4149 = vadd.f32 0.0, %v4148
      %v4150 = vpop.f32.mrb[0].mxu0
      %4151 = vmatprep.mubr.f32.mxu0 0.0
      %4152 = vmatmul.mubr.f32.gmra.mrb[0].mxu0 %v3956
      %v4153 = vpop.f32.mrb[0].mxu0
      %v4154 = vadd.f32 0.0, %v4153
      %v4155 = vpop.f32.mrb[0].mxu0
      %4156 = vmatprep.mubr.f32.mxu0 0.0
      %4157 = vmatmul.mubr.f32.gmra.mrb[0].mxu0 %v3959
      %v4158 = vpop.f32.mrb[0].mxu0
      %v4159 = vadd.f32 0.0, %v4158
      %v4160 = vpop.f32.mrb[0].mxu0
      %4161 = vmatprep.mubr.f32.mxu0 0.0
      %4162 = vmatmul.mubr.f32.gmra.mrb[0].mxu0 %v3962
      %v4163 = vpop.f32.mrb[0].mxu0
      %v4164 = vadd.f32 0.0, %v4163
      %v4165 = vpop.f32.mrb[0].mxu0
      %4166 = vmatprep.mubr.f32.mxu0 0.0
      %4167 = vmatmul.mubr.f32.gmra.mrb[0].mxu0 %v3965
      %v4168 = vpop.f32.mrb[0].mxu0
      %v4169 = vadd.f32 0.0, %v4168
      %v4170 = vpop.f32.mrb[0].mxu0
      %4171 = vmatprep.mubr.f32.mxu0 0.0
      %4172 = vmatmul.mubr.f32.gmra.mrb[0].mxu0 %v3968
      %v4173 = vpop.f32.mrb[0].mxu0
      %v4174 = vadd.f32 0.0, %v4173
      %v4175 = vpop.f32.mrb[0].mxu0
      %4176 = vmatprep.mubr.f32.mxu0 0.0
      %4177 = vmatmul.mubr.f32.gmra.mrb[0].mxu0 %v3971
      %v4178 = vpop.f32.mrb[0].mxu0
      %v4179 = vadd.f32 0.0, %v4178
      %v4180 = vpop.f32.mrb[0].mxu0
      %4181 = vmatprep.mubr.f32.mxu0 0.0
      %4182 = vmatmul.mubr.f32.gmra.mrb[0].mxu0 %v3974
      %v4183 = vpop.f32.mrb[0].mxu0
      %v4184 = vadd.f32 0.0, %v4183
      %v4185 = vpop.f32.mrb[0].mxu0
      %4186 = vmatprep.mubr.f32.mxu0 0.0
      %4187 = vmatmul.mubr.f32.gmra.mrb[0].mxu0 %v3977
      %v4188 = vpop.f32.mrb[0].mxu0
      %v4189 = vadd.f32 0.0, %v4188
      %v4190 = vpop.f32.mrb[0].mxu0
      %4191 = vmatprep.mubr.f32.mxu0 0.0
      %4192 = vmatmul.mubr.f32.gmra.mrb[0].mxu0 %v3980
      %v4193 = vpop.f32.mrb[0].mxu0
      %v4194 = vadd.f32 0.0, %v4193
      %v4195 = vpop.f32.mrb[0].mxu0
      %4196 = vmatprep.mubr.f32.mxu0 0.0
      %4197 = vmatmul.mubr.f32.gmra.mrb[0].mxu0 %v3983
      %v4198 = vpop.f32.mrb[0].mxu0
      %v4199 = vadd.f32 0.0, %v4198
      %v4200 = vpop.f32.mrb[0].mxu0
      %4201 = vmatprep.mubr.f32.mxu0 0.0
      %4202 = vmatmul.mubr.f32.gmra.mrb[0].mxu0 %v3986
      %v4203 = vpop.f32.mrb[0].mxu0
      %v4204 = vadd.f32 0.0, %v4203
      %v4205 = vpop.f32.mrb[0].mxu0
      %4206 = vmatprep.mubr.f32.mxu0 0.0
      %4207 = vmatmul.mubr.f32.gmra.mrb[0].mxu0 %v3989
      %v4208 = vpop.f32.mrb[0].mxu0
      %v4209 = vadd.f32 0.0, %v4208
      %v4210 = vpop.f32.mrb[0].mxu0
      %4211 = vmatprep.mubr.f32.mxu0 0.0
      %4212 = vmatmul.mubr.f32.gmra.mrb[0].mxu0 %v3992
      %v4213 = vpop.f32.mrb[0].mxu0
      %v4214 = vadd.f32 0.0, %v4213
      %v4215 = vpop.f32.mrb[0].mxu0
      %4216 = vmatprep.mubr.f32.mxu0 0.0
      %4217 = vmatmul.mubr.f32.gmra.mrb[0].mxu0 %v3995
      %v4218 = vpop.f32.mrb[0].mxu0
      %v4219 = vadd.f32 0.0, %v4218
      %v4220 = vpop.f32.mrb[0].mxu0
      %4221 = vdwg.mxu0
      %v4223 = vsel %vm3745, %v3834, 0
      %v4226 = vsel %vm3745, %v3835, 0
      %v4229 = vsel %vm3745, %v3836, 0
      %v4232 = vsel %vm3745, %v3837, 0
      %v4235 = vsel %vm3745, %v3838, 0
      %v4238 = vsel %vm3745, %v3839, 0
      %v4241 = vsel %vm3745, %v3840, 0
      %v4244 = vsel %vm3745, %v3841, 0
      %v4247 = vsel %vm3745, %v3842, 0
      %v4250 = vsel %vm3745, %v3843, 0
      %v4253 = vsel %vm3745, %v3844, 0
      %v4256 = vsel %vm3745, %v3845, 0
      %v4259 = vsel %vm3745, %v3846, 0
      %v4262 = vsel %vm3745, %v3847, 0
      %v4265 = vsel %vm3745, %v3848, 0
      %v4268 = vsel %vm3745, %v3849, 0
      %v4271 = vsel %vm3745, %v3850, 0
      %v4274 = vsel %vm3745, %v3851, 0
      %v4277 = vsel %vm3745, %v3852, 0
      %v4280 = vsel %vm3745, %v3853, 0
      %v4283 = vsel %vm3745, %v3854, 0
      %v4286 = vsel %vm3745, %v3855, 0
      %v4289 = vsel %vm3745, %v3856, 0
      %v4292 = vsel %vm3745, %v3857, 0
      %v4295 = vsel %vm3745, %v3858, 0
      %v4298 = vsel %vm3745, %v3859, 0
      %v4301 = vsel %vm3745, %v3860, 0
      %v4304 = vsel %vm3745, %v3861, 0
      %v4307 = vsel %vm3745, %v3862, 0
      %v4310 = vsel %vm3745, %v3863, 0
      %v4313 = vsel %vm3745, %v3864, 0
      %v4316 = vsel %vm3745, %v3865, 0
      %4318 = vmatprep.subr.mxu0 0.0
      %4319 = vmatpush1.msra.mxu0 %v3866
      %4320 = vmatprep.subr.mxu0 0.0
      %4321 = vmatpush1.msra.mxu0 0.0
      %4322 = vmatprep.subr.mxu0 0.0
      %4323 = vmatpush1.msra.mxu0 0.0
      %4324 = vmatprep.subr.mxu0 0.0
      %4325 = vmatpush1.msra.mxu0 0.0
      %4326 = vmatprep.subr.mxu0 0.0
      %4327 = vmatpush1.msra.mxu0 0.0
      %4328 = vmatprep.subr.mxu0 0.0
      %4329 = vmatpush1.msra.mxu0 0.0
      %4330 = vmatprep.subr.mxu0 0.0
      %4331 = vmatpush1.msra.mxu0 0.0
      %4332 = vmatprep.subr.mxu0 0.0
      %4333 = vmatpush1.msra.mxu0 0.0
      %4334 = vmatprep.subr.mxu0 0.0
      %4335 = vmatpush1.msra.mxu0 0.0
      %4336 = vmatprep.subr.mxu0 0.0
      %4337 = vmatpush1.msra.mxu0 0.0
      %4338 = vmatprep.subr.mxu0 0.0
      %4339 = vmatpush1.msra.mxu0 0.0
      %4340 = vmatprep.subr.mxu0 0.0
      %4341 = vmatpush1.msra.mxu0 0.0
      %4342 = vmatprep.subr.mxu0 0.0
      %4343 = vmatpush1.msra.mxu0 0.0
      %4344 = vmatprep.subr.mxu0 0.0
      %4345 = vmatpush1.msra.mxu0 0.0
      %4346 = vmatprep.subr.mxu0 0.0
      %4347 = vmatpush1.msra.mxu0 0.0
      %4348 = vmatprep.subr.mxu0 0.0
      %4349 = vmatpush1.msra.mxu0 0.0
      %4350 = vmatprep.subr.mxu0 0.0
      %4351 = vmatpush1.msra.mxu0 0.0
      %4352 = vmatprep.subr.mxu0 0.0
      %4353 = vmatpush1.msra.mxu0 0.0
      %4354 = vmatprep.subr.mxu0 0.0
      %4355 = vmatpush1.msra.mxu0 0.0
      %4356 = vmatprep.subr.mxu0 0.0
      %4357 = vmatpush1.msra.mxu0 0.0
      %4358 = vmatprep.subr.mxu0 0.0
      %4359 = vmatpush1.msra.mxu0 0.0
      %4360 = vmatprep.subr.mxu0 0.0
      %4361 = vmatpush1.msra.mxu0 0.0
      %4362 = vmatprep.subr.mxu0 0.0
      %4363 = vmatpush1.msra.mxu0 0.0
      %4364 = vmatprep.subr.mxu0 0.0
      %4365 = vmatpush1.msra.mxu0 0.0
      %4366 = vmatprep.subr.mxu0 0.0
      %4367 = vmatpush1.msra.mxu0 0.0
      %4368 = vmatprep.subr.mxu0 0.0
      %4369 = vmatpush1.msra.mxu0 0.0
      %4370 = vmatprep.subr.mxu0 0.0
      %4371 = vmatpush1.msra.mxu0 0.0
      %4372 = vmatprep.subr.mxu0 0.0
      %4373 = vmatpush1.msra.mxu0 0.0
      %4374 = vmatprep.subr.mxu0 0.0
      %4375 = vmatpush1.msra.mxu0 0.0
      %4376 = vmatprep.subr.mxu0 0.0
      %4377 = vmatpush1.msra.mxu0 0.0
      %4378 = vmatprep.subr.mxu0 0.0
      %4379 = vmatpush1.msra.mxu0 0.0
      %4380 = vmatprep.subr.mxu0 0.0
      %4381 = vmatpush1.msra.mxu0 0.0
      %4382 = vmatprep.mubr.f32.mxu0 0.0
      %4383 = vmatmul.mubr.f32.gmra.mrb[0].mxu0 %v4223
      %v4384 = vpop.f32.mrb[0].mxu0
      %v4385 = vadd.f32 %v4064, %v4384
      %v4386 = vpop.f32.mrb[0].mxu0
      %4387 = vmatprep.mubr.f32.mxu0 0.0
      %4388 = vmatmul.mubr.f32.gmra.mrb[0].mxu0 %v4226
      %v4389 = vpop.f32.mrb[0].mxu0
      %v4390 = vadd.f32 %v4069, %v4389
      %v4391 = vpop.f32.mrb[0].mxu0
      %4392 = vmatprep.mubr.f32.mxu0 0.0
      %4393 = vmatmul.mubr.f32.gmra.mrb[0].mxu0 %v4229
      %v4394 = vpop.f32.mrb[0].mxu0
      %v4395 = vadd.f32 %v4074, %v4394
      %v4396 = vpop.f32.mrb[0].mxu0
      %4397 = vmatprep.mubr.f32.mxu0 0.0
      %4398 = vmatmul.mubr.f32.gmra.mrb[0].mxu0 %v4232
      %v4399 = vpop.f32.mrb[0].mxu0
      %v4400 = vadd.f32 %v4079, %v4399
      %v4401 = vpop.f32.mrb[0].mxu0
      %4402 = vmatprep.mubr.f32.mxu0 0.0
      %4403 = vmatmul.mubr.f32.gmra.mrb[0].mxu0 %v4235
      %v4404 = vpop.f32.mrb[0].mxu0
      %v4405 = vadd.f32 %v4084, %v4404
      %v4406 = vpop.f32.mrb[0].mxu0
      %4407 = vmatprep.mubr.f32.mxu0 0.0
      %4408 = vmatmul.mubr.f32.gmra.mrb[0].mxu0 %v4238
      %v4409 = vpop.f32.mrb[0].mxu0
      %v4410 = vadd.f32 %v4089, %v4409
      %v4411 = vpop.f32.mrb[0].mxu0
      %4412 = vmatprep.mubr.f32.mxu0 0.0
      %4413 = vmatmul.mubr.f32.gmra.mrb[0].mxu0 %v4241
      %v4414 = vpop.f32.mrb[0].mxu0
      %v4415 = vadd.f32 %v4094, %v4414
      %v4416 = vpop.f32.mrb[0].mxu0
      %4417 = vmatprep.mubr.f32.mxu0 0.0
      %4418 = vmatmul.mubr.f32.gmra.mrb[0].mxu0 %v4244
      %v4419 = vpop.f32.mrb[0].mxu0
      %v4420 = vadd.f32 %v4099, %v4419
      %v4421 = vpop.f32.mrb[0].mxu0
      %4422 = vmatprep.mubr.f32.mxu0 0.0
      %4423 = vmatmul.mubr.f32.gmra.mrb[0].mxu0 %v4247
      %v4424 = vpop.f32.mrb[0].mxu0
      %v4425 = vadd.f32 %v4104, %v4424
      %v4426 = vpop.f32.mrb[0].mxu0
      %4427 = vmatprep.mubr.f32.mxu0 0.0
      %4428 = vmatmul.mubr.f32.gmra.mrb[0].mxu0 %v4250
      %v4429 = vpop.f32.mrb[0].mxu0
      %v4430 = vadd.f32 %v4109, %v4429
      %v4431 = vpop.f32.mrb[0].mxu0
      %4432 = vmatprep.mubr.f32.mxu0 0.0
      %4433 = vmatmul.mubr.f32.gmra.mrb[0].mxu0 %v4253
      %v4434 = vpop.f32.mrb[0].mxu0
      %v4435 = vadd.f32 %v4114, %v4434
      %v4436 = vpop.f32.mrb[0].mxu0
      %4437 = vmatprep.mubr.f32.mxu0 0.0
      %4438 = vmatmul.mubr.f32.gmra.mrb[0].mxu0 %v4256
      %v4439 = vpop.f32.mrb[0].mxu0
      %v4440 = vadd.f32 %v4119, %v4439
      %v4441 = vpop.f32.mrb[0].mxu0
      %4442 = vmatprep.mubr.f32.mxu0 0.0
      %4443 = vmatmul.mubr.f32.gmra.mrb[0].mxu0 %v4259
      %v4444 = vpop.f32.mrb[0].mxu0
      %v4445 = vadd.f32 %v4124, %v4444
      %v4446 = vpop.f32.mrb[0].mxu0
      %4447 = vmatprep.mubr.f32.mxu0 0.0
      %4448 = vmatmul.mubr.f32.gmra.mrb[0].mxu0 %v4262
      %v4449 = vpop.f32.mrb[0].mxu0
      %v4450 = vadd.f32 %v4129, %v4449
      %v4451 = vpop.f32.mrb[0].mxu0
      %4452 = vmatprep.mubr.f32.mxu0 0.0
      %4453 = vmatmul.mubr.f32.gmra.mrb[0].mxu0 %v4265
      %v4454 = vpop.f32.mrb[0].mxu0
      %v4455 = vadd.f32 %v4134, %v4454
      %v4456 = vpop.f32.mrb[0].mxu0
      %4457 = vmatprep.mubr.f32.mxu0 0.0
      %4458 = vmatmul.mubr.f32.gmra.mrb[0].mxu0 %v4268
      %v4459 = vpop.f32.mrb[0].mxu0
      %v4460 = vadd.f32 %v4139, %v4459
      %v4461 = vpop.f32.mrb[0].mxu0
      %4462 = vmatprep.mubr.f32.mxu0 0.0
      %4463 = vmatmul.mubr.f32.gmra.mrb[0].mxu0 %v4271
      %v4464 = vpop.f32.mrb[0].mxu0
      %v4465 = vadd.f32 %v4144, %v4464
      %v4466 = vpop.f32.mrb[0].mxu0
      %4467 = vmatprep.mubr.f32.mxu0 0.0
      %4468 = vmatmul.mubr.f32.gmra.mrb[0].mxu0 %v4274
      %v4469 = vpop.f32.mrb[0].mxu0
      %v4470 = vadd.f32 %v4149, %v4469
      %v4471 = vpop.f32.mrb[0].mxu0
      %4472 = vmatprep.mubr.f32.mxu0 0.0
      %4473 = vmatmul.mubr.f32.gmra.mrb[0].mxu0 %v4277
      %v4474 = vpop.f32.mrb[0].mxu0
      %v4475 = vadd.f32 %v4154, %v4474
      %v4476 = vpop.f32.mrb[0].mxu0
      %4477 = vmatprep.mubr.f32.mxu0 0.0
      %4478 = vmatmul.mubr.f32.gmra.mrb[0].mxu0 %v4280
      %v4479 = vpop.f32.mrb[0].mxu0
      %v4480 = vadd.f32 %v4159, %v4479
      %v4481 = vpop.f32.mrb[0].mxu0
      %4482 = vmatprep.mubr.f32.mxu0 0.0
      %4483 = vmatmul.mubr.f32.gmra.mrb[0].mxu0 %v4283
      %v4484 = vpop.f32.mrb[0].mxu0
      %v4485 = vadd.f32 %v4164, %v4484
      %v4486 = vpop.f32.mrb[0].mxu0
      %4487 = vmatprep.mubr.f32.mxu0 0.0
      %4488 = vmatmul.mubr.f32.gmra.mrb[0].mxu0 %v4286
      %v4489 = vpop.f32.mrb[0].mxu0
      %v4490 = vadd.f32 %v4169, %v4489
      %v4491 = vpop.f32.mrb[0].mxu0
      %4492 = vmatprep.mubr.f32.mxu0 0.0
      %4493 = vmatmul.mubr.f32.gmra.mrb[0].mxu0 %v4289
      %v4494 = vpop.f32.mrb[0].mxu0
      %v4495 = vadd.f32 %v4174, %v4494
      %v4496 = vpop.f32.mrb[0].mxu0
      %4497 = vmatprep.mubr.f32.mxu0 0.0
      %4498 = vmatmul.mubr.f32.gmra.mrb[0].mxu0 %v4292
      %v4499 = vpop.f32.mrb[0].mxu0
      %v4500 = vadd.f32 %v4179, %v4499
      %v4501 = vpop.f32.mrb[0].mxu0
      %4502 = vmatprep.mubr.f32.mxu0 0.0
      %4503 = vmatmul.mubr.f32.gmra.mrb[0].mxu0 %v4295
      %v4504 = vpop.f32.mrb[0].mxu0
      %v4505 = vadd.f32 %v4184, %v4504
      %v4506 = vpop.f32.mrb[0].mxu0
      %4507 = vmatprep.mubr.f32.mxu0 0.0
      %4508 = vmatmul.mubr.f32.gmra.mrb[0].mxu0 %v4298
      %v4509 = vpop.f32.mrb[0].mxu0
      %v4510 = vadd.f32 %v4189, %v4509
      %v4511 = vpop.f32.mrb[0].mxu0
      %4512 = vmatprep.mubr.f32.mxu0 0.0
      %4513 = vmatmul.mubr.f32.gmra.mrb[0].mxu0 %v4301
      %v4514 = vpop.f32.mrb[0].mxu0
      %v4515 = vadd.f32 %v4194, %v4514
      %v4516 = vpop.f32.mrb[0].mxu0
      %4517 = vmatprep.mubr.f32.mxu0 0.0
      %4518 = vmatmul.mubr.f32.gmra.mrb[0].mxu0 %v4304
      %v4519 = vpop.f32.mrb[0].mxu0
      %v4520 = vadd.f32 %v4199, %v4519
      %v4521 = vpop.f32.mrb[0].mxu0
      %4522 = vmatprep.mubr.f32.mxu0 0.0
      %4523 = vmatmul.mubr.f32.gmra.mrb[0].mxu0 %v4307
      %v4524 = vpop.f32.mrb[0].mxu0
      %v4525 = vadd.f32 %v4204, %v4524
      %v4526 = vpop.f32.mrb[0].mxu0
      %4527 = vmatprep.mubr.f32.mxu0 0.0
      %4528 = vmatmul.mubr.f32.gmra.mrb[0].mxu0 %v4310
      %v4529 = vpop.f32.mrb[0].mxu0
      %v4530 = vadd.f32 %v4209, %v4529
      %v4531 = vpop.f32.mrb[0].mxu0
      %4532 = vmatprep.mubr.f32.mxu0 0.0
      %4533 = vmatmul.mubr.f32.gmra.mrb[0].mxu0 %v4313
      %v4534 = vpop.f32.mrb[0].mxu0
      %v4535 = vadd.f32 %v4214, %v4534
      %v4536 = vpop.f32.mrb[0].mxu0
      %4537 = vmatprep.mubr.f32.mxu0 0.0
      %4538 = vmatmul.mubr.f32.gmra.mrb[0].mxu0 %v4316
      %v4539 = vpop.f32.mrb[0].mxu0
      %v4540 = vadd.f32 %v4219, %v4539
      %v4541 = vpop.f32.mrb[0].mxu0
      %4542 = vdwg.mxu0
      %v4543 = vld [vmem:[#allocation2 + $0x2] sm:$0xff]
      %v4544 = vld [vmem:[#allocation2 + $0xa] sm:$0xff]
      %v4545 = vld [vmem:[#allocation2 + $0x1a] sm:$0xff]
      %v4546 = vld [vmem:[#allocation2 + $0x22] sm:$0xff]
      %v4547 = vld [vmem:[#allocation2 + $0x32] sm:$0xff]
      %v4548 = vld [vmem:[#allocation2 + $0x3a] sm:$0xff]
      %v4549 = vld [vmem:[#allocation2 + $0x4a] sm:$0xff]
      %v4550 = vld [vmem:[#allocation2 + $0x52] sm:$0xff]
      %v4551 = vld [vmem:[#allocation2 + $0x62] sm:$0xff]
      %v4552 = vld [vmem:[#allocation2 + $0x6a] sm:$0xff]
      %v4553 = vld [vmem:[#allocation2 + $0x7a] sm:$0xff]
      %v4554 = vld [vmem:[#allocation2 + $0x82] sm:$0xff]
      %v4555 = vld [vmem:[#allocation2 + $0x92] sm:$0xff]
      %v4556 = vld [vmem:[#allocation2 + $0x9a] sm:$0xff]
      %v4557 = vld [vmem:[#allocation2 + $0xaa] sm:$0xff]
      %v4558 = vld [vmem:[#allocation2 + $0xb2] sm:$0xff]
      %v4559 = vld [vmem:[#allocation2 + $0xc2] sm:$0xff]
      %v4560 = vld [vmem:[#allocation2 + $0xca] sm:$0xff]
      %v4561 = vld [vmem:[#allocation2 + $0xda] sm:$0xff]
      %v4562 = vld [vmem:[#allocation2 + $0xe2] sm:$0xff]
      %v4563 = vld [vmem:[#allocation2 + $0xf2] sm:$0xff]
      %v4564 = vld [vmem:[#allocation2 + $0xfa] sm:$0xff]
      %v4565 = vld [vmem:[#allocation2 + $0x10a] sm:$0xff]
      %v4566 = vld [vmem:[#allocation2 + $0x112] sm:$0xff]
      %v4567 = vld [vmem:[#allocation2 + $0x122] sm:$0xff]
      %v4568 = vld [vmem:[#allocation2 + $0x12a] sm:$0xff]
      %v4569 = vld [vmem:[#allocation2 + $0x13a] sm:$0xff]
      %v4570 = vld [vmem:[#allocation2 + $0x142] sm:$0xff]
      %v4571 = vld [vmem:[#allocation2 + $0x152] sm:$0xff]
      %v4572 = vld [vmem:[#allocation2 + $0x15a] sm:$0xff]
      %v4573 = vld [vmem:[#allocation2 + $0x16a] sm:$0xff]
      %v4574 = vld [vmem:[#allocation2 + $0x172] sm:$0xff]
      %s4575 = scalar_lea.vmem %s3, 16
      %v4576 = vld [vmem:[%s4575] sm:$0xff]
      %v4578 = vsel %vm3745, %v4543, 0
      %v4581 = vsel %vm3745, %v4544, 0
      %v4584 = vsel %vm3745, %v4545, 0
      %v4587 = vsel %vm3745, %v4546, 0
      %v4590 = vsel %vm3745, %v4547, 0
      %v4593 = vsel %vm3745, %v4548, 0
      %v4596 = vsel %vm3745, %v4549, 0
      %v4599 = vsel %vm3745, %v4550, 0
      %v4602 = vsel %vm3745, %v4551, 0
      %v4605 = vsel %vm3745, %v4552, 0
      %v4608 = vsel %vm3745, %v4553, 0
      %v4611 = vsel %vm3745, %v4554, 0
      %v4614 = vsel %vm3745, %v4555, 0
      %v4617 = vsel %vm3745, %v4556, 0
      %v4620 = vsel %vm3745, %v4557, 0
      %v4623 = vsel %vm3745, %v4558, 0
      %v4626 = vsel %vm3745, %v4559, 0
      %v4629 = vsel %vm3745, %v4560, 0
      %v4632 = vsel %vm3745, %v4561, 0
      %v4635 = vsel %vm3745, %v4562, 0
      %v4638 = vsel %vm3745, %v4563, 0
      %v4641 = vsel %vm3745, %v4564, 0
      %v4644 = vsel %vm3745, %v4565, 0
      %v4647 = vsel %vm3745, %v4566, 0
      %v4650 = vsel %vm3745, %v4567, 0
      %v4653 = vsel %vm3745, %v4568, 0
      %v4656 = vsel %vm3745, %v4569, 0
      %v4659 = vsel %vm3745, %v4570, 0
      %v4662 = vsel %vm3745, %v4571, 0
      %v4665 = vsel %vm3745, %v4572, 0
      %v4668 = vsel %vm3745, %v4573, 0
      %v4671 = vsel %vm3745, %v4574, 0
      %4673 = vmatprep.subr.mxu0 0.0
      %4674 = vmatpush1.msra.mxu0 %v4576
      %4675 = vmatprep.subr.mxu0 0.0
      %4676 = vmatpush1.msra.mxu0 0.0
      %4677 = vmatprep.subr.mxu0 0.0
      %4678 = vmatpush1.msra.mxu0 0.0
      %4679 = vmatprep.subr.mxu0 0.0
      %4680 = vmatpush1.msra.mxu0 0.0
      %4681 = vmatprep.subr.mxu0 0.0
      %4682 = vmatpush1.msra.mxu0 0.0
      %4683 = vmatprep.subr.mxu0 0.0
      %4684 = vmatpush1.msra.mxu0 0.0
      %4685 = vmatprep.subr.mxu0 0.0
      %4686 = vmatpush1.msra.mxu0 0.0
      %4687 = vmatprep.subr.mxu0 0.0
      %4688 = vmatpush1.msra.mxu0 0.0
      %4689 = vmatprep.subr.mxu0 0.0
      %4690 = vmatpush1.msra.mxu0 0.0
      %4691 = vmatprep.subr.mxu0 0.0
      %4692 = vmatpush1.msra.mxu0 0.0
      %4693 = vmatprep.subr.mxu0 0.0
      %4694 = vmatpush1.msra.mxu0 0.0
      %4695 = vmatprep.subr.mxu0 0.0
      %4696 = vmatpush1.msra.mxu0 0.0
      %4697 = vmatprep.subr.mxu0 0.0
      %4698 = vmatpush1.msra.mxu0 0.0
      %4699 = vmatprep.subr.mxu0 0.0
      %4700 = vmatpush1.msra.mxu0 0.0
      %4701 = vmatprep.subr.mxu0 0.0
      %4702 = vmatpush1.msra.mxu0 0.0
      %4703 = vmatprep.subr.mxu0 0.0
      %4704 = vmatpush1.msra.mxu0 0.0
      %4705 = vmatprep.subr.mxu0 0.0
      %4706 = vmatpush1.msra.mxu0 0.0
      %4707 = vmatprep.subr.mxu0 0.0
      %4708 = vmatpush1.msra.mxu0 0.0
      %4709 = vmatprep.subr.mxu0 0.0
      %4710 = vmatpush1.msra.mxu0 0.0
      %4711 = vmatprep.subr.mxu0 0.0
      %4712 = vmatpush1.msra.mxu0 0.0
      %4713 = vmatprep.subr.mxu0 0.0
      %4714 = vmatpush1.msra.mxu0 0.0
      %4715 = vmatprep.subr.mxu0 0.0
      %4716 = vmatpush1.msra.mxu0 0.0
      %4717 = vmatprep.subr.mxu0 0.0
      %4718 = vmatpush1.msra.mxu0 0.0
      %4719 = vmatprep.subr.mxu0 0.0
      %4720 = vmatpush1.msra.mxu0 0.0
      %4721 = vmatprep.subr.mxu0 0.0
      %4722 = vmatpush1.msra.mxu0 0.0
      %4723 = vmatprep.subr.mxu0 0.0
      %4724 = vmatpush1.msra.mxu0 0.0
      %4725 = vmatprep.subr.mxu0 0.0
      %4726 = vmatpush1.msra.mxu0 0.0
      %4727 = vmatprep.subr.mxu0 0.0
      %4728 = vmatpush1.msra.mxu0 0.0
      %4729 = vmatprep.subr.mxu0 0.0
      %4730 = vmatpush1.msra.mxu0 0.0
      %4731 = vmatprep.subr.mxu0 0.0
      %4732 = vmatpush1.msra.mxu0 0.0
      %4733 = vmatprep.subr.mxu0 0.0
      %4734 = vmatpush1.msra.mxu0 0.0
      %4735 = vmatprep.subr.mxu0 0.0
      %4736 = vmatpush1.msra.mxu0 0.0
      %4737 = vmatprep.mubr.f32.mxu0 0.0
      %4738 = vmatmul.mubr.f32.gmra.mrb[0].mxu0 %v4578
      %v4739 = vpop.f32.mrb[0].mxu0
      %v4740 = vadd.f32 0.0, %v4739
      %v4741 = vpop.f32.mrb[0].mxu0
      %4742 = vmatprep.mubr.f32.mxu0 0.0
      %4743 = vmatmul.mubr.f32.gmra.mrb[0].mxu0 %v4581
      %v4744 = vpop.f32.mrb[0].mxu0
      %v4745 = vadd.f32 0.0, %v4744
      %v4746 = vpop.f32.mrb[0].mxu0
      %4747 = vmatprep.mubr.f32.mxu0 0.0
      %4748 = vmatmul.mubr.f32.gmra.mrb[0].mxu0 %v4584
      %v4749 = vpop.f32.mrb[0].mxu0
      %v4750 = vadd.f32 0.0, %v4749
      %v4751 = vpop.f32.mrb[0].mxu0
      %4752 = vmatprep.mubr.f32.mxu0 0.0
      %4753 = vmatmul.mubr.f32.gmra.mrb[0].mxu0 %v4587
      %v4754 = vpop.f32.mrb[0].mxu0
      %v4755 = vadd.f32 0.0, %v4754
      %v4756 = vpop.f32.mrb[0].mxu0
      %4757 = vmatprep.mubr.f32.mxu0 0.0
      %4758 = vmatmul.mubr.f32.gmra.mrb[0].mxu0 %v4590
      %v4759 = vpop.f32.mrb[0].mxu0
      %v4760 = vadd.f32 0.0, %v4759
      %v4761 = vpop.f32.mrb[0].mxu0
      %4762 = vmatprep.mubr.f32.mxu0 0.0
      %4763 = vmatmul.mubr.f32.gmra.mrb[0].mxu0 %v4593
      %v4764 = vpop.f32.mrb[0].mxu0
      %v4765 = vadd.f32 0.0, %v4764
      %v4766 = vpop.f32.mrb[0].mxu0
      %4767 = vmatprep.mubr.f32.mxu0 0.0
      %4768 = vmatmul.mubr.f32.gmra.mrb[0].mxu0 %v4596
      %v4769 = vpop.f32.mrb[0].mxu0
      %v4770 = vadd.f32 0.0, %v4769
      %v4771 = vpop.f32.mrb[0].mxu0
      %4772 = vmatprep.mubr.f32.mxu0 0.0
      %4773 = vmatmul.mubr.f32.gmra.mrb[0].mxu0 %v4599
      %v4774 = vpop.f32.mrb[0].mxu0
      %v4775 = vadd.f32 0.0, %v4774
      %v4776 = vpop.f32.mrb[0].mxu0
      %4777 = vmatprep.mubr.f32.mxu0 0.0
      %4778 = vmatmul.mubr.f32.gmra.mrb[0].mxu0 %v4602
      %v4779 = vpop.f32.mrb[0].mxu0
      %v4780 = vadd.f32 0.0, %v4779
      %v4781 = vpop.f32.mrb[0].mxu0
      %4782 = vmatprep.mubr.f32.mxu0 0.0
      %4783 = vmatmul.mubr.f32.gmra.mrb[0].mxu0 %v4605
      %v4784 = vpop.f32.mrb[0].mxu0
      %v4785 = vadd.f32 0.0, %v4784
      %v4786 = vpop.f32.mrb[0].mxu0
      %4787 = vmatprep.mubr.f32.mxu0 0.0
      %4788 = vmatmul.mubr.f32.gmra.mrb[0].mxu0 %v4608
      %v4789 = vpop.f32.mrb[0].mxu0
      %v4790 = vadd.f32 0.0, %v4789
      %v4791 = vpop.f32.mrb[0].mxu0
      %4792 = vmatprep.mubr.f32.mxu0 0.0
      %4793 = vmatmul.mubr.f32.gmra.mrb[0].mxu0 %v4611
      %v4794 = vpop.f32.mrb[0].mxu0
      %v4795 = vadd.f32 0.0, %v4794
      %v4796 = vpop.f32.mrb[0].mxu0
      %4797 = vmatprep.mubr.f32.mxu0 0.0
      %4798 = vmatmul.mubr.f32.gmra.mrb[0].mxu0 %v4614
      %v4799 = vpop.f32.mrb[0].mxu0
      %v4800 = vadd.f32 0.0, %v4799
      %v4801 = vpop.f32.mrb[0].mxu0
      %4802 = vmatprep.mubr.f32.mxu0 0.0
      %4803 = vmatmul.mubr.f32.gmra.mrb[0].mxu0 %v4617
      %v4804 = vpop.f32.mrb[0].mxu0
      %v4805 = vadd.f32 0.0, %v4804
      %v4806 = vpop.f32.mrb[0].mxu0
      %4807 = vmatprep.mubr.f32.mxu0 0.0
      %4808 = vmatmul.mubr.f32.gmra.mrb[0].mxu0 %v4620
      %v4809 = vpop.f32.mrb[0].mxu0
      %v4810 = vadd.f32 0.0, %v4809
      %v4811 = vpop.f32.mrb[0].mxu0
      %4812 = vmatprep.mubr.f32.mxu0 0.0
      %4813 = vmatmul.mubr.f32.gmra.mrb[0].mxu0 %v4623
      %v4814 = vpop.f32.mrb[0].mxu0
      %v4815 = vadd.f32 0.0, %v4814
      %v4816 = vpop.f32.mrb[0].mxu0
      %4817 = vmatprep.mubr.f32.mxu0 0.0
      %4818 = vmatmul.mubr.f32.gmra.mrb[0].mxu0 %v4626
      %v4819 = vpop.f32.mrb[0].mxu0
      %v4820 = vadd.f32 0.0, %v4819
      %v4821 = vpop.f32.mrb[0].mxu0
      %4822 = vmatprep.mubr.f32.mxu0 0.0
      %4823 = vmatmul.mubr.f32.gmra.mrb[0].mxu0 %v4629
      %v4824 = vpop.f32.mrb[0].mxu0
      %v4825 = vadd.f32 0.0, %v4824
      %v4826 = vpop.f32.mrb[0].mxu0
      %4827 = vmatprep.mubr.f32.mxu0 0.0
      %4828 = vmatmul.mubr.f32.gmra.mrb[0].mxu0 %v4632
      %v4829 = vpop.f32.mrb[0].mxu0
      %v4830 = vadd.f32 0.0, %v4829
      %v4831 = vpop.f32.mrb[0].mxu0
      %4832 = vmatprep.mubr.f32.mxu0 0.0
      %4833 = vmatmul.mubr.f32.gmra.mrb[0].mxu0 %v4635
      %v4834 = vpop.f32.mrb[0].mxu0
      %v4835 = vadd.f32 0.0, %v4834
      %v4836 = vpop.f32.mrb[0].mxu0
      %4837 = vmatprep.mubr.f32.mxu0 0.0
      %4838 = vmatmul.mubr.f32.gmra.mrb[0].mxu0 %v4638
      %v4839 = vpop.f32.mrb[0].mxu0
      %v4840 = vadd.f32 0.0, %v4839
      %v4841 = vpop.f32.mrb[0].mxu0
      %4842 = vmatprep.mubr.f32.mxu0 0.0
      %4843 = vmatmul.mubr.f32.gmra.mrb[0].mxu0 %v4641
      %v4844 = vpop.f32.mrb[0].mxu0
      %v4845 = vadd.f32 0.0, %v4844
      %v4846 = vpop.f32.mrb[0].mxu0
      %4847 = vmatprep.mubr.f32.mxu0 0.0
      %4848 = vmatmul.mubr.f32.gmra.mrb[0].mxu0 %v4644
      %v4849 = vpop.f32.mrb[0].mxu0
      %v4850 = vadd.f32 0.0, %v4849
      %v4851 = vpop.f32.mrb[0].mxu0
      %4852 = vmatprep.mubr.f32.mxu0 0.0
      %4853 = vmatmul.mubr.f32.gmra.mrb[0].mxu0 %v4647
      %v4854 = vpop.f32.mrb[0].mxu0
      %v4855 = vadd.f32 0.0, %v4854
      %v4856 = vpop.f32.mrb[0].mxu0
      %4857 = vmatprep.mubr.f32.mxu0 0.0
      %4858 = vmatmul.mubr.f32.gmra.mrb[0].mxu0 %v4650
      %v4859 = vpop.f32.mrb[0].mxu0
      %v4860 = vadd.f32 0.0, %v4859
      %v4861 = vpop.f32.mrb[0].mxu0
      %4862 = vmatprep.mubr.f32.mxu0 0.0
      %4863 = vmatmul.mubr.f32.gmra.mrb[0].mxu0 %v4653
      %v4864 = vpop.f32.mrb[0].mxu0
      %v4865 = vadd.f32 0.0, %v4864
      %v4866 = vpop.f32.mrb[0].mxu0
      %4867 = vmatprep.mubr.f32.mxu0 0.0
      %4868 = vmatmul.mubr.f32.gmra.mrb[0].mxu0 %v4656
      %v4869 = vpop.f32.mrb[0].mxu0
      %v4870 = vadd.f32 0.0, %v4869
      %v4871 = vpop.f32.mrb[0].mxu0
      %4872 = vmatprep.mubr.f32.mxu0 0.0
      %4873 = vmatmul.mubr.f32.gmra.mrb[0].mxu0 %v4659
      %v4874 = vpop.f32.mrb[0].mxu0
      %v4875 = vadd.f32 0.0, %v4874
      %v4876 = vpop.f32.mrb[0].mxu0
      %4877 = vmatprep.mubr.f32.mxu0 0.0
      %4878 = vmatmul.mubr.f32.gmra.mrb[0].mxu0 %v4662
      %v4879 = vpop.f32.mrb[0].mxu0
      %v4880 = vadd.f32 0.0, %v4879
      %v4881 = vpop.f32.mrb[0].mxu0
      %4882 = vmatprep.mubr.f32.mxu0 0.0
      %4883 = vmatmul.mubr.f32.gmra.mrb[0].mxu0 %v4665
      %v4884 = vpop.f32.mrb[0].mxu0
      %v4885 = vadd.f32 0.0, %v4884
      %v4886 = vpop.f32.mrb[0].mxu0
      %4887 = vmatprep.mubr.f32.mxu0 0.0
      %4888 = vmatmul.mubr.f32.gmra.mrb[0].mxu0 %v4668
      %v4889 = vpop.f32.mrb[0].mxu0
      %v4890 = vadd.f32 0.0, %v4889
      %v4891 = vpop.f32.mrb[0].mxu0
      %4892 = vmatprep.mubr.f32.mxu0 0.0
      %4893 = vmatmul.mubr.f32.gmra.mrb[0].mxu0 %v4671
      %v4894 = vpop.f32.mrb[0].mxu0
      %v4895 = vadd.f32 0.0, %v4894
      %v4896 = vpop.f32.mrb[0].mxu0
      %4897 = vdwg.mxu0
      %v4898 = vadd.f32 %v4385, %v4740
      %v4899 = vadd.f32 %v4390, %v4745
      %v4900 = vadd.f32 %v4395, %v4750
      %v4901 = vadd.f32 %v4400, %v4755
      %v4902 = vadd.f32 %v4405, %v4760
      %v4903 = vadd.f32 %v4410, %v4765
      %v4904 = vadd.f32 %v4415, %v4770
      %v4905 = vadd.f32 %v4420, %v4775
      %v4906 = vadd.f32 %v4425, %v4780
      %v4907 = vadd.f32 %v4430, %v4785
      %v4908 = vadd.f32 %v4435, %v4790
      %v4909 = vadd.f32 %v4440, %v4795
      %v4910 = vadd.f32 %v4445, %v4800
      %v4911 = vadd.f32 %v4450, %v4805
      %v4912 = vadd.f32 %v4455, %v4810
      %v4913 = vadd.f32 %v4460, %v4815
      %v4914 = vadd.f32 %v4465, %v4820
      %v4915 = vadd.f32 %v4470, %v4825
      %v4916 = vadd.f32 %v4475, %v4830
      %v4917 = vadd.f32 %v4480, %v4835
      %v4918 = vadd.f32 %v4485, %v4840
      %v4919 = vadd.f32 %v4490, %v4845
      %v4920 = vadd.f32 %v4495, %v4850
      %v4921 = vadd.f32 %v4500, %v4855
      %v4922 = vadd.f32 %v4505, %v4860
      %v4923 = vadd.f32 %v4510, %v4865
      %v4924 = vadd.f32 %v4515, %v4870
      %v4925 = vadd.f32 %v4520, %v4875
      %v4926 = vadd.f32 %v4525, %v4880
      %v4927 = vadd.f32 %v4530, %v4885
      %v4928 = vadd.f32 %v4535, %v4890
      %v4929 = vadd.f32 %v4540, %v4895
      %v4930 = vld [vmem:[%s3801] sm:$0xff]
      %v4931 = vld [vmem:[%s3801 + $0x8] sm:$0xff]
      %v4932 = vld [vmem:[%s3801 + $0x18] sm:$0xff]
      %v4933 = vld [vmem:[%s3801 + $0x20] sm:$0xff]
      %v4934 = vld [vmem:[%s3801 + $0x30] sm:$0xff]
      %v4935 = vld [vmem:[%s3801 + $0x38] sm:$0xff]
      %v4936 = vld [vmem:[%s3801 + $0x48] sm:$0xff]
      %v4937 = vld [vmem:[%s3801 + $0x50] sm:$0xff]
      %v4938 = vld [vmem:[%s3801 + $0x60] sm:$0xff]
      %v4939 = vld [vmem:[%s3801 + $0x68] sm:$0xff]
      %v4940 = vld [vmem:[%s3801 + $0x78] sm:$0xff]
      %v4941 = vld [vmem:[%s3801 + $0x80] sm:$0xff]
      %v4942 = vld [vmem:[%s3801 + $0x90] sm:$0xff]
      %v4943 = vld [vmem:[%s3801 + $0x98] sm:$0xff]
      %v4944 = vld [vmem:[%s3801 + $0xa8] sm:$0xff]
      %v4945 = vld [vmem:[%s3801 + $0xb0] sm:$0xff]
      %v4946 = vld [vmem:[%s3801 + $0xc0] sm:$0xff]
      %v4947 = vld [vmem:[%s3801 + $0xc8] sm:$0xff]
      %v4948 = vld [vmem:[%s3801 + $0xd8] sm:$0xff]
      %v4949 = vld [vmem:[%s3801 + $0xe0] sm:$0xff]
      %v4950 = vld [vmem:[%s3801 + $0xf0] sm:$0xff]
      %v4951 = vld [vmem:[%s3801 + $0xf8] sm:$0xff]
      %v4952 = vld [vmem:[%s3801 + $0x108] sm:$0xff]
      %v4953 = vld [vmem:[%s3801 + $0x110] sm:$0xff]
      %v4954 = vld [vmem:[%s3801 + $0x120] sm:$0xff]
      %v4955 = vld [vmem:[%s3801 + $0x128] sm:$0xff]
      %v4956 = vld [vmem:[%s3801 + $0x138] sm:$0xff]
      %v4957 = vld [vmem:[%s3801 + $0x140] sm:$0xff]
      %v4958 = vld [vmem:[%s3801 + $0x150] sm:$0xff]
      %v4959 = vld [vmem:[%s3801 + $0x158] sm:$0xff]
      %v4960 = vld [vmem:[%s3801 + $0x168] sm:$0xff]
      %v4961 = vld [vmem:[%s3801 + $0x170] sm:$0xff]
      %s4962 = scalar_lea.vmem %s3, 24
      %v4963 = vld [vmem:[%s4962] sm:$0xff]
      %v4965 = vsel %vm3745, %v4930, 0
      %v4968 = vsel %vm3745, %v4931, 0
      %v4971 = vsel %vm3745, %v4932, 0
      %v4974 = vsel %vm3745, %v4933, 0
      %v4977 = vsel %vm3745, %v4934, 0
      %v4980 = vsel %vm3745, %v4935, 0
      %v4983 = vsel %vm3745, %v4936, 0
      %v4986 = vsel %vm3745, %v4937, 0
      %v4989 = vsel %vm3745, %v4938, 0
      %v4992 = vsel %vm3745, %v4939, 0
      %v4995 = vsel %vm3745, %v4940, 0
      %v4998 = vsel %vm3745, %v4941, 0
      %v5001 = vsel %vm3745, %v4942, 0
      %v5004 = vsel %vm3745, %v4943, 0
      %v5007 = vsel %vm3745, %v4944, 0
      %v5010 = vsel %vm3745, %v4945, 0
      %v5013 = vsel %vm3745, %v4946, 0
      %v5016 = vsel %vm3745, %v4947, 0
      %v5019 = vsel %vm3745, %v4948, 0
      %v5022 = vsel %vm3745, %v4949, 0
      %v5025 = vsel %vm3745, %v4950, 0
      %v5028 = vsel %vm3745, %v4951, 0
      %v5031 = vsel %vm3745, %v4952, 0
      %v5034 = vsel %vm3745, %v4953, 0
      %v5037 = vsel %vm3745, %v4954, 0
      %v5040 = vsel %vm3745, %v4955, 0
      %v5043 = vsel %vm3745, %v4956, 0
      %v5046 = vsel %vm3745, %v4957, 0
      %v5049 = vsel %vm3745, %v4958, 0
      %v5052 = vsel %vm3745, %v4959, 0
      %v5055 = vsel %vm3745, %v4960, 0
      %v5058 = vsel %vm3745, %v4961, 0
      %5060 = vmatprep.subr.mxu0 0.0
      %5061 = vmatpush1.msra.mxu0 %v4963
      %5062 = vmatprep.subr.mxu0 0.0
      %5063 = vmatpush1.msra.mxu0 0.0
      %5064 = vmatprep.subr.mxu0 0.0
      %5065 = vmatpush1.msra.mxu0 0.0
      %5066 = vmatprep.subr.mxu0 0.0
      %5067 = vmatpush1.msra.mxu0 0.0
      %5068 = vmatprep.subr.mxu0 0.0
      %5069 = vmatpush1.msra.mxu0 0.0
      %5070 = vmatprep.subr.mxu0 0.0
      %5071 = vmatpush1.msra.mxu0 0.0
      %5072 = vmatprep.subr.mxu0 0.0
      %5073 = vmatpush1.msra.mxu0 0.0
      %5074 = vmatprep.subr.mxu0 0.0
      %5075 = vmatpush1.msra.mxu0 0.0
      %5076 = vmatprep.subr.mxu0 0.0
      %5077 = vmatpush1.msra.mxu0 0.0
      %5078 = vmatprep.subr.mxu0 0.0
      %5079 = vmatpush1.msra.mxu0 0.0
      %5080 = vmatprep.subr.mxu0 0.0
      %5081 = vmatpush1.msra.mxu0 0.0
      %5082 = vmatprep.subr.mxu0 0.0
      %5083 = vmatpush1.msra.mxu0 0.0
      %5084 = vmatprep.subr.mxu0 0.0
      %5085 = vmatpush1.msra.mxu0 0.0
      %5086 = vmatprep.subr.mxu0 0.0
      %5087 = vmatpush1.msra.mxu0 0.0
      %5088 = vmatprep.subr.mxu0 0.0
      %5089 = vmatpush1.msra.mxu0 0.0
      %5090 = vmatprep.subr.mxu0 0.0
      %5091 = vmatpush1.msra.mxu0 0.0
      %5092 = vmatprep.subr.mxu0 0.0
      %5093 = vmatpush1.msra.mxu0 0.0
      %5094 = vmatprep.subr.mxu0 0.0
      %5095 = vmatpush1.msra.mxu0 0.0
      %5096 = vmatprep.subr.mxu0 0.0
      %5097 = vmatpush1.msra.mxu0 0.0
      %5098 = vmatprep.subr.mxu0 0.0
      %5099 = vmatpush1.msra.mxu0 0.0
      %5100 = vmatprep.subr.mxu0 0.0
      %5101 = vmatpush1.msra.mxu0 0.0
      %5102 = vmatprep.subr.mxu0 0.0
      %5103 = vmatpush1.msra.mxu0 0.0
      %5104 = vmatprep.subr.mxu0 0.0
      %5105 = vmatpush1.msra.mxu0 0.0
      %5106 = vmatprep.subr.mxu0 0.0
      %5107 = vmatpush1.msra.mxu0 0.0
      %5108 = vmatprep.subr.mxu0 0.0
      %5109 = vmatpush1.msra.mxu0 0.0
      %5110 = vmatprep.subr.mxu0 0.0
      %5111 = vmatpush1.msra.mxu0 0.0
      %5112 = vmatprep.subr.mxu0 0.0
      %5113 = vmatpush1.msra.mxu0 0.0
      %5114 = vmatprep.subr.mxu0 0.0
      %5115 = vmatpush1.msra.mxu0 0.0
      %5116 = vmatprep.subr.mxu0 0.0
      %5117 = vmatpush1.msra.mxu0 0.0
      %5118 = vmatprep.subr.mxu0 0.0
      %5119 = vmatpush1.msra.mxu0 0.0
      %5120 = vmatprep.subr.mxu0 0.0
      %5121 = vmatpush1.msra.mxu0 0.0
      %5122 = vmatprep.subr.mxu0 0.0
      %5123 = vmatpush1.msra.mxu0 0.0
      %5124 = vmatprep.mubr.f32.mxu0 0.0
      %5125 = vmatmul.mubr.f32.gmra.mrb[0].mxu0 %v4965
      %v5126 = vpop.f32.mrb[0].mxu0
      %v5127 = vadd.f32 0.0, %v5126
      %v5128 = vpop.f32.mrb[0].mxu0
      %5129 = vmatprep.mubr.f32.mxu0 0.0
      %5130 = vmatmul.mubr.f32.gmra.mrb[0].mxu0 %v4968
      %v5131 = vpop.f32.mrb[0].mxu0
      %v5132 = vadd.f32 0.0, %v5131
      %v5133 = vpop.f32.mrb[0].mxu0
      %5134 = vmatprep.mubr.f32.mxu0 0.0
      %5135 = vmatmul.mubr.f32.gmra.mrb[0].mxu0 %v4971
      %v5136 = vpop.f32.mrb[0].mxu0
      %v5137 = vadd.f32 0.0, %v5136
      %v5138 = vpop.f32.mrb[0].mxu0
      %5139 = vmatprep.mubr.f32.mxu0 0.0
      %5140 = vmatmul.mubr.f32.gmra.mrb[0].mxu0 %v4974
      %v5141 = vpop.f32.mrb[0].mxu0
      %v5142 = vadd.f32 0.0, %v5141
      %v5143 = vpop.f32.mrb[0].mxu0
      %5144 = vmatprep.mubr.f32.mxu0 0.0
      %5145 = vmatmul.mubr.f32.gmra.mrb[0].mxu0 %v4977
      %v5146 = vpop.f32.mrb[0].mxu0
      %v5147 = vadd.f32 0.0, %v5146
      %v5148 = vpop.f32.mrb[0].mxu0
      %5149 = vmatprep.mubr.f32.mxu0 0.0
      %5150 = vmatmul.mubr.f32.gmra.mrb[0].mxu0 %v4980
      %v5151 = vpop.f32.mrb[0].mxu0
      %v5152 = vadd.f32 0.0, %v5151
      %v5153 = vpop.f32.mrb[0].mxu0
      %5154 = vmatprep.mubr.f32.mxu0 0.0
      %5155 = vmatmul.mubr.f32.gmra.mrb[0].mxu0 %v4983
      %v5156 = vpop.f32.mrb[0].mxu0
      %v5157 = vadd.f32 0.0, %v5156
      %v5158 = vpop.f32.mrb[0].mxu0
      %5159 = vmatprep.mubr.f32.mxu0 0.0
      %5160 = vmatmul.mubr.f32.gmra.mrb[0].mxu0 %v4986
      %v5161 = vpop.f32.mrb[0].mxu0
      %v5162 = vadd.f32 0.0, %v5161
      %v5163 = vpop.f32.mrb[0].mxu0
      %5164 = vmatprep.mubr.f32.mxu0 0.0
      %5165 = vmatmul.mubr.f32.gmra.mrb[0].mxu0 %v4989
      %v5166 = vpop.f32.mrb[0].mxu0
      %v5167 = vadd.f32 0.0, %v5166
      %v5168 = vpop.f32.mrb[0].mxu0
      %5169 = vmatprep.mubr.f32.mxu0 0.0
      %5170 = vmatmul.mubr.f32.gmra.mrb[0].mxu0 %v4992
      %v5171 = vpop.f32.mrb[0].mxu0
      %v5172 = vadd.f32 0.0, %v5171
      %v5173 = vpop.f32.mrb[0].mxu0
      %5174 = vmatprep.mubr.f32.mxu0 0.0
      %5175 = vmatmul.mubr.f32.gmra.mrb[0].mxu0 %v4995
      %v5176 = vpop.f32.mrb[0].mxu0
      %v5177 = vadd.f32 0.0, %v5176
      %v5178 = vpop.f32.mrb[0].mxu0
      %5179 = vmatprep.mubr.f32.mxu0 0.0
      %5180 = vmatmul.mubr.f32.gmra.mrb[0].mxu0 %v4998
      %v5181 = vpop.f32.mrb[0].mxu0
      %v5182 = vadd.f32 0.0, %v5181
      %v5183 = vpop.f32.mrb[0].mxu0
      %5184 = vmatprep.mubr.f32.mxu0 0.0
      %5185 = vmatmul.mubr.f32.gmra.mrb[0].mxu0 %v5001
      %v5186 = vpop.f32.mrb[0].mxu0
      %v5187 = vadd.f32 0.0, %v5186
      %v5188 = vpop.f32.mrb[0].mxu0
      %5189 = vmatprep.mubr.f32.mxu0 0.0
      %5190 = vmatmul.mubr.f32.gmra.mrb[0].mxu0 %v5004
      %v5191 = vpop.f32.mrb[0].mxu0
      %v5192 = vadd.f32 0.0, %v5191
      %v5193 = vpop.f32.mrb[0].mxu0
      %5194 = vmatprep.mubr.f32.mxu0 0.0
      %5195 = vmatmul.mubr.f32.gmra.mrb[0].mxu0 %v5007
      %v5196 = vpop.f32.mrb[0].mxu0
      %v5197 = vadd.f32 0.0, %v5196
      %v5198 = vpop.f32.mrb[0].mxu0
      %5199 = vmatprep.mubr.f32.mxu0 0.0
      %5200 = vmatmul.mubr.f32.gmra.mrb[0].mxu0 %v5010
      %v5201 = vpop.f32.mrb[0].mxu0
      %v5202 = vadd.f32 0.0, %v5201
      %v5203 = vpop.f32.mrb[0].mxu0
      %5204 = vmatprep.mubr.f32.mxu0 0.0
      %5205 = vmatmul.mubr.f32.gmra.mrb[0].mxu0 %v5013
      %v5206 = vpop.f32.mrb[0].mxu0
      %v5207 = vadd.f32 0.0, %v5206
      %v5208 = vpop.f32.mrb[0].mxu0
      %5209 = vmatprep.mubr.f32.mxu0 0.0
      %5210 = vmatmul.mubr.f32.gmra.mrb[0].mxu0 %v5016
      %v5211 = vpop.f32.mrb[0].mxu0
      %v5212 = vadd.f32 0.0, %v5211
      %v5213 = vpop.f32.mrb[0].mxu0
      %5214 = vmatprep.mubr.f32.mxu0 0.0
      %5215 = vmatmul.mubr.f32.gmra.mrb[0].mxu0 %v5019
      %v5216 = vpop.f32.mrb[0].mxu0
      %v5217 = vadd.f32 0.0, %v5216
      %v5218 = vpop.f32.mrb[0].mxu0
      %5219 = vmatprep.mubr.f32.mxu0 0.0
      %5220 = vmatmul.mubr.f32.gmra.mrb[0].mxu0 %v5022
      %v5221 = vpop.f32.mrb[0].mxu0
      %v5222 = vadd.f32 0.0, %v5221
      %v5223 = vpop.f32.mrb[0].mxu0
      %5224 = vmatprep.mubr.f32.mxu0 0.0
      %5225 = vmatmul.mubr.f32.gmra.mrb[0].mxu0 %v5025
      %v5226 = vpop.f32.mrb[0].mxu0
      %v5227 = vadd.f32 0.0, %v5226
      %v5228 = vpop.f32.mrb[0].mxu0
      %5229 = vmatprep.mubr.f32.mxu0 0.0
      %5230 = vmatmul.mubr.f32.gmra.mrb[0].mxu0 %v5028
      %v5231 = vpop.f32.mrb[0].mxu0
      %v5232 = vadd.f32 0.0, %v5231
      %v5233 = vpop.f32.mrb[0].mxu0
      %5234 = vmatprep.mubr.f32.mxu0 0.0
      %5235 = vmatmul.mubr.f32.gmra.mrb[0].mxu0 %v5031
      %v5236 = vpop.f32.mrb[0].mxu0
      %v5237 = vadd.f32 0.0, %v5236
      %v5238 = vpop.f32.mrb[0].mxu0
      %5239 = vmatprep.mubr.f32.mxu0 0.0
      %5240 = vmatmul.mubr.f32.gmra.mrb[0].mxu0 %v5034
      %v5241 = vpop.f32.mrb[0].mxu0
      %v5242 = vadd.f32 0.0, %v5241
      %v5243 = vpop.f32.mrb[0].mxu0
      %5244 = vmatprep.mubr.f32.mxu0 0.0
      %5245 = vmatmul.mubr.f32.gmra.mrb[0].mxu0 %v5037
      %v5246 = vpop.f32.mrb[0].mxu0
      %v5247 = vadd.f32 0.0, %v5246
      %v5248 = vpop.f32.mrb[0].mxu0
      %5249 = vmatprep.mubr.f32.mxu0 0.0
      %5250 = vmatmul.mubr.f32.gmra.mrb[0].mxu0 %v5040
      %v5251 = vpop.f32.mrb[0].mxu0
      %v5252 = vadd.f32 0.0, %v5251
      %v5253 = vpop.f32.mrb[0].mxu0
      %5254 = vmatprep.mubr.f32.mxu0 0.0
      %5255 = vmatmul.mubr.f32.gmra.mrb[0].mxu0 %v5043
      %v5256 = vpop.f32.mrb[0].mxu0
      %v5257 = vadd.f32 0.0, %v5256
      %v5258 = vpop.f32.mrb[0].mxu0
      %5259 = vmatprep.mubr.f32.mxu0 0.0
      %5260 = vmatmul.mubr.f32.gmra.mrb[0].mxu0 %v5046
      %v5261 = vpop.f32.mrb[0].mxu0
      %v5262 = vadd.f32 0.0, %v5261
      %v5263 = vpop.f32.mrb[0].mxu0
      %5264 = vmatprep.mubr.f32.mxu0 0.0
      %5265 = vmatmul.mubr.f32.gmra.mrb[0].mxu0 %v5049
      %v5266 = vpop.f32.mrb[0].mxu0
      %v5267 = vadd.f32 0.0, %v5266
      %v5268 = vpop.f32.mrb[0].mxu0
      %5269 = vmatprep.mubr.f32.mxu0 0.0
      %5270 = vmatmul.mubr.f32.gmra.mrb[0].mxu0 %v5052
      %v5271 = vpop.f32.mrb[0].mxu0
      %v5272 = vadd.f32 0.0, %v5271
      %v5273 = vpop.f32.mrb[0].mxu0
      %5274 = vmatprep.mubr.f32.mxu0 0.0
      %5275 = vmatmul.mubr.f32.gmra.mrb[0].mxu0 %v5055
      %v5276 = vpop.f32.mrb[0].mxu0
      %v5277 = vadd.f32 0.0, %v5276
      %v5278 = vpop.f32.mrb[0].mxu0
      %5279 = vmatprep.mubr.f32.mxu0 0.0
      %5280 = vmatmul.mubr.f32.gmra.mrb[0].mxu0 %v5058
      %v5281 = vpop.f32.mrb[0].mxu0
      %v5282 = vadd.f32 0.0, %v5281
      %v5283 = vpop.f32.mrb[0].mxu0
      %5284 = vdwg.mxu0
      %v5285 = vadd.f32 %v4898, %v5127
      %v5286 = vadd.f32 %v4899, %v5132
      %v5287 = vadd.f32 %v4900, %v5137
      %v5288 = vadd.f32 %v4901, %v5142
      %v5289 = vadd.f32 %v4902, %v5147
      %v5290 = vadd.f32 %v4903, %v5152
      %v5291 = vadd.f32 %v4904, %v5157
      %v5292 = vadd.f32 %v4905, %v5162
      %v5293 = vadd.f32 %v4906, %v5167
      %v5294 = vadd.f32 %v4907, %v5172
      %v5295 = vadd.f32 %v4908, %v5177
      %v5296 = vadd.f32 %v4909, %v5182
      %v5297 = vadd.f32 %v4910, %v5187
      %v5298 = vadd.f32 %v4911, %v5192
      %v5299 = vadd.f32 %v4912, %v5197
      %v5300 = vadd.f32 %v4913, %v5202
      %v5301 = vadd.f32 %v4914, %v5207
      %v5302 = vadd.f32 %v4915, %v5212
      %v5303 = vadd.f32 %v4916, %v5217
      %v5304 = vadd.f32 %v4917, %v5222
      %v5305 = vadd.f32 %v4918, %v5227
      %v5306 = vadd.f32 %v4919, %v5232
      %v5307 = vadd.f32 %v4920, %v5237
      %v5308 = vadd.f32 %v4921, %v5242
      %v5309 = vadd.f32 %v4922, %v5247
      %v5310 = vadd.f32 %v4923, %v5252
      %v5311 = vadd.f32 %v4924, %v5257
      %v5312 = vadd.f32 %v4925, %v5262
      %v5313 = vadd.f32 %v4926, %v5267
      %v5314 = vadd.f32 %v4927, %v5272
      %v5315 = vadd.f32 %v4928, %v5277
      %v5316 = vadd.f32 %v4929, %v5282
      %v5317 = vld [vmem:[%s3801 + $0x1] sm:$0xff]
      %v5318 = vld [vmem:[%s3801 + $0x9] sm:$0xff]
      %v5319 = vld [vmem:[%s3801 + $0x19] sm:$0xff]
      %v5320 = vld [vmem:[%s3801 + $0x21] sm:$0xff]
      %v5321 = vld [vmem:[%s3801 + $0x31] sm:$0xff]
      %v5322 = vld [vmem:[%s3801 + $0x39] sm:$0xff]
      %v5323 = vld [vmem:[%s3801 + $0x49] sm:$0xff]
      %v5324 = vld [vmem:[%s3801 + $0x51] sm:$0xff]
      %v5325 = vld [vmem:[%s3801 + $0x61] sm:$0xff]
      %v5326 = vld [vmem:[%s3801 + $0x69] sm:$0xff]
      %v5327 = vld [vmem:[%s3801 + $0x79] sm:$0xff]
      %v5328 = vld [vmem:[%s3801 + $0x81] sm:$0xff]
      %v5329 = vld [vmem:[%s3801 + $0x91] sm:$0xff]
      %v5330 = vld [vmem:[%s3801 + $0x99] sm:$0xff]
      %v5331 = vld [vmem:[%s3801 + $0xa9] sm:$0xff]
      %v5332 = vld [vmem:[%s3801 + $0xb1] sm:$0xff]
      %v5333 = vld [vmem:[%s3801 + $0xc1] sm:$0xff]
      %v5334 = vld [vmem:[%s3801 + $0xc9] sm:$0xff]
      %v5335 = vld [vmem:[%s3801 + $0xd9] sm:$0xff]
      %v5336 = vld [vmem:[%s3801 + $0xe1] sm:$0xff]
      %v5337 = vld [vmem:[%s3801 + $0xf1] sm:$0xff]
      %v5338 = vld [vmem:[%s3801 + $0xf9] sm:$0xff]
      %v5339 = vld [vmem:[%s3801 + $0x109] sm:$0xff]
      %v5340 = vld [vmem:[%s3801 + $0x111] sm:$0xff]
      %v5341 = vld [vmem:[%s3801 + $0x121] sm:$0xff]
      %v5342 = vld [vmem:[%s3801 + $0x129] sm:$0xff]
      %v5343 = vld [vmem:[%s3801 + $0x139] sm:$0xff]
      %v5344 = vld [vmem:[%s3801 + $0x141] sm:$0xff]
      %v5345 = vld [vmem:[%s3801 + $0x151] sm:$0xff]
      %v5346 = vld [vmem:[%s3801 + $0x159] sm:$0xff]
      %v5347 = vld [vmem:[%s3801 + $0x169] sm:$0xff]
      %v5348 = vld [vmem:[%s3801 + $0x171] sm:$0xff]
      %s5349 = scalar_lea.vmem %s3, 32
      %v5350 = vld [vmem:[%s5349] sm:$0xff]
      %v5352 = vsel %vm3745, %v5317, 0
      %v5355 = vsel %vm3745, %v5318, 0
      %v5358 = vsel %vm3745, %v5319, 0
      %v5361 = vsel %vm3745, %v5320, 0
      %v5364 = vsel %vm3745, %v5321, 0
      %v5367 = vsel %vm3745, %v5322, 0
      %v5370 = vsel %vm3745, %v5323, 0
      %v5373 = vsel %vm3745, %v5324, 0
      %v5376 = vsel %vm3745, %v5325, 0
      %v5379 = vsel %vm3745, %v5326, 0
      %v5382 = vsel %vm3745, %v5327, 0
      %v5385 = vsel %vm3745, %v5328, 0
      %v5388 = vsel %vm3745, %v5329, 0
      %v5391 = vsel %vm3745, %v5330, 0
      %v5394 = vsel %vm3745, %v5331, 0
      %v5397 = vsel %vm3745, %v5332, 0
      %v5400 = vsel %vm3745, %v5333, 0
      %v5403 = vsel %vm3745, %v5334, 0
      %v5406 = vsel %vm3745, %v5335, 0
      %v5409 = vsel %vm3745, %v5336, 0
      %v5412 = vsel %vm3745, %v5337, 0
      %v5415 = vsel %vm3745, %v5338, 0
      %v5418 = vsel %vm3745, %v5339, 0
      %v5421 = vsel %vm3745, %v5340, 0
      %v5424 = vsel %vm3745, %v5341, 0
      %v5427 = vsel %vm3745, %v5342, 0
      %v5430 = vsel %vm3745, %v5343, 0
      %v5433 = vsel %vm3745, %v5344, 0
      %v5436 = vsel %vm3745, %v5345, 0
      %v5439 = vsel %vm3745, %v5346, 0
      %v5442 = vsel %vm3745, %v5347, 0
      %v5445 = vsel %vm3745, %v5348, 0
      %5447 = vmatprep.subr.mxu0 0.0
      %5448 = vmatpush1.msra.mxu0 %v5350
      %5449 = vmatprep.subr.mxu0 0.0
      %5450 = vmatpush1.msra.mxu0 0.0
      %5451 = vmatprep.subr.mxu0 0.0
      %5452 = vmatpush1.msra.mxu0 0.0
      %5453 = vmatprep.subr.mxu0 0.0
      %5454 = vmatpush1.msra.mxu0 0.0
      %5455 = vmatprep.subr.mxu0 0.0
      %5456 = vmatpush1.msra.mxu0 0.0
      %5457 = vmatprep.subr.mxu0 0.0
      %5458 = vmatpush1.msra.mxu0 0.0
      %5459 = vmatprep.subr.mxu0 0.0
      %5460 = vmatpush1.msra.mxu0 0.0
      %5461 = vmatprep.subr.mxu0 0.0
      %5462 = vmatpush1.msra.mxu0 0.0
      %5463 = vmatprep.subr.mxu0 0.0
      %5464 = vmatpush1.msra.mxu0 0.0
      %5465 = vmatprep.subr.mxu0 0.0
      %5466 = vmatpush1.msra.mxu0 0.0
      %5467 = vmatprep.subr.mxu0 0.0
      %5468 = vmatpush1.msra.mxu0 0.0
      %5469 = vmatprep.subr.mxu0 0.0
      %5470 = vmatpush1.msra.mxu0 0.0
      %5471 = vmatprep.subr.mxu0 0.0
      %5472 = vmatpush1.msra.mxu0 0.0
      %5473 = vmatprep.subr.mxu0 0.0
      %5474 = vmatpush1.msra.mxu0 0.0
      %5475 = vmatprep.subr.mxu0 0.0
      %5476 = vmatpush1.msra.mxu0 0.0
      %5477 = vmatprep.subr.mxu0 0.0
      %5478 = vmatpush1.msra.mxu0 0.0
      %5479 = vmatprep.subr.mxu0 0.0
      %5480 = vmatpush1.msra.mxu0 0.0
      %5481 = vmatprep.subr.mxu0 0.0
      %5482 = vmatpush1.msra.mxu0 0.0
      %5483 = vmatprep.subr.mxu0 0.0
      %5484 = vmatpush1.msra.mxu0 0.0
      %5485 = vmatprep.subr.mxu0 0.0
      %5486 = vmatpush1.msra.mxu0 0.0
      %5487 = vmatprep.subr.mxu0 0.0
      %5488 = vmatpush1.msra.mxu0 0.0
      %5489 = vmatprep.subr.mxu0 0.0
      %5490 = vmatpush1.msra.mxu0 0.0
      %5491 = vmatprep.subr.mxu0 0.0
      %5492 = vmatpush1.msra.mxu0 0.0
      %5493 = vmatprep.subr.mxu0 0.0
      %5494 = vmatpush1.msra.mxu0 0.0
      %5495 = vmatprep.subr.mxu0 0.0
      %5496 = vmatpush1.msra.mxu0 0.0
      %5497 = vmatprep.subr.mxu0 0.0
      %5498 = vmatpush1.msra.mxu0 0.0
      %5499 = vmatprep.subr.mxu0 0.0
      %5500 = vmatpush1.msra.mxu0 0.0
      %5501 = vmatprep.subr.mxu0 0.0
      %5502 = vmatpush1.msra.mxu0 0.0
      %5503 = vmatprep.subr.mxu0 0.0
      %5504 = vmatpush1.msra.mxu0 0.0
      %5505 = vmatprep.subr.mxu0 0.0
      %5506 = vmatpush1.msra.mxu0 0.0
      %5507 = vmatprep.subr.mxu0 0.0
      %5508 = vmatpush1.msra.mxu0 0.0
      %5509 = vmatprep.subr.mxu0 0.0
      %5510 = vmatpush1.msra.mxu0 0.0
      %5511 = vmatprep.mubr.f32.mxu0 0.0
      %5512 = vmatmul.mubr.f32.gmra.mrb[0].mxu0 %v5352
      %v5513 = vpop.f32.mrb[0].mxu0
      %v5514 = vadd.f32 0.0, %v5513
      %v5515 = vpop.f32.mrb[0].mxu0
      %5516 = vmatprep.mubr.f32.mxu0 0.0
      %5517 = vmatmul.mubr.f32.gmra.mrb[0].mxu0 %v5355
      %v5518 = vpop.f32.mrb[0].mxu0
      %v5519 = vadd.f32 0.0, %v5518
      %v5520 = vpop.f32.mrb[0].mxu0
      %5521 = vmatprep.mubr.f32.mxu0 0.0
      %5522 = vmatmul.mubr.f32.gmra.mrb[0].mxu0 %v5358
      %v5523 = vpop.f32.mrb[0].mxu0
      %v5524 = vadd.f32 0.0, %v5523
      %v5525 = vpop.f32.mrb[0].mxu0
      %5526 = vmatprep.mubr.f32.mxu0 0.0
      %5527 = vmatmul.mubr.f32.gmra.mrb[0].mxu0 %v5361
      %v5528 = vpop.f32.mrb[0].mxu0
      %v5529 = vadd.f32 0.0, %v5528
      %v5530 = vpop.f32.mrb[0].mxu0
      %5531 = vmatprep.mubr.f32.mxu0 0.0
      %5532 = vmatmul.mubr.f32.gmra.mrb[0].mxu0 %v5364
      %v5533 = vpop.f32.mrb[0].mxu0
      %v5534 = vadd.f32 0.0, %v5533
      %v5535 = vpop.f32.mrb[0].mxu0
      %5536 = vmatprep.mubr.f32.mxu0 0.0
      %5537 = vmatmul.mubr.f32.gmra.mrb[0].mxu0 %v5367
      %v5538 = vpop.f32.mrb[0].mxu0
      %v5539 = vadd.f32 0.0, %v5538
      %v5540 = vpop.f32.mrb[0].mxu0
      %5541 = vmatprep.mubr.f32.mxu0 0.0
      %5542 = vmatmul.mubr.f32.gmra.mrb[0].mxu0 %v5370
      %v5543 = vpop.f32.mrb[0].mxu0
      %v5544 = vadd.f32 0.0, %v5543
      %v5545 = vpop.f32.mrb[0].mxu0
      %5546 = vmatprep.mubr.f32.mxu0 0.0
      %5547 = vmatmul.mubr.f32.gmra.mrb[0].mxu0 %v5373
      %v5548 = vpop.f32.mrb[0].mxu0
      %v5549 = vadd.f32 0.0, %v5548
      %v5550 = vpop.f32.mrb[0].mxu0
      %5551 = vmatprep.mubr.f32.mxu0 0.0
      %5552 = vmatmul.mubr.f32.gmra.mrb[0].mxu0 %v5376
      %v5553 = vpop.f32.mrb[0].mxu0
      %v5554 = vadd.f32 0.0, %v5553
      %v5555 = vpop.f32.mrb[0].mxu0
      %5556 = vmatprep.mubr.f32.mxu0 0.0
      %5557 = vmatmul.mubr.f32.gmra.mrb[0].mxu0 %v5379
      %v5558 = vpop.f32.mrb[0].mxu0
      %v5559 = vadd.f32 0.0, %v5558
      %v5560 = vpop.f32.mrb[0].mxu0
      %5561 = vmatprep.mubr.f32.mxu0 0.0
      %5562 = vmatmul.mubr.f32.gmra.mrb[0].mxu0 %v5382
      %v5563 = vpop.f32.mrb[0].mxu0
      %v5564 = vadd.f32 0.0, %v5563
      %v5565 = vpop.f32.mrb[0].mxu0
      %5566 = vmatprep.mubr.f32.mxu0 0.0
      %5567 = vmatmul.mubr.f32.gmra.mrb[0].mxu0 %v5385
      %v5568 = vpop.f32.mrb[0].mxu0
      %v5569 = vadd.f32 0.0, %v5568
      %v5570 = vpop.f32.mrb[0].mxu0
      %5571 = vmatprep.mubr.f32.mxu0 0.0
      %5572 = vmatmul.mubr.f32.gmra.mrb[0].mxu0 %v5388
      %v5573 = vpop.f32.mrb[0].mxu0
      %v5574 = vadd.f32 0.0, %v5573
      %v5575 = vpop.f32.mrb[0].mxu0
      %5576 = vmatprep.mubr.f32.mxu0 0.0
      %5577 = vmatmul.mubr.f32.gmra.mrb[0].mxu0 %v5391
      %v5578 = vpop.f32.mrb[0].mxu0
      %v5579 = vadd.f32 0.0, %v5578
      %v5580 = vpop.f32.mrb[0].mxu0
      %5581 = vmatprep.mubr.f32.mxu0 0.0
      %5582 = vmatmul.mubr.f32.gmra.mrb[0].mxu0 %v5394
      %v5583 = vpop.f32.mrb[0].mxu0
      %v5584 = vadd.f32 0.0, %v5583
      %v5585 = vpop.f32.mrb[0].mxu0
      %5586 = vmatprep.mubr.f32.mxu0 0.0
      %5587 = vmatmul.mubr.f32.gmra.mrb[0].mxu0 %v5397
      %v5588 = vpop.f32.mrb[0].mxu0
      %v5589 = vadd.f32 0.0, %v5588
      %v5590 = vpop.f32.mrb[0].mxu0
      %5591 = vmatprep.mubr.f32.mxu0 0.0
      %5592 = vmatmul.mubr.f32.gmra.mrb[0].mxu0 %v5400
      %v5593 = vpop.f32.mrb[0].mxu0
      %v5594 = vadd.f32 0.0, %v5593
      %v5595 = vpop.f32.mrb[0].mxu0
      %5596 = vmatprep.mubr.f32.mxu0 0.0
      %5597 = vmatmul.mubr.f32.gmra.mrb[0].mxu0 %v5403
      %v5598 = vpop.f32.mrb[0].mxu0
      %v5599 = vadd.f32 0.0, %v5598
      %v5600 = vpop.f32.mrb[0].mxu0
      %5601 = vmatprep.mubr.f32.mxu0 0.0
      %5602 = vmatmul.mubr.f32.gmra.mrb[0].mxu0 %v5406
      %v5603 = vpop.f32.mrb[0].mxu0
      %v5604 = vadd.f32 0.0, %v5603
      %v5605 = vpop.f32.mrb[0].mxu0
      %5606 = vmatprep.mubr.f32.mxu0 0.0
      %5607 = vmatmul.mubr.f32.gmra.mrb[0].mxu0 %v5409
      %v5608 = vpop.f32.mrb[0].mxu0
      %v5609 = vadd.f32 0.0, %v5608
      %v5610 = vpop.f32.mrb[0].mxu0
      %5611 = vmatprep.mubr.f32.mxu0 0.0
      %5612 = vmatmul.mubr.f32.gmra.mrb[0].mxu0 %v5412
      %v5613 = vpop.f32.mrb[0].mxu0
      %v5614 = vadd.f32 0.0, %v5613
      %v5615 = vpop.f32.mrb[0].mxu0
      %5616 = vmatprep.mubr.f32.mxu0 0.0
      %5617 = vmatmul.mubr.f32.gmra.mrb[0].mxu0 %v5415
      %v5618 = vpop.f32.mrb[0].mxu0
      %v5619 = vadd.f32 0.0, %v5618
      %v5620 = vpop.f32.mrb[0].mxu0
      %5621 = vmatprep.mubr.f32.mxu0 0.0
      %5622 = vmatmul.mubr.f32.gmra.mrb[0].mxu0 %v5418
      %v5623 = vpop.f32.mrb[0].mxu0
      %v5624 = vadd.f32 0.0, %v5623
      %v5625 = vpop.f32.mrb[0].mxu0
      %5626 = vmatprep.mubr.f32.mxu0 0.0
      %5627 = vmatmul.mubr.f32.gmra.mrb[0].mxu0 %v5421
      %v5628 = vpop.f32.mrb[0].mxu0
      %v5629 = vadd.f32 0.0, %v5628
      %v5630 = vpop.f32.mrb[0].mxu0
      %5631 = vmatprep.mubr.f32.mxu0 0.0
      %5632 = vmatmul.mubr.f32.gmra.mrb[0].mxu0 %v5424
      %v5633 = vpop.f32.mrb[0].mxu0
      %v5634 = vadd.f32 0.0, %v5633
      %v5635 = vpop.f32.mrb[0].mxu0
      %5636 = vmatprep.mubr.f32.mxu0 0.0
      %5637 = vmatmul.mubr.f32.gmra.mrb[0].mxu0 %v5427
      %v5638 = vpop.f32.mrb[0].mxu0
      %v5639 = vadd.f32 0.0, %v5638
      %v5640 = vpop.f32.mrb[0].mxu0
      %5641 = vmatprep.mubr.f32.mxu0 0.0
      %5642 = vmatmul.mubr.f32.gmra.mrb[0].mxu0 %v5430
      %v5643 = vpop.f32.mrb[0].mxu0
      %v5644 = vadd.f32 0.0, %v5643
      %v5645 = vpop.f32.mrb[0].mxu0
      %5646 = vmatprep.mubr.f32.mxu0 0.0
      %5647 = vmatmul.mubr.f32.gmra.mrb[0].mxu0 %v5433
      %v5648 = vpop.f32.mrb[0].mxu0
      %v5649 = vadd.f32 0.0, %v5648
      %v5650 = vpop.f32.mrb[0].mxu0
      %5651 = vmatprep.mubr.f32.mxu0 0.0
      %5652 = vmatmul.mubr.f32.gmra.mrb[0].mxu0 %v5436
      %v5653 = vpop.f32.mrb[0].mxu0
      %v5654 = vadd.f32 0.0, %v5653
      %v5655 = vpop.f32.mrb[0].mxu0
      %5656 = vmatprep.mubr.f32.mxu0 0.0
      %5657 = vmatmul.mubr.f32.gmra.mrb[0].mxu0 %v5439
      %v5658 = vpop.f32.mrb[0].mxu0
      %v5659 = vadd.f32 0.0, %v5658
      %v5660 = vpop.f32.mrb[0].mxu0
      %5661 = vmatprep.mubr.f32.mxu0 0.0
      %5662 = vmatmul.mubr.f32.gmra.mrb[0].mxu0 %v5442
      %v5663 = vpop.f32.mrb[0].mxu0
      %v5664 = vadd.f32 0.0, %v5663
      %v5665 = vpop.f32.mrb[0].mxu0
      %5666 = vmatprep.mubr.f32.mxu0 0.0
      %5667 = vmatmul.mubr.f32.gmra.mrb[0].mxu0 %v5445
      %v5668 = vpop.f32.mrb[0].mxu0
      %v5669 = vadd.f32 0.0, %v5668
      %v5670 = vpop.f32.mrb[0].mxu0
      %5671 = vdwg.mxu0
      %v5672 = vadd.f32 %v5285, %v5514
      %v5673 = vadd.f32 %v5286, %v5519
      %v5674 = vadd.f32 %v5287, %v5524
      %v5675 = vadd.f32 %v5288, %v5529
      %v5676 = vadd.f32 %v5289, %v5534
      %v5677 = vadd.f32 %v5290, %v5539
      %v5678 = vadd.f32 %v5291, %v5544
      %v5679 = vadd.f32 %v5292, %v5549
      %v5680 = vadd.f32 %v5293, %v5554
      %v5681 = vadd.f32 %v5294, %v5559
      %v5682 = vadd.f32 %v5295, %v5564
      %v5683 = vadd.f32 %v5296, %v5569
      %v5684 = vadd.f32 %v5297, %v5574
      %v5685 = vadd.f32 %v5298, %v5579
      %v5686 = vadd.f32 %v5299, %v5584
      %v5687 = vadd.f32 %v5300, %v5589
      %v5688 = vadd.f32 %v5301, %v5594
      %v5689 = vadd.f32 %v5302, %v5599
      %v5690 = vadd.f32 %v5303, %v5604
      %v5691 = vadd.f32 %v5304, %v5609
      %v5692 = vadd.f32 %v5305, %v5614
      %v5693 = vadd.f32 %v5306, %v5619
      %v5694 = vadd.f32 %v5307, %v5624
      %v5695 = vadd.f32 %v5308, %v5629
      %v5696 = vadd.f32 %v5309, %v5634
      %v5697 = vadd.f32 %v5310, %v5639
      %v5698 = vadd.f32 %v5311, %v5644
      %v5699 = vadd.f32 %v5312, %v5649
      %v5700 = vadd.f32 %v5313, %v5654
      %v5701 = vadd.f32 %v5314, %v5659
      %v5702 = vadd.f32 %v5315, %v5664
      %v5703 = vadd.f32 %v5316, %v5669
      %v5704 = vld [vmem:[%s3801 + $0x2] sm:$0xff]
      %v5705 = vld [vmem:[%s3801 + $0xa] sm:$0xff]
      %v5706 = vld [vmem:[%s3801 + $0x1a] sm:$0xff]
      %v5707 = vld [vmem:[%s3801 + $0x22] sm:$0xff]
      %v5708 = vld [vmem:[%s3801 + $0x32] sm:$0xff]
      %v5709 = vld [vmem:[%s3801 + $0x3a] sm:$0xff]
      %v5710 = vld [vmem:[%s3801 + $0x4a] sm:$0xff]
      %v5711 = vld [vmem:[%s3801 + $0x52] sm:$0xff]
      %v5712 = vld [vmem:[%s3801 + $0x62] sm:$0xff]
      %v5713 = vld [vmem:[%s3801 + $0x6a] sm:$0xff]
      %v5714 = vld [vmem:[%s3801 + $0x7a] sm:$0xff]
      %v5715 = vld [vmem:[%s3801 + $0x82] sm:$0xff]
      %v5716 = vld [vmem:[%s3801 + $0x92] sm:$0xff]
      %v5717 = vld [vmem:[%s3801 + $0x9a] sm:$0xff]
      %v5718 = vld [vmem:[%s3801 + $0xaa] sm:$0xff]
      %v5719 = vld [vmem:[%s3801 + $0xb2] sm:$0xff]
      %v5720 = vld [vmem:[%s3801 + $0xc2] sm:$0xff]
      %v5721 = vld [vmem:[%s3801 + $0xca] sm:$0xff]
      %v5722 = vld [vmem:[%s3801 + $0xda] sm:$0xff]
      %v5723 = vld [vmem:[%s3801 + $0xe2] sm:$0xff]
      %v5724 = vld [vmem:[%s3801 + $0xf2] sm:$0xff]
      %v5725 = vld [vmem:[%s3801 + $0xfa] sm:$0xff]
      %v5726 = vld [vmem:[%s3801 + $0x10a] sm:$0xff]
      %v5727 = vld [vmem:[%s3801 + $0x112] sm:$0xff]
      %v5728 = vld [vmem:[%s3801 + $0x122] sm:$0xff]
      %v5729 = vld [vmem:[%s3801 + $0x12a] sm:$0xff]
      %v5730 = vld [vmem:[%s3801 + $0x13a] sm:$0xff]
      %v5731 = vld [vmem:[%s3801 + $0x142] sm:$0xff]
      %v5732 = vld [vmem:[%s3801 + $0x152] sm:$0xff]
      %v5733 = vld [vmem:[%s3801 + $0x15a] sm:$0xff]
      %v5734 = vld [vmem:[%s3801 + $0x16a] sm:$0xff]
      %v5735 = vld [vmem:[%s3801 + $0x172] sm:$0xff]
      %s5736 = scalar_lea.vmem %s3, 40
      %v5737 = vld [vmem:[%s5736] sm:$0xff]
      %v5739 = vsel %vm3745, %v5704, 0
      %v5742 = vsel %vm3745, %v5705, 0
      %v5745 = vsel %vm3745, %v5706, 0
      %v5748 = vsel %vm3745, %v5707, 0
      %v5751 = vsel %vm3745, %v5708, 0
      %v5754 = vsel %vm3745, %v5709, 0
      %v5757 = vsel %vm3745, %v5710, 0
      %v5760 = vsel %vm3745, %v5711, 0
      %v5763 = vsel %vm3745, %v5712, 0
      %v5766 = vsel %vm3745, %v5713, 0
      %v5769 = vsel %vm3745, %v5714, 0
      %v5772 = vsel %vm3745, %v5715, 0
      %v5775 = vsel %vm3745, %v5716, 0
      %v5778 = vsel %vm3745, %v5717, 0
      %v5781 = vsel %vm3745, %v5718, 0
      %v5784 = vsel %vm3745, %v5719, 0
      %v5787 = vsel %vm3745, %v5720, 0
      %v5790 = vsel %vm3745, %v5721, 0
      %v5793 = vsel %vm3745, %v5722, 0
      %v5796 = vsel %vm3745, %v5723, 0
      %v5799 = vsel %vm3745, %v5724, 0
      %v5802 = vsel %vm3745, %v5725, 0
      %v5805 = vsel %vm3745, %v5726, 0
      %v5808 = vsel %vm3745, %v5727, 0
      %v5811 = vsel %vm3745, %v5728, 0
      %v5814 = vsel %vm3745, %v5729, 0
      %v5817 = vsel %vm3745, %v5730, 0
      %v5820 = vsel %vm3745, %v5731, 0
      %v5823 = vsel %vm3745, %v5732, 0
      %v5826 = vsel %vm3745, %v5733, 0
      %v5829 = vsel %vm3745, %v5734, 0
      %v5832 = vsel %vm3745, %v5735, 0
      %5834 = vmatprep.subr.mxu0 0.0
      %5835 = vmatpush1.msra.mxu0 %v5737
      %5836 = vmatprep.subr.mxu0 0.0
      %5837 = vmatpush1.msra.mxu0 0.0
      %5838 = vmatprep.subr.mxu0 0.0
      %5839 = vmatpush1.msra.mxu0 0.0
      %5840 = vmatprep.subr.mxu0 0.0
      %5841 = vmatpush1.msra.mxu0 0.0
      %5842 = vmatprep.subr.mxu0 0.0
      %5843 = vmatpush1.msra.mxu0 0.0
      %5844 = vmatprep.subr.mxu0 0.0
      %5845 = vmatpush1.msra.mxu0 0.0
      %5846 = vmatprep.subr.mxu0 0.0
      %5847 = vmatpush1.msra.mxu0 0.0
      %5848 = vmatprep.subr.mxu0 0.0
      %5849 = vmatpush1.msra.mxu0 0.0
      %5850 = vmatprep.subr.mxu0 0.0
      %5851 = vmatpush1.msra.mxu0 0.0
      %5852 = vmatprep.subr.mxu0 0.0
      %5853 = vmatpush1.msra.mxu0 0.0
      %5854 = vmatprep.subr.mxu0 0.0
      %5855 = vmatpush1.msra.mxu0 0.0
      %5856 = vmatprep.subr.mxu0 0.0
      %5857 = vmatpush1.msra.mxu0 0.0
      %5858 = vmatprep.subr.mxu0 0.0
      %5859 = vmatpush1.msra.mxu0 0.0
      %5860 = vmatprep.subr.mxu0 0.0
      %5861 = vmatpush1.msra.mxu0 0.0
      %5862 = vmatprep.subr.mxu0 0.0
      %5863 = vmatpush1.msra.mxu0 0.0
      %5864 = vmatprep.subr.mxu0 0.0
      %5865 = vmatpush1.msra.mxu0 0.0
      %5866 = vmatprep.subr.mxu0 0.0
      %5867 = vmatpush1.msra.mxu0 0.0
      %5868 = vmatprep.subr.mxu0 0.0
      %5869 = vmatpush1.msra.mxu0 0.0
      %5870 = vmatprep.subr.mxu0 0.0
      %5871 = vmatpush1.msra.mxu0 0.0
      %5872 = vmatprep.subr.mxu0 0.0
      %5873 = vmatpush1.msra.mxu0 0.0
      %5874 = vmatprep.subr.mxu0 0.0
      %5875 = vmatpush1.msra.mxu0 0.0
      %5876 = vmatprep.subr.mxu0 0.0
      %5877 = vmatpush1.msra.mxu0 0.0
      %5878 = vmatprep.subr.mxu0 0.0
      %5879 = vmatpush1.msra.mxu0 0.0
      %5880 = vmatprep.subr.mxu0 0.0
      %5881 = vmatpush1.msra.mxu0 0.0
      %5882 = vmatprep.subr.mxu0 0.0
      %5883 = vmatpush1.msra.mxu0 0.0
      %5884 = vmatprep.subr.mxu0 0.0
      %5885 = vmatpush1.msra.mxu0 0.0
      %5886 = vmatprep.subr.mxu0 0.0
      %5887 = vmatpush1.msra.mxu0 0.0
      %5888 = vmatprep.subr.mxu0 0.0
      %5889 = vmatpush1.msra.mxu0 0.0
      %5890 = vmatprep.subr.mxu0 0.0
      %5891 = vmatpush1.msra.mxu0 0.0
      %5892 = vmatprep.subr.mxu0 0.0
      %5893 = vmatpush1.msra.mxu0 0.0
      %5894 = vmatprep.subr.mxu0 0.0
      %5895 = vmatpush1.msra.mxu0 0.0
      %5896 = vmatprep.subr.mxu0 0.0
      %5897 = vmatpush1.msra.mxu0 0.0
      %5898 = vmatprep.mubr.f32.mxu0 0.0
      %5899 = vmatmul.mubr.f32.gmra.mrb[0].mxu0 %v5739
      %v5900 = vpop.f32.mrb[0].mxu0
      %v5901 = vadd.f32 0.0, %v5900
      %v5902 = vpop.f32.mrb[0].mxu0
      %5903 = vmatprep.mubr.f32.mxu0 0.0
      %5904 = vmatmul.mubr.f32.gmra.mrb[0].mxu0 %v5742
      %v5905 = vpop.f32.mrb[0].mxu0
      %v5906 = vadd.f32 0.0, %v5905
      %v5907 = vpop.f32.mrb[0].mxu0
      %5908 = vmatprep.mubr.f32.mxu0 0.0
      %5909 = vmatmul.mubr.f32.gmra.mrb[0].mxu0 %v5745
      %v5910 = vpop.f32.mrb[0].mxu0
      %v5911 = vadd.f32 0.0, %v5910
      %v5912 = vpop.f32.mrb[0].mxu0
      %5913 = vmatprep.mubr.f32.mxu0 0.0
      %5914 = vmatmul.mubr.f32.gmra.mrb[0].mxu0 %v5748
      %v5915 = vpop.f32.mrb[0].mxu0
      %v5916 = vadd.f32 0.0, %v5915
      %v5917 = vpop.f32.mrb[0].mxu0
      %5918 = vmatprep.mubr.f32.mxu0 0.0
      %5919 = vmatmul.mubr.f32.gmra.mrb[0].mxu0 %v5751
      %v5920 = vpop.f32.mrb[0].mxu0
      %v5921 = vadd.f32 0.0, %v5920
      %v5922 = vpop.f32.mrb[0].mxu0
      %5923 = vmatprep.mubr.f32.mxu0 0.0
      %5924 = vmatmul.mubr.f32.gmra.mrb[0].mxu0 %v5754
      %v5925 = vpop.f32.mrb[0].mxu0
      %v5926 = vadd.f32 0.0, %v5925
      %v5927 = vpop.f32.mrb[0].mxu0
      %5928 = vmatprep.mubr.f32.mxu0 0.0
      %5929 = vmatmul.mubr.f32.gmra.mrb[0].mxu0 %v5757
      %v5930 = vpop.f32.mrb[0].mxu0
      %v5931 = vadd.f32 0.0, %v5930
      %v5932 = vpop.f32.mrb[0].mxu0
      %5933 = vmatprep.mubr.f32.mxu0 0.0
      %5934 = vmatmul.mubr.f32.gmra.mrb[0].mxu0 %v5760
      %v5935 = vpop.f32.mrb[0].mxu0
      %v5936 = vadd.f32 0.0, %v5935
      %v5937 = vpop.f32.mrb[0].mxu0
      %5938 = vmatprep.mubr.f32.mxu0 0.0
      %5939 = vmatmul.mubr.f32.gmra.mrb[0].mxu0 %v5763
      %v5940 = vpop.f32.mrb[0].mxu0
      %v5941 = vadd.f32 0.0, %v5940
      %v5942 = vpop.f32.mrb[0].mxu0
      %5943 = vmatprep.mubr.f32.mxu0 0.0
      %5944 = vmatmul.mubr.f32.gmra.mrb[0].mxu0 %v5766
      %v5945 = vpop.f32.mrb[0].mxu0
      %v5946 = vadd.f32 0.0, %v5945
      %v5947 = vpop.f32.mrb[0].mxu0
      %5948 = vmatprep.mubr.f32.mxu0 0.0
      %5949 = vmatmul.mubr.f32.gmra.mrb[0].mxu0 %v5769
      %v5950 = vpop.f32.mrb[0].mxu0
      %v5951 = vadd.f32 0.0, %v5950
      %v5952 = vpop.f32.mrb[0].mxu0
      %5953 = vmatprep.mubr.f32.mxu0 0.0
      %5954 = vmatmul.mubr.f32.gmra.mrb[0].mxu0 %v5772
      %v5955 = vpop.f32.mrb[0].mxu0
      %v5956 = vadd.f32 0.0, %v5955
      %v5957 = vpop.f32.mrb[0].mxu0
      %5958 = vmatprep.mubr.f32.mxu0 0.0
      %5959 = vmatmul.mubr.f32.gmra.mrb[0].mxu0 %v5775
      %v5960 = vpop.f32.mrb[0].mxu0
      %v5961 = vadd.f32 0.0, %v5960
      %v5962 = vpop.f32.mrb[0].mxu0
      %5963 = vmatprep.mubr.f32.mxu0 0.0
      %5964 = vmatmul.mubr.f32.gmra.mrb[0].mxu0 %v5778
      %v5965 = vpop.f32.mrb[0].mxu0
      %v5966 = vadd.f32 0.0, %v5965
      %v5967 = vpop.f32.mrb[0].mxu0
      %5968 = vmatprep.mubr.f32.mxu0 0.0
      %5969 = vmatmul.mubr.f32.gmra.mrb[0].mxu0 %v5781
      %v5970 = vpop.f32.mrb[0].mxu0
      %v5971 = vadd.f32 0.0, %v5970
      %v5972 = vpop.f32.mrb[0].mxu0
      %5973 = vmatprep.mubr.f32.mxu0 0.0
      %5974 = vmatmul.mubr.f32.gmra.mrb[0].mxu0 %v5784
      %v5975 = vpop.f32.mrb[0].mxu0
      %v5976 = vadd.f32 0.0, %v5975
      %v5977 = vpop.f32.mrb[0].mxu0
      %5978 = vmatprep.mubr.f32.mxu0 0.0
      %5979 = vmatmul.mubr.f32.gmra.mrb[0].mxu0 %v5787
      %v5980 = vpop.f32.mrb[0].mxu0
      %v5981 = vadd.f32 0.0, %v5980
      %v5982 = vpop.f32.mrb[0].mxu0
      %5983 = vmatprep.mubr.f32.mxu0 0.0
      %5984 = vmatmul.mubr.f32.gmra.mrb[0].mxu0 %v5790
      %v5985 = vpop.f32.mrb[0].mxu0
      %v5986 = vadd.f32 0.0, %v5985
      %v5987 = vpop.f32.mrb[0].mxu0
      %5988 = vmatprep.mubr.f32.mxu0 0.0
      %5989 = vmatmul.mubr.f32.gmra.mrb[0].mxu0 %v5793
      %v5990 = vpop.f32.mrb[0].mxu0
      %v5991 = vadd.f32 0.0, %v5990
      %v5992 = vpop.f32.mrb[0].mxu0
      %5993 = vmatprep.mubr.f32.mxu0 0.0
      %5994 = vmatmul.mubr.f32.gmra.mrb[0].mxu0 %v5796
      %v5995 = vpop.f32.mrb[0].mxu0
      %v5996 = vadd.f32 0.0, %v5995
      %v5997 = vpop.f32.mrb[0].mxu0
      %5998 = vmatprep.mubr.f32.mxu0 0.0
      %5999 = vmatmul.mubr.f32.gmra.mrb[0].mxu0 %v5799
      %v6000 = vpop.f32.mrb[0].mxu0
      %v6001 = vadd.f32 0.0, %v6000
      %v6002 = vpop.f32.mrb[0].mxu0
      %6003 = vmatprep.mubr.f32.mxu0 0.0
      %6004 = vmatmul.mubr.f32.gmra.mrb[0].mxu0 %v5802
      %v6005 = vpop.f32.mrb[0].mxu0
      %v6006 = vadd.f32 0.0, %v6005
      %v6007 = vpop.f32.mrb[0].mxu0
      %6008 = vmatprep.mubr.f32.mxu0 0.0
      %6009 = vmatmul.mubr.f32.gmra.mrb[0].mxu0 %v5805
      %v6010 = vpop.f32.mrb[0].mxu0
      %v6011 = vadd.f32 0.0, %v6010
      %v6012 = vpop.f32.mrb[0].mxu0
      %6013 = vmatprep.mubr.f32.mxu0 0.0
      %6014 = vmatmul.mubr.f32.gmra.mrb[0].mxu0 %v5808
      %v6015 = vpop.f32.mrb[0].mxu0
      %v6016 = vadd.f32 0.0, %v6015
      %v6017 = vpop.f32.mrb[0].mxu0
      %6018 = vmatprep.mubr.f32.mxu0 0.0
      %6019 = vmatmul.mubr.f32.gmra.mrb[0].mxu0 %v5811
      %v6020 = vpop.f32.mrb[0].mxu0
      %v6021 = vadd.f32 0.0, %v6020
      %v6022 = vpop.f32.mrb[0].mxu0
      %6023 = vmatprep.mubr.f32.mxu0 0.0
      %6024 = vmatmul.mubr.f32.gmra.mrb[0].mxu0 %v5814
      %v6025 = vpop.f32.mrb[0].mxu0
      %v6026 = vadd.f32 0.0, %v6025
      %v6027 = vpop.f32.mrb[0].mxu0
      %6028 = vmatprep.mubr.f32.mxu0 0.0
      %6029 = vmatmul.mubr.f32.gmra.mrb[0].mxu0 %v5817
      %v6030 = vpop.f32.mrb[0].mxu0
      %v6031 = vadd.f32 0.0, %v6030
      %v6032 = vpop.f32.mrb[0].mxu0
      %6033 = vmatprep.mubr.f32.mxu0 0.0
      %6034 = vmatmul.mubr.f32.gmra.mrb[0].mxu0 %v5820
      %v6035 = vpop.f32.mrb[0].mxu0
      %v6036 = vadd.f32 0.0, %v6035
      %v6037 = vpop.f32.mrb[0].mxu0
      %6038 = vmatprep.mubr.f32.mxu0 0.0
      %6039 = vmatmul.mubr.f32.gmra.mrb[0].mxu0 %v5823
      %v6040 = vpop.f32.mrb[0].mxu0
      %v6041 = vadd.f32 0.0, %v6040
      %v6042 = vpop.f32.mrb[0].mxu0
      %6043 = vmatprep.mubr.f32.mxu0 0.0
      %6044 = vmatmul.mubr.f32.gmra.mrb[0].mxu0 %v5826
      %v6045 = vpop.f32.mrb[0].mxu0
      %v6046 = vadd.f32 0.0, %v6045
      %v6047 = vpop.f32.mrb[0].mxu0
      %6048 = vmatprep.mubr.f32.mxu0 0.0
      %6049 = vmatmul.mubr.f32.gmra.mrb[0].mxu0 %v5829
      %v6050 = vpop.f32.mrb[0].mxu0
      %v6051 = vadd.f32 0.0, %v6050
      %v6052 = vpop.f32.mrb[0].mxu0
      %6053 = vmatprep.mubr.f32.mxu0 0.0
      %6054 = vmatmul.mubr.f32.gmra.mrb[0].mxu0 %v5832
      %v6055 = vpop.f32.mrb[0].mxu0
      %v6056 = vadd.f32 0.0, %v6055
      %v6057 = vpop.f32.mrb[0].mxu0
      %6058 = vdwg.mxu0
      %v6059 = vadd.f32 %v5672, %v5901
      %v6060 = vadd.f32 %v5673, %v5906
      %v6061 = vadd.f32 %v5674, %v5911
      %v6062 = vadd.f32 %v5675, %v5916
      %v6063 = vadd.f32 %v5676, %v5921
      %v6064 = vadd.f32 %v5677, %v5926
      %v6065 = vadd.f32 %v5678, %v5931
      %v6066 = vadd.f32 %v5679, %v5936
      %v6067 = vadd.f32 %v5680, %v5941
      %v6068 = vadd.f32 %v5681, %v5946
      %v6069 = vadd.f32 %v5682, %v5951
      %v6070 = vadd.f32 %v5683, %v5956
      %v6071 = vadd.f32 %v5684, %v5961
      %v6072 = vadd.f32 %v5685, %v5966
      %v6073 = vadd.f32 %v5686, %v5971
      %v6074 = vadd.f32 %v5687, %v5976
      %v6075 = vadd.f32 %v5688, %v5981
      %v6076 = vadd.f32 %v5689, %v5986
      %v6077 = vadd.f32 %v5690, %v5991
      %v6078 = vadd.f32 %v5691, %v5996
      %v6079 = vadd.f32 %v5692, %v6001
      %v6080 = vadd.f32 %v5693, %v6006
      %v6081 = vadd.f32 %v5694, %v6011
      %v6082 = vadd.f32 %v5695, %v6016
      %v6083 = vadd.f32 %v5696, %v6021
      %v6084 = vadd.f32 %v5697, %v6026
      %v6085 = vadd.f32 %v5698, %v6031
      %v6086 = vadd.f32 %v5699, %v6036
      %v6087 = vadd.f32 %v5700, %v6041
      %v6088 = vadd.f32 %v5701, %v6046
      %v6089 = vadd.f32 %v5702, %v6051
      %v6090 = vadd.f32 %v5703, %v6056
      %s6091 = scalar_lea.vmem [#allocation2], 48
      %v6092 = vld [vmem:[%s6091] sm:$0xff]
      %v6093 = vld [vmem:[%s6091 + $0x8] sm:$0xff]
      %v6094 = vld [vmem:[%s6091 + $0x18] sm:$0xff]
      %v6095 = vld [vmem:[%s6091 + $0x20] sm:$0xff]
      %v6096 = vld [vmem:[%s6091 + $0x30] sm:$0xff]
      %v6097 = vld [vmem:[%s6091 + $0x38] sm:$0xff]
      %v6098 = vld [vmem:[%s6091 + $0x48] sm:$0xff]
      %v6099 = vld [vmem:[%s6091 + $0x50] sm:$0xff]
      %v6100 = vld [vmem:[%s6091 + $0x60] sm:$0xff]
      %v6101 = vld [vmem:[%s6091 + $0x68] sm:$0xff]
      %v6102 = vld [vmem:[%s6091 + $0x78] sm:$0xff]
      %v6103 = vld [vmem:[%s6091 + $0x80] sm:$0xff]
      %v6104 = vld [vmem:[%s6091 + $0x90] sm:$0xff]
      %v6105 = vld [vmem:[%s6091 + $0x98] sm:$0xff]
      %v6106 = vld [vmem:[%s6091 + $0xa8] sm:$0xff]
      %v6107 = vld [vmem:[%s6091 + $0xb0] sm:$0xff]
      %v6108 = vld [vmem:[%s6091 + $0xc0] sm:$0xff]
      %v6109 = vld [vmem:[%s6091 + $0xc8] sm:$0xff]
      %v6110 = vld [vmem:[%s6091 + $0xd8] sm:$0xff]
      %v6111 = vld [vmem:[%s6091 + $0xe0] sm:$0xff]
      %v6112 = vld [vmem:[%s6091 + $0xf0] sm:$0xff]
      %v6113 = vld [vmem:[%s6091 + $0xf8] sm:$0xff]
      %v6114 = vld [vmem:[%s6091 + $0x108] sm:$0xff]
      %v6115 = vld [vmem:[%s6091 + $0x110] sm:$0xff]
      %v6116 = vld [vmem:[%s6091 + $0x120] sm:$0xff]
      %v6117 = vld [vmem:[%s6091 + $0x128] sm:$0xff]
      %v6118 = vld [vmem:[%s6091 + $0x138] sm:$0xff]
      %v6119 = vld [vmem:[%s6091 + $0x140] sm:$0xff]
      %v6120 = vld [vmem:[%s6091 + $0x150] sm:$0xff]
      %v6121 = vld [vmem:[%s6091 + $0x158] sm:$0xff]
      %v6122 = vld [vmem:[%s6091 + $0x168] sm:$0xff]
      %v6123 = vld [vmem:[%s6091 + $0x170] sm:$0xff]
      %s6124 = scalar_lea.vmem %s3, 48
      %v6125 = vld [vmem:[%s6124] sm:$0xff]
      %v6127 = vsel %vm3745, %v6092, 0
      %v6130 = vsel %vm3745, %v6093, 0
      %v6133 = vsel %vm3745, %v6094, 0
      %v6136 = vsel %vm3745, %v6095, 0
      %v6139 = vsel %vm3745, %v6096, 0
      %v6142 = vsel %vm3745, %v6097, 0
      %v6145 = vsel %vm3745, %v6098, 0
      %v6148 = vsel %vm3745, %v6099, 0
      %v6151 = vsel %vm3745, %v6100, 0
      %v6154 = vsel %vm3745, %v6101, 0
      %v6157 = vsel %vm3745, %v6102, 0
      %v6160 = vsel %vm3745, %v6103, 0
      %v6163 = vsel %vm3745, %v6104, 0
      %v6166 = vsel %vm3745, %v6105, 0
      %v6169 = vsel %vm3745, %v6106, 0
      %v6172 = vsel %vm3745, %v6107, 0
      %v6175 = vsel %vm3745, %v6108, 0
      %v6178 = vsel %vm3745, %v6109, 0
      %v6181 = vsel %vm3745, %v6110, 0
      %v6184 = vsel %vm3745, %v6111, 0
      %v6187 = vsel %vm3745, %v6112, 0
      %v6190 = vsel %vm3745, %v6113, 0
      %v6193 = vsel %vm3745, %v6114, 0
      %v6196 = vsel %vm3745, %v6115, 0
      %v6199 = vsel %vm3745, %v6116, 0
      %v6202 = vsel %vm3745, %v6117, 0
      %v6205 = vsel %vm3745, %v6118, 0
      %v6208 = vsel %vm3745, %v6119, 0
      %v6211 = vsel %vm3745, %v6120, 0
      %v6214 = vsel %vm3745, %v6121, 0
      %v6217 = vsel %vm3745, %v6122, 0
      %v6220 = vsel %vm3745, %v6123, 0
      %6222 = vmatprep.subr.mxu0 0.0
      %6223 = vmatpush1.msra.mxu0 %v6125
      %6224 = vmatprep.subr.mxu0 0.0
      %6225 = vmatpush1.msra.mxu0 0.0
      %6226 = vmatprep.subr.mxu0 0.0
      %6227 = vmatpush1.msra.mxu0 0.0
      %6228 = vmatprep.subr.mxu0 0.0
      %6229 = vmatpush1.msra.mxu0 0.0
      %6230 = vmatprep.subr.mxu0 0.0
      %6231 = vmatpush1.msra.mxu0 0.0
      %6232 = vmatprep.subr.mxu0 0.0
      %6233 = vmatpush1.msra.mxu0 0.0
      %6234 = vmatprep.subr.mxu0 0.0
      %6235 = vmatpush1.msra.mxu0 0.0
      %6236 = vmatprep.subr.mxu0 0.0
      %6237 = vmatpush1.msra.mxu0 0.0
      %6238 = vmatprep.subr.mxu0 0.0
      %6239 = vmatpush1.msra.mxu0 0.0
      %6240 = vmatprep.subr.mxu0 0.0
      %6241 = vmatpush1.msra.mxu0 0.0
      %6242 = vmatprep.subr.mxu0 0.0
      %6243 = vmatpush1.msra.mxu0 0.0
      %6244 = vmatprep.subr.mxu0 0.0
      %6245 = vmatpush1.msra.mxu0 0.0
      %6246 = vmatprep.subr.mxu0 0.0
      %6247 = vmatpush1.msra.mxu0 0.0
      %6248 = vmatprep.subr.mxu0 0.0
      %6249 = vmatpush1.msra.mxu0 0.0
      %6250 = vmatprep.subr.mxu0 0.0
      %6251 = vmatpush1.msra.mxu0 0.0
      %6252 = vmatprep.subr.mxu0 0.0
      %6253 = vmatpush1.msra.mxu0 0.0
      %6254 = vmatprep.subr.mxu0 0.0
      %6255 = vmatpush1.msra.mxu0 0.0
      %6256 = vmatprep.subr.mxu0 0.0
      %6257 = vmatpush1.msra.mxu0 0.0
      %6258 = vmatprep.subr.mxu0 0.0
      %6259 = vmatpush1.msra.mxu0 0.0
      %6260 = vmatprep.subr.mxu0 0.0
      %6261 = vmatpush1.msra.mxu0 0.0
      %6262 = vmatprep.subr.mxu0 0.0
      %6263 = vmatpush1.msra.mxu0 0.0
      %6264 = vmatprep.subr.mxu0 0.0
      %6265 = vmatpush1.msra.mxu0 0.0
      %6266 = vmatprep.subr.mxu0 0.0
      %6267 = vmatpush1.msra.mxu0 0.0
      %6268 = vmatprep.subr.mxu0 0.0
      %6269 = vmatpush1.msra.mxu0 0.0
      %6270 = vmatprep.subr.mxu0 0.0
      %6271 = vmatpush1.msra.mxu0 0.0
      %6272 = vmatprep.subr.mxu0 0.0
      %6273 = vmatpush1.msra.mxu0 0.0
      %6274 = vmatprep.subr.mxu0 0.0
      %6275 = vmatpush1.msra.mxu0 0.0
      %6276 = vmatprep.subr.mxu0 0.0
      %6277 = vmatpush1.msra.mxu0 0.0
      %6278 = vmatprep.subr.mxu0 0.0
      %6279 = vmatpush1.msra.mxu0 0.0
      %6280 = vmatprep.subr.mxu0 0.0
      %6281 = vmatpush1.msra.mxu0 0.0
      %6282 = vmatprep.subr.mxu0 0.0
      %6283 = vmatpush1.msra.mxu0 0.0
      %6284 = vmatprep.subr.mxu0 0.0
      %6285 = vmatpush1.msra.mxu0 0.0
      %6286 = vmatprep.mubr.f32.mxu0 0.0
      %6287 = vmatmul.mubr.f32.gmra.mrb[0].mxu0 %v6127
      %v6288 = vpop.f32.mrb[0].mxu0
      %v6289 = vadd.f32 0.0, %v6288
      %v6290 = vpop.f32.mrb[0].mxu0
      %6291 = vmatprep.mubr.f32.mxu0 0.0
      %6292 = vmatmul.mubr.f32.gmra.mrb[0].mxu0 %v6130
      %v6293 = vpop.f32.mrb[0].mxu0
      %v6294 = vadd.f32 0.0, %v6293
      %v6295 = vpop.f32.mrb[0].mxu0
      %6296 = vmatprep.mubr.f32.mxu0 0.0
      %6297 = vmatmul.mubr.f32.gmra.mrb[0].mxu0 %v6133
      %v6298 = vpop.f32.mrb[0].mxu0
      %v6299 = vadd.f32 0.0, %v6298
      %v6300 = vpop.f32.mrb[0].mxu0
      %6301 = vmatprep.mubr.f32.mxu0 0.0
      %6302 = vmatmul.mubr.f32.gmra.mrb[0].mxu0 %v6136
      %v6303 = vpop.f32.mrb[0].mxu0
      %v6304 = vadd.f32 0.0, %v6303
      %v6305 = vpop.f32.mrb[0].mxu0
      %6306 = vmatprep.mubr.f32.mxu0 0.0
      %6307 = vmatmul.mubr.f32.gmra.mrb[0].mxu0 %v6139
      %v6308 = vpop.f32.mrb[0].mxu0
      %v6309 = vadd.f32 0.0, %v6308
      %v6310 = vpop.f32.mrb[0].mxu0
      %6311 = vmatprep.mubr.f32.mxu0 0.0
      %6312 = vmatmul.mubr.f32.gmra.mrb[0].mxu0 %v6142
      %v6313 = vpop.f32.mrb[0].mxu0
      %v6314 = vadd.f32 0.0, %v6313
      %v6315 = vpop.f32.mrb[0].mxu0
      %6316 = vmatprep.mubr.f32.mxu0 0.0
      %6317 = vmatmul.mubr.f32.gmra.mrb[0].mxu0 %v6145
      %v6318 = vpop.f32.mrb[0].mxu0
      %v6319 = vadd.f32 0.0, %v6318
      %v6320 = vpop.f32.mrb[0].mxu0
      %6321 = vmatprep.mubr.f32.mxu0 0.0
      %6322 = vmatmul.mubr.f32.gmra.mrb[0].mxu0 %v6148
      %v6323 = vpop.f32.mrb[0].mxu0
      %v6324 = vadd.f32 0.0, %v6323
      %v6325 = vpop.f32.mrb[0].mxu0
      %6326 = vmatprep.mubr.f32.mxu0 0.0
      %6327 = vmatmul.mubr.f32.gmra.mrb[0].mxu0 %v6151
      %v6328 = vpop.f32.mrb[0].mxu0
      %v6329 = vadd.f32 0.0, %v6328
      %v6330 = vpop.f32.mrb[0].mxu0
      %6331 = vmatprep.mubr.f32.mxu0 0.0
      %6332 = vmatmul.mubr.f32.gmra.mrb[0].mxu0 %v6154
      %v6333 = vpop.f32.mrb[0].mxu0
      %v6334 = vadd.f32 0.0, %v6333
      %v6335 = vpop.f32.mrb[0].mxu0
      %6336 = vmatprep.mubr.f32.mxu0 0.0
      %6337 = vmatmul.mubr.f32.gmra.mrb[0].mxu0 %v6157
      %v6338 = vpop.f32.mrb[0].mxu0
      %v6339 = vadd.f32 0.0, %v6338
      %v6340 = vpop.f32.mrb[0].mxu0
      %6341 = vmatprep.mubr.f32.mxu0 0.0
      %6342 = vmatmul.mubr.f32.gmra.mrb[0].mxu0 %v6160
      %v6343 = vpop.f32.mrb[0].mxu0
      %v6344 = vadd.f32 0.0, %v6343
      %v6345 = vpop.f32.mrb[0].mxu0
      %6346 = vmatprep.mubr.f32.mxu0 0.0
      %6347 = vmatmul.mubr.f32.gmra.mrb[0].mxu0 %v6163
      %v6348 = vpop.f32.mrb[0].mxu0
      %v6349 = vadd.f32 0.0, %v6348
      %v6350 = vpop.f32.mrb[0].mxu0
      %6351 = vmatprep.mubr.f32.mxu0 0.0
      %6352 = vmatmul.mubr.f32.gmra.mrb[0].mxu0 %v6166
      %v6353 = vpop.f32.mrb[0].mxu0
      %v6354 = vadd.f32 0.0, %v6353
      %v6355 = vpop.f32.mrb[0].mxu0
      %6356 = vmatprep.mubr.f32.mxu0 0.0
      %6357 = vmatmul.mubr.f32.gmra.mrb[0].mxu0 %v6169
      %v6358 = vpop.f32.mrb[0].mxu0
      %v6359 = vadd.f32 0.0, %v6358
      %v6360 = vpop.f32.mrb[0].mxu0
      %6361 = vmatprep.mubr.f32.mxu0 0.0
      %6362 = vmatmul.mubr.f32.gmra.mrb[0].mxu0 %v6172
      %v6363 = vpop.f32.mrb[0].mxu0
      %v6364 = vadd.f32 0.0, %v6363
      %v6365 = vpop.f32.mrb[0].mxu0
      %6366 = vmatprep.mubr.f32.mxu0 0.0
      %6367 = vmatmul.mubr.f32.gmra.mrb[0].mxu0 %v6175
      %v6368 = vpop.f32.mrb[0].mxu0
      %v6369 = vadd.f32 0.0, %v6368
      %v6370 = vpop.f32.mrb[0].mxu0
      %6371 = vmatprep.mubr.f32.mxu0 0.0
      %6372 = vmatmul.mubr.f32.gmra.mrb[0].mxu0 %v6178
      %v6373 = vpop.f32.mrb[0].mxu0
      %v6374 = vadd.f32 0.0, %v6373
      %v6375 = vpop.f32.mrb[0].mxu0
      %6376 = vmatprep.mubr.f32.mxu0 0.0
      %6377 = vmatmul.mubr.f32.gmra.mrb[0].mxu0 %v6181
      %v6378 = vpop.f32.mrb[0].mxu0
      %v6379 = vadd.f32 0.0, %v6378
      %v6380 = vpop.f32.mrb[0].mxu0
      %6381 = vmatprep.mubr.f32.mxu0 0.0
      %6382 = vmatmul.mubr.f32.gmra.mrb[0].mxu0 %v6184
      %v6383 = vpop.f32.mrb[0].mxu0
      %v6384 = vadd.f32 0.0, %v6383
      %v6385 = vpop.f32.mrb[0].mxu0
      %6386 = vmatprep.mubr.f32.mxu0 0.0
      %6387 = vmatmul.mubr.f32.gmra.mrb[0].mxu0 %v6187
      %v6388 = vpop.f32.mrb[0].mxu0
      %v6389 = vadd.f32 0.0, %v6388
      %v6390 = vpop.f32.mrb[0].mxu0
      %6391 = vmatprep.mubr.f32.mxu0 0.0
      %6392 = vmatmul.mubr.f32.gmra.mrb[0].mxu0 %v6190
      %v6393 = vpop.f32.mrb[0].mxu0
      %v6394 = vadd.f32 0.0, %v6393
      %v6395 = vpop.f32.mrb[0].mxu0
      %6396 = vmatprep.mubr.f32.mxu0 0.0
      %6397 = vmatmul.mubr.f32.gmra.mrb[0].mxu0 %v6193
      %v6398 = vpop.f32.mrb[0].mxu0
      %v6399 = vadd.f32 0.0, %v6398
      %v6400 = vpop.f32.mrb[0].mxu0
      %6401 = vmatprep.mubr.f32.mxu0 0.0
      %6402 = vmatmul.mubr.f32.gmra.mrb[0].mxu0 %v6196
      %v6403 = vpop.f32.mrb[0].mxu0
      %v6404 = vadd.f32 0.0, %v6403
      %v6405 = vpop.f32.mrb[0].mxu0
      %6406 = vmatprep.mubr.f32.mxu0 0.0
      %6407 = vmatmul.mubr.f32.gmra.mrb[0].mxu0 %v6199
      %v6408 = vpop.f32.mrb[0].mxu0
      %v6409 = vadd.f32 0.0, %v6408
      %v6410 = vpop.f32.mrb[0].mxu0
      %6411 = vmatprep.mubr.f32.mxu0 0.0
      %6412 = vmatmul.mubr.f32.gmra.mrb[0].mxu0 %v6202
      %v6413 = vpop.f32.mrb[0].mxu0
      %v6414 = vadd.f32 0.0, %v6413
      %v6415 = vpop.f32.mrb[0].mxu0
      %6416 = vmatprep.mubr.f32.mxu0 0.0
      %6417 = vmatmul.mubr.f32.gmra.mrb[0].mxu0 %v6205
      %v6418 = vpop.f32.mrb[0].mxu0
      %v6419 = vadd.f32 0.0, %v6418
      %v6420 = vpop.f32.mrb[0].mxu0
      %6421 = vmatprep.mubr.f32.mxu0 0.0
      %6422 = vmatmul.mubr.f32.gmra.mrb[0].mxu0 %v6208
      %v6423 = vpop.f32.mrb[0].mxu0
      %v6424 = vadd.f32 0.0, %v6423
      %v6425 = vpop.f32.mrb[0].mxu0
      %6426 = vmatprep.mubr.f32.mxu0 0.0
      %6427 = vmatmul.mubr.f32.gmra.mrb[0].mxu0 %v6211
      %v6428 = vpop.f32.mrb[0].mxu0
      %v6429 = vadd.f32 0.0, %v6428
      %v6430 = vpop.f32.mrb[0].mxu0
      %6431 = vmatprep.mubr.f32.mxu0 0.0
      %6432 = vmatmul.mubr.f32.gmra.mrb[0].mxu0 %v6214
      %v6433 = vpop.f32.mrb[0].mxu0
      %v6434 = vadd.f32 0.0, %v6433
      %v6435 = vpop.f32.mrb[0].mxu0
      %6436 = vmatprep.mubr.f32.mxu0 0.0
      %6437 = vmatmul.mubr.f32.gmra.mrb[0].mxu0 %v6217
      %v6438 = vpop.f32.mrb[0].mxu0
      %v6439 = vadd.f32 0.0, %v6438
      %v6440 = vpop.f32.mrb[0].mxu0
      %6441 = vmatprep.mubr.f32.mxu0 0.0
      %6442 = vmatmul.mubr.f32.gmra.mrb[0].mxu0 %v6220
      %v6443 = vpop.f32.mrb[0].mxu0
      %v6444 = vadd.f32 0.0, %v6443
      %v6445 = vpop.f32.mrb[0].mxu0
      %6446 = vdwg.mxu0
      %v6447 = vadd.f32 %v6059, %v6289
      %v6448 = vadd.f32 %v6060, %v6294
      %v6449 = vadd.f32 %v6061, %v6299
      %v6450 = vadd.f32 %v6062, %v6304
      %v6451 = vadd.f32 %v6063, %v6309
      %v6452 = vadd.f32 %v6064, %v6314
      %v6453 = vadd.f32 %v6065, %v6319
      %v6454 = vadd.f32 %v6066, %v6324
      %v6455 = vadd.f32 %v6067, %v6329
      %v6456 = vadd.f32 %v6068, %v6334
      %v6457 = vadd.f32 %v6069, %v6339
      %v6458 = vadd.f32 %v6070, %v6344
      %v6459 = vadd.f32 %v6071, %v6349
      %v6460 = vadd.f32 %v6072, %v6354
      %v6461 = vadd.f32 %v6073, %v6359
      %v6462 = vadd.f32 %v6074, %v6364
      %v6463 = vadd.f32 %v6075, %v6369
      %v6464 = vadd.f32 %v6076, %v6374
      %v6465 = vadd.f32 %v6077, %v6379
      %v6466 = vadd.f32 %v6078, %v6384
      %v6467 = vadd.f32 %v6079, %v6389
      %v6468 = vadd.f32 %v6080, %v6394
      %v6469 = vadd.f32 %v6081, %v6399
      %v6470 = vadd.f32 %v6082, %v6404
      %v6471 = vadd.f32 %v6083, %v6409
      %v6472 = vadd.f32 %v6084, %v6414
      %v6473 = vadd.f32 %v6085, %v6419
      %v6474 = vadd.f32 %v6086, %v6424
      %v6475 = vadd.f32 %v6087, %v6429
      %v6476 = vadd.f32 %v6088, %v6434
      %v6477 = vadd.f32 %v6089, %v6439
      %v6478 = vadd.f32 %v6090, %v6444
      %v6479 = vld [vmem:[%s6091 + $0x1] sm:$0xff]
      %v6480 = vld [vmem:[%s6091 + $0x9] sm:$0xff]
      %v6481 = vld [vmem:[%s6091 + $0x19] sm:$0xff]
      %v6482 = vld [vmem:[%s6091 + $0x21] sm:$0xff]
      %v6483 = vld [vmem:[%s6091 + $0x31] sm:$0xff]
      %v6484 = vld [vmem:[%s6091 + $0x39] sm:$0xff]
      %v6485 = vld [vmem:[%s6091 + $0x49] sm:$0xff]
      %v6486 = vld [vmem:[%s6091 + $0x51] sm:$0xff]
      %v6487 = vld [vmem:[%s6091 + $0x61] sm:$0xff]
      %v6488 = vld [vmem:[%s6091 + $0x69] sm:$0xff]
      %v6489 = vld [vmem:[%s6091 + $0x79] sm:$0xff]
      %v6490 = vld [vmem:[%s6091 + $0x81] sm:$0xff]
      %v6491 = vld [vmem:[%s6091 + $0x91] sm:$0xff]
      %v6492 = vld [vmem:[%s6091 + $0x99] sm:$0xff]
      %v6493 = vld [vmem:[%s6091 + $0xa9] sm:$0xff]
      %v6494 = vld [vmem:[%s6091 + $0xb1] sm:$0xff]
      %v6495 = vld [vmem:[%s6091 + $0xc1] sm:$0xff]
      %v6496 = vld [vmem:[%s6091 + $0xc9] sm:$0xff]
      %v6497 = vld [vmem:[%s6091 + $0xd9] sm:$0xff]
      %v6498 = vld [vmem:[%s6091 + $0xe1] sm:$0xff]
      %v6499 = vld [vmem:[%s6091 + $0xf1] sm:$0xff]
      %v6500 = vld [vmem:[%s6091 + $0xf9] sm:$0xff]
      %v6501 = vld [vmem:[%s6091 + $0x109] sm:$0xff]
      %v6502 = vld [vmem:[%s6091 + $0x111] sm:$0xff]
      %v6503 = vld [vmem:[%s6091 + $0x121] sm:$0xff]
      %v6504 = vld [vmem:[%s6091 + $0x129] sm:$0xff]
      %v6505 = vld [vmem:[%s6091 + $0x139] sm:$0xff]
      %v6506 = vld [vmem:[%s6091 + $0x141] sm:$0xff]
      %v6507 = vld [vmem:[%s6091 + $0x151] sm:$0xff]
      %v6508 = vld [vmem:[%s6091 + $0x159] sm:$0xff]
      %v6509 = vld [vmem:[%s6091 + $0x169] sm:$0xff]
      %v6510 = vld [vmem:[%s6091 + $0x171] sm:$0xff]
      %s6511 = scalar_lea.vmem %s3, 56
      %v6512 = vld [vmem:[%s6511] sm:$0xff]
      %v6514 = vsel %vm3745, %v6479, 0
      %v6517 = vsel %vm3745, %v6480, 0
      %v6520 = vsel %vm3745, %v6481, 0
      %v6523 = vsel %vm3745, %v6482, 0
      %v6526 = vsel %vm3745, %v6483, 0
      %v6529 = vsel %vm3745, %v6484, 0
      %v6532 = vsel %vm3745, %v6485, 0
      %v6535 = vsel %vm3745, %v6486, 0
      %v6538 = vsel %vm3745, %v6487, 0
      %v6541 = vsel %vm3745, %v6488, 0
      %v6544 = vsel %vm3745, %v6489, 0
      %v6547 = vsel %vm3745, %v6490, 0
      %v6550 = vsel %vm3745, %v6491, 0
      %v6553 = vsel %vm3745, %v6492, 0
      %v6556 = vsel %vm3745, %v6493, 0
      %v6559 = vsel %vm3745, %v6494, 0
      %v6562 = vsel %vm3745, %v6495, 0
      %v6565 = vsel %vm3745, %v6496, 0
      %v6568 = vsel %vm3745, %v6497, 0
      %v6571 = vsel %vm3745, %v6498, 0
      %v6574 = vsel %vm3745, %v6499, 0
      %v6577 = vsel %vm3745, %v6500, 0
      %v6580 = vsel %vm3745, %v6501, 0
      %v6583 = vsel %vm3745, %v6502, 0
      %v6586 = vsel %vm3745, %v6503, 0
      %v6589 = vsel %vm3745, %v6504, 0
      %v6592 = vsel %vm3745, %v6505, 0
      %v6595 = vsel %vm3745, %v6506, 0
      %v6598 = vsel %vm3745, %v6507, 0
      %v6601 = vsel %vm3745, %v6508, 0
      %v6604 = vsel %vm3745, %v6509, 0
      %v6607 = vsel %vm3745, %v6510, 0
      %6609 = vmatprep.subr.mxu0 0.0
      %6610 = vmatpush1.msra.mxu0 %v6512
      %6611 = vmatprep.subr.mxu0 0.0
      %6612 = vmatpush1.msra.mxu0 0.0
      %6613 = vmatprep.subr.mxu0 0.0
      %6614 = vmatpush1.msra.mxu0 0.0
      %6615 = vmatprep.subr.mxu0 0.0
      %6616 = vmatpush1.msra.mxu0 0.0
      %6617 = vmatprep.subr.mxu0 0.0
      %6618 = vmatpush1.msra.mxu0 0.0
      %6619 = vmatprep.subr.mxu0 0.0
      %6620 = vmatpush1.msra.mxu0 0.0
      %6621 = vmatprep.subr.mxu0 0.0
      %6622 = vmatpush1.msra.mxu0 0.0
      %6623 = vmatprep.subr.mxu0 0.0
      %6624 = vmatpush1.msra.mxu0 0.0
      %6625 = vmatprep.subr.mxu0 0.0
      %6626 = vmatpush1.msra.mxu0 0.0
      %6627 = vmatprep.subr.mxu0 0.0
      %6628 = vmatpush1.msra.mxu0 0.0
      %6629 = vmatprep.subr.mxu0 0.0
      %6630 = vmatpush1.msra.mxu0 0.0
      %6631 = vmatprep.subr.mxu0 0.0
      %6632 = vmatpush1.msra.mxu0 0.0
      %6633 = vmatprep.subr.mxu0 0.0
      %6634 = vmatpush1.msra.mxu0 0.0
      %6635 = vmatprep.subr.mxu0 0.0
      %6636 = vmatpush1.msra.mxu0 0.0
      %6637 = vmatprep.subr.mxu0 0.0
      %6638 = vmatpush1.msra.mxu0 0.0
      %6639 = vmatprep.subr.mxu0 0.0
      %6640 = vmatpush1.msra.mxu0 0.0
      %6641 = vmatprep.subr.mxu0 0.0
      %6642 = vmatpush1.msra.mxu0 0.0
      %6643 = vmatprep.subr.mxu0 0.0
      %6644 = vmatpush1.msra.mxu0 0.0
      %6645 = vmatprep.subr.mxu0 0.0
      %6646 = vmatpush1.msra.mxu0 0.0
      %6647 = vmatprep.subr.mxu0 0.0
      %6648 = vmatpush1.msra.mxu0 0.0
      %6649 = vmatprep.subr.mxu0 0.0
      %6650 = vmatpush1.msra.mxu0 0.0
      %6651 = vmatprep.subr.mxu0 0.0
      %6652 = vmatpush1.msra.mxu0 0.0
      %6653 = vmatprep.subr.mxu0 0.0
      %6654 = vmatpush1.msra.mxu0 0.0
      %6655 = vmatprep.subr.mxu0 0.0
      %6656 = vmatpush1.msra.mxu0 0.0
      %6657 = vmatprep.subr.mxu0 0.0
      %6658 = vmatpush1.msra.mxu0 0.0
      %6659 = vmatprep.subr.mxu0 0.0
      %6660 = vmatpush1.msra.mxu0 0.0
      %6661 = vmatprep.subr.mxu0 0.0
      %6662 = vmatpush1.msra.mxu0 0.0
      %6663 = vmatprep.subr.mxu0 0.0
      %6664 = vmatpush1.msra.mxu0 0.0
      %6665 = vmatprep.subr.mxu0 0.0
      %6666 = vmatpush1.msra.mxu0 0.0
      %6667 = vmatprep.subr.mxu0 0.0
      %6668 = vmatpush1.msra.mxu0 0.0
      %6669 = vmatprep.subr.mxu0 0.0
      %6670 = vmatpush1.msra.mxu0 0.0
      %6671 = vmatprep.subr.mxu0 0.0
      %6672 = vmatpush1.msra.mxu0 0.0
      %6673 = vmatprep.mubr.f32.mxu0 0.0
      %6674 = vmatmul.mubr.f32.gmra.mrb[0].mxu0 %v6514
      %v6675 = vpop.f32.mrb[0].mxu0
      %v6676 = vadd.f32 0.0, %v6675
      %v6677 = vpop.f32.mrb[0].mxu0
      %6678 = vmatprep.mubr.f32.mxu0 0.0
      %6679 = vmatmul.mubr.f32.gmra.mrb[0].mxu0 %v6517
      %v6680 = vpop.f32.mrb[0].mxu0
      %v6681 = vadd.f32 0.0, %v6680
      %v6682 = vpop.f32.mrb[0].mxu0
      %6683 = vmatprep.mubr.f32.mxu0 0.0
      %6684 = vmatmul.mubr.f32.gmra.mrb[0].mxu0 %v6520
      %v6685 = vpop.f32.mrb[0].mxu0
      %v6686 = vadd.f32 0.0, %v6685
      %v6687 = vpop.f32.mrb[0].mxu0
      %6688 = vmatprep.mubr.f32.mxu0 0.0
      %6689 = vmatmul.mubr.f32.gmra.mrb[0].mxu0 %v6523
      %v6690 = vpop.f32.mrb[0].mxu0
      %v6691 = vadd.f32 0.0, %v6690
      %v6692 = vpop.f32.mrb[0].mxu0
      %6693 = vmatprep.mubr.f32.mxu0 0.0
      %6694 = vmatmul.mubr.f32.gmra.mrb[0].mxu0 %v6526
      %v6695 = vpop.f32.mrb[0].mxu0
      %v6696 = vadd.f32 0.0, %v6695
      %v6697 = vpop.f32.mrb[0].mxu0
      %6698 = vmatprep.mubr.f32.mxu0 0.0
      %6699 = vmatmul.mubr.f32.gmra.mrb[0].mxu0 %v6529
      %v6700 = vpop.f32.mrb[0].mxu0
      %v6701 = vadd.f32 0.0, %v6700
      %v6702 = vpop.f32.mrb[0].mxu0
      %6703 = vmatprep.mubr.f32.mxu0 0.0
      %6704 = vmatmul.mubr.f32.gmra.mrb[0].mxu0 %v6532
      %v6705 = vpop.f32.mrb[0].mxu0
      %v6706 = vadd.f32 0.0, %v6705
      %v6707 = vpop.f32.mrb[0].mxu0
      %6708 = vmatprep.mubr.f32.mxu0 0.0
      %6709 = vmatmul.mubr.f32.gmra.mrb[0].mxu0 %v6535
      %v6710 = vpop.f32.mrb[0].mxu0
      %v6711 = vadd.f32 0.0, %v6710
      %v6712 = vpop.f32.mrb[0].mxu0
      %6713 = vmatprep.mubr.f32.mxu0 0.0
      %6714 = vmatmul.mubr.f32.gmra.mrb[0].mxu0 %v6538
      %v6715 = vpop.f32.mrb[0].mxu0
      %v6716 = vadd.f32 0.0, %v6715
      %v6717 = vpop.f32.mrb[0].mxu0
      %6718 = vmatprep.mubr.f32.mxu0 0.0
      %6719 = vmatmul.mubr.f32.gmra.mrb[0].mxu0 %v6541
      %v6720 = vpop.f32.mrb[0].mxu0
      %v6721 = vadd.f32 0.0, %v6720
      %v6722 = vpop.f32.mrb[0].mxu0
      %6723 = vmatprep.mubr.f32.mxu0 0.0
      %6724 = vmatmul.mubr.f32.gmra.mrb[0].mxu0 %v6544
      %v6725 = vpop.f32.mrb[0].mxu0
      %v6726 = vadd.f32 0.0, %v6725
      %v6727 = vpop.f32.mrb[0].mxu0
      %6728 = vmatprep.mubr.f32.mxu0 0.0
      %6729 = vmatmul.mubr.f32.gmra.mrb[0].mxu0 %v6547
      %v6730 = vpop.f32.mrb[0].mxu0
      %v6731 = vadd.f32 0.0, %v6730
      %v6732 = vpop.f32.mrb[0].mxu0
      %6733 = vmatprep.mubr.f32.mxu0 0.0
      %6734 = vmatmul.mubr.f32.gmra.mrb[0].mxu0 %v6550
      %v6735 = vpop.f32.mrb[0].mxu0
      %v6736 = vadd.f32 0.0, %v6735
      %v6737 = vpop.f32.mrb[0].mxu0
      %6738 = vmatprep.mubr.f32.mxu0 0.0
      %6739 = vmatmul.mubr.f32.gmra.mrb[0].mxu0 %v6553
      %v6740 = vpop.f32.mrb[0].mxu0
      %v6741 = vadd.f32 0.0, %v6740
      %v6742 = vpop.f32.mrb[0].mxu0
      %6743 = vmatprep.mubr.f32.mxu0 0.0
      %6744 = vmatmul.mubr.f32.gmra.mrb[0].mxu0 %v6556
      %v6745 = vpop.f32.mrb[0].mxu0
      %v6746 = vadd.f32 0.0, %v6745
      %v6747 = vpop.f32.mrb[0].mxu0
      %6748 = vmatprep.mubr.f32.mxu0 0.0
      %6749 = vmatmul.mubr.f32.gmra.mrb[0].mxu0 %v6559
      %v6750 = vpop.f32.mrb[0].mxu0
      %v6751 = vadd.f32 0.0, %v6750
      %v6752 = vpop.f32.mrb[0].mxu0
      %6753 = vmatprep.mubr.f32.mxu0 0.0
      %6754 = vmatmul.mubr.f32.gmra.mrb[0].mxu0 %v6562
      %v6755 = vpop.f32.mrb[0].mxu0
      %v6756 = vadd.f32 0.0, %v6755
      %v6757 = vpop.f32.mrb[0].mxu0
      %6758 = vmatprep.mubr.f32.mxu0 0.0
      %6759 = vmatmul.mubr.f32.gmra.mrb[0].mxu0 %v6565
      %v6760 = vpop.f32.mrb[0].mxu0
      %v6761 = vadd.f32 0.0, %v6760
      %v6762 = vpop.f32.mrb[0].mxu0
      %6763 = vmatprep.mubr.f32.mxu0 0.0
      %6764 = vmatmul.mubr.f32.gmra.mrb[0].mxu0 %v6568
      %v6765 = vpop.f32.mrb[0].mxu0
      %v6766 = vadd.f32 0.0, %v6765
      %v6767 = vpop.f32.mrb[0].mxu0
      %6768 = vmatprep.mubr.f32.mxu0 0.0
      %6769 = vmatmul.mubr.f32.gmra.mrb[0].mxu0 %v6571
      %v6770 = vpop.f32.mrb[0].mxu0
      %v6771 = vadd.f32 0.0, %v6770
      %v6772 = vpop.f32.mrb[0].mxu0
      %6773 = vmatprep.mubr.f32.mxu0 0.0
      %6774 = vmatmul.mubr.f32.gmra.mrb[0].mxu0 %v6574
      %v6775 = vpop.f32.mrb[0].mxu0
      %v6776 = vadd.f32 0.0, %v6775
      %v6777 = vpop.f32.mrb[0].mxu0
      %6778 = vmatprep.mubr.f32.mxu0 0.0
      %6779 = vmatmul.mubr.f32.gmra.mrb[0].mxu0 %v6577
      %v6780 = vpop.f32.mrb[0].mxu0
      %v6781 = vadd.f32 0.0, %v6780
      %v6782 = vpop.f32.mrb[0].mxu0
      %6783 = vmatprep.mubr.f32.mxu0 0.0
      %6784 = vmatmul.mubr.f32.gmra.mrb[0].mxu0 %v6580
      %v6785 = vpop.f32.mrb[0].mxu0
      %v6786 = vadd.f32 0.0, %v6785
      %v6787 = vpop.f32.mrb[0].mxu0
      %6788 = vmatprep.mubr.f32.mxu0 0.0
      %6789 = vmatmul.mubr.f32.gmra.mrb[0].mxu0 %v6583
      %v6790 = vpop.f32.mrb[0].mxu0
      %v6791 = vadd.f32 0.0, %v6790
      %v6792 = vpop.f32.mrb[0].mxu0
      %6793 = vmatprep.mubr.f32.mxu0 0.0
      %6794 = vmatmul.mubr.f32.gmra.mrb[0].mxu0 %v6586
      %v6795 = vpop.f32.mrb[0].mxu0
      %v6796 = vadd.f32 0.0, %v6795
      %v6797 = vpop.f32.mrb[0].mxu0
      %6798 = vmatprep.mubr.f32.mxu0 0.0
      %6799 = vmatmul.mubr.f32.gmra.mrb[0].mxu0 %v6589
      %v6800 = vpop.f32.mrb[0].mxu0
      %v6801 = vadd.f32 0.0, %v6800
      %v6802 = vpop.f32.mrb[0].mxu0
      %6803 = vmatprep.mubr.f32.mxu0 0.0
      %6804 = vmatmul.mubr.f32.gmra.mrb[0].mxu0 %v6592
      %v6805 = vpop.f32.mrb[0].mxu0
      %v6806 = vadd.f32 0.0, %v6805
      %v6807 = vpop.f32.mrb[0].mxu0
      %6808 = vmatprep.mubr.f32.mxu0 0.0
      %6809 = vmatmul.mubr.f32.gmra.mrb[0].mxu0 %v6595
      %v6810 = vpop.f32.mrb[0].mxu0
      %v6811 = vadd.f32 0.0, %v6810
      %v6812 = vpop.f32.mrb[0].mxu0
      %6813 = vmatprep.mubr.f32.mxu0 0.0
      %6814 = vmatmul.mubr.f32.gmra.mrb[0].mxu0 %v6598
      %v6815 = vpop.f32.mrb[0].mxu0
      %v6816 = vadd.f32 0.0, %v6815
      %v6817 = vpop.f32.mrb[0].mxu0
      %6818 = vmatprep.mubr.f32.mxu0 0.0
      %6819 = vmatmul.mubr.f32.gmra.mrb[0].mxu0 %v6601
      %v6820 = vpop.f32.mrb[0].mxu0
      %v6821 = vadd.f32 0.0, %v6820
      %v6822 = vpop.f32.mrb[0].mxu0
      %6823 = vmatprep.mubr.f32.mxu0 0.0
      %6824 = vmatmul.mubr.f32.gmra.mrb[0].mxu0 %v6604
      %v6825 = vpop.f32.mrb[0].mxu0
      %v6826 = vadd.f32 0.0, %v6825
      %v6827 = vpop.f32.mrb[0].mxu0
      %6828 = vmatprep.mubr.f32.mxu0 0.0
      %6829 = vmatmul.mubr.f32.gmra.mrb[0].mxu0 %v6607
      %v6830 = vpop.f32.mrb[0].mxu0
      %v6831 = vadd.f32 0.0, %v6830
      %v6832 = vpop.f32.mrb[0].mxu0
      %6833 = vdwg.mxu0
      %v6834 = vadd.f32 %v6447, %v6676
      %v6835 = vadd.f32 %v6448, %v6681
      %v6836 = vadd.f32 %v6449, %v6686
      %v6837 = vadd.f32 %v6450, %v6691
      %v6838 = vadd.f32 %v6451, %v6696
      %v6839 = vadd.f32 %v6452, %v6701
      %v6840 = vadd.f32 %v6453, %v6706
      %v6841 = vadd.f32 %v6454, %v6711
      %v6842 = vadd.f32 %v6455, %v6716
      %v6843 = vadd.f32 %v6456, %v6721
      %v6844 = vadd.f32 %v6457, %v6726
      %v6845 = vadd.f32 %v6458, %v6731
      %v6846 = vadd.f32 %v6459, %v6736
      %v6847 = vadd.f32 %v6460, %v6741
      %v6848 = vadd.f32 %v6461, %v6746
      %v6849 = vadd.f32 %v6462, %v6751
      %v6850 = vadd.f32 %v6463, %v6756
      %v6851 = vadd.f32 %v6464, %v6761
      %v6852 = vadd.f32 %v6465, %v6766
      %v6853 = vadd.f32 %v6466, %v6771
      %v6854 = vadd.f32 %v6467, %v6776
      %v6855 = vadd.f32 %v6468, %v6781
      %v6856 = vadd.f32 %v6469, %v6786
      %v6857 = vadd.f32 %v6470, %v6791
      %v6858 = vadd.f32 %v6471, %v6796
      %v6859 = vadd.f32 %v6472, %v6801
      %v6860 = vadd.f32 %v6473, %v6806
      %v6861 = vadd.f32 %v6474, %v6811
      %v6862 = vadd.f32 %v6475, %v6816
      %v6863 = vadd.f32 %v6476, %v6821
      %v6864 = vadd.f32 %v6477, %v6826
      %v6865 = vadd.f32 %v6478, %v6831
      %v6866 = vld [vmem:[%s6091 + $0x2] sm:$0xff]
      %v6867 = vld [vmem:[%s6091 + $0xa] sm:$0xff]
      %v6868 = vld [vmem:[%s6091 + $0x1a] sm:$0xff]
      %v6869 = vld [vmem:[%s6091 + $0x22] sm:$0xff]
      %v6870 = vld [vmem:[%s6091 + $0x32] sm:$0xff]
      %v6871 = vld [vmem:[%s6091 + $0x3a] sm:$0xff]
      %v6872 = vld [vmem:[%s6091 + $0x4a] sm:$0xff]
      %v6873 = vld [vmem:[%s6091 + $0x52] sm:$0xff]
      %v6874 = vld [vmem:[%s6091 + $0x62] sm:$0xff]
      %v6875 = vld [vmem:[%s6091 + $0x6a] sm:$0xff]
      %v6876 = vld [vmem:[%s6091 + $0x7a] sm:$0xff]
      %v6877 = vld [vmem:[%s6091 + $0x82] sm:$0xff]
      %v6878 = vld [vmem:[%s6091 + $0x92] sm:$0xff]
      %v6879 = vld [vmem:[%s6091 + $0x9a] sm:$0xff]
      %v6880 = vld [vmem:[%s6091 + $0xaa] sm:$0xff]
      %v6881 = vld [vmem:[%s6091 + $0xb2] sm:$0xff]
      %v6882 = vld [vmem:[%s6091 + $0xc2] sm:$0xff]
      %v6883 = vld [vmem:[%s6091 + $0xca] sm:$0xff]
      %v6884 = vld [vmem:[%s6091 + $0xda] sm:$0xff]
      %v6885 = vld [vmem:[%s6091 + $0xe2] sm:$0xff]
      %v6886 = vld [vmem:[%s6091 + $0xf2] sm:$0xff]
      %v6887 = vld [vmem:[%s6091 + $0xfa] sm:$0xff]
      %v6888 = vld [vmem:[%s6091 + $0x10a] sm:$0xff]
      %v6889 = vld [vmem:[%s6091 + $0x112] sm:$0xff]
      %v6890 = vld [vmem:[%s6091 + $0x122] sm:$0xff]
      %v6891 = vld [vmem:[%s6091 + $0x12a] sm:$0xff]
      %v6892 = vld [vmem:[%s6091 + $0x13a] sm:$0xff]
      %v6893 = vld [vmem:[%s6091 + $0x142] sm:$0xff]
      %v6894 = vld [vmem:[%s6091 + $0x152] sm:$0xff]
      %v6895 = vld [vmem:[%s6091 + $0x15a] sm:$0xff]
      %v6896 = vld [vmem:[%s6091 + $0x16a] sm:$0xff]
      %v6897 = vld [vmem:[%s6091 + $0x172] sm:$0xff]
      %s6898 = scalar_lea.vmem %s3, 64
      %v6899 = vld [vmem:[%s6898] sm:$0xff]
      %v6901 = vsel %vm3745, %v6866, 0
      %v6904 = vsel %vm3745, %v6867, 0
      %v6907 = vsel %vm3745, %v6868, 0
      %v6910 = vsel %vm3745, %v6869, 0
      %v6913 = vsel %vm3745, %v6870, 0
      %v6916 = vsel %vm3745, %v6871, 0
      %v6919 = vsel %vm3745, %v6872, 0
      %v6922 = vsel %vm3745, %v6873, 0
      %v6925 = vsel %vm3745, %v6874, 0
      %v6928 = vsel %vm3745, %v6875, 0
      %v6931 = vsel %vm3745, %v6876, 0
      %v6934 = vsel %vm3745, %v6877, 0
      %v6937 = vsel %vm3745, %v6878, 0
      %v6940 = vsel %vm3745, %v6879, 0
      %v6943 = vsel %vm3745, %v6880, 0
      %v6946 = vsel %vm3745, %v6881, 0
      %v6949 = vsel %vm3745, %v6882, 0
      %v6952 = vsel %vm3745, %v6883, 0
      %v6955 = vsel %vm3745, %v6884, 0
      %v6958 = vsel %vm3745, %v6885, 0
      %v6961 = vsel %vm3745, %v6886, 0
      %v6964 = vsel %vm3745, %v6887, 0
      %v6967 = vsel %vm3745, %v6888, 0
      %v6970 = vsel %vm3745, %v6889, 0
      %v6973 = vsel %vm3745, %v6890, 0
      %v6976 = vsel %vm3745, %v6891, 0
      %v6979 = vsel %vm3745, %v6892, 0
      %v6982 = vsel %vm3745, %v6893, 0
      %v6985 = vsel %vm3745, %v6894, 0
      %v6988 = vsel %vm3745, %v6895, 0
      %v6991 = vsel %vm3745, %v6896, 0
      %v6994 = vsel %vm3745, %v6897, 0
      %6996 = vmatprep.subr.mxu0 0.0
      %6997 = vmatpush1.msra.mxu0 %v6899
      %6998 = vmatprep.subr.mxu0 0.0
      %6999 = vmatpush1.msra.mxu0 0.0
      %7000 = vmatprep.subr.mxu0 0.0
      %7001 = vmatpush1.msra.mxu0 0.0
      %7002 = vmatprep.subr.mxu0 0.0
      %7003 = vmatpush1.msra.mxu0 0.0
      %7004 = vmatprep.subr.mxu0 0.0
      %7005 = vmatpush1.msra.mxu0 0.0
      %7006 = vmatprep.subr.mxu0 0.0
      %7007 = vmatpush1.msra.mxu0 0.0
      %7008 = vmatprep.subr.mxu0 0.0
      %7009 = vmatpush1.msra.mxu0 0.0
      %7010 = vmatprep.subr.mxu0 0.0
      %7011 = vmatpush1.msra.mxu0 0.0
      %7012 = vmatprep.subr.mxu0 0.0
      %7013 = vmatpush1.msra.mxu0 0.0
      %7014 = vmatprep.subr.mxu0 0.0
      %7015 = vmatpush1.msra.mxu0 0.0
      %7016 = vmatprep.subr.mxu0 0.0
      %7017 = vmatpush1.msra.mxu0 0.0
      %7018 = vmatprep.subr.mxu0 0.0
      %7019 = vmatpush1.msra.mxu0 0.0
      %7020 = vmatprep.subr.mxu0 0.0
      %7021 = vmatpush1.msra.mxu0 0.0
      %7022 = vmatprep.subr.mxu0 0.0
      %7023 = vmatpush1.msra.mxu0 0.0
      %7024 = vmatprep.subr.mxu0 0.0
      %7025 = vmatpush1.msra.mxu0 0.0
      %7026 = vmatprep.subr.mxu0 0.0
      %7027 = vmatpush1.msra.mxu0 0.0
      %7028 = vmatprep.subr.mxu0 0.0
      %7029 = vmatpush1.msra.mxu0 0.0
      %7030 = vmatprep.subr.mxu0 0.0
      %7031 = vmatpush1.msra.mxu0 0.0
      %7032 = vmatprep.subr.mxu0 0.0
      %7033 = vmatpush1.msra.mxu0 0.0
      %7034 = vmatprep.subr.mxu0 0.0
      %7035 = vmatpush1.msra.mxu0 0.0
      %7036 = vmatprep.subr.mxu0 0.0
      %7037 = vmatpush1.msra.mxu0 0.0
      %7038 = vmatprep.subr.mxu0 0.0
      %7039 = vmatpush1.msra.mxu0 0.0
      %7040 = vmatprep.subr.mxu0 0.0
      %7041 = vmatpush1.msra.mxu0 0.0
      %7042 = vmatprep.subr.mxu0 0.0
      %7043 = vmatpush1.msra.mxu0 0.0
      %7044 = vmatprep.subr.mxu0 0.0
      %7045 = vmatpush1.msra.mxu0 0.0
      %7046 = vmatprep.subr.mxu0 0.0
      %7047 = vmatpush1.msra.mxu0 0.0
      %7048 = vmatprep.subr.mxu0 0.0
      %7049 = vmatpush1.msra.mxu0 0.0
      %7050 = vmatprep.subr.mxu0 0.0
      %7051 = vmatpush1.msra.mxu0 0.0
      %7052 = vmatprep.subr.mxu0 0.0
      %7053 = vmatpush1.msra.mxu0 0.0
      %7054 = vmatprep.subr.mxu0 0.0
      %7055 = vmatpush1.msra.mxu0 0.0
      %7056 = vmatprep.subr.mxu0 0.0
      %7057 = vmatpush1.msra.mxu0 0.0
      %7058 = vmatprep.subr.mxu0 0.0
      %7059 = vmatpush1.msra.mxu0 0.0
      %7060 = vmatprep.mubr.f32.mxu0 0.0
      %7061 = vmatmul.mubr.f32.gmra.mrb[0].mxu0 %v6901
      %v7062 = vpop.f32.mrb[0].mxu0
      %v7063 = vadd.f32 0.0, %v7062
      %v7064 = vpop.f32.mrb[0].mxu0
      %7065 = vmatprep.mubr.f32.mxu0 0.0
      %7066 = vmatmul.mubr.f32.gmra.mrb[0].mxu0 %v6904
      %v7067 = vpop.f32.mrb[0].mxu0
      %v7068 = vadd.f32 0.0, %v7067
      %v7069 = vpop.f32.mrb[0].mxu0
      %7070 = vmatprep.mubr.f32.mxu0 0.0
      %7071 = vmatmul.mubr.f32.gmra.mrb[0].mxu0 %v6907
      %v7072 = vpop.f32.mrb[0].mxu0
      %v7073 = vadd.f32 0.0, %v7072
      %v7074 = vpop.f32.mrb[0].mxu0
      %7075 = vmatprep.mubr.f32.mxu0 0.0
      %7076 = vmatmul.mubr.f32.gmra.mrb[0].mxu0 %v6910
      %v7077 = vpop.f32.mrb[0].mxu0
      %v7078 = vadd.f32 0.0, %v7077
      %v7079 = vpop.f32.mrb[0].mxu0
      %7080 = vmatprep.mubr.f32.mxu0 0.0
      %7081 = vmatmul.mubr.f32.gmra.mrb[0].mxu0 %v6913
      %v7082 = vpop.f32.mrb[0].mxu0
      %v7083 = vadd.f32 0.0, %v7082
      %v7084 = vpop.f32.mrb[0].mxu0
      %7085 = vmatprep.mubr.f32.mxu0 0.0
      %7086 = vmatmul.mubr.f32.gmra.mrb[0].mxu0 %v6916
      %v7087 = vpop.f32.mrb[0].mxu0
      %v7088 = vadd.f32 0.0, %v7087
      %v7089 = vpop.f32.mrb[0].mxu0
      %7090 = vmatprep.mubr.f32.mxu0 0.0
      %7091 = vmatmul.mubr.f32.gmra.mrb[0].mxu0 %v6919
      %v7092 = vpop.f32.mrb[0].mxu0
      %v7093 = vadd.f32 0.0, %v7092
      %v7094 = vpop.f32.mrb[0].mxu0
      %7095 = vmatprep.mubr.f32.mxu0 0.0
      %7096 = vmatmul.mubr.f32.gmra.mrb[0].mxu0 %v6922
      %v7097 = vpop.f32.mrb[0].mxu0
      %v7098 = vadd.f32 0.0, %v7097
      %v7099 = vpop.f32.mrb[0].mxu0
      %7100 = vmatprep.mubr.f32.mxu0 0.0
      %7101 = vmatmul.mubr.f32.gmra.mrb[0].mxu0 %v6925
      %v7102 = vpop.f32.mrb[0].mxu0
      %v7103 = vadd.f32 0.0, %v7102
      %v7104 = vpop.f32.mrb[0].mxu0
      %7105 = vmatprep.mubr.f32.mxu0 0.0
      %7106 = vmatmul.mubr.f32.gmra.mrb[0].mxu0 %v6928
      %v7107 = vpop.f32.mrb[0].mxu0
      %v7108 = vadd.f32 0.0, %v7107
      %v7109 = vpop.f32.mrb[0].mxu0
      %7110 = vmatprep.mubr.f32.mxu0 0.0
      %7111 = vmatmul.mubr.f32.gmra.mrb[0].mxu0 %v6931
      %v7112 = vpop.f32.mrb[0].mxu0
      %v7113 = vadd.f32 0.0, %v7112
      %v7114 = vpop.f32.mrb[0].mxu0
      %7115 = vmatprep.mubr.f32.mxu0 0.0
      %7116 = vmatmul.mubr.f32.gmra.mrb[0].mxu0 %v6934
      %v7117 = vpop.f32.mrb[0].mxu0
      %v7118 = vadd.f32 0.0, %v7117
      %v7119 = vpop.f32.mrb[0].mxu0
      %7120 = vmatprep.mubr.f32.mxu0 0.0
      %7121 = vmatmul.mubr.f32.gmra.mrb[0].mxu0 %v6937
      %v7122 = vpop.f32.mrb[0].mxu0
      %v7123 = vadd.f32 0.0, %v7122
      %v7124 = vpop.f32.mrb[0].mxu0
      %7125 = vmatprep.mubr.f32.mxu0 0.0
      %7126 = vmatmul.mubr.f32.gmra.mrb[0].mxu0 %v6940
      %v7127 = vpop.f32.mrb[0].mxu0
      %v7128 = vadd.f32 0.0, %v7127
      %v7129 = vpop.f32.mrb[0].mxu0
      %7130 = vmatprep.mubr.f32.mxu0 0.0
      %7131 = vmatmul.mubr.f32.gmra.mrb[0].mxu0 %v6943
      %v7132 = vpop.f32.mrb[0].mxu0
      %v7133 = vadd.f32 0.0, %v7132
      %v7134 = vpop.f32.mrb[0].mxu0
      %7135 = vmatprep.mubr.f32.mxu0 0.0
      %7136 = vmatmul.mubr.f32.gmra.mrb[0].mxu0 %v6946
      %v7137 = vpop.f32.mrb[0].mxu0
      %v7138 = vadd.f32 0.0, %v7137
      %v7139 = vpop.f32.mrb[0].mxu0
      %7140 = vmatprep.mubr.f32.mxu0 0.0
      %7141 = vmatmul.mubr.f32.gmra.mrb[0].mxu0 %v6949
      %v7142 = vpop.f32.mrb[0].mxu0
      %v7143 = vadd.f32 0.0, %v7142
      %v7144 = vpop.f32.mrb[0].mxu0
      %7145 = vmatprep.mubr.f32.mxu0 0.0
      %7146 = vmatmul.mubr.f32.gmra.mrb[0].mxu0 %v6952
      %v7147 = vpop.f32.mrb[0].mxu0
      %v7148 = vadd.f32 0.0, %v7147
      %v7149 = vpop.f32.mrb[0].mxu0
      %7150 = vmatprep.mubr.f32.mxu0 0.0
      %7151 = vmatmul.mubr.f32.gmra.mrb[0].mxu0 %v6955
      %v7152 = vpop.f32.mrb[0].mxu0
      %v7153 = vadd.f32 0.0, %v7152
      %v7154 = vpop.f32.mrb[0].mxu0
      %7155 = vmatprep.mubr.f32.mxu0 0.0
      %7156 = vmatmul.mubr.f32.gmra.mrb[0].mxu0 %v6958
      %v7157 = vpop.f32.mrb[0].mxu0
      %v7158 = vadd.f32 0.0, %v7157
      %v7159 = vpop.f32.mrb[0].mxu0
      %7160 = vmatprep.mubr.f32.mxu0 0.0
      %7161 = vmatmul.mubr.f32.gmra.mrb[0].mxu0 %v6961
      %v7162 = vpop.f32.mrb[0].mxu0
      %v7163 = vadd.f32 0.0, %v7162
      %v7164 = vpop.f32.mrb[0].mxu0
      %7165 = vmatprep.mubr.f32.mxu0 0.0
      %7166 = vmatmul.mubr.f32.gmra.mrb[0].mxu0 %v6964
      %v7167 = vpop.f32.mrb[0].mxu0
      %v7168 = vadd.f32 0.0, %v7167
      %v7169 = vpop.f32.mrb[0].mxu0
      %7170 = vmatprep.mubr.f32.mxu0 0.0
      %7171 = vmatmul.mubr.f32.gmra.mrb[0].mxu0 %v6967
      %v7172 = vpop.f32.mrb[0].mxu0
      %v7173 = vadd.f32 0.0, %v7172
      %v7174 = vpop.f32.mrb[0].mxu0
      %7175 = vmatprep.mubr.f32.mxu0 0.0
      %7176 = vmatmul.mubr.f32.gmra.mrb[0].mxu0 %v6970
      %v7177 = vpop.f32.mrb[0].mxu0
      %v7178 = vadd.f32 0.0, %v7177
      %v7179 = vpop.f32.mrb[0].mxu0
      %7180 = vmatprep.mubr.f32.mxu0 0.0
      %7181 = vmatmul.mubr.f32.gmra.mrb[0].mxu0 %v6973
      %v7182 = vpop.f32.mrb[0].mxu0
      %v7183 = vadd.f32 0.0, %v7182
      %v7184 = vpop.f32.mrb[0].mxu0
      %7185 = vmatprep.mubr.f32.mxu0 0.0
      %7186 = vmatmul.mubr.f32.gmra.mrb[0].mxu0 %v6976
      %v7187 = vpop.f32.mrb[0].mxu0
      %v7188 = vadd.f32 0.0, %v7187
      %v7189 = vpop.f32.mrb[0].mxu0
      %7190 = vmatprep.mubr.f32.mxu0 0.0
      %7191 = vmatmul.mubr.f32.gmra.mrb[0].mxu0 %v6979
      %v7192 = vpop.f32.mrb[0].mxu0
      %v7193 = vadd.f32 0.0, %v7192
      %v7194 = vpop.f32.mrb[0].mxu0
      %7195 = vmatprep.mubr.f32.mxu0 0.0
      %7196 = vmatmul.mubr.f32.gmra.mrb[0].mxu0 %v6982
      %v7197 = vpop.f32.mrb[0].mxu0
      %v7198 = vadd.f32 0.0, %v7197
      %v7199 = vpop.f32.mrb[0].mxu0
      %7200 = vmatprep.mubr.f32.mxu0 0.0
      %7201 = vmatmul.mubr.f32.gmra.mrb[0].mxu0 %v6985
      %v7202 = vpop.f32.mrb[0].mxu0
      %v7203 = vadd.f32 0.0, %v7202
      %v7204 = vpop.f32.mrb[0].mxu0
      %7205 = vmatprep.mubr.f32.mxu0 0.0
      %7206 = vmatmul.mubr.f32.gmra.mrb[0].mxu0 %v6988
      %v7207 = vpop.f32.mrb[0].mxu0
      %v7208 = vadd.f32 0.0, %v7207
      %v7209 = vpop.f32.mrb[0].mxu0
      %7210 = vmatprep.mubr.f32.mxu0 0.0
      %7211 = vmatmul.mubr.f32.gmra.mrb[0].mxu0 %v6991
      %v7212 = vpop.f32.mrb[0].mxu0
      %v7213 = vadd.f32 0.0, %v7212
      %v7214 = vpop.f32.mrb[0].mxu0
      %7215 = vmatprep.mubr.f32.mxu0 0.0
      %7216 = vmatmul.mubr.f32.gmra.mrb[0].mxu0 %v6994
      %v7217 = vpop.f32.mrb[0].mxu0
      %v7218 = vadd.f32 0.0, %v7217
      %v7219 = vpop.f32.mrb[0].mxu0
      %7220 = vdwg.mxu0
      %v7221 = vadd.f32 %v6834, %v7063
      %v7222 = vadd.f32 %v6835, %v7068
      %v7223 = vadd.f32 %v6836, %v7073
      %v7224 = vadd.f32 %v6837, %v7078
      %v7225 = vadd.f32 %v6838, %v7083
      %v7226 = vadd.f32 %v6839, %v7088
      %v7227 = vadd.f32 %v6840, %v7093
      %v7228 = vadd.f32 %v6841, %v7098
      %v7229 = vadd.f32 %v6842, %v7103
      %v7230 = vadd.f32 %v6843, %v7108
      %v7231 = vadd.f32 %v6844, %v7113
      %v7232 = vadd.f32 %v6845, %v7118
      %v7233 = vadd.f32 %v6846, %v7123
      %v7234 = vadd.f32 %v6847, %v7128
      %v7235 = vadd.f32 %v6848, %v7133
      %v7236 = vadd.f32 %v6849, %v7138
      %v7237 = vadd.f32 %v6850, %v7143
      %v7238 = vadd.f32 %v6851, %v7148
      %v7239 = vadd.f32 %v6852, %v7153
      %v7240 = vadd.f32 %v6853, %v7158
      %v7241 = vadd.f32 %v6854, %v7163
      %v7242 = vadd.f32 %v6855, %v7168
      %v7243 = vadd.f32 %v6856, %v7173
      %v7244 = vadd.f32 %v6857, %v7178
      %v7245 = vadd.f32 %v6858, %v7183
      %v7246 = vadd.f32 %v6859, %v7188
      %v7247 = vadd.f32 %v6860, %v7193
      %v7248 = vadd.f32 %v6861, %v7198
      %v7249 = vadd.f32 %v6862, %v7203
      %v7250 = vadd.f32 %v6863, %v7208
      %v7251 = vadd.f32 %v6864, %v7213
      %v7252 = vadd.f32 %v6865, %v7218
      %v7253 = vld [vmem:[%s4] sm:$0x1]
      %v7255 = vlaneseq
      %v7256 = vshrl.u32 %v7255, 7
      %v7257 = vsub.s32 0, %v7256
      %v7258 = vrot.slane %v7253, %v7257
      %v7260 = vadd.f32 %v7221, %v7258
      %v7261 = vadd.f32 %v7222, %v7258
      %v7262 = vadd.f32 %v7223, %v7258
      %v7263 = vadd.f32 %v7224, %v7258
      %v7264 = vadd.f32 %v7225, %v7258
      %v7265 = vadd.f32 %v7226, %v7258
      %v7266 = vadd.f32 %v7227, %v7258
      %v7267 = vadd.f32 %v7228, %v7258
      %v7268 = vadd.f32 %v7229, %v7258
      %v7269 = vadd.f32 %v7230, %v7258
      %v7270 = vadd.f32 %v7231, %v7258
      %v7271 = vadd.f32 %v7232, %v7258
      %v7272 = vadd.f32 %v7233, %v7258
      %v7273 = vadd.f32 %v7234, %v7258
      %v7274 = vadd.f32 %v7235, %v7258
      %v7275 = vadd.f32 %v7236, %v7258
      %v7276 = vadd.f32 %v7237, %v7258
      %v7277 = vadd.f32 %v7238, %v7258
      %v7278 = vadd.f32 %v7239, %v7258
      %v7279 = vadd.f32 %v7240, %v7258
      %v7280 = vadd.f32 %v7241, %v7258
      %v7281 = vadd.f32 %v7242, %v7258
      %v7282 = vadd.f32 %v7243, %v7258
      %v7283 = vadd.f32 %v7244, %v7258
      %v7284 = vadd.f32 %v7245, %v7258
      %v7285 = vadd.f32 %v7246, %v7258
      %v7286 = vadd.f32 %v7247, %v7258
      %v7287 = vadd.f32 %v7248, %v7258
      %v7288 = vadd.f32 %v7249, %v7258
      %v7289 = vadd.f32 %v7250, %v7258
      %v7290 = vadd.f32 %v7251, %v7258
      %v7291 = vadd.f32 %v7252, %v7258
      %v7292 = vmax.f32 %v7260, 0.0
      %v7293 = vmax.f32 %v7261, 0.0
      %v7294 = vmax.f32 %v7262, 0.0
      %v7295 = vmax.f32 %v7263, 0.0
      %v7296 = vmax.f32 %v7264, 0.0
      %v7297 = vmax.f32 %v7265, 0.0
      %v7298 = vmax.f32 %v7266, 0.0
      %v7299 = vmax.f32 %v7267, 0.0
      %v7300 = vmax.f32 %v7268, 0.0
      %v7301 = vmax.f32 %v7269, 0.0
      %v7302 = vmax.f32 %v7270, 0.0
      %v7303 = vmax.f32 %v7271, 0.0
      %v7304 = vmax.f32 %v7272, 0.0
      %v7305 = vmax.f32 %v7273, 0.0
      %v7306 = vmax.f32 %v7274, 0.0
      %v7307 = vmax.f32 %v7275, 0.0
      %v7308 = vmax.f32 %v7276, 0.0
      %v7309 = vmax.f32 %v7277, 0.0
      %v7310 = vmax.f32 %v7278, 0.0
      %v7311 = vmax.f32 %v7279, 0.0
      %v7312 = vmax.f32 %v7280, 0.0
      %v7313 = vmax.f32 %v7281, 0.0
      %v7314 = vmax.f32 %v7282, 0.0
      %v7315 = vmax.f32 %v7283, 0.0
      %v7316 = vmax.f32 %v7284, 0.0
      %v7317 = vmax.f32 %v7285, 0.0
      %v7318 = vmax.f32 %v7286, 0.0
      %v7319 = vmax.f32 %v7287, 0.0
      %v7320 = vmax.f32 %v7288, 0.0
      %v7321 = vmax.f32 %v7289, 0.0
      %v7322 = vmax.f32 %v7290, 0.0
      %v7323 = vmax.f32 %v7291, 0.0
      %vm7324 = vcmask 130048
      %7325 = vst.msk [vmem:[%s224] sm:$0xff] %vm7324, %v7292
      %7326 = vst.msk [vmem:[%s224 + $0x8] sm:$0xff] %vm7324, %v7293
      %7327 = vst.msk [vmem:[%s224 + $0x10] sm:$0xff] %vm7324, %v7294
      %7328 = vst.msk [vmem:[%s224 + $0x18] sm:$0xff] %vm7324, %v7295
      %7329 = vst.msk [vmem:[%s224 + $0x20] sm:$0xff] %vm7324, %v7296
      %7330 = vst.msk [vmem:[%s224 + $0x28] sm:$0xff] %vm7324, %v7297
      %7331 = vst.msk [vmem:[%s224 + $0x30] sm:$0xff] %vm7324, %v7298
      %7332 = vst.msk [vmem:[%s224 + $0x38] sm:$0xff] %vm7324, %v7299
      %7333 = vst.msk [vmem:[%s224 + $0x40] sm:$0xff] %vm7324, %v7300
      %7334 = vst.msk [vmem:[%s224 + $0x48] sm:$0xff] %vm7324, %v7301
      %7335 = vst.msk [vmem:[%s224 + $0x50] sm:$0xff] %vm7324, %v7302
      %7336 = vst.msk [vmem:[%s224 + $0x58] sm:$0xff] %vm7324, %v7303
      %7337 = vst.msk [vmem:[%s224 + $0x60] sm:$0xff] %vm7324, %v7304
      %7338 = vst.msk [vmem:[%s224 + $0x68] sm:$0xff] %vm7324, %v7305
      %7339 = vst.msk [vmem:[%s224 + $0x70] sm:$0xff] %vm7324, %v7306
      %7340 = vst.msk [vmem:[%s224 + $0x78] sm:$0xff] %vm7324, %v7307
      %7341 = vst.msk [vmem:[%s224 + $0x80] sm:$0xff] %vm7324, %v7308
      %7342 = vst.msk [vmem:[%s224 + $0x88] sm:$0xff] %vm7324, %v7309
      %7343 = vst.msk [vmem:[%s224 + $0x90] sm:$0xff] %vm7324, %v7310
      %7344 = vst.msk [vmem:[%s224 + $0x98] sm:$0xff] %vm7324, %v7311
      %7345 = vst.msk [vmem:[%s224 + $0xa0] sm:$0xff] %vm7324, %v7312
      %7346 = vst.msk [vmem:[%s224 + $0xa8] sm:$0xff] %vm7324, %v7313
      %7347 = vst.msk [vmem:[%s224 + $0xb0] sm:$0xff] %vm7324, %v7314
      %7348 = vst.msk [vmem:[%s224 + $0xb8] sm:$0xff] %vm7324, %v7315
      %7349 = vst.msk [vmem:[%s224 + $0xc0] sm:$0xff] %vm7324, %v7316
      %7350 = vst.msk [vmem:[%s224 + $0xc8] sm:$0xff] %vm7324, %v7317
      %7351 = vst.msk [vmem:[%s224 + $0xd0] sm:$0xff] %vm7324, %v7318
      %7352 = vst.msk [vmem:[%s224 + $0xd8] sm:$0xff] %vm7324, %v7319
      %7353 = vst.msk [vmem:[%s224 + $0xe0] sm:$0xff] %vm7324, %v7320
      %7354 = vst.msk [vmem:[%s224 + $0xe8] sm:$0xff] %vm7324, %v7321
      %7355 = vst.msk [vmem:[%s224 + $0xf0] sm:$0xff] %vm7324, %v7322
      %7356 = vst.msk [vmem:[%s224 + $0xf8] sm:$0xff] %vm7324, %v7323
      %p7357 = scmp.lt.s32.totalorder %s16, 1
      %s7358 = scalar_select %p7357, %s16, 1
      %s7359 = smul.addr %s7358, 32
      %s7360 = smul.addr %s7359, 8
      %s7361 = scalar_lea.vmem %s5, %s7360
      // Predicated region
      $region41: #{decoder_block_resnet_forward.1} parent=39 // pred_check
        %p7362 = pneg %p144
      $region42: #{decoder_block_resnet_forward.1} parent=39 // pred_check_branch
        %7364 = sbr.rel (%p7362) target = $region44
      $region43: #{decoder_block_resnet_forward.1} parent=39 // pred_region
        _
      $region44: #{decoder_block_resnet_forward.1} parent=39 // pred_fallthru
        _
    $region40: #{decoder_block_resnet_forward.1} parent=5 // pred_fallthru
      _
    %p7365 = scmp.le.s32.totalorder 2, %s11
    // Predicated region
    $region45: #{decoder_block_resnet_forward.1} parent=5 // pred_check
      %p7366 = pneg %p7365
    $region46: #{decoder_block_resnet_forward.1} parent=5 // pred_check_branch
      %7368 = sbr.rel (%p7366) target = $region48
    $region47: #{decoder_block_resnet_forward.1} parent=5 // pred_region
      %s7369 = ssub.s32 %s11, 2
      // Predicated region
      $region49: #{decoder_block_resnet_forward.1} parent=47 // pred_check
        %p7370 = pneg %p150
      $region50: #{decoder_block_resnet_forward.1} parent=47 // pred_check_branch
        %7372 = sbr.rel (%p7370) target = $region52
      $region51: #{decoder_block_resnet_forward.1} parent=47 // pred_region
        %p7373 = scmp.lt.s32.totalorder %s17, 1
        %s7374 = scalar_select %p7373, %s17, 1
        %s7375 = smul.addr %s7374, 32
        %s7376 = smul.addr %s7375, 8
        %s7377 = scalar_lea.vmem %s5, %s7376
      $region52: #{decoder_block_resnet_forward.1} parent=47 // pred_fallthru
        _
    $region48: #{decoder_block_resnet_forward.1} parent=5 // pred_fallthru
      _
  $region6: #{decoder_block_resnet_forward.1} parent=0 // loop_footer
    %s15 = sadd.s32 1, %s11
  $region7: #{decoder_block_resnet_forward.1} parent=0 // loop_footer_branch
    %10 = sbr.rel target = $region3
  $region8: #{decoder_block_resnet_forward.1} parent=0 // loop_exit
    _

</llo_original>
